<compile_context>
chip_gen: v6e
topology: v6e:2x2x1
jax: 0.10.0
libtpu: 0.0.40
codegen_flags: <defaults>
</compile_context>

<pallas_src>
import functools

import numpy as np

import jax
import jax.numpy as jnp
from jax.experimental import pallas as pl
from jax.experimental.pallas import tpu as pltpu


def _round_up(x, m):
    return (x + m - 1) // m * m


def _full_spec(a):
    nd = a.ndim
    return pl.BlockSpec(a.shape, lambda *_: (0,) * nd)


# ----------------------------------------------------------------------------
# Single fused kernel: conv3x3 + relu + masked mean-pool -> res linear ->
# gcs linear -> gated attention -> dns head.   grid=() : one invocation.
# ----------------------------------------------------------------------------
def _fused_forward_kernel(
    x2_ref,        # (R, Cin_pad)        f32  zero-padded, flattened NHWC image
    pool_ref,      # (B, M)              bf16 validity-mask * 1/(H*W)
    conv_w_ref,    # (9, Cin_pad, Cout)  bf16
    conv_b_ref,    # (1, Cout)           f32
    res_w_ref,     # (Cout, Fr)          bf16
    res_b_ref,     # (1, Fr)             f32
    gcs_ref,       # (1, 16)             bf16 gcs mask vector (padded 15 -> 16)
    gcs_w_ref,     # (16, Fg)            bf16
    gcs_b_ref,     # (1, Fg)             f32
    attn_w0_ref,   # (Fr+Fg, Fr)         bf16 columns [:Fr]  of attn_w
    attn_w1_ref,   # (Fr+Fg, Fg)         bf16 columns [Fr:]  of attn_w
    attn_b0_ref,   # (1, Fr)             f32
    attn_b1_ref,   # (1, Fg)             f32
    dns_w_ref,     # (Fr+Fg, O)          bf16
    dns_b_ref,     # (1, O)              f32
    out_ref,       # (B, O)              f32  <- only HBM store
    conv_acc_ref,  # (M, Cout)           f32  VMEM scratch accumulator
    *, shifts, m,
):
    f32, bf16 = jnp.float32, jnp.bfloat16

    # --- res stage 1: 3x3 SAME conv as 9 shifted-row-slice matmuls (MXU) -----
    conv_acc_ref[...] = jnp.zeros_like(conv_acc_ref)
    for k, s in enumerate(shifts):
        patch = x2_ref[s:s + m, :].astype(bf16)               # (M, Cin_pad)
        conv_acc_ref[...] += jnp.dot(patch, conv_w_ref[k],
                                     preferred_element_type=f32)
    conv = jnp.maximum(conv_acc_ref[...] + conv_b_ref[...], 0.0)   # (M, Cout)

    # --- res stage 2: masked global average pool as one matmul ---------------
    pooled = jnp.dot(pool_ref[...], conv.astype(bf16),
                     preferred_element_type=f32)               # (B, Cout)

    # --- res stage 3: linear head of `res` ------------------------------------
    gf = jnp.dot(pooled.astype(bf16), res_w_ref[...],
                 preferred_element_type=f32) + res_b_ref[...]  # (B, Fr)

    # --- gcs branch (batch invariant): computed once as (1, Fg) ---------------
    gcs_f = jnp.dot(gcs_ref[...], gcs_w_ref[...],
                    preferred_element_type=f32) + gcs_b_ref[...]

    # --- attn: gated attention over concat([gf, gcs]) without materializing ---
    #     the concat: attn_w is split by rows at Fr and by columns at Fr.
    fr = res_w_ref.shape[1]
    ftot = dns_w_ref.shape[0]
    gf16, gcs16 = gf.astype(bf16), gcs_f.astype(bf16)
    z0 = (jnp.dot(gf16, attn_w0_ref[0:fr, :], preferred_element_type=f32)
          + jnp.dot(gcs16, attn_w0_ref[fr:ftot, :], preferred_element_type=f32)
          + attn_b0_ref[...])                                  # (B, Fr)
    z1 = (jnp.dot(gf16, attn_w1_ref[0:fr, :], preferred_element_type=f32)
          + jnp.dot(gcs16, attn_w1_ref[fr:ftot, :], preferred_element_type=f32)
          + attn_b1_ref[...])                                  # (B, Fg)
    gated0 = gf * jax.nn.sigmoid(z0)                           # (B, Fr)
    gated1 = gcs_f * jax.nn.sigmoid(z1)                        # (1,Fg)*(B,Fg)

    # --- dns head (row-split to match the virtual concat) ---------------------
    out = (jnp.dot(gated0.astype(bf16), dns_w_ref[0:fr, :],
                   preferred_element_type=f32)
           + jnp.dot(gated1.astype(bf16), dns_w_ref[fr:ftot, :],
                     preferred_element_type=f32)
           + dns_b_ref[...])
    out_ref[...] = out.astype(out_ref.dtype)


# ----------------------------------------------------------------------------
# Parameters (deterministic, synthetic) + one-time kernel re-layout
# ----------------------------------------------------------------------------
def init_params(key, cin=4, conv_cout=8, f_res=64, f_gcs=64, out_dim=15):
    """Canonical (framework-layout) synthetic parameters."""
    ks = jax.random.split(key, 8)
    s = 0.1
    p = {}
    p["conv_w"] = s * jax.random.normal(ks[0], (9 * cin, conv_cout), jnp.float32)
    p["conv_b"] = jnp.zeros((conv_cout,), jnp.float32)
    p["res_w"] = s * jax.random.normal(ks[1], (conv_cout, f_res), jnp.float32)
    p["res_b"] = jnp.zeros((f_res,), jnp.float32)
    p["gcs_w"] = s * jax.random.normal(ks[2], (15, f_gcs), jnp.float32)
    p["gcs_b"] = jnp.zeros((f_gcs,), jnp.float32)
    ftot = f_res + f_gcs
    p["attn_w"] = s * jax.random.normal(ks[3], (ftot, ftot), jnp.float32)
    p["attn_b"] = jnp.zeros((ftot,), jnp.float32)
    p["dns_w"] = s * jax.random.normal(ks[4], (ftot, out_dim), jnp.float32)
    p["dns_b"] = jnp.zeros((out_dim,), jnp.float32)
    return p


def prepare_params(p, cin_pad=8):
    """One-time host-side re-layout for the fused kernel:
    conv weights -> (9, Cin_pad, Cout); attn weights column-split at f_res;
    gcs weights K-padded 15 -> 16; matmul weights cast to bf16 (f32 accum)."""
    bf16, f32 = jnp.bfloat16, jnp.float32
    cout = p["conv_w"].shape[1]
    cin = p["conv_w"].shape[0] // 9
    f_res = p["res_w"].shape[1]
    q = {}
    cw = p["conv_w"].reshape(9, cin, cout)           # rows were (dy*3+dx, ci)
    q["conv_w"] = jnp.pad(cw, ((0, 0), (0, cin_pad - cin), (0, 0))).astype(bf16)
    q["conv_b"] = p["conv_b"].reshape(1, cout).astype(f32)
    q["res_w"] = p["res_w"].astype(bf16)
    q["res_b"] = p["res_b"].reshape(1, -1).astype(f32)
    q["gcs_w"] = jnp.pad(p["gcs_w"], ((0, 1), (0, 0))).astype(bf16)   # (16, Fg)
    q["gcs_b"] = p["gcs_b"].reshape(1, -1).astype(f32)
    q["attn_w0"] = p["attn_w"][:, :f_res].astype(bf16)
    q["attn_w1"] = p["attn_w"][:, f_res:].astype(bf16)
    q["attn_b0"] = p["attn_b"][:f_res].reshape(1, -1).astype(f32)
    q["attn_b1"] = p["attn_b"][f_res:].reshape(1, -1).astype(f32)
    q["dns_w"] = p["dns_w"].astype(bf16)
    q["dns_b"] = p["dns_b"].reshape(1, -1).astype(f32)
    return q


def make_gcs_tensor(gcs_steps):
    # gcs_np: first `gcs_steps` entries 1, rest 0, length 15; shape (1, 15),
    # padded with one zero column (K = 16, matches the padded gcs_w).
    vals = [1.0 if i < gcs_steps else 0.0 for i in range(15)] + [0.0]
    return jnp.array(vals, jnp.bfloat16).reshape(1, 16)


# ----------------------------------------------------------------------------
# Forward pass (mirrors Test.forward with with_gcs=True)
# ----------------------------------------------------------------------------
def test_forward(kparams, x_nchw, gcs_vec):
    B, C, H, W = x_nchw.shape
    Hp, Wp = H + 2, W + 2
    cin_pad = kparams["conv_w"].shape[1]
    cout = kparams["conv_w"].shape[2]
    out_dim = kparams["dns_w"].shape[1]

    n_rows = B * Hp * Wp                              # flattened padded positions
    M = _round_up(n_rows, 8)                          # conv rows computed in-kernel
    shifts = tuple(dy * Wp + dx for dy in range(3) for dx in range(3))
    total_rows = _round_up(M + shifts[-1], 8)         # rows the shifted slices touch

    # --- only remaining XLA glue: NCHW->NHWC, SAME zero-pad, flatten, pad ----
    # TODO(synk): disappears entirely if the caller supplies NHWC input.
    x_nhwc = jnp.transpose(x_nchw, (0, 2, 3, 1))
    xp = jnp.pad(x_nhwc, ((0, 0), (1, 1), (1, 1), (0, 0)))
    x2 = xp.reshape(n_rows, C)
    x2 = jnp.pad(x2, ((0, total_rows - n_rows), (0, cin_pad - C)))
    x2 = x2.astype(jnp.float32)

    # Pooling / validity-mask matrix: pooled = P @ relu(conv). Built with numpy
    # from static shapes, so under jit it is baked in as a constant.
    P = np.zeros((B, M), np.float32)
    for b in range(B):
        for h in range(H):
            r0 = b * Hp * Wp + h * Wp
            P[b, r0:r0 + W] = 1.0 / (H * W)
    pool_mat = jnp.asarray(P, dtype=jnp.bfloat16)

    args = (
        x2, pool_mat,
        kparams["conv_w"], kparams["conv_b"],
        kparams["res_w"], kparams["res_b"],
        gcs_vec, kparams["gcs_w"], kparams["gcs_b"],
        kparams["attn_w0"], kparams["attn_w1"],
        kparams["attn_b0"], kparams["attn_b1"],
        kparams["dns_w"], kparams["dns_b"],
    )
    kernel = functools.partial(_fused_forward_kernel, shifts=shifts, m=M)
    out = pl.pallas_call(
        kernel,
        out_shape=jax.ShapeDtypeStruct((B, out_dim), jnp.float32),
        in_specs=[_full_spec(a) for a in args],
        out_specs=pl.BlockSpec((B, out_dim), lambda *_: (0, 0)),
        scratch_shapes=[pltpu.VMEM((M, cout), jnp.float32)],
    )(*args)
    return out


if __name__ == "__main__":
    key = jax.random.PRNGKey(0)
    pkey, xkey = jax.random.split(key)

    params = init_params(pkey)                 # canonical synthetic params
    kparams = prepare_params(params)           # one-time kernel re-layout

    x = jax.random.normal(xkey, (2, 4, 16, 16), jnp.float32)   # NCHW input
    gcs_vec = make_gcs_tensor(gcs_steps=5)                     # select=5 case

    fwd = jax.jit(test_forward)
    out = jax.block_until_ready(fwd(kparams, x, gcs_vec))
    assert out.shape == (2, 15) and out.dtype == jnp.float32
    print("KERNEL_OK")
</pallas_src>

<mosaic_0001>
module attributes {stable_mosaic.version = 11 : i64} {
  func.func @_fused_forward_kernel(%arg0: memref<688x8xf32, #tpu.memory_space<vmem>>, %arg1: memref<2x648xbf16, #tpu.memory_space<vmem>>, %arg2: memref<9x8x8xbf16, #tpu.memory_space<vmem>>, %arg3: memref<1x8xf32, #tpu.memory_space<vmem>>, %arg4: memref<8x64xbf16, #tpu.memory_space<vmem>>, %arg5: memref<1x64xf32, #tpu.memory_space<vmem>>, %arg6: memref<1x16xbf16, #tpu.memory_space<vmem>>, %arg7: memref<16x64xbf16, #tpu.memory_space<vmem>>, %arg8: memref<1x64xf32, #tpu.memory_space<vmem>>, %arg9: memref<128x64xbf16, #tpu.memory_space<vmem>>, %arg10: memref<128x64xbf16, #tpu.memory_space<vmem>>, %arg11: memref<1x64xf32, #tpu.memory_space<vmem>>, %arg12: memref<1x64xf32, #tpu.memory_space<vmem>>, %arg13: memref<128x15xbf16, #tpu.memory_space<vmem>>, %arg14: memref<1x15xf32, #tpu.memory_space<vmem>>, %arg15: memref<2x15xf32, #tpu.memory_space<vmem>>, %arg16: memref<648x8xf32, #tpu.memory_space<vmem>>) attributes {dimension_semantics = [], scalar_prefetch = 0 : i64, scratch_operands = 1 : i64, tpu.core_type = #tpu.core_type<tc>} {
    %cst = arith.constant 0.000000e+00 : f32
    %0 = vector.broadcast %cst : f32 to vector<648x8xf32>
    %c0 = arith.constant 0 : index
    %c0_0 = arith.constant 0 : index
    %1 = vector.load %arg16[%c0, %c0_0] : memref<648x8xf32, #tpu.memory_space<vmem>>, vector<648x8xf32>
    tpu.vector_store %arg16[%c0, %c0_0], %0 {strides = array<i32>} : memref<648x8xf32, #tpu.memory_space<vmem>>, vector<648x8xf32>,
    %c0_1 = arith.constant 0 : index
    %c0_2 = arith.constant 0 : index
    %2 = vector.load %arg0[%c0_1, %c0_2] : memref<688x8xf32, #tpu.memory_space<vmem>>, vector<648x8xf32>
    %3 = arith.truncf %2 : vector<648x8xf32> to vector<648x8xbf16>
    %c0_3 = arith.constant 0 : index
    %c0_4 = arith.constant 0 : index
    %4 = vector.load %arg16[%c0_3, %c0_4] : memref<648x8xf32, #tpu.memory_space<vmem>>, vector<648x8xf32>
    %c0_5 = arith.constant 0 : index
    %c0_6 = arith.constant 0 : index
    %c0_7 = arith.constant 0 : index
    %5 = vector.load %arg2[%c0_5, %c0_6, %c0_7] : memref<9x8x8xbf16, #tpu.memory_space<vmem>>, vector<1x8x8xbf16>
    %6 = vector.shape_cast %5 : vector<1x8x8xbf16> to vector<8x8xbf16>
    %cst_8 = arith.constant dense<0.000000e+00> : vector<648x8xf32>
    %7 = tpu.matmul %3, %6, %cst_8 {dimension_numbers = #tpu.dot_dimension_numbers<[1], [0], [0], [1], [0, 0, 1, 1], [], []>} : vector<648x8xbf16>, vector<8x8xbf16>, vector<648x8xf32> -> vector<648x8xf32>
    %8 = arith.addf %4, %7 : vector<648x8xf32>
    %c0_9 = arith.constant 0 : index
    %c0_10 = arith.constant 0 : index
    %9 = vector.load %arg16[%c0_9, %c0_10] : memref<648x8xf32, #tpu.memory_space<vmem>>, vector<648x8xf32>
    tpu.vector_store %arg16[%c0_9, %c0_10], %8 {strides = array<i32>} : memref<648x8xf32, #tpu.memory_space<vmem>>, vector<648x8xf32>,
    %c1 = arith.constant 1 : index
    %c0_11 = arith.constant 0 : index
    %10 = vector.load %arg0[%c1, %c0_11] : memref<688x8xf32, #tpu.memory_space<vmem>>, vector<648x8xf32>
    %11 = arith.truncf %10 : vector<648x8xf32> to vector<648x8xbf16>
    %c0_12 = arith.constant 0 : index
    %c0_13 = arith.constant 0 : index
    %12 = vector.load %arg16[%c0_12, %c0_13] : memref<648x8xf32, #tpu.memory_space<vmem>>, vector<648x8xf32>
    %c1_14 = arith.constant 1 : index
    %c0_15 = arith.constant 0 : index
    %c0_16 = arith.constant 0 : index
    %13 = vector.load %arg2[%c1_14, %c0_15, %c0_16] : memref<9x8x8xbf16, #tpu.memory_space<vmem>>, vector<1x8x8xbf16>
    %14 = vector.shape_cast %13 : vector<1x8x8xbf16> to vector<8x8xbf16>
    %cst_17 = arith.constant dense<0.000000e+00> : vector<648x8xf32>
    %15 = tpu.matmul %11, %14, %cst_17 {dimension_numbers = #tpu.dot_dimension_numbers<[1], [0], [0], [1], [0, 0, 1, 1], [], []>} : vector<648x8xbf16>, vector<8x8xbf16>, vector<648x8xf32> -> vector<648x8xf32>
    %16 = arith.addf %12, %15 : vector<648x8xf32>
    %c0_18 = arith.constant 0 : index
    %c0_19 = arith.constant 0 : index
    %17 = vector.load %arg16[%c0_18, %c0_19] : memref<648x8xf32, #tpu.memory_space<vmem>>, vector<648x8xf32>
    tpu.vector_store %arg16[%c0_18, %c0_19], %16 {strides = array<i32>} : memref<648x8xf32, #tpu.memory_space<vmem>>, vector<648x8xf32>,
    %c2 = arith.constant 2 : index
    %c0_20 = arith.constant 0 : index
    %18 = vector.load %arg0[%c2, %c0_20] : memref<688x8xf32, #tpu.memory_space<vmem>>, vector<648x8xf32>
    %19 = arith.truncf %18 : vector<648x8xf32> to vector<648x8xbf16>
    %c0_21 = arith.constant 0 : index
    %c0_22 = arith.constant 0 : index
    %20 = vector.load %arg16[%c0_21, %c0_22] : memref<648x8xf32, #tpu.memory_space<vmem>>, vector<648x8xf32>
    %c2_23 = arith.constant 2 : index
    %c0_24 = arith.constant 0 : index
    %c0_25 = arith.constant 0 : index
    %21 = vector.load %arg2[%c2_23, %c0_24, %c0_25] : memref<9x8x8xbf16, #tpu.memory_space<vmem>>, vector<1x8x8xbf16>
    %22 = vector.shape_cast %21 : vector<1x8x8xbf16> to vector<8x8xbf16>
    %cst_26 = arith.constant dense<0.000000e+00> : vector<648x8xf32>
    %23 = tpu.matmul %19, %22, %cst_26 {dimension_numbers = #tpu.dot_dimension_numbers<[1], [0], [0], [1], [0, 0, 1, 1], [], []>} : vector<648x8xbf16>, vector<8x8xbf16>, vector<648x8xf32> -> vector<648x8xf32>
    %24 = arith.addf %20, %23 : vector<648x8xf32>
    %c0_27 = arith.constant 0 : index
    %c0_28 = arith.constant 0 : index
    %25 = vector.load %arg16[%c0_27, %c0_28] : memref<648x8xf32, #tpu.memory_space<vmem>>, vector<648x8xf32>
    tpu.vector_store %arg16[%c0_27, %c0_28], %24 {strides = array<i32>} : memref<648x8xf32, #tpu.memory_space<vmem>>, vector<648x8xf32>,
    %c18 = arith.constant 18 : index
    %c0_29 = arith.constant 0 : index
    %26 = vector.load %arg0[%c18, %c0_29] : memref<688x8xf32, #tpu.memory_space<vmem>>, vector<648x8xf32>
    %27 = arith.truncf %26 : vector<648x8xf32> to vector<648x8xbf16>
    %c0_30 = arith.constant 0 : index
    %c0_31 = arith.constant 0 : index
    %28 = vector.load %arg16[%c0_30, %c0_31] : memref<648x8xf32, #tpu.memory_space<vmem>>, vector<648x8xf32>
    %c3 = arith.constant 3 : index
    %c0_32 = arith.constant 0 : index
    %c0_33 = arith.constant 0 : index
    %29 = vector.load %arg2[%c3, %c0_32, %c0_33] : memref<9x8x8xbf16, #tpu.memory_space<vmem>>, vector<1x8x8xbf16>
    %30 = vector.shape_cast %29 : vector<1x8x8xbf16> to vector<8x8xbf16>
    %cst_34 = arith.constant dense<0.000000e+00> : vector<648x8xf32>
    %31 = tpu.matmul %27, %30, %cst_34 {dimension_numbers = #tpu.dot_dimension_numbers<[1], [0], [0], [1], [0, 0, 1, 1], [], []>} : vector<648x8xbf16>, vector<8x8xbf16>, vector<648x8xf32> -> vector<648x8xf32>
    %32 = arith.addf %28, %31 : vector<648x8xf32>
    %c0_35 = arith.constant 0 : index
    %c0_36 = arith.constant 0 : index
    %33 = vector.load %arg16[%c0_35, %c0_36] : memref<648x8xf32, #tpu.memory_space<vmem>>, vector<648x8xf32>
    tpu.vector_store %arg16[%c0_35, %c0_36], %32 {strides = array<i32>} : memref<648x8xf32, #tpu.memory_space<vmem>>, vector<648x8xf32>,
    %c19 = arith.constant 19 : index
    %c0_37 = arith.constant 0 : index
    %34 = vector.load %arg0[%c19, %c0_37] : memref<688x8xf32, #tpu.memory_space<vmem>>, vector<648x8xf32>
    %35 = arith.truncf %34 : vector<648x8xf32> to vector<648x8xbf16>
    %c0_38 = arith.constant 0 : index
    %c0_39 = arith.constant 0 : index
    %36 = vector.load %arg16[%c0_38, %c0_39] : memref<648x8xf32, #tpu.memory_space<vmem>>, vector<648x8xf32>
    %c4 = arith.constant 4 : index
    %c0_40 = arith.constant 0 : index
    %c0_41 = arith.constant 0 : index
    %37 = vector.load %arg2[%c4, %c0_40, %c0_41] : memref<9x8x8xbf16, #tpu.memory_space<vmem>>, vector<1x8x8xbf16>
    %38 = vector.shape_cast %37 : vector<1x8x8xbf16> to vector<8x8xbf16>
    %cst_42 = arith.constant dense<0.000000e+00> : vector<648x8xf32>
    %39 = tpu.matmul %35, %38, %cst_42 {dimension_numbers = #tpu.dot_dimension_numbers<[1], [0], [0], [1], [0, 0, 1, 1], [], []>} : vector<648x8xbf16>, vector<8x8xbf16>, vector<648x8xf32> -> vector<648x8xf32>
    %40 = arith.addf %36, %39 : vector<648x8xf32>
    %c0_43 = arith.constant 0 : index
    %c0_44 = arith.constant 0 : index
    %41 = vector.load %arg16[%c0_43, %c0_44] : memref<648x8xf32, #tpu.memory_space<vmem>>, vector<648x8xf32>
    tpu.vector_store %arg16[%c0_43, %c0_44], %40 {strides = array<i32>} : memref<648x8xf32, #tpu.memory_space<vmem>>, vector<648x8xf32>,
    %c20 = arith.constant 20 : index
    %c0_45 = arith.constant 0 : index
    %42 = vector.load %arg0[%c20, %c0_45] : memref<688x8xf32, #tpu.memory_space<vmem>>, vector<648x8xf32>
    %43 = arith.truncf %42 : vector<648x8xf32> to vector<648x8xbf16>
    %c0_46 = arith.constant 0 : index
    %c0_47 = arith.constant 0 : index
    %44 = vector.load %arg16[%c0_46, %c0_47] : memref<648x8xf32, #tpu.memory_space<vmem>>, vector<648x8xf32>
    %c5 = arith.constant 5 : index
    %c0_48 = arith.constant 0 : index
    %c0_49 = arith.constant 0 : index
    %45 = vector.load %arg2[%c5, %c0_48, %c0_49] : memref<9x8x8xbf16, #tpu.memory_space<vmem>>, vector<1x8x8xbf16>
    %46 = vector.shape_cast %45 : vector<1x8x8xbf16> to vector<8x8xbf16>
    %cst_50 = arith.constant dense<0.000000e+00> : vector<648x8xf32>
    %47 = tpu.matmul %43, %46, %cst_50 {dimension_numbers = #tpu.dot_dimension_numbers<[1], [0], [0], [1], [0, 0, 1, 1], [], []>} : vector<648x8xbf16>, vector<8x8xbf16>, vector<648x8xf32> -> vector<648x8xf32>
    %48 = arith.addf %44, %47 : vector<648x8xf32>
    %c0_51 = arith.constant 0 : index
    %c0_52 = arith.constant 0 : index
    %49 = vector.load %arg16[%c0_51, %c0_52] : memref<648x8xf32, #tpu.memory_space<vmem>>, vector<648x8xf32>
    tpu.vector_store %arg16[%c0_51, %c0_52], %48 {strides = array<i32>} : memref<648x8xf32, #tpu.memory_space<vmem>>, vector<648x8xf32>,
    %c36 = arith.constant 36 : index
    %c0_53 = arith.constant 0 : index
    %50 = vector.load %arg0[%c36, %c0_53] : memref<688x8xf32, #tpu.memory_space<vmem>>, vector<648x8xf32>
    %51 = arith.truncf %50 : vector<648x8xf32> to vector<648x8xbf16>
    %c0_54 = arith.constant 0 : index
    %c0_55 = arith.constant 0 : index
    %52 = vector.load %arg16[%c0_54, %c0_55] : memref<648x8xf32, #tpu.memory_space<vmem>>, vector<648x8xf32>
    %c6 = arith.constant 6 : index
    %c0_56 = arith.constant 0 : index
    %c0_57 = arith.constant 0 : index
    %53 = vector.load %arg2[%c6, %c0_56, %c0_57] : memref<9x8x8xbf16, #tpu.memory_space<vmem>>, vector<1x8x8xbf16>
    %54 = vector.shape_cast %53 : vector<1x8x8xbf16> to vector<8x8xbf16>
    %cst_58 = arith.constant dense<0.000000e+00> : vector<648x8xf32>
    %55 = tpu.matmul %51, %54, %cst_58 {dimension_numbers = #tpu.dot_dimension_numbers<[1], [0], [0], [1], [0, 0, 1, 1], [], []>} : vector<648x8xbf16>, vector<8x8xbf16>, vector<648x8xf32> -> vector<648x8xf32>
    %56 = arith.addf %52, %55 : vector<648x8xf32>
    %c0_59 = arith.constant 0 : index
    %c0_60 = arith.constant 0 : index
    %57 = vector.load %arg16[%c0_59, %c0_60] : memref<648x8xf32, #tpu.memory_space<vmem>>, vector<648x8xf32>
    tpu.vector_store %arg16[%c0_59, %c0_60], %56 {strides = array<i32>} : memref<648x8xf32, #tpu.memory_space<vmem>>, vector<648x8xf32>,
    %c37 = arith.constant 37 : index
    %c0_61 = arith.constant 0 : index
    %58 = vector.load %arg0[%c37, %c0_61] : memref<688x8xf32, #tpu.memory_space<vmem>>, vector<648x8xf32>
    %59 = arith.truncf %58 : vector<648x8xf32> to vector<648x8xbf16>
    %c0_62 = arith.constant 0 : index
    %c0_63 = arith.constant 0 : index
    %60 = vector.load %arg16[%c0_62, %c0_63] : memref<648x8xf32, #tpu.memory_space<vmem>>, vector<648x8xf32>
    %c7 = arith.constant 7 : index
    %c0_64 = arith.constant 0 : index
    %c0_65 = arith.constant 0 : index
    %61 = vector.load %arg2[%c7, %c0_64, %c0_65] : memref<9x8x8xbf16, #tpu.memory_space<vmem>>, vector<1x8x8xbf16>
    %62 = vector.shape_cast %61 : vector<1x8x8xbf16> to vector<8x8xbf16>
    %cst_66 = arith.constant dense<0.000000e+00> : vector<648x8xf32>
    %63 = tpu.matmul %59, %62, %cst_66 {dimension_numbers = #tpu.dot_dimension_numbers<[1], [0], [0], [1], [0, 0, 1, 1], [], []>} : vector<648x8xbf16>, vector<8x8xbf16>, vector<648x8xf32> -> vector<648x8xf32>
    %64 = arith.addf %60, %63 : vector<648x8xf32>
    %c0_67 = arith.constant 0 : index
    %c0_68 = arith.constant 0 : index
    %65 = vector.load %arg16[%c0_67, %c0_68] : memref<648x8xf32, #tpu.memory_space<vmem>>, vector<648x8xf32>
    tpu.vector_store %arg16[%c0_67, %c0_68], %64 {strides = array<i32>} : memref<648x8xf32, #tpu.memory_space<vmem>>, vector<648x8xf32>,
    %c38 = arith.constant 38 : index
    %c0_69 = arith.constant 0 : index
    %66 = vector.load %arg0[%c38, %c0_69] : memref<688x8xf32, #tpu.memory_space<vmem>>, vector<648x8xf32>
    %67 = arith.truncf %66 : vector<648x8xf32> to vector<648x8xbf16>
    %c0_70 = arith.constant 0 : index
    %c0_71 = arith.constant 0 : index
    %68 = vector.load %arg16[%c0_70, %c0_71] : memref<648x8xf32, #tpu.memory_space<vmem>>, vector<648x8xf32>
    %c8 = arith.constant 8 : index
    %c0_72 = arith.constant 0 : index
    %c0_73 = arith.constant 0 : index
    %69 = vector.load %arg2[%c8, %c0_72, %c0_73] : memref<9x8x8xbf16, #tpu.memory_space<vmem>>, vector<1x8x8xbf16>
    %70 = vector.shape_cast %69 : vector<1x8x8xbf16> to vector<8x8xbf16>
    %cst_74 = arith.constant dense<0.000000e+00> : vector<648x8xf32>
    %71 = tpu.matmul %67, %70, %cst_74 {dimension_numbers = #tpu.dot_dimension_numbers<[1], [0], [0], [1], [0, 0, 1, 1], [], []>} : vector<648x8xbf16>, vector<8x8xbf16>, vector<648x8xf32> -> vector<648x8xf32>
    %72 = arith.addf %68, %71 : vector<648x8xf32>
    %c0_75 = arith.constant 0 : index
    %c0_76 = arith.constant 0 : index
    %73 = vector.load %arg16[%c0_75, %c0_76] : memref<648x8xf32, #tpu.memory_space<vmem>>, vector<648x8xf32>
    tpu.vector_store %arg16[%c0_75, %c0_76], %72 {strides = array<i32>} : memref<648x8xf32, #tpu.memory_space<vmem>>, vector<648x8xf32>,
    %c0_77 = arith.constant 0 : index
    %c0_78 = arith.constant 0 : index
    %74 = vector.load %arg16[%c0_77, %c0_78] : memref<648x8xf32, #tpu.memory_space<vmem>>, vector<648x8xf32>
    %c0_79 = arith.constant 0 : index
    %c0_80 = arith.constant 0 : index
    %75 = vector.load %arg3[%c0_79, %c0_80] : memref<1x8xf32, #tpu.memory_space<vmem>>, vector<1x8xf32>
    %76 = vector.broadcast %75 : vector<1x8xf32> to vector<648x8xf32>
    %77 = arith.addf %74, %76 : vector<648x8xf32>
    %cst_81 = arith.constant 0.000000e+00 : f32
    %78 = vector.broadcast %cst_81 : f32 to vector<648x8xf32>
    %79 = arith.maximumf %77, %78 : vector<648x8xf32>
    %c0_82 = arith.constant 0 : index
    %c0_83 = arith.constant 0 : index
    %80 = vector.load %arg1[%c0_82, %c0_83] : memref<2x648xbf16, #tpu.memory_space<vmem>>, vector<2x648xbf16>
    %81 = arith.truncf %79 : vector<648x8xf32> to vector<648x8xbf16>
    %cst_84 = arith.constant dense<0.000000e+00> : vector<2x8xf32>
    %82 = tpu.matmul %80, %81, %cst_84 {dimension_numbers = #tpu.dot_dimension_numbers<[1], [0], [0], [1], [0, 0, 1, 1], [], []>} : vector<2x648xbf16>, vector<648x8xbf16>, vector<2x8xf32> -> vector<2x8xf32>
    %83 = arith.truncf %82 : vector<2x8xf32> to vector<2x8xbf16>
    %c0_85 = arith.constant 0 : index
    %c0_86 = arith.constant 0 : index
    %84 = vector.load %arg4[%c0_85, %c0_86] : memref<8x64xbf16, #tpu.memory_space<vmem>>, vector<8x64xbf16>
    %cst_87 = arith.constant dense<0.000000e+00> : vector<2x64xf32>
    %85 = tpu.matmul %83, %84, %cst_87 {dimension_numbers = #tpu.dot_dimension_numbers<[1], [0], [0], [1], [0, 0, 1, 1], [], []>} : vector<2x8xbf16>, vector<8x64xbf16>, vector<2x64xf32> -> vector<2x64xf32>
    %c0_88 = arith.constant 0 : index
    %c0_89 = arith.constant 0 : index
    %86 = vector.load %arg5[%c0_88, %c0_89] : memref<1x64xf32, #tpu.memory_space<vmem>>, vector<1x64xf32>
    %87 = vector.broadcast %86 : vector<1x64xf32> to vector<2x64xf32>
    %88 = arith.addf %85, %87 : vector<2x64xf32>
    %c0_90 = arith.constant 0 : index
    %c0_91 = arith.constant 0 : index
    %89 = vector.load %arg6[%c0_90, %c0_91] : memref<1x16xbf16, #tpu.memory_space<vmem>>, vector<1x16xbf16>
    %c0_92 = arith.constant 0 : index
    %c0_93 = arith.constant 0 : index
    %90 = vector.load %arg7[%c0_92, %c0_93] : memref<16x64xbf16, #tpu.memory_space<vmem>>, vector<16x64xbf16>
    %cst_94 = arith.constant dense<0.000000e+00> : vector<1x64xf32>
    %91 = tpu.matmul %89, %90, %cst_94 {dimension_numbers = #tpu.dot_dimension_numbers<[1], [0], [0], [1], [0, 0, 1, 1], [], []>} : vector<1x16xbf16>, vector<16x64xbf16>, vector<1x64xf32> -> vector<1x64xf32>
    %c0_95 = arith.constant 0 : index
    %c0_96 = arith.constant 0 : index
    %92 = vector.load %arg8[%c0_95, %c0_96] : memref<1x64xf32, #tpu.memory_space<vmem>>, vector<1x64xf32>
    %93 = arith.addf %91, %92 : vector<1x64xf32>
    %94 = arith.truncf %88 : vector<2x64xf32> to vector<2x64xbf16>
    %95 = arith.truncf %93 : vector<1x64xf32> to vector<1x64xbf16>
    %c0_97 = arith.constant 0 : index
    %c0_98 = arith.constant 0 : index
    %96 = vector.load %arg9[%c0_97, %c0_98] : memref<128x64xbf16, #tpu.memory_space<vmem>>, vector<64x64xbf16>
    %cst_99 = arith.constant dense<0.000000e+00> : vector<2x64xf32>
    %97 = tpu.matmul %94, %96, %cst_99 {dimension_numbers = #tpu.dot_dimension_numbers<[1], [0], [0], [1], [0, 0, 1, 1], [], []>} : vector<2x64xbf16>, vector<64x64xbf16>, vector<2x64xf32> -> vector<2x64xf32>
    %c64 = arith.constant 64 : index
    %c0_100 = arith.constant 0 : index
    %98 = vector.load %arg9[%c64, %c0_100] : memref<128x64xbf16, #tpu.memory_space<vmem>>, vector<64x64xbf16>
    %cst_101 = arith.constant dense<0.000000e+00> : vector<1x64xf32>
    %99 = tpu.matmul %95, %98, %cst_101 {dimension_numbers = #tpu.dot_dimension_numbers<[1], [0], [0], [1], [0, 0, 1, 1], [], []>} : vector<1x64xbf16>, vector<64x64xbf16>, vector<1x64xf32> -> vector<1x64xf32>
    %100 = vector.broadcast %99 : vector<1x64xf32> to vector<2x64xf32>
    %101 = arith.addf %97, %100 : vector<2x64xf32>
    %c0_102 = arith.constant 0 : index
    %c0_103 = arith.constant 0 : index
    %102 = vector.load %arg11[%c0_102, %c0_103] : memref<1x64xf32, #tpu.memory_space<vmem>>, vector<1x64xf32>
    %103 = vector.broadcast %102 : vector<1x64xf32> to vector<2x64xf32>
    %104 = arith.addf %101, %103 : vector<2x64xf32>
    %c0_104 = arith.constant 0 : index
    %c0_105 = arith.constant 0 : index
    %105 = vector.load %arg10[%c0_104, %c0_105] : memref<128x64xbf16, #tpu.memory_space<vmem>>, vector<64x64xbf16>
    %cst_106 = arith.constant dense<0.000000e+00> : vector<2x64xf32>
    %106 = tpu.matmul %94, %105, %cst_106 {dimension_numbers = #tpu.dot_dimension_numbers<[1], [0], [0], [1], [0, 0, 1, 1], [], []>} : vector<2x64xbf16>, vector<64x64xbf16>, vector<2x64xf32> -> vector<2x64xf32>
    %c64_107 = arith.constant 64 : index
    %c0_108 = arith.constant 0 : index
    %107 = vector.load %arg10[%c64_107, %c0_108] : memref<128x64xbf16, #tpu.memory_space<vmem>>, vector<64x64xbf16>
    %cst_109 = arith.constant dense<0.000000e+00> : vector<1x64xf32>
    %108 = tpu.matmul %95, %107, %cst_109 {dimension_numbers = #tpu.dot_dimension_numbers<[1], [0], [0], [1], [0, 0, 1, 1], [], []>} : vector<1x64xbf16>, vector<64x64xbf16>, vector<1x64xf32> -> vector<1x64xf32>
    %109 = vector.broadcast %108 : vector<1x64xf32> to vector<2x64xf32>
    %110 = arith.addf %106, %109 : vector<2x64xf32>
    %c0_110 = arith.constant 0 : index
    %c0_111 = arith.constant 0 : index
    %111 = vector.load %arg12[%c0_110, %c0_111] : memref<1x64xf32, #tpu.memory_space<vmem>>, vector<1x64xf32>
    %112 = vector.broadcast %111 : vector<1x64xf32> to vector<2x64xf32>
    %113 = arith.addf %110, %112 : vector<2x64xf32>
    %114 = arith.negf %104 : vector<2x64xf32>
    %115 = math.exp %114 : vector<2x64xf32>
    %cst_112 = arith.constant 1.000000e+00 : f32
    %116 = vector.broadcast %cst_112 : f32 to vector<2x64xf32>
    %117 = arith.addf %116, %115 : vector<2x64xf32>
    %118 = arith.divf %116, %117 : vector<2x64xf32>
    %119 = arith.mulf %88, %118 : vector<2x64xf32>
    %120 = arith.negf %113 : vector<2x64xf32>
    %121 = math.exp %120 : vector<2x64xf32>
    %cst_113 = arith.constant 1.000000e+00 : f32
    %122 = vector.broadcast %cst_113 : f32 to vector<2x64xf32>
    %123 = arith.addf %122, %121 : vector<2x64xf32>
    %124 = arith.divf %122, %123 : vector<2x64xf32>
    %125 = vector.broadcast %93 : vector<1x64xf32> to vector<2x64xf32>
    %126 = arith.mulf %125, %124 : vector<2x64xf32>
    %127 = arith.truncf %119 : vector<2x64xf32> to vector<2x64xbf16>
    %c0_114 = arith.constant 0 : index
    %c0_115 = arith.constant 0 : index
    %128 = vector.load %arg13[%c0_114, %c0_115] : memref<128x15xbf16, #tpu.memory_space<vmem>>, vector<64x15xbf16>
    %cst_116 = arith.constant dense<0.000000e+00> : vector<2x15xf32>
    %129 = tpu.matmul %127, %128, %cst_116 {dimension_numbers = #tpu.dot_dimension_numbers<[1], [0], [0], [1], [0, 0, 1, 1], [], []>} : vector<2x64xbf16>, vector<64x15xbf16>, vector<2x15xf32> -> vector<2x15xf32>
    %130 = arith.truncf %126 : vector<2x64xf32> to vector<2x64xbf16>
    %c64_117 = arith.constant 64 : index
    %c0_118 = arith.constant 0 : index
    %131 = vector.load %arg13[%c64_117, %c0_118] : memref<128x15xbf16, #tpu.memory_space<vmem>>, vector<64x15xbf16>
    %cst_119 = arith.constant dense<0.000000e+00> : vector<2x15xf32>
    %132 = tpu.matmul %130, %131, %cst_119 {dimension_numbers = #tpu.dot_dimension_numbers<[1], [0], [0], [1], [0, 0, 1, 1], [], []>} : vector<2x64xbf16>, vector<64x15xbf16>, vector<2x15xf32> -> vector<2x15xf32>
    %133 = arith.addf %129, %132 : vector<2x15xf32>
    %c0_120 = arith.constant 0 : index
    %c0_121 = arith.constant 0 : index
    %134 = vector.load %arg14[%c0_120, %c0_121] : memref<1x15xf32, #tpu.memory_space<vmem>>, vector<1x15xf32>
    %135 = vector.broadcast %134 : vector<1x15xf32> to vector<2x15xf32>
    %136 = arith.addf %133, %135 : vector<2x15xf32>
    %c0_122 = arith.constant 0 : index
    %c0_123 = arith.constant 0 : index
    %137 = vector.load %arg15[%c0_122, %c0_123] : memref<2x15xf32, #tpu.memory_space<vmem>>, vector<2x15xf32>
    tpu.vector_store %arg15[%c0_122, %c0_123], %136 {strides = array<i32>} : memref<2x15xf32, #tpu.memory_space<vmem>>, vector<2x15xf32>,
    return
  }
}

</mosaic_0001>

<llo_original>
// kernel: test_forward.1
$region0: #{test_forward.1}
  #allocation0 [shape = 'u32[]', space=smem, size = 0x4, offset = 0x4, fixed_abs, tag = 'smem constant byte address 0x4 - core index']
  #allocation1 [shape = 'u32[144,128]{1,0:T(1,128)}', space=vmem, size = 0x12000, scoped, tag = 'internal scratch']
  #allocation2 [shape = 'f32[648,8]{1,0:T(8,128)}', space=vmem, size = 0x51000, scoped, tag = 'scratch operand']
  %s0 = inlined_call_operand.vmem [shape: f32[688,8], index: 0, kind: input, shape index: {}]
  %s1 = inlined_call_operand.vmem [shape: bf16[2,648], index: 1, kind: input, shape index: {}]
  %s2 = inlined_call_operand.vmem [shape: bf16[9,8,8], index: 2, kind: input, shape index: {}]
  %s3 = inlined_call_operand.vmem [shape: f32[1,8], index: 3, kind: input, shape index: {}]
  %s4 = inlined_call_operand.vmem [shape: bf16[8,64], index: 4, kind: input, shape index: {}]
  %s5 = inlined_call_operand.vmem [shape: f32[1,64], index: 5, kind: input, shape index: {}]
  %s6 = inlined_call_operand.vmem [shape: bf16[1,16], index: 6, kind: input, shape index: {}]
  %s7 = inlined_call_operand.vmem [shape: bf16[16,64], index: 7, kind: input, shape index: {}]
  %s8 = inlined_call_operand.vmem [shape: f32[1,64], index: 8, kind: input, shape index: {}]
  %s9 = inlined_call_operand.vmem [shape: bf16[128,64], index: 9, kind: input, shape index: {}]
  %s10 = inlined_call_operand.vmem [shape: bf16[128,64], index: 10, kind: input, shape index: {}]
  %s11 = inlined_call_operand.vmem [shape: f32[1,64], index: 11, kind: input, shape index: {}]
  %s12 = inlined_call_operand.vmem [shape: f32[1,64], index: 12, kind: input, shape index: {}]
  %s13 = inlined_call_operand.vmem [shape: bf16[128,15], index: 13, kind: input, shape index: {}]
  %s14 = inlined_call_operand.vmem [shape: f32[1,15], index: 14, kind: input, shape index: {}]
  %s15 = inlined_call_operand.hbm [shape: f32[2,15], index: 15, kind: output, shape index: {}]
  %s16 = sld [smem:[#allocation0]]
  $region70: #{test_forward.1} parent=0
    _
  %s18 = ssub.s32 1, %s16
  %s19 = scalar_select 0, %s18, %s16
  $region1: #{test_forward.1} parent=0
    #allocation3 [shape = 'u8[1024]{0}', space=vmem, size = 0x400, scoped, tag = 'output window, operand 0, single buffered']
    #allocation4 [shape = 's32[1]{0}', space=sflag, size = 0x4, scoped, tag = 'scoped memory for test_forward.1']
    %20 = vsyncpa [#allocation4], 0
    // Predicated region
    $region2: #{test_forward.1} parent=1 // pred_check
      _
    $region3: #{test_forward.1} parent=1 // pred_check_branch
      %22 = sbr.rel (0) target = $region5
    $region4: #{test_forward.1} parent=1 // pred_region
      _
    $region5: #{test_forward.1} parent=1 // pred_fallthru
      _
    // Predicated region
    $region6: #{test_forward.1} parent=1 // pred_check
      _
    $region7: #{test_forward.1} parent=1 // pred_check_branch
      %24 = sbr.rel (0) target = $region9
    $region8: #{test_forward.1} parent=1 // pred_region
      _
    $region9: #{test_forward.1} parent=1 // pred_fallthru
      _
    // Predicated region
    $region10: #{test_forward.1} parent=1 // pred_check
      _
    $region11: #{test_forward.1} parent=1 // pred_check_branch
      %26 = sbr.rel (0) target = $region13
    $region12: #{test_forward.1} parent=1 // pred_region
      _
    $region13: #{test_forward.1} parent=1 // pred_fallthru
      _
    // Predicated region
    $region14: #{test_forward.1} parent=1 // pred_check
      _
    $region15: #{test_forward.1} parent=1 // pred_check_branch
      %28 = sbr.rel (0) target = $region17
    $region16: #{test_forward.1} parent=1 // pred_region
      _
    $region17: #{test_forward.1} parent=1 // pred_fallthru
      _
    // Predicated region
    $region18: #{test_forward.1} parent=1 // pred_check
      _
    $region19: #{test_forward.1} parent=1 // pred_check_branch
      %30 = sbr.rel (0) target = $region21
    $region20: #{test_forward.1} parent=1 // pred_region
      _
    $region21: #{test_forward.1} parent=1 // pred_fallthru
      _
    // Predicated region
    $region22: #{test_forward.1} parent=1 // pred_check
      _
    $region23: #{test_forward.1} parent=1 // pred_check_branch
      %32 = sbr.rel (0) target = $region25
    $region24: #{test_forward.1} parent=1 // pred_region
      _
    $region25: #{test_forward.1} parent=1 // pred_fallthru
      _
    // Predicated region
    $region26: #{test_forward.1} parent=1 // pred_check
      _
    $region27: #{test_forward.1} parent=1 // pred_check_branch
      %34 = sbr.rel (0) target = $region29
    $region28: #{test_forward.1} parent=1 // pred_region
      _
    $region29: #{test_forward.1} parent=1 // pred_fallthru
      _
    // Predicated region
    $region30: #{test_forward.1} parent=1 // pred_check
      _
    $region31: #{test_forward.1} parent=1 // pred_check_branch
      %36 = sbr.rel (0) target = $region33
    $region32: #{test_forward.1} parent=1 // pred_region
      _
    $region33: #{test_forward.1} parent=1 // pred_fallthru
      _
    // Predicated region
    $region34: #{test_forward.1} parent=1 // pred_check
      _
    $region35: #{test_forward.1} parent=1 // pred_check_branch
      %38 = sbr.rel (0) target = $region37
    $region36: #{test_forward.1} parent=1 // pred_region
      _
    $region37: #{test_forward.1} parent=1 // pred_fallthru
      _
    // Predicated region
    $region38: #{test_forward.1} parent=1 // pred_check
      _
    $region39: #{test_forward.1} parent=1 // pred_check_branch
      %40 = sbr.rel (0) target = $region41
    $region40: #{test_forward.1} parent=1 // pred_region
      _
    $region41: #{test_forward.1} parent=1 // pred_fallthru
      _
    // Predicated region
    $region42: #{test_forward.1} parent=1 // pred_check
      _
    $region43: #{test_forward.1} parent=1 // pred_check_branch
      %42 = sbr.rel (0) target = $region45
    $region44: #{test_forward.1} parent=1 // pred_region
      _
    $region45: #{test_forward.1} parent=1 // pred_fallthru
      _
    // Predicated region
    $region46: #{test_forward.1} parent=1 // pred_check
      _
    $region47: #{test_forward.1} parent=1 // pred_check_branch
      %44 = sbr.rel (0) target = $region49
    $region48: #{test_forward.1} parent=1 // pred_region
      _
    $region49: #{test_forward.1} parent=1 // pred_fallthru
      _
    // Predicated region
    $region50: #{test_forward.1} parent=1 // pred_check
      _
    $region51: #{test_forward.1} parent=1 // pred_check_branch
      %46 = sbr.rel (0) target = $region53
    $region52: #{test_forward.1} parent=1 // pred_region
      _
    $region53: #{test_forward.1} parent=1 // pred_fallthru
      _
    // Predicated region
    $region54: #{test_forward.1} parent=1 // pred_check
      _
    $region55: #{test_forward.1} parent=1 // pred_check_branch
      %48 = sbr.rel (0) target = $region57
    $region56: #{test_forward.1} parent=1 // pred_region
      _
    $region57: #{test_forward.1} parent=1 // pred_fallthru
      _
    // Predicated region
    $region58: #{test_forward.1} parent=1 // pred_check
      _
    $region59: #{test_forward.1} parent=1 // pred_check_branch
      %50 = sbr.rel (0) target = $region61
    $region60: #{test_forward.1} parent=1 // pred_region
      _
    $region61: #{test_forward.1} parent=1 // pred_fallthru
      _
    %vm52 = vcmask 64512
    %53 = vst.msk [vmem:[#allocation2] sm:$0xff] %vm52, 0.0
    %54 = vst.msk [vmem:[#allocation2 + $0x8] sm:$0xff] %vm52, 0.0
    %55 = vst.msk [vmem:[#allocation2 + $0x10] sm:$0xff] %vm52, 0.0
    %56 = vst.msk [vmem:[#allocation2 + $0x18] sm:$0xff] %vm52, 0.0
    %57 = vst.msk [vmem:[#allocation2 + $0x20] sm:$0xff] %vm52, 0.0
    %58 = vst.msk [vmem:[#allocation2 + $0x28] sm:$0xff] %vm52, 0.0
    %59 = vst.msk [vmem:[#allocation2 + $0x30] sm:$0xff] %vm52, 0.0
    %60 = vst.msk [vmem:[#allocation2 + $0x38] sm:$0xff] %vm52, 0.0
    %61 = vst.msk [vmem:[#allocation2 + $0x40] sm:$0xff] %vm52, 0.0
    %62 = vst.msk [vmem:[#allocation2 + $0x48] sm:$0xff] %vm52, 0.0
    %63 = vst.msk [vmem:[#allocation2 + $0x50] sm:$0xff] %vm52, 0.0
    %64 = vst.msk [vmem:[#allocation2 + $0x58] sm:$0xff] %vm52, 0.0
    %65 = vst.msk [vmem:[#allocation2 + $0x60] sm:$0xff] %vm52, 0.0
    %66 = vst.msk [vmem:[#allocation2 + $0x68] sm:$0xff] %vm52, 0.0
    %67 = vst.msk [vmem:[#allocation2 + $0x70] sm:$0xff] %vm52, 0.0
    %68 = vst.msk [vmem:[#allocation2 + $0x78] sm:$0xff] %vm52, 0.0
    %69 = vst.msk [vmem:[#allocation2 + $0x80] sm:$0xff] %vm52, 0.0
    %70 = vst.msk [vmem:[#allocation2 + $0x88] sm:$0xff] %vm52, 0.0
    %71 = vst.msk [vmem:[#allocation2 + $0x90] sm:$0xff] %vm52, 0.0
    %72 = vst.msk [vmem:[#allocation2 + $0x98] sm:$0xff] %vm52, 0.0
    %73 = vst.msk [vmem:[#allocation2 + $0xa0] sm:$0xff] %vm52, 0.0
    %74 = vst.msk [vmem:[#allocation2 + $0xa8] sm:$0xff] %vm52, 0.0
    %75 = vst.msk [vmem:[#allocation2 + $0xb0] sm:$0xff] %vm52, 0.0
    %76 = vst.msk [vmem:[#allocation2 + $0xb8] sm:$0xff] %vm52, 0.0
    %77 = vst.msk [vmem:[#allocation2 + $0xc0] sm:$0xff] %vm52, 0.0
    %78 = vst.msk [vmem:[#allocation2 + $0xc8] sm:$0xff] %vm52, 0.0
    %79 = vst.msk [vmem:[#allocation2 + $0xd0] sm:$0xff] %vm52, 0.0
    %80 = vst.msk [vmem:[#allocation2 + $0xd8] sm:$0xff] %vm52, 0.0
    %81 = vst.msk [vmem:[#allocation2 + $0xe0] sm:$0xff] %vm52, 0.0
    %82 = vst.msk [vmem:[#allocation2 + $0xe8] sm:$0xff] %vm52, 0.0
    %83 = vst.msk [vmem:[#allocation2 + $0xf0] sm:$0xff] %vm52, 0.0
    %84 = vst.msk [vmem:[#allocation2 + $0xf8] sm:$0xff] %vm52, 0.0
    %85 = vst.msk [vmem:[#allocation2 + $0x100] sm:$0xff] %vm52, 0.0
    %86 = vst.msk [vmem:[#allocation2 + $0x108] sm:$0xff] %vm52, 0.0
    %87 = vst.msk [vmem:[#allocation2 + $0x110] sm:$0xff] %vm52, 0.0
    %88 = vst.msk [vmem:[#allocation2 + $0x118] sm:$0xff] %vm52, 0.0
    %89 = vst.msk [vmem:[#allocation2 + $0x120] sm:$0xff] %vm52, 0.0
    %90 = vst.msk [vmem:[#allocation2 + $0x128] sm:$0xff] %vm52, 0.0
    %91 = vst.msk [vmem:[#allocation2 + $0x130] sm:$0xff] %vm52, 0.0
    %92 = vst.msk [vmem:[#allocation2 + $0x138] sm:$0xff] %vm52, 0.0
    %93 = vst.msk [vmem:[#allocation2 + $0x140] sm:$0xff] %vm52, 0.0
    %94 = vst.msk [vmem:[#allocation2 + $0x148] sm:$0xff] %vm52, 0.0
    %95 = vst.msk [vmem:[#allocation2 + $0x150] sm:$0xff] %vm52, 0.0
    %96 = vst.msk [vmem:[#allocation2 + $0x158] sm:$0xff] %vm52, 0.0
    %97 = vst.msk [vmem:[#allocation2 + $0x160] sm:$0xff] %vm52, 0.0
    %98 = vst.msk [vmem:[#allocation2 + $0x168] sm:$0xff] %vm52, 0.0
    %99 = vst.msk [vmem:[#allocation2 + $0x170] sm:$0xff] %vm52, 0.0
    %100 = vst.msk [vmem:[#allocation2 + $0x178] sm:$0xff] %vm52, 0.0
    %101 = vst.msk [vmem:[#allocation2 + $0x180] sm:$0xff] %vm52, 0.0
    %102 = vst.msk [vmem:[#allocation2 + $0x188] sm:$0xff] %vm52, 0.0
    %103 = vst.msk [vmem:[#allocation2 + $0x190] sm:$0xff] %vm52, 0.0
    %104 = vst.msk [vmem:[#allocation2 + $0x198] sm:$0xff] %vm52, 0.0
    %105 = vst.msk [vmem:[#allocation2 + $0x1a0] sm:$0xff] %vm52, 0.0
    %106 = vst.msk [vmem:[#allocation2 + $0x1a8] sm:$0xff] %vm52, 0.0
    %107 = vst.msk [vmem:[#allocation2 + $0x1b0] sm:$0xff] %vm52, 0.0
    %108 = vst.msk [vmem:[#allocation2 + $0x1b8] sm:$0xff] %vm52, 0.0
    %109 = vst.msk [vmem:[#allocation2 + $0x1c0] sm:$0xff] %vm52, 0.0
    %110 = vst.msk [vmem:[#allocation2 + $0x1c8] sm:$0xff] %vm52, 0.0
    %111 = vst.msk [vmem:[#allocation2 + $0x1d0] sm:$0xff] %vm52, 0.0
    %112 = vst.msk [vmem:[#allocation2 + $0x1d8] sm:$0xff] %vm52, 0.0
    %113 = vst.msk [vmem:[#allocation2 + $0x1e0] sm:$0xff] %vm52, 0.0
    %114 = vst.msk [vmem:[#allocation2 + $0x1e8] sm:$0xff] %vm52, 0.0
    %115 = vst.msk [vmem:[#allocation2 + $0x1f0] sm:$0xff] %vm52, 0.0
    %116 = vst.msk [vmem:[#allocation2 + $0x1f8] sm:$0xff] %vm52, 0.0
    %117 = vst.msk [vmem:[#allocation2 + $0x200] sm:$0xff] %vm52, 0.0
    %118 = vst.msk [vmem:[#allocation2 + $0x208] sm:$0xff] %vm52, 0.0
    %119 = vst.msk [vmem:[#allocation2 + $0x210] sm:$0xff] %vm52, 0.0
    %120 = vst.msk [vmem:[#allocation2 + $0x218] sm:$0xff] %vm52, 0.0
    %121 = vst.msk [vmem:[#allocation2 + $0x220] sm:$0xff] %vm52, 0.0
    %122 = vst.msk [vmem:[#allocation2 + $0x228] sm:$0xff] %vm52, 0.0
    %123 = vst.msk [vmem:[#allocation2 + $0x230] sm:$0xff] %vm52, 0.0
    %124 = vst.msk [vmem:[#allocation2 + $0x238] sm:$0xff] %vm52, 0.0
    %125 = vst.msk [vmem:[#allocation2 + $0x240] sm:$0xff] %vm52, 0.0
    %126 = vst.msk [vmem:[#allocation2 + $0x248] sm:$0xff] %vm52, 0.0
    %127 = vst.msk [vmem:[#allocation2 + $0x250] sm:$0xff] %vm52, 0.0
    %128 = vst.msk [vmem:[#allocation2 + $0x258] sm:$0xff] %vm52, 0.0
    %129 = vst.msk [vmem:[#allocation2 + $0x260] sm:$0xff] %vm52, 0.0
    %130 = vst.msk [vmem:[#allocation2 + $0x268] sm:$0xff] %vm52, 0.0
    %131 = vst.msk [vmem:[#allocation2 + $0x270] sm:$0xff] %vm52, 0.0
    %132 = vst.msk [vmem:[#allocation2 + $0x278] sm:$0xff] %vm52, 0.0
    %133 = vst.msk [vmem:[#allocation2 + $0x280] sm:$0xff] %vm52, 0.0
    %v134 = vld [vmem:[%s0] sm:$0xff]
    %v135 = vld [vmem:[%s0 + $0x8] sm:$0xff]
    %v136 = vld [vmem:[%s0 + $0x10] sm:$0xff]
    %v137 = vld [vmem:[%s0 + $0x18] sm:$0xff]
    %v138 = vld [vmem:[%s0 + $0x20] sm:$0xff]
    %v139 = vld [vmem:[%s0 + $0x28] sm:$0xff]
    %v140 = vld [vmem:[%s0 + $0x30] sm:$0xff]
    %v141 = vld [vmem:[%s0 + $0x38] sm:$0xff]
    %v142 = vld [vmem:[%s0 + $0x40] sm:$0xff]
    %v143 = vld [vmem:[%s0 + $0x48] sm:$0xff]
    %v144 = vld [vmem:[%s0 + $0x50] sm:$0xff]
    %v145 = vld [vmem:[%s0 + $0x58] sm:$0xff]
    %v146 = vld [vmem:[%s0 + $0x60] sm:$0xff]
    %v147 = vld [vmem:[%s0 + $0x68] sm:$0xff]
    %v148 = vld [vmem:[%s0 + $0x70] sm:$0xff]
    %v149 = vld [vmem:[%s0 + $0x78] sm:$0xff]
    %v150 = vld [vmem:[%s0 + $0x80] sm:$0xff]
    %v151 = vld [vmem:[%s0 + $0x88] sm:$0xff]
    %v152 = vld [vmem:[%s0 + $0x90] sm:$0xff]
    %v153 = vld [vmem:[%s0 + $0x98] sm:$0xff]
    %v154 = vld [vmem:[%s0 + $0xa0] sm:$0xff]
    %v155 = vld [vmem:[%s0 + $0xa8] sm:$0xff]
    %v156 = vld [vmem:[%s0 + $0xb0] sm:$0xff]
    %v157 = vld [vmem:[%s0 + $0xb8] sm:$0xff]
    %v158 = vld [vmem:[%s0 + $0xc0] sm:$0xff]
    %v159 = vld [vmem:[%s0 + $0xc8] sm:$0xff]
    %v160 = vld [vmem:[%s0 + $0xd0] sm:$0xff]
    %v161 = vld [vmem:[%s0 + $0xd8] sm:$0xff]
    %v162 = vld [vmem:[%s0 + $0xe0] sm:$0xff]
    %v163 = vld [vmem:[%s0 + $0xe8] sm:$0xff]
    %v164 = vld [vmem:[%s0 + $0xf0] sm:$0xff]
    %v165 = vld [vmem:[%s0 + $0xf8] sm:$0xff]
    %v166 = vld [vmem:[%s0 + $0x100] sm:$0xff]
    %v167 = vld [vmem:[%s0 + $0x108] sm:$0xff]
    %v168 = vld [vmem:[%s0 + $0x110] sm:$0xff]
    %v169 = vld [vmem:[%s0 + $0x118] sm:$0xff]
    %v170 = vld [vmem:[%s0 + $0x120] sm:$0xff]
    %v171 = vld [vmem:[%s0 + $0x128] sm:$0xff]
    %v172 = vld [vmem:[%s0 + $0x130] sm:$0xff]
    %v173 = vld [vmem:[%s0 + $0x138] sm:$0xff]
    %v174 = vld [vmem:[%s0 + $0x140] sm:$0xff]
    %v175 = vld [vmem:[%s0 + $0x148] sm:$0xff]
    %v176 = vld [vmem:[%s0 + $0x150] sm:$0xff]
    %v177 = vld [vmem:[%s0 + $0x158] sm:$0xff]
    %v178 = vld [vmem:[%s0 + $0x160] sm:$0xff]
    %v179 = vld [vmem:[%s0 + $0x168] sm:$0xff]
    %v180 = vld [vmem:[%s0 + $0x170] sm:$0xff]
    %v181 = vld [vmem:[%s0 + $0x178] sm:$0xff]
    %v182 = vld [vmem:[%s0 + $0x180] sm:$0xff]
    %v183 = vld [vmem:[%s0 + $0x188] sm:$0xff]
    %v184 = vld [vmem:[%s0 + $0x190] sm:$0xff]
    %v185 = vld [vmem:[%s0 + $0x198] sm:$0xff]
    %v186 = vld [vmem:[%s0 + $0x1a0] sm:$0xff]
    %v187 = vld [vmem:[%s0 + $0x1a8] sm:$0xff]
    %v188 = vld [vmem:[%s0 + $0x1b0] sm:$0xff]
    %v189 = vld [vmem:[%s0 + $0x1b8] sm:$0xff]
    %v190 = vld [vmem:[%s0 + $0x1c0] sm:$0xff]
    %v191 = vld [vmem:[%s0 + $0x1c8] sm:$0xff]
    %v192 = vld [vmem:[%s0 + $0x1d0] sm:$0xff]
    %v193 = vld [vmem:[%s0 + $0x1d8] sm:$0xff]
    %v194 = vld [vmem:[%s0 + $0x1e0] sm:$0xff]
    %v195 = vld [vmem:[%s0 + $0x1e8] sm:$0xff]
    %v196 = vld [vmem:[%s0 + $0x1f0] sm:$0xff]
    %v197 = vld [vmem:[%s0 + $0x1f8] sm:$0xff]
    %v198 = vld [vmem:[%s0 + $0x200] sm:$0xff]
    %v199 = vld [vmem:[%s0 + $0x208] sm:$0xff]
    %v200 = vld [vmem:[%s0 + $0x210] sm:$0xff]
    %v201 = vld [vmem:[%s0 + $0x218] sm:$0xff]
    %v202 = vld [vmem:[%s0 + $0x220] sm:$0xff]
    %v203 = vld [vmem:[%s0 + $0x228] sm:$0xff]
    %v204 = vld [vmem:[%s0 + $0x230] sm:$0xff]
    %v205 = vld [vmem:[%s0 + $0x238] sm:$0xff]
    %v206 = vld [vmem:[%s0 + $0x240] sm:$0xff]
    %v207 = vld [vmem:[%s0 + $0x248] sm:$0xff]
    %v208 = vld [vmem:[%s0 + $0x250] sm:$0xff]
    %v209 = vld [vmem:[%s0 + $0x258] sm:$0xff]
    %v210 = vld [vmem:[%s0 + $0x260] sm:$0xff]
    %v211 = vld [vmem:[%s0 + $0x268] sm:$0xff]
    %v212 = vld [vmem:[%s0 + $0x270] sm:$0xff]
    %v213 = vld [vmem:[%s0 + $0x278] sm:$0xff]
    %v214 = vld [vmem:[%s0 + $0x280] sm:$0xff]
    %v215 = vpack.c.bf16 %v135, %v134
    %v216 = vpack.c.bf16 %v137, %v136
    %v217 = vpack.c.bf16 %v139, %v138
    %v218 = vpack.c.bf16 %v141, %v140
    %v219 = vpack.c.bf16 %v143, %v142
    %v220 = vpack.c.bf16 %v145, %v144
    %v221 = vpack.c.bf16 %v147, %v146
    %v222 = vpack.c.bf16 %v149, %v148
    %v223 = vpack.c.bf16 %v151, %v150
    %v224 = vpack.c.bf16 %v153, %v152
    %v225 = vpack.c.bf16 %v155, %v154
    %v226 = vpack.c.bf16 %v157, %v156
    %v227 = vpack.c.bf16 %v159, %v158
    %v228 = vpack.c.bf16 %v161, %v160
    %v229 = vpack.c.bf16 %v163, %v162
    %v230 = vpack.c.bf16 %v165, %v164
    %v231 = vpack.c.bf16 %v167, %v166
    %v232 = vpack.c.bf16 %v169, %v168
    %v233 = vpack.c.bf16 %v171, %v170
    %v234 = vpack.c.bf16 %v173, %v172
    %v235 = vpack.c.bf16 %v175, %v174
    %v236 = vpack.c.bf16 %v177, %v176
    %v237 = vpack.c.bf16 %v179, %v178
    %v238 = vpack.c.bf16 %v181, %v180
    %v239 = vpack.c.bf16 %v183, %v182
    %v240 = vpack.c.bf16 %v185, %v184
    %v241 = vpack.c.bf16 %v187, %v186
    %v242 = vpack.c.bf16 %v189, %v188
    %v243 = vpack.c.bf16 %v191, %v190
    %v244 = vpack.c.bf16 %v193, %v192
    %v245 = vpack.c.bf16 %v195, %v194
    %v246 = vpack.c.bf16 %v197, %v196
    %v247 = vpack.c.bf16 %v199, %v198
    %v248 = vpack.c.bf16 %v201, %v200
    %v249 = vpack.c.bf16 %v203, %v202
    %v250 = vpack.c.bf16 %v205, %v204
    %v251 = vpack.c.bf16 %v207, %v206
    %v252 = vpack.c.bf16 %v209, %v208
    %v253 = vpack.c.bf16 %v211, %v210
    %v254 = vpack.c.bf16 %v213, %v212
    %v255 = vpack.c.bf16 %v214, %v214
    %v256 = vld [vmem:[#allocation2] sm:$0xff]
    %v257 = vld [vmem:[#allocation2 + $0x8] sm:$0xff]
    %v258 = vld [vmem:[#allocation2 + $0x10] sm:$0xff]
    %v259 = vld [vmem:[#allocation2 + $0x18] sm:$0xff]
    %v260 = vld [vmem:[#allocation2 + $0x20] sm:$0xff]
    %v261 = vld [vmem:[#allocation2 + $0x28] sm:$0xff]
    %v262 = vld [vmem:[#allocation2 + $0x30] sm:$0xff]
    %v263 = vld [vmem:[#allocation2 + $0x38] sm:$0xff]
    %v264 = vld [vmem:[#allocation2 + $0x40] sm:$0xff]
    %v265 = vld [vmem:[#allocation2 + $0x48] sm:$0xff]
    %v266 = vld [vmem:[#allocation2 + $0x50] sm:$0xff]
    %v267 = vld [vmem:[#allocation2 + $0x58] sm:$0xff]
    %v268 = vld [vmem:[#allocation2 + $0x60] sm:$0xff]
    %v269 = vld [vmem:[#allocation2 + $0x68] sm:$0xff]
    %v270 = vld [vmem:[#allocation2 + $0x70] sm:$0xff]
    %v271 = vld [vmem:[#allocation2 + $0x78] sm:$0xff]
    %v272 = vld [vmem:[#allocation2 + $0x80] sm:$0xff]
    %v273 = vld [vmem:[#allocation2 + $0x88] sm:$0xff]
    %v274 = vld [vmem:[#allocation2 + $0x90] sm:$0xff]
    %v275 = vld [vmem:[#allocation2 + $0x98] sm:$0xff]
    %v276 = vld [vmem:[#allocation2 + $0xa0] sm:$0xff]
    %v277 = vld [vmem:[#allocation2 + $0xa8] sm:$0xff]
    %v278 = vld [vmem:[#allocation2 + $0xb0] sm:$0xff]
    %v279 = vld [vmem:[#allocation2 + $0xb8] sm:$0xff]
    %v280 = vld [vmem:[#allocation2 + $0xc0] sm:$0xff]
    %v281 = vld [vmem:[#allocation2 + $0xc8] sm:$0xff]
    %v282 = vld [vmem:[#allocation2 + $0xd0] sm:$0xff]
    %v283 = vld [vmem:[#allocation2 + $0xd8] sm:$0xff]
    %v284 = vld [vmem:[#allocation2 + $0xe0] sm:$0xff]
    %v285 = vld [vmem:[#allocation2 + $0xe8] sm:$0xff]
    %v286 = vld [vmem:[#allocation2 + $0xf0] sm:$0xff]
    %v287 = vld [vmem:[#allocation2 + $0xf8] sm:$0xff]
    %v288 = vld [vmem:[#allocation2 + $0x100] sm:$0xff]
    %v289 = vld [vmem:[#allocation2 + $0x108] sm:$0xff]
    %v290 = vld [vmem:[#allocation2 + $0x110] sm:$0xff]
    %v291 = vld [vmem:[#allocation2 + $0x118] sm:$0xff]
    %v292 = vld [vmem:[#allocation2 + $0x120] sm:$0xff]
    %v293 = vld [vmem:[#allocation2 + $0x128] sm:$0xff]
    %v294 = vld [vmem:[#allocation2 + $0x130] sm:$0xff]
    %v295 = vld [vmem:[#allocation2 + $0x138] sm:$0xff]
    %v296 = vld [vmem:[#allocation2 + $0x140] sm:$0xff]
    %v297 = vld [vmem:[#allocation2 + $0x148] sm:$0xff]
    %v298 = vld [vmem:[#allocation2 + $0x150] sm:$0xff]
    %v299 = vld [vmem:[#allocation2 + $0x158] sm:$0xff]
    %v300 = vld [vmem:[#allocation2 + $0x160] sm:$0xff]
    %v301 = vld [vmem:[#allocation2 + $0x168] sm:$0xff]
    %v302 = vld [vmem:[#allocation2 + $0x170] sm:$0xff]
    %v303 = vld [vmem:[#allocation2 + $0x178] sm:$0xff]
    %v304 = vld [vmem:[#allocation2 + $0x180] sm:$0xff]
    %v305 = vld [vmem:[#allocation2 + $0x188] sm:$0xff]
    %v306 = vld [vmem:[#allocation2 + $0x190] sm:$0xff]
    %v307 = vld [vmem:[#allocation2 + $0x198] sm:$0xff]
    %v308 = vld [vmem:[#allocation2 + $0x1a0] sm:$0xff]
    %v309 = vld [vmem:[#allocation2 + $0x1a8] sm:$0xff]
    %v310 = vld [vmem:[#allocation2 + $0x1b0] sm:$0xff]
    %v311 = vld [vmem:[#allocation2 + $0x1b8] sm:$0xff]
    %v312 = vld [vmem:[#allocation2 + $0x1c0] sm:$0xff]
    %v313 = vld [vmem:[#allocation2 + $0x1c8] sm:$0xff]
    %v314 = vld [vmem:[#allocation2 + $0x1d0] sm:$0xff]
    %v315 = vld [vmem:[#allocation2 + $0x1d8] sm:$0xff]
    %v316 = vld [vmem:[#allocation2 + $0x1e0] sm:$0xff]
    %v317 = vld [vmem:[#allocation2 + $0x1e8] sm:$0xff]
    %v318 = vld [vmem:[#allocation2 + $0x1f0] sm:$0xff]
    %v319 = vld [vmem:[#allocation2 + $0x1f8] sm:$0xff]
    %v320 = vld [vmem:[#allocation2 + $0x200] sm:$0xff]
    %v321 = vld [vmem:[#allocation2 + $0x208] sm:$0xff]
    %v322 = vld [vmem:[#allocation2 + $0x210] sm:$0xff]
    %v323 = vld [vmem:[#allocation2 + $0x218] sm:$0xff]
    %v324 = vld [vmem:[#allocation2 + $0x220] sm:$0xff]
    %v325 = vld [vmem:[#allocation2 + $0x228] sm:$0xff]
    %v326 = vld [vmem:[#allocation2 + $0x230] sm:$0xff]
    %v327 = vld [vmem:[#allocation2 + $0x238] sm:$0xff]
    %v328 = vld [vmem:[#allocation2 + $0x240] sm:$0xff]
    %v329 = vld [vmem:[#allocation2 + $0x248] sm:$0xff]
    %v330 = vld [vmem:[#allocation2 + $0x250] sm:$0xff]
    %v331 = vld [vmem:[#allocation2 + $0x258] sm:$0xff]
    %v332 = vld [vmem:[#allocation2 + $0x260] sm:$0xff]
    %v333 = vld [vmem:[#allocation2 + $0x268] sm:$0xff]
    %v334 = vld [vmem:[#allocation2 + $0x270] sm:$0xff]
    %v335 = vld [vmem:[#allocation2 + $0x278] sm:$0xff]
    %v336 = vld [vmem:[#allocation2 + $0x280] sm:$0xff]
    %v337 = vld [vmem:[%s2] sm:$0xf]
    %v339 = vsel %vm52, %v215, 0
    %v342 = vsel %vm52, %v216, 0
    %v345 = vsel %vm52, %v217, 0
    %v348 = vsel %vm52, %v218, 0
    %v351 = vsel %vm52, %v219, 0
    %v354 = vsel %vm52, %v220, 0
    %v357 = vsel %vm52, %v221, 0
    %v360 = vsel %vm52, %v222, 0
    %v363 = vsel %vm52, %v223, 0
    %v366 = vsel %vm52, %v224, 0
    %v369 = vsel %vm52, %v225, 0
    %v372 = vsel %vm52, %v226, 0
    %v375 = vsel %vm52, %v227, 0
    %v378 = vsel %vm52, %v228, 0
    %v381 = vsel %vm52, %v229, 0
    %v384 = vsel %vm52, %v230, 0
    %v387 = vsel %vm52, %v231, 0
    %v390 = vsel %vm52, %v232, 0
    %v393 = vsel %vm52, %v233, 0
    %v396 = vsel %vm52, %v234, 0
    %v399 = vsel %vm52, %v235, 0
    %v402 = vsel %vm52, %v236, 0
    %v405 = vsel %vm52, %v237, 0
    %v408 = vsel %vm52, %v238, 0
    %v411 = vsel %vm52, %v239, 0
    %v414 = vsel %vm52, %v240, 0
    %v417 = vsel %vm52, %v241, 0
    %v420 = vsel %vm52, %v242, 0
    %v423 = vsel %vm52, %v243, 0
    %v426 = vsel %vm52, %v244, 0
    %v429 = vsel %vm52, %v245, 0
    %v432 = vsel %vm52, %v246, 0
    %v435 = vsel %vm52, %v247, 0
    %v438 = vsel %vm52, %v248, 0
    %v441 = vsel %vm52, %v249, 0
    %v444 = vsel %vm52, %v250, 0
    %v447 = vsel %vm52, %v251, 0
    %v450 = vsel %vm52, %v252, 0
    %v453 = vsel %vm52, %v253, 0
    %v456 = vsel %vm52, %v254, 0
    %v459 = vsel %vm52, %v255, 0
    %vm461 = vcmask 1043456
    %v463 = vsel %vm461, %v337, 0
    %465 = vmatprep.subr.bf16.mxu0 0
    %466 = vmatpush1.bf16.msra.mxu0 0
    %467 = vmatprep.subr.bf16.mxu0 0
    %468 = vmatpush1.bf16.msra.mxu0 0
    %469 = vmatprep.subr.bf16.mxu0 0
    %470 = vmatpush1.bf16.msra.mxu0 0
    %471 = vmatprep.subr.bf16.mxu0 0
    %472 = vmatpush1.bf16.msra.mxu0 0
    %473 = vmatprep.subr.bf16.mxu0 0
    %474 = vmatpush1.bf16.msra.mxu0 0
    %475 = vmatprep.subr.bf16.mxu0 0
    %476 = vmatpush1.bf16.msra.mxu0 0
    %477 = vmatprep.subr.bf16.mxu0 0
    %478 = vmatpush1.bf16.msra.mxu0 0
    %479 = vmatprep.subr.bf16.mxu0 0
    %480 = vmatpush1.bf16.msra.mxu0 %v463
    %481 = vmatprep.subr.bf16.mxu0 0
    %482 = vmatpush2.bf16.msra.mxu0 0
    %483 = vmatprep.subr.bf16.mxu0 0
    %484 = vmatpush2.bf16.msra.mxu0 0
    %485 = vmatprep.subr.bf16.mxu0 0
    %486 = vmatpush2.bf16.msra.mxu0 0
    %487 = vmatprep.subr.bf16.mxu0 0
    %488 = vmatpush2.bf16.msra.mxu0 0
    %489 = vmatprep.subr.bf16.mxu0 0
    %490 = vmatpush2.bf16.msra.mxu0 0
    %491 = vmatprep.subr.bf16.mxu0 0
    %492 = vmatpush2.bf16.msra.mxu0 0
    %493 = vmatprep.subr.bf16.mxu0 0
    %494 = vmatpush2.bf16.msra.mxu0 0
    %495 = vmatprep.subr.bf16.mxu0 0
    %496 = vmatpush2.bf16.msra.mxu0 0
    %497 = vmatprep.mubr.bf16.mxu0 0
    %498 = vmatmul.mubr.bf16.gmra.mxu0 %v339
    %v499 = vpop.f32.mrf.mxu0
    %v500 = vadd.f32 0.0, %v499
    %v501 = vpop.f32.mrf.mxu0
    %v502 = vpop.f32.mrf.mxu0
    %v503 = vadd.f32 0.0, %v502
    %v504 = vpop.f32.mrf.mxu0
    %505 = vmatprep.mubr.bf16.mxu0 0
    %506 = vmatmul.mubr.bf16.gmra.mxu0 %v342
    %v507 = vpop.f32.mrf.mxu0
    %v508 = vadd.f32 0.0, %v507
    %v509 = vpop.f32.mrf.mxu0
    %v510 = vpop.f32.mrf.mxu0
    %v511 = vadd.f32 0.0, %v510
    %v512 = vpop.f32.mrf.mxu0
    %513 = vmatprep.mubr.bf16.mxu0 0
    %514 = vmatmul.mubr.bf16.gmra.mxu0 %v345
    %v515 = vpop.f32.mrf.mxu0
    %v516 = vadd.f32 0.0, %v515
    %v517 = vpop.f32.mrf.mxu0
    %v518 = vpop.f32.mrf.mxu0
    %v519 = vadd.f32 0.0, %v518
    %v520 = vpop.f32.mrf.mxu0
    %521 = vmatprep.mubr.bf16.mxu0 0
    %522 = vmatmul.mubr.bf16.gmra.mxu0 %v348
    %v523 = vpop.f32.mrf.mxu0
    %v524 = vadd.f32 0.0, %v523
    %v525 = vpop.f32.mrf.mxu0
    %v526 = vpop.f32.mrf.mxu0
    %v527 = vadd.f32 0.0, %v526
    %v528 = vpop.f32.mrf.mxu0
    %529 = vmatprep.mubr.bf16.mxu0 0
    %530 = vmatmul.mubr.bf16.gmra.mxu0 %v351
    %v531 = vpop.f32.mrf.mxu0
    %v532 = vadd.f32 0.0, %v531
    %v533 = vpop.f32.mrf.mxu0
    %v534 = vpop.f32.mrf.mxu0
    %v535 = vadd.f32 0.0, %v534
    %v536 = vpop.f32.mrf.mxu0
    %537 = vmatprep.mubr.bf16.mxu0 0
    %538 = vmatmul.mubr.bf16.gmra.mxu0 %v354
    %v539 = vpop.f32.mrf.mxu0
    %v540 = vadd.f32 0.0, %v539
    %v541 = vpop.f32.mrf.mxu0
    %v542 = vpop.f32.mrf.mxu0
    %v543 = vadd.f32 0.0, %v542
    %v544 = vpop.f32.mrf.mxu0
    %545 = vmatprep.mubr.bf16.mxu0 0
    %546 = vmatmul.mubr.bf16.gmra.mxu0 %v357
    %v547 = vpop.f32.mrf.mxu0
    %v548 = vadd.f32 0.0, %v547
    %v549 = vpop.f32.mrf.mxu0
    %v550 = vpop.f32.mrf.mxu0
    %v551 = vadd.f32 0.0, %v550
    %v552 = vpop.f32.mrf.mxu0
    %553 = vmatprep.mubr.bf16.mxu0 0
    %554 = vmatmul.mubr.bf16.gmra.mxu0 %v360
    %v555 = vpop.f32.mrf.mxu0
    %v556 = vadd.f32 0.0, %v555
    %v557 = vpop.f32.mrf.mxu0
    %v558 = vpop.f32.mrf.mxu0
    %v559 = vadd.f32 0.0, %v558
    %v560 = vpop.f32.mrf.mxu0
    %561 = vmatprep.mubr.bf16.mxu0 0
    %562 = vmatmul.mubr.bf16.gmra.mxu0 %v363
    %v563 = vpop.f32.mrf.mxu0
    %v564 = vadd.f32 0.0, %v563
    %v565 = vpop.f32.mrf.mxu0
    %v566 = vpop.f32.mrf.mxu0
    %v567 = vadd.f32 0.0, %v566
    %v568 = vpop.f32.mrf.mxu0
    %569 = vmatprep.mubr.bf16.mxu0 0
    %570 = vmatmul.mubr.bf16.gmra.mxu0 %v366
    %v571 = vpop.f32.mrf.mxu0
    %v572 = vadd.f32 0.0, %v571
    %v573 = vpop.f32.mrf.mxu0
    %v574 = vpop.f32.mrf.mxu0
    %v575 = vadd.f32 0.0, %v574
    %v576 = vpop.f32.mrf.mxu0
    %577 = vmatprep.mubr.bf16.mxu0 0
    %578 = vmatmul.mubr.bf16.gmra.mxu0 %v369
    %v579 = vpop.f32.mrf.mxu0
    %v580 = vadd.f32 0.0, %v579
    %v581 = vpop.f32.mrf.mxu0
    %v582 = vpop.f32.mrf.mxu0
    %v583 = vadd.f32 0.0, %v582
    %v584 = vpop.f32.mrf.mxu0
    %585 = vmatprep.mubr.bf16.mxu0 0
    %586 = vmatmul.mubr.bf16.gmra.mxu0 %v372
    %v587 = vpop.f32.mrf.mxu0
    %v588 = vadd.f32 0.0, %v587
    %v589 = vpop.f32.mrf.mxu0
    %v590 = vpop.f32.mrf.mxu0
    %v591 = vadd.f32 0.0, %v590
    %v592 = vpop.f32.mrf.mxu0
    %593 = vmatprep.mubr.bf16.mxu0 0
    %594 = vmatmul.mubr.bf16.gmra.mxu0 %v375
    %v595 = vpop.f32.mrf.mxu0
    %v596 = vadd.f32 0.0, %v595
    %v597 = vpop.f32.mrf.mxu0
    %v598 = vpop.f32.mrf.mxu0
    %v599 = vadd.f32 0.0, %v598
    %v600 = vpop.f32.mrf.mxu0
    %601 = vmatprep.mubr.bf16.mxu0 0
    %602 = vmatmul.mubr.bf16.gmra.mxu0 %v378
    %v603 = vpop.f32.mrf.mxu0
    %v604 = vadd.f32 0.0, %v603
    %v605 = vpop.f32.mrf.mxu0
    %v606 = vpop.f32.mrf.mxu0
    %v607 = vadd.f32 0.0, %v606
    %v608 = vpop.f32.mrf.mxu0
    %609 = vmatprep.mubr.bf16.mxu0 0
    %610 = vmatmul.mubr.bf16.gmra.mxu0 %v381
    %v611 = vpop.f32.mrf.mxu0
    %v612 = vadd.f32 0.0, %v611
    %v613 = vpop.f32.mrf.mxu0
    %v614 = vpop.f32.mrf.mxu0
    %v615 = vadd.f32 0.0, %v614
    %v616 = vpop.f32.mrf.mxu0
    %617 = vmatprep.mubr.bf16.mxu0 0
    %618 = vmatmul.mubr.bf16.gmra.mxu0 %v384
    %v619 = vpop.f32.mrf.mxu0
    %v620 = vadd.f32 0.0, %v619
    %v621 = vpop.f32.mrf.mxu0
    %v622 = vpop.f32.mrf.mxu0
    %v623 = vadd.f32 0.0, %v622
    %v624 = vpop.f32.mrf.mxu0
    %625 = vmatprep.mubr.bf16.mxu0 0
    %626 = vmatmul.mubr.bf16.gmra.mxu0 %v387
    %v627 = vpop.f32.mrf.mxu0
    %v628 = vadd.f32 0.0, %v627
    %v629 = vpop.f32.mrf.mxu0
    %v630 = vpop.f32.mrf.mxu0
    %v631 = vadd.f32 0.0, %v630
    %v632 = vpop.f32.mrf.mxu0
    %633 = vmatprep.mubr.bf16.mxu0 0
    %634 = vmatmul.mubr.bf16.gmra.mxu0 %v390
    %v635 = vpop.f32.mrf.mxu0
    %v636 = vadd.f32 0.0, %v635
    %v637 = vpop.f32.mrf.mxu0
    %v638 = vpop.f32.mrf.mxu0
    %v639 = vadd.f32 0.0, %v638
    %v640 = vpop.f32.mrf.mxu0
    %641 = vmatprep.mubr.bf16.mxu0 0
    %642 = vmatmul.mubr.bf16.gmra.mxu0 %v393
    %v643 = vpop.f32.mrf.mxu0
    %v644 = vadd.f32 0.0, %v643
    %v645 = vpop.f32.mrf.mxu0
    %v646 = vpop.f32.mrf.mxu0
    %v647 = vadd.f32 0.0, %v646
    %v648 = vpop.f32.mrf.mxu0
    %649 = vmatprep.mubr.bf16.mxu0 0
    %650 = vmatmul.mubr.bf16.gmra.mxu0 %v396
    %v651 = vpop.f32.mrf.mxu0
    %v652 = vadd.f32 0.0, %v651
    %v653 = vpop.f32.mrf.mxu0
    %v654 = vpop.f32.mrf.mxu0
    %v655 = vadd.f32 0.0, %v654
    %v656 = vpop.f32.mrf.mxu0
    %657 = vmatprep.mubr.bf16.mxu0 0
    %658 = vmatmul.mubr.bf16.gmra.mxu0 %v399
    %v659 = vpop.f32.mrf.mxu0
    %v660 = vadd.f32 0.0, %v659
    %v661 = vpop.f32.mrf.mxu0
    %v662 = vpop.f32.mrf.mxu0
    %v663 = vadd.f32 0.0, %v662
    %v664 = vpop.f32.mrf.mxu0
    %665 = vmatprep.mubr.bf16.mxu0 0
    %666 = vmatmul.mubr.bf16.gmra.mxu0 %v402
    %v667 = vpop.f32.mrf.mxu0
    %v668 = vadd.f32 0.0, %v667
    %v669 = vpop.f32.mrf.mxu0
    %v670 = vpop.f32.mrf.mxu0
    %v671 = vadd.f32 0.0, %v670
    %v672 = vpop.f32.mrf.mxu0
    %673 = vmatprep.mubr.bf16.mxu0 0
    %674 = vmatmul.mubr.bf16.gmra.mxu0 %v405
    %v675 = vpop.f32.mrf.mxu0
    %v676 = vadd.f32 0.0, %v675
    %v677 = vpop.f32.mrf.mxu0
    %v678 = vpop.f32.mrf.mxu0
    %v679 = vadd.f32 0.0, %v678
    %v680 = vpop.f32.mrf.mxu0
    %681 = vmatprep.mubr.bf16.mxu0 0
    %682 = vmatmul.mubr.bf16.gmra.mxu0 %v408
    %v683 = vpop.f32.mrf.mxu0
    %v684 = vadd.f32 0.0, %v683
    %v685 = vpop.f32.mrf.mxu0
    %v686 = vpop.f32.mrf.mxu0
    %v687 = vadd.f32 0.0, %v686
    %v688 = vpop.f32.mrf.mxu0
    %689 = vmatprep.mubr.bf16.mxu0 0
    %690 = vmatmul.mubr.bf16.gmra.mxu0 %v411
    %v691 = vpop.f32.mrf.mxu0
    %v692 = vadd.f32 0.0, %v691
    %v693 = vpop.f32.mrf.mxu0
    %v694 = vpop.f32.mrf.mxu0
    %v695 = vadd.f32 0.0, %v694
    %v696 = vpop.f32.mrf.mxu0
    %697 = vmatprep.mubr.bf16.mxu0 0
    %698 = vmatmul.mubr.bf16.gmra.mxu0 %v414
    %v699 = vpop.f32.mrf.mxu0
    %v700 = vadd.f32 0.0, %v699
    %v701 = vpop.f32.mrf.mxu0
    %v702 = vpop.f32.mrf.mxu0
    %v703 = vadd.f32 0.0, %v702
    %v704 = vpop.f32.mrf.mxu0
    %705 = vmatprep.mubr.bf16.mxu0 0
    %706 = vmatmul.mubr.bf16.gmra.mxu0 %v417
    %v707 = vpop.f32.mrf.mxu0
    %v708 = vadd.f32 0.0, %v707
    %v709 = vpop.f32.mrf.mxu0
    %v710 = vpop.f32.mrf.mxu0
    %v711 = vadd.f32 0.0, %v710
    %v712 = vpop.f32.mrf.mxu0
    %713 = vmatprep.mubr.bf16.mxu0 0
    %714 = vmatmul.mubr.bf16.gmra.mxu0 %v420
    %v715 = vpop.f32.mrf.mxu0
    %v716 = vadd.f32 0.0, %v715
    %v717 = vpop.f32.mrf.mxu0
    %v718 = vpop.f32.mrf.mxu0
    %v719 = vadd.f32 0.0, %v718
    %v720 = vpop.f32.mrf.mxu0
    %721 = vmatprep.mubr.bf16.mxu0 0
    %722 = vmatmul.mubr.bf16.gmra.mxu0 %v423
    %v723 = vpop.f32.mrf.mxu0
    %v724 = vadd.f32 0.0, %v723
    %v725 = vpop.f32.mrf.mxu0
    %v726 = vpop.f32.mrf.mxu0
    %v727 = vadd.f32 0.0, %v726
    %v728 = vpop.f32.mrf.mxu0
    %729 = vmatprep.mubr.bf16.mxu0 0
    %730 = vmatmul.mubr.bf16.gmra.mxu0 %v426
    %v731 = vpop.f32.mrf.mxu0
    %v732 = vadd.f32 0.0, %v731
    %v733 = vpop.f32.mrf.mxu0
    %v734 = vpop.f32.mrf.mxu0
    %v735 = vadd.f32 0.0, %v734
    %v736 = vpop.f32.mrf.mxu0
    %737 = vmatprep.mubr.bf16.mxu0 0
    %738 = vmatmul.mubr.bf16.gmra.mxu0 %v429
    %v739 = vpop.f32.mrf.mxu0
    %v740 = vadd.f32 0.0, %v739
    %v741 = vpop.f32.mrf.mxu0
    %v742 = vpop.f32.mrf.mxu0
    %v743 = vadd.f32 0.0, %v742
    %v744 = vpop.f32.mrf.mxu0
    %745 = vmatprep.mubr.bf16.mxu0 0
    %746 = vmatmul.mubr.bf16.gmra.mxu0 %v432
    %v747 = vpop.f32.mrf.mxu0
    %v748 = vadd.f32 0.0, %v747
    %v749 = vpop.f32.mrf.mxu0
    %v750 = vpop.f32.mrf.mxu0
    %v751 = vadd.f32 0.0, %v750
    %v752 = vpop.f32.mrf.mxu0
    %753 = vmatprep.mubr.bf16.mxu0 0
    %754 = vmatmul.mubr.bf16.gmra.mxu0 %v435
    %v755 = vpop.f32.mrf.mxu0
    %v756 = vadd.f32 0.0, %v755
    %v757 = vpop.f32.mrf.mxu0
    %v758 = vpop.f32.mrf.mxu0
    %v759 = vadd.f32 0.0, %v758
    %v760 = vpop.f32.mrf.mxu0
    %761 = vmatprep.mubr.bf16.mxu0 0
    %762 = vmatmul.mubr.bf16.gmra.mxu0 %v438
    %v763 = vpop.f32.mrf.mxu0
    %v764 = vadd.f32 0.0, %v763
    %v765 = vpop.f32.mrf.mxu0
    %v766 = vpop.f32.mrf.mxu0
    %v767 = vadd.f32 0.0, %v766
    %v768 = vpop.f32.mrf.mxu0
    %769 = vmatprep.mubr.bf16.mxu0 0
    %770 = vmatmul.mubr.bf16.gmra.mxu0 %v441
    %v771 = vpop.f32.mrf.mxu0
    %v772 = vadd.f32 0.0, %v771
    %v773 = vpop.f32.mrf.mxu0
    %v774 = vpop.f32.mrf.mxu0
    %v775 = vadd.f32 0.0, %v774
    %v776 = vpop.f32.mrf.mxu0
    %777 = vmatprep.mubr.bf16.mxu0 0
    %778 = vmatmul.mubr.bf16.gmra.mxu0 %v444
    %v779 = vpop.f32.mrf.mxu0
    %v780 = vadd.f32 0.0, %v779
    %v781 = vpop.f32.mrf.mxu0
    %v782 = vpop.f32.mrf.mxu0
    %v783 = vadd.f32 0.0, %v782
    %v784 = vpop.f32.mrf.mxu0
    %785 = vmatprep.mubr.bf16.mxu0 0
    %786 = vmatmul.mubr.bf16.gmra.mxu0 %v447
    %v787 = vpop.f32.mrf.mxu0
    %v788 = vadd.f32 0.0, %v787
    %v789 = vpop.f32.mrf.mxu0
    %v790 = vpop.f32.mrf.mxu0
    %v791 = vadd.f32 0.0, %v790
    %v792 = vpop.f32.mrf.mxu0
    %793 = vmatprep.mubr.bf16.mxu0 0
    %794 = vmatmul.mubr.bf16.gmra.mxu0 %v450
    %v795 = vpop.f32.mrf.mxu0
    %v796 = vadd.f32 0.0, %v795
    %v797 = vpop.f32.mrf.mxu0
    %v798 = vpop.f32.mrf.mxu0
    %v799 = vadd.f32 0.0, %v798
    %v800 = vpop.f32.mrf.mxu0
    %801 = vmatprep.mubr.bf16.mxu0 0
    %802 = vmatmul.mubr.bf16.gmra.mxu0 %v453
    %v803 = vpop.f32.mrf.mxu0
    %v804 = vadd.f32 0.0, %v803
    %v805 = vpop.f32.mrf.mxu0
    %v806 = vpop.f32.mrf.mxu0
    %v807 = vadd.f32 0.0, %v806
    %v808 = vpop.f32.mrf.mxu0
    %809 = vmatprep.mubr.bf16.mxu0 0
    %810 = vmatmul.mubr.bf16.gmra.mxu0 %v456
    %v811 = vpop.f32.mrf.mxu0
    %v812 = vadd.f32 0.0, %v811
    %v813 = vpop.f32.mrf.mxu0
    %v814 = vpop.f32.mrf.mxu0
    %v815 = vadd.f32 0.0, %v814
    %v816 = vpop.f32.mrf.mxu0
    %817 = vmatprep.mubr.bf16.mxu0 0
    %818 = vmatmul.mubr.bf16.gmra.mxu0 %v459
    %v819 = vpop.f32.mrf.mxu0
    %v820 = vadd.f32 0.0, %v819
    %v821 = vpop.f32.mrf.mxu0
    %v822 = vpop.f32.mrf.mxu0
    %v823 = vpop.f32.mrf.mxu0
    %824 = vdwg.mxu0
    %v825 = vadd.f32 %v256, %v500
    %v826 = vadd.f32 %v257, %v503
    %v827 = vadd.f32 %v258, %v508
    %v828 = vadd.f32 %v259, %v511
    %v829 = vadd.f32 %v260, %v516
    %v830 = vadd.f32 %v261, %v519
    %v831 = vadd.f32 %v262, %v524
    %v832 = vadd.f32 %v263, %v527
    %v833 = vadd.f32 %v264, %v532
    %v834 = vadd.f32 %v265, %v535
    %v835 = vadd.f32 %v266, %v540
    %v836 = vadd.f32 %v267, %v543
    %v837 = vadd.f32 %v268, %v548
    %v838 = vadd.f32 %v269, %v551
    %v839 = vadd.f32 %v270, %v556
    %v840 = vadd.f32 %v271, %v559
    %v841 = vadd.f32 %v272, %v564
    %v842 = vadd.f32 %v273, %v567
    %v843 = vadd.f32 %v274, %v572
    %v844 = vadd.f32 %v275, %v575
    %v845 = vadd.f32 %v276, %v580
    %v846 = vadd.f32 %v277, %v583
    %v847 = vadd.f32 %v278, %v588
    %v848 = vadd.f32 %v279, %v591
    %v849 = vadd.f32 %v280, %v596
    %v850 = vadd.f32 %v281, %v599
    %v851 = vadd.f32 %v282, %v604
    %v852 = vadd.f32 %v283, %v607
    %v853 = vadd.f32 %v284, %v612
    %v854 = vadd.f32 %v285, %v615
    %v855 = vadd.f32 %v286, %v620
    %v856 = vadd.f32 %v287, %v623
    %v857 = vadd.f32 %v288, %v628
    %v858 = vadd.f32 %v289, %v631
    %v859 = vadd.f32 %v290, %v636
    %v860 = vadd.f32 %v291, %v639
    %v861 = vadd.f32 %v292, %v644
    %v862 = vadd.f32 %v293, %v647
    %v863 = vadd.f32 %v294, %v652
    %v864 = vadd.f32 %v295, %v655
    %v865 = vadd.f32 %v296, %v660
    %v866 = vadd.f32 %v297, %v663
    %v867 = vadd.f32 %v298, %v668
    %v868 = vadd.f32 %v299, %v671
    %v869 = vadd.f32 %v300, %v676
    %v870 = vadd.f32 %v301, %v679
    %v871 = vadd.f32 %v302, %v684
    %v872 = vadd.f32 %v303, %v687
    %v873 = vadd.f32 %v304, %v692
    %v874 = vadd.f32 %v305, %v695
    %v875 = vadd.f32 %v306, %v700
    %v876 = vadd.f32 %v307, %v703
    %v877 = vadd.f32 %v308, %v708
    %v878 = vadd.f32 %v309, %v711
    %v879 = vadd.f32 %v310, %v716
    %v880 = vadd.f32 %v311, %v719
    %v881 = vadd.f32 %v312, %v724
    %v882 = vadd.f32 %v313, %v727
    %v883 = vadd.f32 %v314, %v732
    %v884 = vadd.f32 %v315, %v735
    %v885 = vadd.f32 %v316, %v740
    %v886 = vadd.f32 %v317, %v743
    %v887 = vadd.f32 %v318, %v748
    %v888 = vadd.f32 %v319, %v751
    %v889 = vadd.f32 %v320, %v756
    %v890 = vadd.f32 %v321, %v759
    %v891 = vadd.f32 %v322, %v764
    %v892 = vadd.f32 %v323, %v767
    %v893 = vadd.f32 %v324, %v772
    %v894 = vadd.f32 %v325, %v775
    %v895 = vadd.f32 %v326, %v780
    %v896 = vadd.f32 %v327, %v783
    %v897 = vadd.f32 %v328, %v788
    %v898 = vadd.f32 %v329, %v791
    %v899 = vadd.f32 %v330, %v796
    %v900 = vadd.f32 %v331, %v799
    %v901 = vadd.f32 %v332, %v804
    %v902 = vadd.f32 %v333, %v807
    %v903 = vadd.f32 %v334, %v812
    %v904 = vadd.f32 %v335, %v815
    %v905 = vadd.f32 %v336, %v820
    %906 = vst.msk [vmem:[#allocation2] sm:$0xff] %vm52, %v825
    %907 = vst.msk [vmem:[#allocation2 + $0x8] sm:$0xff] %vm52, %v826
    %908 = vst.msk [vmem:[#allocation2 + $0x10] sm:$0xff] %vm52, %v827
    %909 = vst.msk [vmem:[#allocation2 + $0x18] sm:$0xff] %vm52, %v828
    %910 = vst.msk [vmem:[#allocation2 + $0x20] sm:$0xff] %vm52, %v829
    %911 = vst.msk [vmem:[#allocation2 + $0x28] sm:$0xff] %vm52, %v830
    %912 = vst.msk [vmem:[#allocation2 + $0x30] sm:$0xff] %vm52, %v831
    %913 = vst.msk [vmem:[#allocation2 + $0x38] sm:$0xff] %vm52, %v832
    %914 = vst.msk [vmem:[#allocation2 + $0x40] sm:$0xff] %vm52, %v833
    %915 = vst.msk [vmem:[#allocation2 + $0x48] sm:$0xff] %vm52, %v834
    %916 = vst.msk [vmem:[#allocation2 + $0x50] sm:$0xff] %vm52, %v835
    %917 = vst.msk [vmem:[#allocation2 + $0x58] sm:$0xff] %vm52, %v836
    %918 = vst.msk [vmem:[#allocation2 + $0x60] sm:$0xff] %vm52, %v837
    %919 = vst.msk [vmem:[#allocation2 + $0x68] sm:$0xff] %vm52, %v838
    %920 = vst.msk [vmem:[#allocation2 + $0x70] sm:$0xff] %vm52, %v839
    %921 = vst.msk [vmem:[#allocation2 + $0x78] sm:$0xff] %vm52, %v840
    %922 = vst.msk [vmem:[#allocation2 + $0x80] sm:$0xff] %vm52, %v841
    %923 = vst.msk [vmem:[#allocation2 + $0x88] sm:$0xff] %vm52, %v842
    %924 = vst.msk [vmem:[#allocation2 + $0x90] sm:$0xff] %vm52, %v843
    %925 = vst.msk [vmem:[#allocation2 + $0x98] sm:$0xff] %vm52, %v844
    %926 = vst.msk [vmem:[#allocation2 + $0xa0] sm:$0xff] %vm52, %v845
    %927 = vst.msk [vmem:[#allocation2 + $0xa8] sm:$0xff] %vm52, %v846
    %928 = vst.msk [vmem:[#allocation2 + $0xb0] sm:$0xff] %vm52, %v847
    %929 = vst.msk [vmem:[#allocation2 + $0xb8] sm:$0xff] %vm52, %v848
    %930 = vst.msk [vmem:[#allocation2 + $0xc0] sm:$0xff] %vm52, %v849
    %931 = vst.msk [vmem:[#allocation2 + $0xc8] sm:$0xff] %vm52, %v850
    %932 = vst.msk [vmem:[#allocation2 + $0xd0] sm:$0xff] %vm52, %v851
    %933 = vst.msk [vmem:[#allocation2 + $0xd8] sm:$0xff] %vm52, %v852
    %934 = vst.msk [vmem:[#allocation2 + $0xe0] sm:$0xff] %vm52, %v853
    %935 = vst.msk [vmem:[#allocation2 + $0xe8] sm:$0xff] %vm52, %v854
    %936 = vst.msk [vmem:[#allocation2 + $0xf0] sm:$0xff] %vm52, %v855
    %937 = vst.msk [vmem:[#allocation2 + $0xf8] sm:$0xff] %vm52, %v856
    %938 = vst.msk [vmem:[#allocation2 + $0x100] sm:$0xff] %vm52, %v857
    %939 = vst.msk [vmem:[#allocation2 + $0x108] sm:$0xff] %vm52, %v858
    %940 = vst.msk [vmem:[#allocation2 + $0x110] sm:$0xff] %vm52, %v859
    %941 = vst.msk [vmem:[#allocation2 + $0x118] sm:$0xff] %vm52, %v860
    %942 = vst.msk [vmem:[#allocation2 + $0x120] sm:$0xff] %vm52, %v861
    %943 = vst.msk [vmem:[#allocation2 + $0x128] sm:$0xff] %vm52, %v862
    %944 = vst.msk [vmem:[#allocation2 + $0x130] sm:$0xff] %vm52, %v863
    %945 = vst.msk [vmem:[#allocation2 + $0x138] sm:$0xff] %vm52, %v864
    %946 = vst.msk [vmem:[#allocation2 + $0x140] sm:$0xff] %vm52, %v865
    %947 = vst.msk [vmem:[#allocation2 + $0x148] sm:$0xff] %vm52, %v866
    %948 = vst.msk [vmem:[#allocation2 + $0x150] sm:$0xff] %vm52, %v867
    %949 = vst.msk [vmem:[#allocation2 + $0x158] sm:$0xff] %vm52, %v868
    %950 = vst.msk [vmem:[#allocation2 + $0x160] sm:$0xff] %vm52, %v869
    %951 = vst.msk [vmem:[#allocation2 + $0x168] sm:$0xff] %vm52, %v870
    %952 = vst.msk [vmem:[#allocation2 + $0x170] sm:$0xff] %vm52, %v871
    %953 = vst.msk [vmem:[#allocation2 + $0x178] sm:$0xff] %vm52, %v872
    %954 = vst.msk [vmem:[#allocation2 + $0x180] sm:$0xff] %vm52, %v873
    %955 = vst.msk [vmem:[#allocation2 + $0x188] sm:$0xff] %vm52, %v874
    %956 = vst.msk [vmem:[#allocation2 + $0x190] sm:$0xff] %vm52, %v875
    %957 = vst.msk [vmem:[#allocation2 + $0x198] sm:$0xff] %vm52, %v876
    %958 = vst.msk [vmem:[#allocation2 + $0x1a0] sm:$0xff] %vm52, %v877
    %959 = vst.msk [vmem:[#allocation2 + $0x1a8] sm:$0xff] %vm52, %v878
    %960 = vst.msk [vmem:[#allocation2 + $0x1b0] sm:$0xff] %vm52, %v879
    %961 = vst.msk [vmem:[#allocation2 + $0x1b8] sm:$0xff] %vm52, %v880
    %962 = vst.msk [vmem:[#allocation2 + $0x1c0] sm:$0xff] %vm52, %v881
    %963 = vst.msk [vmem:[#allocation2 + $0x1c8] sm:$0xff] %vm52, %v882
    %964 = vst.msk [vmem:[#allocation2 + $0x1d0] sm:$0xff] %vm52, %v883
    %965 = vst.msk [vmem:[#allocation2 + $0x1d8] sm:$0xff] %vm52, %v884
    %966 = vst.msk [vmem:[#allocation2 + $0x1e0] sm:$0xff] %vm52, %v885
    %967 = vst.msk [vmem:[#allocation2 + $0x1e8] sm:$0xff] %vm52, %v886
    %968 = vst.msk [vmem:[#allocation2 + $0x1f0] sm:$0xff] %vm52, %v887
    %969 = vst.msk [vmem:[#allocation2 + $0x1f8] sm:$0xff] %vm52, %v888
    %970 = vst.msk [vmem:[#allocation2 + $0x200] sm:$0xff] %vm52, %v889
    %971 = vst.msk [vmem:[#allocation2 + $0x208] sm:$0xff] %vm52, %v890
    %972 = vst.msk [vmem:[#allocation2 + $0x210] sm:$0xff] %vm52, %v891
    %973 = vst.msk [vmem:[#allocation2 + $0x218] sm:$0xff] %vm52, %v892
    %974 = vst.msk [vmem:[#allocation2 + $0x220] sm:$0xff] %vm52, %v893
    %975 = vst.msk [vmem:[#allocation2 + $0x228] sm:$0xff] %vm52, %v894
    %976 = vst.msk [vmem:[#allocation2 + $0x230] sm:$0xff] %vm52, %v895
    %977 = vst.msk [vmem:[#allocation2 + $0x238] sm:$0xff] %vm52, %v896
    %978 = vst.msk [vmem:[#allocation2 + $0x240] sm:$0xff] %vm52, %v897
    %979 = vst.msk [vmem:[#allocation2 + $0x248] sm:$0xff] %vm52, %v898
    %980 = vst.msk [vmem:[#allocation2 + $0x250] sm:$0xff] %vm52, %v899
    %981 = vst.msk [vmem:[#allocation2 + $0x258] sm:$0xff] %vm52, %v900
    %982 = vst.msk [vmem:[#allocation2 + $0x260] sm:$0xff] %vm52, %v901
    %983 = vst.msk [vmem:[#allocation2 + $0x268] sm:$0xff] %vm52, %v902
    %984 = vst.msk [vmem:[#allocation2 + $0x270] sm:$0xff] %vm52, %v903
    %985 = vst.msk [vmem:[#allocation2 + $0x278] sm:$0xff] %vm52, %v904
    %986 = vst.msk [vmem:[#allocation2 + $0x280] sm:$0xff] %vm52, %v905
    %v987 = vld [vmem:[%s0 + $0x1] sm:$0xff]
    %v988 = vld [vmem:[%s0 + $0x9] sm:$0xff]
    %v989 = vld [vmem:[%s0 + $0x11] sm:$0xff]
    %v990 = vld [vmem:[%s0 + $0x19] sm:$0xff]
    %v991 = vld [vmem:[%s0 + $0x21] sm:$0xff]
    %v992 = vld [vmem:[%s0 + $0x29] sm:$0xff]
    %v993 = vld [vmem:[%s0 + $0x31] sm:$0xff]
    %v994 = vld [vmem:[%s0 + $0x39] sm:$0xff]
    %v995 = vld [vmem:[%s0 + $0x41] sm:$0xff]
    %v996 = vld [vmem:[%s0 + $0x49] sm:$0xff]
    %v997 = vld [vmem:[%s0 + $0x51] sm:$0xff]
    %v998 = vld [vmem:[%s0 + $0x59] sm:$0xff]
    %v999 = vld [vmem:[%s0 + $0x61] sm:$0xff]
    %v1000 = vld [vmem:[%s0 + $0x69] sm:$0xff]
    %v1001 = vld [vmem:[%s0 + $0x71] sm:$0xff]
    %v1002 = vld [vmem:[%s0 + $0x79] sm:$0xff]
    %v1003 = vld [vmem:[%s0 + $0x81] sm:$0xff]
    %v1004 = vld [vmem:[%s0 + $0x89] sm:$0xff]
    %v1005 = vld [vmem:[%s0 + $0x91] sm:$0xff]
    %v1006 = vld [vmem:[%s0 + $0x99] sm:$0xff]
    %v1007 = vld [vmem:[%s0 + $0xa1] sm:$0xff]
    %v1008 = vld [vmem:[%s0 + $0xa9] sm:$0xff]
    %v1009 = vld [vmem:[%s0 + $0xb1] sm:$0xff]
    %v1010 = vld [vmem:[%s0 + $0xb9] sm:$0xff]
    %v1011 = vld [vmem:[%s0 + $0xc1] sm:$0xff]
    %v1012 = vld [vmem:[%s0 + $0xc9] sm:$0xff]
    %v1013 = vld [vmem:[%s0 + $0xd1] sm:$0xff]
    %v1014 = vld [vmem:[%s0 + $0xd9] sm:$0xff]
    %v1015 = vld [vmem:[%s0 + $0xe1] sm:$0xff]
    %v1016 = vld [vmem:[%s0 + $0xe9] sm:$0xff]
    %v1017 = vld [vmem:[%s0 + $0xf1] sm:$0xff]
    %v1018 = vld [vmem:[%s0 + $0xf9] sm:$0xff]
    %v1019 = vld [vmem:[%s0 + $0x101] sm:$0xff]
    %v1020 = vld [vmem:[%s0 + $0x109] sm:$0xff]
    %v1021 = vld [vmem:[%s0 + $0x111] sm:$0xff]
    %v1022 = vld [vmem:[%s0 + $0x119] sm:$0xff]
    %v1023 = vld [vmem:[%s0 + $0x121] sm:$0xff]
    %v1024 = vld [vmem:[%s0 + $0x129] sm:$0xff]
    %v1025 = vld [vmem:[%s0 + $0x131] sm:$0xff]
    %v1026 = vld [vmem:[%s0 + $0x139] sm:$0xff]
    %v1027 = vld [vmem:[%s0 + $0x141] sm:$0xff]
    %v1028 = vld [vmem:[%s0 + $0x149] sm:$0xff]
    %v1029 = vld [vmem:[%s0 + $0x151] sm:$0xff]
    %v1030 = vld [vmem:[%s0 + $0x159] sm:$0xff]
    %v1031 = vld [vmem:[%s0 + $0x161] sm:$0xff]
    %v1032 = vld [vmem:[%s0 + $0x169] sm:$0xff]
    %v1033 = vld [vmem:[%s0 + $0x171] sm:$0xff]
    %v1034 = vld [vmem:[%s0 + $0x179] sm:$0xff]
    %v1035 = vld [vmem:[%s0 + $0x181] sm:$0xff]
    %v1036 = vld [vmem:[%s0 + $0x189] sm:$0xff]
    %v1037 = vld [vmem:[%s0 + $0x191] sm:$0xff]
    %v1038 = vld [vmem:[%s0 + $0x199] sm:$0xff]
    %v1039 = vld [vmem:[%s0 + $0x1a1] sm:$0xff]
    %v1040 = vld [vmem:[%s0 + $0x1a9] sm:$0xff]
    %v1041 = vld [vmem:[%s0 + $0x1b1] sm:$0xff]
    %v1042 = vld [vmem:[%s0 + $0x1b9] sm:$0xff]
    %v1043 = vld [vmem:[%s0 + $0x1c1] sm:$0xff]
    %v1044 = vld [vmem:[%s0 + $0x1c9] sm:$0xff]
    %v1045 = vld [vmem:[%s0 + $0x1d1] sm:$0xff]
    %v1046 = vld [vmem:[%s0 + $0x1d9] sm:$0xff]
    %v1047 = vld [vmem:[%s0 + $0x1e1] sm:$0xff]
    %v1048 = vld [vmem:[%s0 + $0x1e9] sm:$0xff]
    %v1049 = vld [vmem:[%s0 + $0x1f1] sm:$0xff]
    %v1050 = vld [vmem:[%s0 + $0x1f9] sm:$0xff]
    %v1051 = vld [vmem:[%s0 + $0x201] sm:$0xff]
    %v1052 = vld [vmem:[%s0 + $0x209] sm:$0xff]
    %v1053 = vld [vmem:[%s0 + $0x211] sm:$0xff]
    %v1054 = vld [vmem:[%s0 + $0x219] sm:$0xff]
    %v1055 = vld [vmem:[%s0 + $0x221] sm:$0xff]
    %v1056 = vld [vmem:[%s0 + $0x229] sm:$0xff]
    %v1057 = vld [vmem:[%s0 + $0x231] sm:$0xff]
    %v1058 = vld [vmem:[%s0 + $0x239] sm:$0xff]
    %v1059 = vld [vmem:[%s0 + $0x241] sm:$0xff]
    %v1060 = vld [vmem:[%s0 + $0x249] sm:$0xff]
    %v1061 = vld [vmem:[%s0 + $0x251] sm:$0xff]
    %v1062 = vld [vmem:[%s0 + $0x259] sm:$0xff]
    %v1063 = vld [vmem:[%s0 + $0x261] sm:$0xff]
    %v1064 = vld [vmem:[%s0 + $0x269] sm:$0xff]
    %v1065 = vld [vmem:[%s0 + $0x271] sm:$0xff]
    %v1066 = vld [vmem:[%s0 + $0x279] sm:$0xff]
    %v1067 = vld [vmem:[%s0 + $0x281] sm:$0xff]
    %v1068 = vpack.c.bf16 %v988, %v987
    %v1069 = vpack.c.bf16 %v990, %v989
    %v1070 = vpack.c.bf16 %v992, %v991
    %v1071 = vpack.c.bf16 %v994, %v993
    %v1072 = vpack.c.bf16 %v996, %v995
    %v1073 = vpack.c.bf16 %v998, %v997
    %v1074 = vpack.c.bf16 %v1000, %v999
    %v1075 = vpack.c.bf16 %v1002, %v1001
    %v1076 = vpack.c.bf16 %v1004, %v1003
    %v1077 = vpack.c.bf16 %v1006, %v1005
    %v1078 = vpack.c.bf16 %v1008, %v1007
    %v1079 = vpack.c.bf16 %v1010, %v1009
    %v1080 = vpack.c.bf16 %v1012, %v1011
    %v1081 = vpack.c.bf16 %v1014, %v1013
    %v1082 = vpack.c.bf16 %v1016, %v1015
    %v1083 = vpack.c.bf16 %v1018, %v1017
    %v1084 = vpack.c.bf16 %v1020, %v1019
    %v1085 = vpack.c.bf16 %v1022, %v1021
    %v1086 = vpack.c.bf16 %v1024, %v1023
    %v1087 = vpack.c.bf16 %v1026, %v1025
    %v1088 = vpack.c.bf16 %v1028, %v1027
    %v1089 = vpack.c.bf16 %v1030, %v1029
    %v1090 = vpack.c.bf16 %v1032, %v1031
    %v1091 = vpack.c.bf16 %v1034, %v1033
    %v1092 = vpack.c.bf16 %v1036, %v1035
    %v1093 = vpack.c.bf16 %v1038, %v1037
    %v1094 = vpack.c.bf16 %v1040, %v1039
    %v1095 = vpack.c.bf16 %v1042, %v1041
    %v1096 = vpack.c.bf16 %v1044, %v1043
    %v1097 = vpack.c.bf16 %v1046, %v1045
    %v1098 = vpack.c.bf16 %v1048, %v1047
    %v1099 = vpack.c.bf16 %v1050, %v1049
    %v1100 = vpack.c.bf16 %v1052, %v1051
    %v1101 = vpack.c.bf16 %v1054, %v1053
    %v1102 = vpack.c.bf16 %v1056, %v1055
    %v1103 = vpack.c.bf16 %v1058, %v1057
    %v1104 = vpack.c.bf16 %v1060, %v1059
    %v1105 = vpack.c.bf16 %v1062, %v1061
    %v1106 = vpack.c.bf16 %v1064, %v1063
    %v1107 = vpack.c.bf16 %v1066, %v1065
    %v1108 = vpack.c.bf16 %v1067, %v1067
    %v1109 = vld [vmem:[#allocation2] sm:$0xff]
    %v1110 = vld [vmem:[#allocation2 + $0x8] sm:$0xff]
    %v1111 = vld [vmem:[#allocation2 + $0x10] sm:$0xff]
    %v1112 = vld [vmem:[#allocation2 + $0x18] sm:$0xff]
    %v1113 = vld [vmem:[#allocation2 + $0x20] sm:$0xff]
    %v1114 = vld [vmem:[#allocation2 + $0x28] sm:$0xff]
    %v1115 = vld [vmem:[#allocation2 + $0x30] sm:$0xff]
    %v1116 = vld [vmem:[#allocation2 + $0x38] sm:$0xff]
    %v1117 = vld [vmem:[#allocation2 + $0x40] sm:$0xff]
    %v1118 = vld [vmem:[#allocation2 + $0x48] sm:$0xff]
    %v1119 = vld [vmem:[#allocation2 + $0x50] sm:$0xff]
    %v1120 = vld [vmem:[#allocation2 + $0x58] sm:$0xff]
    %v1121 = vld [vmem:[#allocation2 + $0x60] sm:$0xff]
    %v1122 = vld [vmem:[#allocation2 + $0x68] sm:$0xff]
    %v1123 = vld [vmem:[#allocation2 + $0x70] sm:$0xff]
    %v1124 = vld [vmem:[#allocation2 + $0x78] sm:$0xff]
    %v1125 = vld [vmem:[#allocation2 + $0x80] sm:$0xff]
    %v1126 = vld [vmem:[#allocation2 + $0x88] sm:$0xff]
    %v1127 = vld [vmem:[#allocation2 + $0x90] sm:$0xff]
    %v1128 = vld [vmem:[#allocation2 + $0x98] sm:$0xff]
    %v1129 = vld [vmem:[#allocation2 + $0xa0] sm:$0xff]
    %v1130 = vld [vmem:[#allocation2 + $0xa8] sm:$0xff]
    %v1131 = vld [vmem:[#allocation2 + $0xb0] sm:$0xff]
    %v1132 = vld [vmem:[#allocation2 + $0xb8] sm:$0xff]
    %v1133 = vld [vmem:[#allocation2 + $0xc0] sm:$0xff]
    %v1134 = vld [vmem:[#allocation2 + $0xc8] sm:$0xff]
    %v1135 = vld [vmem:[#allocation2 + $0xd0] sm:$0xff]
    %v1136 = vld [vmem:[#allocation2 + $0xd8] sm:$0xff]
    %v1137 = vld [vmem:[#allocation2 + $0xe0] sm:$0xff]
    %v1138 = vld [vmem:[#allocation2 + $0xe8] sm:$0xff]
    %v1139 = vld [vmem:[#allocation2 + $0xf0] sm:$0xff]
    %v1140 = vld [vmem:[#allocation2 + $0xf8] sm:$0xff]
    %v1141 = vld [vmem:[#allocation2 + $0x100] sm:$0xff]
    %v1142 = vld [vmem:[#allocation2 + $0x108] sm:$0xff]
    %v1143 = vld [vmem:[#allocation2 + $0x110] sm:$0xff]
    %v1144 = vld [vmem:[#allocation2 + $0x118] sm:$0xff]
    %v1145 = vld [vmem:[#allocation2 + $0x120] sm:$0xff]
    %v1146 = vld [vmem:[#allocation2 + $0x128] sm:$0xff]
    %v1147 = vld [vmem:[#allocation2 + $0x130] sm:$0xff]
    %v1148 = vld [vmem:[#allocation2 + $0x138] sm:$0xff]
    %v1149 = vld [vmem:[#allocation2 + $0x140] sm:$0xff]
    %v1150 = vld [vmem:[#allocation2 + $0x148] sm:$0xff]
    %v1151 = vld [vmem:[#allocation2 + $0x150] sm:$0xff]
    %v1152 = vld [vmem:[#allocation2 + $0x158] sm:$0xff]
    %v1153 = vld [vmem:[#allocation2 + $0x160] sm:$0xff]
    %v1154 = vld [vmem:[#allocation2 + $0x168] sm:$0xff]
    %v1155 = vld [vmem:[#allocation2 + $0x170] sm:$0xff]
    %v1156 = vld [vmem:[#allocation2 + $0x178] sm:$0xff]
    %v1157 = vld [vmem:[#allocation2 + $0x180] sm:$0xff]
    %v1158 = vld [vmem:[#allocation2 + $0x188] sm:$0xff]
    %v1159 = vld [vmem:[#allocation2 + $0x190] sm:$0xff]
    %v1160 = vld [vmem:[#allocation2 + $0x198] sm:$0xff]
    %v1161 = vld [vmem:[#allocation2 + $0x1a0] sm:$0xff]
    %v1162 = vld [vmem:[#allocation2 + $0x1a8] sm:$0xff]
    %v1163 = vld [vmem:[#allocation2 + $0x1b0] sm:$0xff]
    %v1164 = vld [vmem:[#allocation2 + $0x1b8] sm:$0xff]
    %v1165 = vld [vmem:[#allocation2 + $0x1c0] sm:$0xff]
    %v1166 = vld [vmem:[#allocation2 + $0x1c8] sm:$0xff]
    %v1167 = vld [vmem:[#allocation2 + $0x1d0] sm:$0xff]
    %v1168 = vld [vmem:[#allocation2 + $0x1d8] sm:$0xff]
    %v1169 = vld [vmem:[#allocation2 + $0x1e0] sm:$0xff]
    %v1170 = vld [vmem:[#allocation2 + $0x1e8] sm:$0xff]
    %v1171 = vld [vmem:[#allocation2 + $0x1f0] sm:$0xff]
    %v1172 = vld [vmem:[#allocation2 + $0x1f8] sm:$0xff]
    %v1173 = vld [vmem:[#allocation2 + $0x200] sm:$0xff]
    %v1174 = vld [vmem:[#allocation2 + $0x208] sm:$0xff]
    %v1175 = vld [vmem:[#allocation2 + $0x210] sm:$0xff]
    %v1176 = vld [vmem:[#allocation2 + $0x218] sm:$0xff]
    %v1177 = vld [vmem:[#allocation2 + $0x220] sm:$0xff]
    %v1178 = vld [vmem:[#allocation2 + $0x228] sm:$0xff]
    %v1179 = vld [vmem:[#allocation2 + $0x230] sm:$0xff]
    %v1180 = vld [vmem:[#allocation2 + $0x238] sm:$0xff]
    %v1181 = vld [vmem:[#allocation2 + $0x240] sm:$0xff]
    %v1182 = vld [vmem:[#allocation2 + $0x248] sm:$0xff]
    %v1183 = vld [vmem:[#allocation2 + $0x250] sm:$0xff]
    %v1184 = vld [vmem:[#allocation2 + $0x258] sm:$0xff]
    %v1185 = vld [vmem:[#allocation2 + $0x260] sm:$0xff]
    %v1186 = vld [vmem:[#allocation2 + $0x268] sm:$0xff]
    %v1187 = vld [vmem:[#allocation2 + $0x270] sm:$0xff]
    %v1188 = vld [vmem:[#allocation2 + $0x278] sm:$0xff]
    %v1189 = vld [vmem:[#allocation2 + $0x280] sm:$0xff]
    %s1190 = scalar_lea.vmem %s2, 4
    %v1191 = vld [vmem:[%s1190] sm:$0xf]
    %v1193 = vsel %vm52, %v1068, 0
    %v1196 = vsel %vm52, %v1069, 0
    %v1199 = vsel %vm52, %v1070, 0
    %v1202 = vsel %vm52, %v1071, 0
    %v1205 = vsel %vm52, %v1072, 0
    %v1208 = vsel %vm52, %v1073, 0
    %v1211 = vsel %vm52, %v1074, 0
    %v1214 = vsel %vm52, %v1075, 0
    %v1217 = vsel %vm52, %v1076, 0
    %v1220 = vsel %vm52, %v1077, 0
    %v1223 = vsel %vm52, %v1078, 0
    %v1226 = vsel %vm52, %v1079, 0
    %v1229 = vsel %vm52, %v1080, 0
    %v1232 = vsel %vm52, %v1081, 0
    %v1235 = vsel %vm52, %v1082, 0
    %v1238 = vsel %vm52, %v1083, 0
    %v1241 = vsel %vm52, %v1084, 0
    %v1244 = vsel %vm52, %v1085, 0
    %v1247 = vsel %vm52, %v1086, 0
    %v1250 = vsel %vm52, %v1087, 0
    %v1253 = vsel %vm52, %v1088, 0
    %v1256 = vsel %vm52, %v1089, 0
    %v1259 = vsel %vm52, %v1090, 0
    %v1262 = vsel %vm52, %v1091, 0
    %v1265 = vsel %vm52, %v1092, 0
    %v1268 = vsel %vm52, %v1093, 0
    %v1271 = vsel %vm52, %v1094, 0
    %v1274 = vsel %vm52, %v1095, 0
    %v1277 = vsel %vm52, %v1096, 0
    %v1280 = vsel %vm52, %v1097, 0
    %v1283 = vsel %vm52, %v1098, 0
    %v1286 = vsel %vm52, %v1099, 0
    %v1289 = vsel %vm52, %v1100, 0
    %v1292 = vsel %vm52, %v1101, 0
    %v1295 = vsel %vm52, %v1102, 0
    %v1298 = vsel %vm52, %v1103, 0
    %v1301 = vsel %vm52, %v1104, 0
    %v1304 = vsel %vm52, %v1105, 0
    %v1307 = vsel %vm52, %v1106, 0
    %v1310 = vsel %vm52, %v1107, 0
    %v1313 = vsel %vm52, %v1108, 0
    %v1316 = vsel %vm461, %v1191, 0
    %1318 = vmatprep.subr.bf16.mxu0 0
    %1319 = vmatpush1.bf16.msra.mxu0 0
    %1320 = vmatprep.subr.bf16.mxu0 0
    %1321 = vmatpush1.bf16.msra.mxu0 0
    %1322 = vmatprep.subr.bf16.mxu0 0
    %1323 = vmatpush1.bf16.msra.mxu0 0
    %1324 = vmatprep.subr.bf16.mxu0 0
    %1325 = vmatpush1.bf16.msra.mxu0 0
    %1326 = vmatprep.subr.bf16.mxu0 0
    %1327 = vmatpush1.bf16.msra.mxu0 0
    %1328 = vmatprep.subr.bf16.mxu0 0
    %1329 = vmatpush1.bf16.msra.mxu0 0
    %1330 = vmatprep.subr.bf16.mxu0 0
    %1331 = vmatpush1.bf16.msra.mxu0 0
    %1332 = vmatprep.subr.bf16.mxu0 0
    %1333 = vmatpush1.bf16.msra.mxu0 %v1316
    %1334 = vmatprep.subr.bf16.mxu0 0
    %1335 = vmatpush2.bf16.msra.mxu0 0
    %1336 = vmatprep.subr.bf16.mxu0 0
    %1337 = vmatpush2.bf16.msra.mxu0 0
    %1338 = vmatprep.subr.bf16.mxu0 0
    %1339 = vmatpush2.bf16.msra.mxu0 0
    %1340 = vmatprep.subr.bf16.mxu0 0
    %1341 = vmatpush2.bf16.msra.mxu0 0
    %1342 = vmatprep.subr.bf16.mxu0 0
    %1343 = vmatpush2.bf16.msra.mxu0 0
    %1344 = vmatprep.subr.bf16.mxu0 0
    %1345 = vmatpush2.bf16.msra.mxu0 0
    %1346 = vmatprep.subr.bf16.mxu0 0
    %1347 = vmatpush2.bf16.msra.mxu0 0
    %1348 = vmatprep.subr.bf16.mxu0 0
    %1349 = vmatpush2.bf16.msra.mxu0 0
    %1350 = vmatprep.mubr.bf16.mxu0 0
    %1351 = vmatmul.mubr.bf16.gmra.mxu0 %v1193
    %v1352 = vpop.f32.mrf.mxu0
    %v1353 = vadd.f32 0.0, %v1352
    %v1354 = vpop.f32.mrf.mxu0
    %v1355 = vpop.f32.mrf.mxu0
    %v1356 = vadd.f32 0.0, %v1355
    %v1357 = vpop.f32.mrf.mxu0
    %1358 = vmatprep.mubr.bf16.mxu0 0
    %1359 = vmatmul.mubr.bf16.gmra.mxu0 %v1196
    %v1360 = vpop.f32.mrf.mxu0
    %v1361 = vadd.f32 0.0, %v1360
    %v1362 = vpop.f32.mrf.mxu0
    %v1363 = vpop.f32.mrf.mxu0
    %v1364 = vadd.f32 0.0, %v1363
    %v1365 = vpop.f32.mrf.mxu0
    %1366 = vmatprep.mubr.bf16.mxu0 0
    %1367 = vmatmul.mubr.bf16.gmra.mxu0 %v1199
    %v1368 = vpop.f32.mrf.mxu0
    %v1369 = vadd.f32 0.0, %v1368
    %v1370 = vpop.f32.mrf.mxu0
    %v1371 = vpop.f32.mrf.mxu0
    %v1372 = vadd.f32 0.0, %v1371
    %v1373 = vpop.f32.mrf.mxu0
    %1374 = vmatprep.mubr.bf16.mxu0 0
    %1375 = vmatmul.mubr.bf16.gmra.mxu0 %v1202
    %v1376 = vpop.f32.mrf.mxu0
    %v1377 = vadd.f32 0.0, %v1376
    %v1378 = vpop.f32.mrf.mxu0
    %v1379 = vpop.f32.mrf.mxu0
    %v1380 = vadd.f32 0.0, %v1379
    %v1381 = vpop.f32.mrf.mxu0
    %1382 = vmatprep.mubr.bf16.mxu0 0
    %1383 = vmatmul.mubr.bf16.gmra.mxu0 %v1205
    %v1384 = vpop.f32.mrf.mxu0
    %v1385 = vadd.f32 0.0, %v1384
    %v1386 = vpop.f32.mrf.mxu0
    %v1387 = vpop.f32.mrf.mxu0
    %v1388 = vadd.f32 0.0, %v1387
    %v1389 = vpop.f32.mrf.mxu0
    %1390 = vmatprep.mubr.bf16.mxu0 0
    %1391 = vmatmul.mubr.bf16.gmra.mxu0 %v1208
    %v1392 = vpop.f32.mrf.mxu0
    %v1393 = vadd.f32 0.0, %v1392
    %v1394 = vpop.f32.mrf.mxu0
    %v1395 = vpop.f32.mrf.mxu0
    %v1396 = vadd.f32 0.0, %v1395
    %v1397 = vpop.f32.mrf.mxu0
    %1398 = vmatprep.mubr.bf16.mxu0 0
    %1399 = vmatmul.mubr.bf16.gmra.mxu0 %v1211
    %v1400 = vpop.f32.mrf.mxu0
    %v1401 = vadd.f32 0.0, %v1400
    %v1402 = vpop.f32.mrf.mxu0
    %v1403 = vpop.f32.mrf.mxu0
    %v1404 = vadd.f32 0.0, %v1403
    %v1405 = vpop.f32.mrf.mxu0
    %1406 = vmatprep.mubr.bf16.mxu0 0
    %1407 = vmatmul.mubr.bf16.gmra.mxu0 %v1214
    %v1408 = vpop.f32.mrf.mxu0
    %v1409 = vadd.f32 0.0, %v1408
    %v1410 = vpop.f32.mrf.mxu0
    %v1411 = vpop.f32.mrf.mxu0
    %v1412 = vadd.f32 0.0, %v1411
    %v1413 = vpop.f32.mrf.mxu0
    %1414 = vmatprep.mubr.bf16.mxu0 0
    %1415 = vmatmul.mubr.bf16.gmra.mxu0 %v1217
    %v1416 = vpop.f32.mrf.mxu0
    %v1417 = vadd.f32 0.0, %v1416
    %v1418 = vpop.f32.mrf.mxu0
    %v1419 = vpop.f32.mrf.mxu0
    %v1420 = vadd.f32 0.0, %v1419
    %v1421 = vpop.f32.mrf.mxu0
    %1422 = vmatprep.mubr.bf16.mxu0 0
    %1423 = vmatmul.mubr.bf16.gmra.mxu0 %v1220
    %v1424 = vpop.f32.mrf.mxu0
    %v1425 = vadd.f32 0.0, %v1424
    %v1426 = vpop.f32.mrf.mxu0
    %v1427 = vpop.f32.mrf.mxu0
    %v1428 = vadd.f32 0.0, %v1427
    %v1429 = vpop.f32.mrf.mxu0
    %1430 = vmatprep.mubr.bf16.mxu0 0
    %1431 = vmatmul.mubr.bf16.gmra.mxu0 %v1223
    %v1432 = vpop.f32.mrf.mxu0
    %v1433 = vadd.f32 0.0, %v1432
    %v1434 = vpop.f32.mrf.mxu0
    %v1435 = vpop.f32.mrf.mxu0
    %v1436 = vadd.f32 0.0, %v1435
    %v1437 = vpop.f32.mrf.mxu0
    %1438 = vmatprep.mubr.bf16.mxu0 0
    %1439 = vmatmul.mubr.bf16.gmra.mxu0 %v1226
    %v1440 = vpop.f32.mrf.mxu0
    %v1441 = vadd.f32 0.0, %v1440
    %v1442 = vpop.f32.mrf.mxu0
    %v1443 = vpop.f32.mrf.mxu0
    %v1444 = vadd.f32 0.0, %v1443
    %v1445 = vpop.f32.mrf.mxu0
    %1446 = vmatprep.mubr.bf16.mxu0 0
    %1447 = vmatmul.mubr.bf16.gmra.mxu0 %v1229
    %v1448 = vpop.f32.mrf.mxu0
    %v1449 = vadd.f32 0.0, %v1448
    %v1450 = vpop.f32.mrf.mxu0
    %v1451 = vpop.f32.mrf.mxu0
    %v1452 = vadd.f32 0.0, %v1451
    %v1453 = vpop.f32.mrf.mxu0
    %1454 = vmatprep.mubr.bf16.mxu0 0
    %1455 = vmatmul.mubr.bf16.gmra.mxu0 %v1232
    %v1456 = vpop.f32.mrf.mxu0
    %v1457 = vadd.f32 0.0, %v1456
    %v1458 = vpop.f32.mrf.mxu0
    %v1459 = vpop.f32.mrf.mxu0
    %v1460 = vadd.f32 0.0, %v1459
    %v1461 = vpop.f32.mrf.mxu0
    %1462 = vmatprep.mubr.bf16.mxu0 0
    %1463 = vmatmul.mubr.bf16.gmra.mxu0 %v1235
    %v1464 = vpop.f32.mrf.mxu0
    %v1465 = vadd.f32 0.0, %v1464
    %v1466 = vpop.f32.mrf.mxu0
    %v1467 = vpop.f32.mrf.mxu0
    %v1468 = vadd.f32 0.0, %v1467
    %v1469 = vpop.f32.mrf.mxu0
    %1470 = vmatprep.mubr.bf16.mxu0 0
    %1471 = vmatmul.mubr.bf16.gmra.mxu0 %v1238
    %v1472 = vpop.f32.mrf.mxu0
    %v1473 = vadd.f32 0.0, %v1472
    %v1474 = vpop.f32.mrf.mxu0
    %v1475 = vpop.f32.mrf.mxu0
    %v1476 = vadd.f32 0.0, %v1475
    %v1477 = vpop.f32.mrf.mxu0
    %1478 = vmatprep.mubr.bf16.mxu0 0
    %1479 = vmatmul.mubr.bf16.gmra.mxu0 %v1241
    %v1480 = vpop.f32.mrf.mxu0
    %v1481 = vadd.f32 0.0, %v1480
    %v1482 = vpop.f32.mrf.mxu0
    %v1483 = vpop.f32.mrf.mxu0
    %v1484 = vadd.f32 0.0, %v1483
    %v1485 = vpop.f32.mrf.mxu0
    %1486 = vmatprep.mubr.bf16.mxu0 0
    %1487 = vmatmul.mubr.bf16.gmra.mxu0 %v1244
    %v1488 = vpop.f32.mrf.mxu0
    %v1489 = vadd.f32 0.0, %v1488
    %v1490 = vpop.f32.mrf.mxu0
    %v1491 = vpop.f32.mrf.mxu0
    %v1492 = vadd.f32 0.0, %v1491
    %v1493 = vpop.f32.mrf.mxu0
    %1494 = vmatprep.mubr.bf16.mxu0 0
    %1495 = vmatmul.mubr.bf16.gmra.mxu0 %v1247
    %v1496 = vpop.f32.mrf.mxu0
    %v1497 = vadd.f32 0.0, %v1496
    %v1498 = vpop.f32.mrf.mxu0
    %v1499 = vpop.f32.mrf.mxu0
    %v1500 = vadd.f32 0.0, %v1499
    %v1501 = vpop.f32.mrf.mxu0
    %1502 = vmatprep.mubr.bf16.mxu0 0
    %1503 = vmatmul.mubr.bf16.gmra.mxu0 %v1250
    %v1504 = vpop.f32.mrf.mxu0
    %v1505 = vadd.f32 0.0, %v1504
    %v1506 = vpop.f32.mrf.mxu0
    %v1507 = vpop.f32.mrf.mxu0
    %v1508 = vadd.f32 0.0, %v1507
    %v1509 = vpop.f32.mrf.mxu0
    %1510 = vmatprep.mubr.bf16.mxu0 0
    %1511 = vmatmul.mubr.bf16.gmra.mxu0 %v1253
    %v1512 = vpop.f32.mrf.mxu0
    %v1513 = vadd.f32 0.0, %v1512
    %v1514 = vpop.f32.mrf.mxu0
    %v1515 = vpop.f32.mrf.mxu0
    %v1516 = vadd.f32 0.0, %v1515
    %v1517 = vpop.f32.mrf.mxu0
    %1518 = vmatprep.mubr.bf16.mxu0 0
    %1519 = vmatmul.mubr.bf16.gmra.mxu0 %v1256
    %v1520 = vpop.f32.mrf.mxu0
    %v1521 = vadd.f32 0.0, %v1520
    %v1522 = vpop.f32.mrf.mxu0
    %v1523 = vpop.f32.mrf.mxu0
    %v1524 = vadd.f32 0.0, %v1523
    %v1525 = vpop.f32.mrf.mxu0
    %1526 = vmatprep.mubr.bf16.mxu0 0
    %1527 = vmatmul.mubr.bf16.gmra.mxu0 %v1259
    %v1528 = vpop.f32.mrf.mxu0
    %v1529 = vadd.f32 0.0, %v1528
    %v1530 = vpop.f32.mrf.mxu0
    %v1531 = vpop.f32.mrf.mxu0
    %v1532 = vadd.f32 0.0, %v1531
    %v1533 = vpop.f32.mrf.mxu0
    %1534 = vmatprep.mubr.bf16.mxu0 0
    %1535 = vmatmul.mubr.bf16.gmra.mxu0 %v1262
    %v1536 = vpop.f32.mrf.mxu0
    %v1537 = vadd.f32 0.0, %v1536
    %v1538 = vpop.f32.mrf.mxu0
    %v1539 = vpop.f32.mrf.mxu0
    %v1540 = vadd.f32 0.0, %v1539
    %v1541 = vpop.f32.mrf.mxu0
    %1542 = vmatprep.mubr.bf16.mxu0 0
    %1543 = vmatmul.mubr.bf16.gmra.mxu0 %v1265
    %v1544 = vpop.f32.mrf.mxu0
    %v1545 = vadd.f32 0.0, %v1544
    %v1546 = vpop.f32.mrf.mxu0
    %v1547 = vpop.f32.mrf.mxu0
    %v1548 = vadd.f32 0.0, %v1547
    %v1549 = vpop.f32.mrf.mxu0
    %1550 = vmatprep.mubr.bf16.mxu0 0
    %1551 = vmatmul.mubr.bf16.gmra.mxu0 %v1268
    %v1552 = vpop.f32.mrf.mxu0
    %v1553 = vadd.f32 0.0, %v1552
    %v1554 = vpop.f32.mrf.mxu0
    %v1555 = vpop.f32.mrf.mxu0
    %v1556 = vadd.f32 0.0, %v1555
    %v1557 = vpop.f32.mrf.mxu0
    %1558 = vmatprep.mubr.bf16.mxu0 0
    %1559 = vmatmul.mubr.bf16.gmra.mxu0 %v1271
    %v1560 = vpop.f32.mrf.mxu0
    %v1561 = vadd.f32 0.0, %v1560
    %v1562 = vpop.f32.mrf.mxu0
    %v1563 = vpop.f32.mrf.mxu0
    %v1564 = vadd.f32 0.0, %v1563
    %v1565 = vpop.f32.mrf.mxu0
    %1566 = vmatprep.mubr.bf16.mxu0 0
    %1567 = vmatmul.mubr.bf16.gmra.mxu0 %v1274
    %v1568 = vpop.f32.mrf.mxu0
    %v1569 = vadd.f32 0.0, %v1568
    %v1570 = vpop.f32.mrf.mxu0
    %v1571 = vpop.f32.mrf.mxu0
    %v1572 = vadd.f32 0.0, %v1571
    %v1573 = vpop.f32.mrf.mxu0
    %1574 = vmatprep.mubr.bf16.mxu0 0
    %1575 = vmatmul.mubr.bf16.gmra.mxu0 %v1277
    %v1576 = vpop.f32.mrf.mxu0
    %v1577 = vadd.f32 0.0, %v1576
    %v1578 = vpop.f32.mrf.mxu0
    %v1579 = vpop.f32.mrf.mxu0
    %v1580 = vadd.f32 0.0, %v1579
    %v1581 = vpop.f32.mrf.mxu0
    %1582 = vmatprep.mubr.bf16.mxu0 0
    %1583 = vmatmul.mubr.bf16.gmra.mxu0 %v1280
    %v1584 = vpop.f32.mrf.mxu0
    %v1585 = vadd.f32 0.0, %v1584
    %v1586 = vpop.f32.mrf.mxu0
    %v1587 = vpop.f32.mrf.mxu0
    %v1588 = vadd.f32 0.0, %v1587
    %v1589 = vpop.f32.mrf.mxu0
    %1590 = vmatprep.mubr.bf16.mxu0 0
    %1591 = vmatmul.mubr.bf16.gmra.mxu0 %v1283
    %v1592 = vpop.f32.mrf.mxu0
    %v1593 = vadd.f32 0.0, %v1592
    %v1594 = vpop.f32.mrf.mxu0
    %v1595 = vpop.f32.mrf.mxu0
    %v1596 = vadd.f32 0.0, %v1595
    %v1597 = vpop.f32.mrf.mxu0
    %1598 = vmatprep.mubr.bf16.mxu0 0
    %1599 = vmatmul.mubr.bf16.gmra.mxu0 %v1286
    %v1600 = vpop.f32.mrf.mxu0
    %v1601 = vadd.f32 0.0, %v1600
    %v1602 = vpop.f32.mrf.mxu0
    %v1603 = vpop.f32.mrf.mxu0
    %v1604 = vadd.f32 0.0, %v1603
    %v1605 = vpop.f32.mrf.mxu0
    %1606 = vmatprep.mubr.bf16.mxu0 0
    %1607 = vmatmul.mubr.bf16.gmra.mxu0 %v1289
    %v1608 = vpop.f32.mrf.mxu0
    %v1609 = vadd.f32 0.0, %v1608
    %v1610 = vpop.f32.mrf.mxu0
    %v1611 = vpop.f32.mrf.mxu0
    %v1612 = vadd.f32 0.0, %v1611
    %v1613 = vpop.f32.mrf.mxu0
    %1614 = vmatprep.mubr.bf16.mxu0 0
    %1615 = vmatmul.mubr.bf16.gmra.mxu0 %v1292
    %v1616 = vpop.f32.mrf.mxu0
    %v1617 = vadd.f32 0.0, %v1616
    %v1618 = vpop.f32.mrf.mxu0
    %v1619 = vpop.f32.mrf.mxu0
    %v1620 = vadd.f32 0.0, %v1619
    %v1621 = vpop.f32.mrf.mxu0
    %1622 = vmatprep.mubr.bf16.mxu0 0
    %1623 = vmatmul.mubr.bf16.gmra.mxu0 %v1295
    %v1624 = vpop.f32.mrf.mxu0
    %v1625 = vadd.f32 0.0, %v1624
    %v1626 = vpop.f32.mrf.mxu0
    %v1627 = vpop.f32.mrf.mxu0
    %v1628 = vadd.f32 0.0, %v1627
    %v1629 = vpop.f32.mrf.mxu0
    %1630 = vmatprep.mubr.bf16.mxu0 0
    %1631 = vmatmul.mubr.bf16.gmra.mxu0 %v1298
    %v1632 = vpop.f32.mrf.mxu0
    %v1633 = vadd.f32 0.0, %v1632
    %v1634 = vpop.f32.mrf.mxu0
    %v1635 = vpop.f32.mrf.mxu0
    %v1636 = vadd.f32 0.0, %v1635
    %v1637 = vpop.f32.mrf.mxu0
    %1638 = vmatprep.mubr.bf16.mxu0 0
    %1639 = vmatmul.mubr.bf16.gmra.mxu0 %v1301
    %v1640 = vpop.f32.mrf.mxu0
    %v1641 = vadd.f32 0.0, %v1640
    %v1642 = vpop.f32.mrf.mxu0
    %v1643 = vpop.f32.mrf.mxu0
    %v1644 = vadd.f32 0.0, %v1643
    %v1645 = vpop.f32.mrf.mxu0
    %1646 = vmatprep.mubr.bf16.mxu0 0
    %1647 = vmatmul.mubr.bf16.gmra.mxu0 %v1304
    %v1648 = vpop.f32.mrf.mxu0
    %v1649 = vadd.f32 0.0, %v1648
    %v1650 = vpop.f32.mrf.mxu0
    %v1651 = vpop.f32.mrf.mxu0
    %v1652 = vadd.f32 0.0, %v1651
    %v1653 = vpop.f32.mrf.mxu0
    %1654 = vmatprep.mubr.bf16.mxu0 0
    %1655 = vmatmul.mubr.bf16.gmra.mxu0 %v1307
    %v1656 = vpop.f32.mrf.mxu0
    %v1657 = vadd.f32 0.0, %v1656
    %v1658 = vpop.f32.mrf.mxu0
    %v1659 = vpop.f32.mrf.mxu0
    %v1660 = vadd.f32 0.0, %v1659
    %v1661 = vpop.f32.mrf.mxu0
    %1662 = vmatprep.mubr.bf16.mxu0 0
    %1663 = vmatmul.mubr.bf16.gmra.mxu0 %v1310
    %v1664 = vpop.f32.mrf.mxu0
    %v1665 = vadd.f32 0.0, %v1664
    %v1666 = vpop.f32.mrf.mxu0
    %v1667 = vpop.f32.mrf.mxu0
    %v1668 = vadd.f32 0.0, %v1667
    %v1669 = vpop.f32.mrf.mxu0
    %1670 = vmatprep.mubr.bf16.mxu0 0
    %1671 = vmatmul.mubr.bf16.gmra.mxu0 %v1313
    %v1672 = vpop.f32.mrf.mxu0
    %v1673 = vadd.f32 0.0, %v1672
    %v1674 = vpop.f32.mrf.mxu0
    %v1675 = vpop.f32.mrf.mxu0
    %v1676 = vpop.f32.mrf.mxu0
    %1677 = vdwg.mxu0
    %v1678 = vadd.f32 %v1109, %v1353
    %v1679 = vadd.f32 %v1110, %v1356
    %v1680 = vadd.f32 %v1111, %v1361
    %v1681 = vadd.f32 %v1112, %v1364
    %v1682 = vadd.f32 %v1113, %v1369
    %v1683 = vadd.f32 %v1114, %v1372
    %v1684 = vadd.f32 %v1115, %v1377
    %v1685 = vadd.f32 %v1116, %v1380
    %v1686 = vadd.f32 %v1117, %v1385
    %v1687 = vadd.f32 %v1118, %v1388
    %v1688 = vadd.f32 %v1119, %v1393
    %v1689 = vadd.f32 %v1120, %v1396
    %v1690 = vadd.f32 %v1121, %v1401
    %v1691 = vadd.f32 %v1122, %v1404
    %v1692 = vadd.f32 %v1123, %v1409
    %v1693 = vadd.f32 %v1124, %v1412
    %v1694 = vadd.f32 %v1125, %v1417
    %v1695 = vadd.f32 %v1126, %v1420
    %v1696 = vadd.f32 %v1127, %v1425
    %v1697 = vadd.f32 %v1128, %v1428
    %v1698 = vadd.f32 %v1129, %v1433
    %v1699 = vadd.f32 %v1130, %v1436
    %v1700 = vadd.f32 %v1131, %v1441
    %v1701 = vadd.f32 %v1132, %v1444
    %v1702 = vadd.f32 %v1133, %v1449
    %v1703 = vadd.f32 %v1134, %v1452
    %v1704 = vadd.f32 %v1135, %v1457
    %v1705 = vadd.f32 %v1136, %v1460
    %v1706 = vadd.f32 %v1137, %v1465
    %v1707 = vadd.f32 %v1138, %v1468
    %v1708 = vadd.f32 %v1139, %v1473
    %v1709 = vadd.f32 %v1140, %v1476
    %v1710 = vadd.f32 %v1141, %v1481
    %v1711 = vadd.f32 %v1142, %v1484
    %v1712 = vadd.f32 %v1143, %v1489
    %v1713 = vadd.f32 %v1144, %v1492
    %v1714 = vadd.f32 %v1145, %v1497
    %v1715 = vadd.f32 %v1146, %v1500
    %v1716 = vadd.f32 %v1147, %v1505
    %v1717 = vadd.f32 %v1148, %v1508
    %v1718 = vadd.f32 %v1149, %v1513
    %v1719 = vadd.f32 %v1150, %v1516
    %v1720 = vadd.f32 %v1151, %v1521
    %v1721 = vadd.f32 %v1152, %v1524
    %v1722 = vadd.f32 %v1153, %v1529
    %v1723 = vadd.f32 %v1154, %v1532
    %v1724 = vadd.f32 %v1155, %v1537
    %v1725 = vadd.f32 %v1156, %v1540
    %v1726 = vadd.f32 %v1157, %v1545
    %v1727 = vadd.f32 %v1158, %v1548
    %v1728 = vadd.f32 %v1159, %v1553
    %v1729 = vadd.f32 %v1160, %v1556
    %v1730 = vadd.f32 %v1161, %v1561
    %v1731 = vadd.f32 %v1162, %v1564
    %v1732 = vadd.f32 %v1163, %v1569
    %v1733 = vadd.f32 %v1164, %v1572
    %v1734 = vadd.f32 %v1165, %v1577
    %v1735 = vadd.f32 %v1166, %v1580
    %v1736 = vadd.f32 %v1167, %v1585
    %v1737 = vadd.f32 %v1168, %v1588
    %v1738 = vadd.f32 %v1169, %v1593
    %v1739 = vadd.f32 %v1170, %v1596
    %v1740 = vadd.f32 %v1171, %v1601
    %v1741 = vadd.f32 %v1172, %v1604
    %v1742 = vadd.f32 %v1173, %v1609
    %v1743 = vadd.f32 %v1174, %v1612
    %v1744 = vadd.f32 %v1175, %v1617
    %v1745 = vadd.f32 %v1176, %v1620
    %v1746 = vadd.f32 %v1177, %v1625
    %v1747 = vadd.f32 %v1178, %v1628
    %v1748 = vadd.f32 %v1179, %v1633
    %v1749 = vadd.f32 %v1180, %v1636
    %v1750 = vadd.f32 %v1181, %v1641
    %v1751 = vadd.f32 %v1182, %v1644
    %v1752 = vadd.f32 %v1183, %v1649
    %v1753 = vadd.f32 %v1184, %v1652
    %v1754 = vadd.f32 %v1185, %v1657
    %v1755 = vadd.f32 %v1186, %v1660
    %v1756 = vadd.f32 %v1187, %v1665
    %v1757 = vadd.f32 %v1188, %v1668
    %v1758 = vadd.f32 %v1189, %v1673
    %1759 = vst.msk [vmem:[#allocation2] sm:$0xff] %vm52, %v1678
    %1760 = vst.msk [vmem:[#allocation2 + $0x8] sm:$0xff] %vm52, %v1679
    %1761 = vst.msk [vmem:[#allocation2 + $0x10] sm:$0xff] %vm52, %v1680
    %1762 = vst.msk [vmem:[#allocation2 + $0x18] sm:$0xff] %vm52, %v1681
    %1763 = vst.msk [vmem:[#allocation2 + $0x20] sm:$0xff] %vm52, %v1682
    %1764 = vst.msk [vmem:[#allocation2 + $0x28] sm:$0xff] %vm52, %v1683
    %1765 = vst.msk [vmem:[#allocation2 + $0x30] sm:$0xff] %vm52, %v1684
    %1766 = vst.msk [vmem:[#allocation2 + $0x38] sm:$0xff] %vm52, %v1685
    %1767 = vst.msk [vmem:[#allocation2 + $0x40] sm:$0xff] %vm52, %v1686
    %1768 = vst.msk [vmem:[#allocation2 + $0x48] sm:$0xff] %vm52, %v1687
    %1769 = vst.msk [vmem:[#allocation2 + $0x50] sm:$0xff] %vm52, %v1688
    %1770 = vst.msk [vmem:[#allocation2 + $0x58] sm:$0xff] %vm52, %v1689
    %1771 = vst.msk [vmem:[#allocation2 + $0x60] sm:$0xff] %vm52, %v1690
    %1772 = vst.msk [vmem:[#allocation2 + $0x68] sm:$0xff] %vm52, %v1691
    %1773 = vst.msk [vmem:[#allocation2 + $0x70] sm:$0xff] %vm52, %v1692
    %1774 = vst.msk [vmem:[#allocation2 + $0x78] sm:$0xff] %vm52, %v1693
    %1775 = vst.msk [vmem:[#allocation2 + $0x80] sm:$0xff] %vm52, %v1694
    %1776 = vst.msk [vmem:[#allocation2 + $0x88] sm:$0xff] %vm52, %v1695
    %1777 = vst.msk [vmem:[#allocation2 + $0x90] sm:$0xff] %vm52, %v1696
    %1778 = vst.msk [vmem:[#allocation2 + $0x98] sm:$0xff] %vm52, %v1697
    %1779 = vst.msk [vmem:[#allocation2 + $0xa0] sm:$0xff] %vm52, %v1698
    %1780 = vst.msk [vmem:[#allocation2 + $0xa8] sm:$0xff] %vm52, %v1699
    %1781 = vst.msk [vmem:[#allocation2 + $0xb0] sm:$0xff] %vm52, %v1700
    %1782 = vst.msk [vmem:[#allocation2 + $0xb8] sm:$0xff] %vm52, %v1701
    %1783 = vst.msk [vmem:[#allocation2 + $0xc0] sm:$0xff] %vm52, %v1702
    %1784 = vst.msk [vmem:[#allocation2 + $0xc8] sm:$0xff] %vm52, %v1703
    %1785 = vst.msk [vmem:[#allocation2 + $0xd0] sm:$0xff] %vm52, %v1704
    %1786 = vst.msk [vmem:[#allocation2 + $0xd8] sm:$0xff] %vm52, %v1705
    %1787 = vst.msk [vmem:[#allocation2 + $0xe0] sm:$0xff] %vm52, %v1706
    %1788 = vst.msk [vmem:[#allocation2 + $0xe8] sm:$0xff] %vm52, %v1707
    %1789 = vst.msk [vmem:[#allocation2 + $0xf0] sm:$0xff] %vm52, %v1708
    %1790 = vst.msk [vmem:[#allocation2 + $0xf8] sm:$0xff] %vm52, %v1709
    %1791 = vst.msk [vmem:[#allocation2 + $0x100] sm:$0xff] %vm52, %v1710
    %1792 = vst.msk [vmem:[#allocation2 + $0x108] sm:$0xff] %vm52, %v1711
    %1793 = vst.msk [vmem:[#allocation2 + $0x110] sm:$0xff] %vm52, %v1712
    %1794 = vst.msk [vmem:[#allocation2 + $0x118] sm:$0xff] %vm52, %v1713
    %1795 = vst.msk [vmem:[#allocation2 + $0x120] sm:$0xff] %vm52, %v1714
    %1796 = vst.msk [vmem:[#allocation2 + $0x128] sm:$0xff] %vm52, %v1715
    %1797 = vst.msk [vmem:[#allocation2 + $0x130] sm:$0xff] %vm52, %v1716
    %1798 = vst.msk [vmem:[#allocation2 + $0x138] sm:$0xff] %vm52, %v1717
    %1799 = vst.msk [vmem:[#allocation2 + $0x140] sm:$0xff] %vm52, %v1718
    %1800 = vst.msk [vmem:[#allocation2 + $0x148] sm:$0xff] %vm52, %v1719
    %1801 = vst.msk [vmem:[#allocation2 + $0x150] sm:$0xff] %vm52, %v1720
    %1802 = vst.msk [vmem:[#allocation2 + $0x158] sm:$0xff] %vm52, %v1721
    %1803 = vst.msk [vmem:[#allocation2 + $0x160] sm:$0xff] %vm52, %v1722
    %1804 = vst.msk [vmem:[#allocation2 + $0x168] sm:$0xff] %vm52, %v1723
    %1805 = vst.msk [vmem:[#allocation2 + $0x170] sm:$0xff] %vm52, %v1724
    %1806 = vst.msk [vmem:[#allocation2 + $0x178] sm:$0xff] %vm52, %v1725
    %1807 = vst.msk [vmem:[#allocation2 + $0x180] sm:$0xff] %vm52, %v1726
    %1808 = vst.msk [vmem:[#allocation2 + $0x188] sm:$0xff] %vm52, %v1727
    %1809 = vst.msk [vmem:[#allocation2 + $0x190] sm:$0xff] %vm52, %v1728
    %1810 = vst.msk [vmem:[#allocation2 + $0x198] sm:$0xff] %vm52, %v1729
    %1811 = vst.msk [vmem:[#allocation2 + $0x1a0] sm:$0xff] %vm52, %v1730
    %1812 = vst.msk [vmem:[#allocation2 + $0x1a8] sm:$0xff] %vm52, %v1731
    %1813 = vst.msk [vmem:[#allocation2 + $0x1b0] sm:$0xff] %vm52, %v1732
    %1814 = vst.msk [vmem:[#allocation2 + $0x1b8] sm:$0xff] %vm52, %v1733
    %1815 = vst.msk [vmem:[#allocation2 + $0x1c0] sm:$0xff] %vm52, %v1734
    %1816 = vst.msk [vmem:[#allocation2 + $0x1c8] sm:$0xff] %vm52, %v1735
    %1817 = vst.msk [vmem:[#allocation2 + $0x1d0] sm:$0xff] %vm52, %v1736
    %1818 = vst.msk [vmem:[#allocation2 + $0x1d8] sm:$0xff] %vm52, %v1737
    %1819 = vst.msk [vmem:[#allocation2 + $0x1e0] sm:$0xff] %vm52, %v1738
    %1820 = vst.msk [vmem:[#allocation2 + $0x1e8] sm:$0xff] %vm52, %v1739
    %1821 = vst.msk [vmem:[#allocation2 + $0x1f0] sm:$0xff] %vm52, %v1740
    %1822 = vst.msk [vmem:[#allocation2 + $0x1f8] sm:$0xff] %vm52, %v1741
    %1823 = vst.msk [vmem:[#allocation2 + $0x200] sm:$0xff] %vm52, %v1742
    %1824 = vst.msk [vmem:[#allocation2 + $0x208] sm:$0xff] %vm52, %v1743
    %1825 = vst.msk [vmem:[#allocation2 + $0x210] sm:$0xff] %vm52, %v1744
    %1826 = vst.msk [vmem:[#allocation2 + $0x218] sm:$0xff] %vm52, %v1745
    %1827 = vst.msk [vmem:[#allocation2 + $0x220] sm:$0xff] %vm52, %v1746
    %1828 = vst.msk [vmem:[#allocation2 + $0x228] sm:$0xff] %vm52, %v1747
    %1829 = vst.msk [vmem:[#allocation2 + $0x230] sm:$0xff] %vm52, %v1748
    %1830 = vst.msk [vmem:[#allocation2 + $0x238] sm:$0xff] %vm52, %v1749
    %1831 = vst.msk [vmem:[#allocation2 + $0x240] sm:$0xff] %vm52, %v1750
    %1832 = vst.msk [vmem:[#allocation2 + $0x248] sm:$0xff] %vm52, %v1751
    %1833 = vst.msk [vmem:[#allocation2 + $0x250] sm:$0xff] %vm52, %v1752
    %1834 = vst.msk [vmem:[#allocation2 + $0x258] sm:$0xff] %vm52, %v1753
    %1835 = vst.msk [vmem:[#allocation2 + $0x260] sm:$0xff] %vm52, %v1754
    %1836 = vst.msk [vmem:[#allocation2 + $0x268] sm:$0xff] %vm52, %v1755
    %1837 = vst.msk [vmem:[#allocation2 + $0x270] sm:$0xff] %vm52, %v1756
    %1838 = vst.msk [vmem:[#allocation2 + $0x278] sm:$0xff] %vm52, %v1757
    %1839 = vst.msk [vmem:[#allocation2 + $0x280] sm:$0xff] %vm52, %v1758
    %v1840 = vld [vmem:[%s0 + $0x2] sm:$0xff]
    %v1841 = vld [vmem:[%s0 + $0xa] sm:$0xff]
    %v1842 = vld [vmem:[%s0 + $0x12] sm:$0xff]
    %v1843 = vld [vmem:[%s0 + $0x1a] sm:$0xff]
    %v1844 = vld [vmem:[%s0 + $0x22] sm:$0xff]
    %v1845 = vld [vmem:[%s0 + $0x2a] sm:$0xff]
    %v1846 = vld [vmem:[%s0 + $0x32] sm:$0xff]
    %v1847 = vld [vmem:[%s0 + $0x3a] sm:$0xff]
    %v1848 = vld [vmem:[%s0 + $0x42] sm:$0xff]
    %v1849 = vld [vmem:[%s0 + $0x4a] sm:$0xff]
    %v1850 = vld [vmem:[%s0 + $0x52] sm:$0xff]
    %v1851 = vld [vmem:[%s0 + $0x5a] sm:$0xff]
    %v1852 = vld [vmem:[%s0 + $0x62] sm:$0xff]
    %v1853 = vld [vmem:[%s0 + $0x6a] sm:$0xff]
    %v1854 = vld [vmem:[%s0 + $0x72] sm:$0xff]
    %v1855 = vld [vmem:[%s0 + $0x7a] sm:$0xff]
    %v1856 = vld [vmem:[%s0 + $0x82] sm:$0xff]
    %v1857 = vld [vmem:[%s0 + $0x8a] sm:$0xff]
    %v1858 = vld [vmem:[%s0 + $0x92] sm:$0xff]
    %v1859 = vld [vmem:[%s0 + $0x9a] sm:$0xff]
    %v1860 = vld [vmem:[%s0 + $0xa2] sm:$0xff]
    %v1861 = vld [vmem:[%s0 + $0xaa] sm:$0xff]
    %v1862 = vld [vmem:[%s0 + $0xb2] sm:$0xff]
    %v1863 = vld [vmem:[%s0 + $0xba] sm:$0xff]
    %v1864 = vld [vmem:[%s0 + $0xc2] sm:$0xff]
    %v1865 = vld [vmem:[%s0 + $0xca] sm:$0xff]
    %v1866 = vld [vmem:[%s0 + $0xd2] sm:$0xff]
    %v1867 = vld [vmem:[%s0 + $0xda] sm:$0xff]
    %v1868 = vld [vmem:[%s0 + $0xe2] sm:$0xff]
    %v1869 = vld [vmem:[%s0 + $0xea] sm:$0xff]
    %v1870 = vld [vmem:[%s0 + $0xf2] sm:$0xff]
    %v1871 = vld [vmem:[%s0 + $0xfa] sm:$0xff]
    %v1872 = vld [vmem:[%s0 + $0x102] sm:$0xff]
    %v1873 = vld [vmem:[%s0 + $0x10a] sm:$0xff]
    %v1874 = vld [vmem:[%s0 + $0x112] sm:$0xff]
    %v1875 = vld [vmem:[%s0 + $0x11a] sm:$0xff]
    %v1876 = vld [vmem:[%s0 + $0x122] sm:$0xff]
    %v1877 = vld [vmem:[%s0 + $0x12a] sm:$0xff]
    %v1878 = vld [vmem:[%s0 + $0x132] sm:$0xff]
    %v1879 = vld [vmem:[%s0 + $0x13a] sm:$0xff]
    %v1880 = vld [vmem:[%s0 + $0x142] sm:$0xff]
    %v1881 = vld [vmem:[%s0 + $0x14a] sm:$0xff]
    %v1882 = vld [vmem:[%s0 + $0x152] sm:$0xff]
    %v1883 = vld [vmem:[%s0 + $0x15a] sm:$0xff]
    %v1884 = vld [vmem:[%s0 + $0x162] sm:$0xff]
    %v1885 = vld [vmem:[%s0 + $0x16a] sm:$0xff]
    %v1886 = vld [vmem:[%s0 + $0x172] sm:$0xff]
    %v1887 = vld [vmem:[%s0 + $0x17a] sm:$0xff]
    %v1888 = vld [vmem:[%s0 + $0x182] sm:$0xff]
    %v1889 = vld [vmem:[%s0 + $0x18a] sm:$0xff]
    %v1890 = vld [vmem:[%s0 + $0x192] sm:$0xff]
    %v1891 = vld [vmem:[%s0 + $0x19a] sm:$0xff]
    %v1892 = vld [vmem:[%s0 + $0x1a2] sm:$0xff]
    %v1893 = vld [vmem:[%s0 + $0x1aa] sm:$0xff]
    %v1894 = vld [vmem:[%s0 + $0x1b2] sm:$0xff]
    %v1895 = vld [vmem:[%s0 + $0x1ba] sm:$0xff]
    %v1896 = vld [vmem:[%s0 + $0x1c2] sm:$0xff]
    %v1897 = vld [vmem:[%s0 + $0x1ca] sm:$0xff]
    %v1898 = vld [vmem:[%s0 + $0x1d2] sm:$0xff]
    %v1899 = vld [vmem:[%s0 + $0x1da] sm:$0xff]
    %v1900 = vld [vmem:[%s0 + $0x1e2] sm:$0xff]
    %v1901 = vld [vmem:[%s0 + $0x1ea] sm:$0xff]
    %v1902 = vld [vmem:[%s0 + $0x1f2] sm:$0xff]
    %v1903 = vld [vmem:[%s0 + $0x1fa] sm:$0xff]
    %v1904 = vld [vmem:[%s0 + $0x202] sm:$0xff]
    %v1905 = vld [vmem:[%s0 + $0x20a] sm:$0xff]
    %v1906 = vld [vmem:[%s0 + $0x212] sm:$0xff]
    %v1907 = vld [vmem:[%s0 + $0x21a] sm:$0xff]
    %v1908 = vld [vmem:[%s0 + $0x222] sm:$0xff]
    %v1909 = vld [vmem:[%s0 + $0x22a] sm:$0xff]
    %v1910 = vld [vmem:[%s0 + $0x232] sm:$0xff]
    %v1911 = vld [vmem:[%s0 + $0x23a] sm:$0xff]
    %v1912 = vld [vmem:[%s0 + $0x242] sm:$0xff]
    %v1913 = vld [vmem:[%s0 + $0x24a] sm:$0xff]
    %v1914 = vld [vmem:[%s0 + $0x252] sm:$0xff]
    %v1915 = vld [vmem:[%s0 + $0x25a] sm:$0xff]
    %v1916 = vld [vmem:[%s0 + $0x262] sm:$0xff]
    %v1917 = vld [vmem:[%s0 + $0x26a] sm:$0xff]
    %v1918 = vld [vmem:[%s0 + $0x272] sm:$0xff]
    %v1919 = vld [vmem:[%s0 + $0x27a] sm:$0xff]
    %v1920 = vld [vmem:[%s0 + $0x282] sm:$0xff]
    %v1921 = vpack.c.bf16 %v1841, %v1840
    %v1922 = vpack.c.bf16 %v1843, %v1842
    %v1923 = vpack.c.bf16 %v1845, %v1844
    %v1924 = vpack.c.bf16 %v1847, %v1846
    %v1925 = vpack.c.bf16 %v1849, %v1848
    %v1926 = vpack.c.bf16 %v1851, %v1850
    %v1927 = vpack.c.bf16 %v1853, %v1852
    %v1928 = vpack.c.bf16 %v1855, %v1854
    %v1929 = vpack.c.bf16 %v1857, %v1856
    %v1930 = vpack.c.bf16 %v1859, %v1858
    %v1931 = vpack.c.bf16 %v1861, %v1860
    %v1932 = vpack.c.bf16 %v1863, %v1862
    %v1933 = vpack.c.bf16 %v1865, %v1864
    %v1934 = vpack.c.bf16 %v1867, %v1866
    %v1935 = vpack.c.bf16 %v1869, %v1868
    %v1936 = vpack.c.bf16 %v1871, %v1870
    %v1937 = vpack.c.bf16 %v1873, %v1872
    %v1938 = vpack.c.bf16 %v1875, %v1874
    %v1939 = vpack.c.bf16 %v1877, %v1876
    %v1940 = vpack.c.bf16 %v1879, %v1878
    %v1941 = vpack.c.bf16 %v1881, %v1880
    %v1942 = vpack.c.bf16 %v1883, %v1882
    %v1943 = vpack.c.bf16 %v1885, %v1884
    %v1944 = vpack.c.bf16 %v1887, %v1886
    %v1945 = vpack.c.bf16 %v1889, %v1888
    %v1946 = vpack.c.bf16 %v1891, %v1890
    %v1947 = vpack.c.bf16 %v1893, %v1892
    %v1948 = vpack.c.bf16 %v1895, %v1894
    %v1949 = vpack.c.bf16 %v1897, %v1896
    %v1950 = vpack.c.bf16 %v1899, %v1898
    %v1951 = vpack.c.bf16 %v1901, %v1900
    %v1952 = vpack.c.bf16 %v1903, %v1902
    %v1953 = vpack.c.bf16 %v1905, %v1904
    %v1954 = vpack.c.bf16 %v1907, %v1906
    %v1955 = vpack.c.bf16 %v1909, %v1908
    %v1956 = vpack.c.bf16 %v1911, %v1910
    %v1957 = vpack.c.bf16 %v1913, %v1912
    %v1958 = vpack.c.bf16 %v1915, %v1914
    %v1959 = vpack.c.bf16 %v1917, %v1916
    %v1960 = vpack.c.bf16 %v1919, %v1918
    %v1961 = vpack.c.bf16 %v1920, %v1920
    %v1962 = vld [vmem:[#allocation2] sm:$0xff]
    %v1963 = vld [vmem:[#allocation2 + $0x8] sm:$0xff]
    %v1964 = vld [vmem:[#allocation2 + $0x10] sm:$0xff]
    %v1965 = vld [vmem:[#allocation2 + $0x18] sm:$0xff]
    %v1966 = vld [vmem:[#allocation2 + $0x20] sm:$0xff]
    %v1967 = vld [vmem:[#allocation2 + $0x28] sm:$0xff]
    %v1968 = vld [vmem:[#allocation2 + $0x30] sm:$0xff]
    %v1969 = vld [vmem:[#allocation2 + $0x38] sm:$0xff]
    %v1970 = vld [vmem:[#allocation2 + $0x40] sm:$0xff]
    %v1971 = vld [vmem:[#allocation2 + $0x48] sm:$0xff]
    %v1972 = vld [vmem:[#allocation2 + $0x50] sm:$0xff]
    %v1973 = vld [vmem:[#allocation2 + $0x58] sm:$0xff]
    %v1974 = vld [vmem:[#allocation2 + $0x60] sm:$0xff]
    %v1975 = vld [vmem:[#allocation2 + $0x68] sm:$0xff]
    %v1976 = vld [vmem:[#allocation2 + $0x70] sm:$0xff]
    %v1977 = vld [vmem:[#allocation2 + $0x78] sm:$0xff]
    %v1978 = vld [vmem:[#allocation2 + $0x80] sm:$0xff]
    %v1979 = vld [vmem:[#allocation2 + $0x88] sm:$0xff]
    %v1980 = vld [vmem:[#allocation2 + $0x90] sm:$0xff]
    %v1981 = vld [vmem:[#allocation2 + $0x98] sm:$0xff]
    %v1982 = vld [vmem:[#allocation2 + $0xa0] sm:$0xff]
    %v1983 = vld [vmem:[#allocation2 + $0xa8] sm:$0xff]
    %v1984 = vld [vmem:[#allocation2 + $0xb0] sm:$0xff]
    %v1985 = vld [vmem:[#allocation2 + $0xb8] sm:$0xff]
    %v1986 = vld [vmem:[#allocation2 + $0xc0] sm:$0xff]
    %v1987 = vld [vmem:[#allocation2 + $0xc8] sm:$0xff]
    %v1988 = vld [vmem:[#allocation2 + $0xd0] sm:$0xff]
    %v1989 = vld [vmem:[#allocation2 + $0xd8] sm:$0xff]
    %v1990 = vld [vmem:[#allocation2 + $0xe0] sm:$0xff]
    %v1991 = vld [vmem:[#allocation2 + $0xe8] sm:$0xff]
    %v1992 = vld [vmem:[#allocation2 + $0xf0] sm:$0xff]
    %v1993 = vld [vmem:[#allocation2 + $0xf8] sm:$0xff]
    %v1994 = vld [vmem:[#allocation2 + $0x100] sm:$0xff]
    %v1995 = vld [vmem:[#allocation2 + $0x108] sm:$0xff]
    %v1996 = vld [vmem:[#allocation2 + $0x110] sm:$0xff]
    %v1997 = vld [vmem:[#allocation2 + $0x118] sm:$0xff]
    %v1998 = vld [vmem:[#allocation2 + $0x120] sm:$0xff]
    %v1999 = vld [vmem:[#allocation2 + $0x128] sm:$0xff]
    %v2000 = vld [vmem:[#allocation2 + $0x130] sm:$0xff]
    %v2001 = vld [vmem:[#allocation2 + $0x138] sm:$0xff]
    %v2002 = vld [vmem:[#allocation2 + $0x140] sm:$0xff]
    %v2003 = vld [vmem:[#allocation2 + $0x148] sm:$0xff]
    %v2004 = vld [vmem:[#allocation2 + $0x150] sm:$0xff]
    %v2005 = vld [vmem:[#allocation2 + $0x158] sm:$0xff]
    %v2006 = vld [vmem:[#allocation2 + $0x160] sm:$0xff]
    %v2007 = vld [vmem:[#allocation2 + $0x168] sm:$0xff]
    %v2008 = vld [vmem:[#allocation2 + $0x170] sm:$0xff]
    %v2009 = vld [vmem:[#allocation2 + $0x178] sm:$0xff]
    %v2010 = vld [vmem:[#allocation2 + $0x180] sm:$0xff]
    %v2011 = vld [vmem:[#allocation2 + $0x188] sm:$0xff]
    %v2012 = vld [vmem:[#allocation2 + $0x190] sm:$0xff]
    %v2013 = vld [vmem:[#allocation2 + $0x198] sm:$0xff]
    %v2014 = vld [vmem:[#allocation2 + $0x1a0] sm:$0xff]
    %v2015 = vld [vmem:[#allocation2 + $0x1a8] sm:$0xff]
    %v2016 = vld [vmem:[#allocation2 + $0x1b0] sm:$0xff]
    %v2017 = vld [vmem:[#allocation2 + $0x1b8] sm:$0xff]
    %v2018 = vld [vmem:[#allocation2 + $0x1c0] sm:$0xff]
    %v2019 = vld [vmem:[#allocation2 + $0x1c8] sm:$0xff]
    %v2020 = vld [vmem:[#allocation2 + $0x1d0] sm:$0xff]
    %v2021 = vld [vmem:[#allocation2 + $0x1d8] sm:$0xff]
    %v2022 = vld [vmem:[#allocation2 + $0x1e0] sm:$0xff]
    %v2023 = vld [vmem:[#allocation2 + $0x1e8] sm:$0xff]
    %v2024 = vld [vmem:[#allocation2 + $0x1f0] sm:$0xff]
    %v2025 = vld [vmem:[#allocation2 + $0x1f8] sm:$0xff]
    %v2026 = vld [vmem:[#allocation2 + $0x200] sm:$0xff]
    %v2027 = vld [vmem:[#allocation2 + $0x208] sm:$0xff]
    %v2028 = vld [vmem:[#allocation2 + $0x210] sm:$0xff]
    %v2029 = vld [vmem:[#allocation2 + $0x218] sm:$0xff]
    %v2030 = vld [vmem:[#allocation2 + $0x220] sm:$0xff]
    %v2031 = vld [vmem:[#allocation2 + $0x228] sm:$0xff]
    %v2032 = vld [vmem:[#allocation2 + $0x230] sm:$0xff]
    %v2033 = vld [vmem:[#allocation2 + $0x238] sm:$0xff]
    %v2034 = vld [vmem:[#allocation2 + $0x240] sm:$0xff]
    %v2035 = vld [vmem:[#allocation2 + $0x248] sm:$0xff]
    %v2036 = vld [vmem:[#allocation2 + $0x250] sm:$0xff]
    %v2037 = vld [vmem:[#allocation2 + $0x258] sm:$0xff]
    %v2038 = vld [vmem:[#allocation2 + $0x260] sm:$0xff]
    %v2039 = vld [vmem:[#allocation2 + $0x268] sm:$0xff]
    %v2040 = vld [vmem:[#allocation2 + $0x270] sm:$0xff]
    %v2041 = vld [vmem:[#allocation2 + $0x278] sm:$0xff]
    %v2042 = vld [vmem:[#allocation2 + $0x280] sm:$0xff]
    %s2043 = scalar_lea.vmem %s2, 8
    %v2044 = vld [vmem:[%s2043] sm:$0xf]
    %v2046 = vsel %vm52, %v1921, 0
    %v2049 = vsel %vm52, %v1922, 0
    %v2052 = vsel %vm52, %v1923, 0
    %v2055 = vsel %vm52, %v1924, 0
    %v2058 = vsel %vm52, %v1925, 0
    %v2061 = vsel %vm52, %v1926, 0
    %v2064 = vsel %vm52, %v1927, 0
    %v2067 = vsel %vm52, %v1928, 0
    %v2070 = vsel %vm52, %v1929, 0
    %v2073 = vsel %vm52, %v1930, 0
    %v2076 = vsel %vm52, %v1931, 0
    %v2079 = vsel %vm52, %v1932, 0
    %v2082 = vsel %vm52, %v1933, 0
    %v2085 = vsel %vm52, %v1934, 0
    %v2088 = vsel %vm52, %v1935, 0
    %v2091 = vsel %vm52, %v1936, 0
    %v2094 = vsel %vm52, %v1937, 0
    %v2097 = vsel %vm52, %v1938, 0
    %v2100 = vsel %vm52, %v1939, 0
    %v2103 = vsel %vm52, %v1940, 0
    %v2106 = vsel %vm52, %v1941, 0
    %v2109 = vsel %vm52, %v1942, 0
    %v2112 = vsel %vm52, %v1943, 0
    %v2115 = vsel %vm52, %v1944, 0
    %v2118 = vsel %vm52, %v1945, 0
    %v2121 = vsel %vm52, %v1946, 0
    %v2124 = vsel %vm52, %v1947, 0
    %v2127 = vsel %vm52, %v1948, 0
    %v2130 = vsel %vm52, %v1949, 0
    %v2133 = vsel %vm52, %v1950, 0
    %v2136 = vsel %vm52, %v1951, 0
    %v2139 = vsel %vm52, %v1952, 0
    %v2142 = vsel %vm52, %v1953, 0
    %v2145 = vsel %vm52, %v1954, 0
    %v2148 = vsel %vm52, %v1955, 0
    %v2151 = vsel %vm52, %v1956, 0
    %v2154 = vsel %vm52, %v1957, 0
    %v2157 = vsel %vm52, %v1958, 0
    %v2160 = vsel %vm52, %v1959, 0
    %v2163 = vsel %vm52, %v1960, 0
    %v2166 = vsel %vm52, %v1961, 0
    %v2169 = vsel %vm461, %v2044, 0
    %2171 = vmatprep.subr.bf16.mxu0 0
    %2172 = vmatpush1.bf16.msra.mxu0 0
    %2173 = vmatprep.subr.bf16.mxu0 0
    %2174 = vmatpush1.bf16.msra.mxu0 0
    %2175 = vmatprep.subr.bf16.mxu0 0
    %2176 = vmatpush1.bf16.msra.mxu0 0
    %2177 = vmatprep.subr.bf16.mxu0 0
    %2178 = vmatpush1.bf16.msra.mxu0 0
    %2179 = vmatprep.subr.bf16.mxu0 0
    %2180 = vmatpush1.bf16.msra.mxu0 0
    %2181 = vmatprep.subr.bf16.mxu0 0
    %2182 = vmatpush1.bf16.msra.mxu0 0
    %2183 = vmatprep.subr.bf16.mxu0 0
    %2184 = vmatpush1.bf16.msra.mxu0 0
    %2185 = vmatprep.subr.bf16.mxu0 0
    %2186 = vmatpush1.bf16.msra.mxu0 %v2169
    %2187 = vmatprep.subr.bf16.mxu0 0
    %2188 = vmatpush2.bf16.msra.mxu0 0
    %2189 = vmatprep.subr.bf16.mxu0 0
    %2190 = vmatpush2.bf16.msra.mxu0 0
    %2191 = vmatprep.subr.bf16.mxu0 0
    %2192 = vmatpush2.bf16.msra.mxu0 0
    %2193 = vmatprep.subr.bf16.mxu0 0
    %2194 = vmatpush2.bf16.msra.mxu0 0
    %2195 = vmatprep.subr.bf16.mxu0 0
    %2196 = vmatpush2.bf16.msra.mxu0 0
    %2197 = vmatprep.subr.bf16.mxu0 0
    %2198 = vmatpush2.bf16.msra.mxu0 0
    %2199 = vmatprep.subr.bf16.mxu0 0
    %2200 = vmatpush2.bf16.msra.mxu0 0
    %2201 = vmatprep.subr.bf16.mxu0 0
    %2202 = vmatpush2.bf16.msra.mxu0 0
    %2203 = vmatprep.mubr.bf16.mxu0 0
    %2204 = vmatmul.mubr.bf16.gmra.mxu0 %v2046
    %v2205 = vpop.f32.mrf.mxu0
    %v2206 = vadd.f32 0.0, %v2205
    %v2207 = vpop.f32.mrf.mxu0
    %v2208 = vpop.f32.mrf.mxu0
    %v2209 = vadd.f32 0.0, %v2208
    %v2210 = vpop.f32.mrf.mxu0
    %2211 = vmatprep.mubr.bf16.mxu0 0
    %2212 = vmatmul.mubr.bf16.gmra.mxu0 %v2049
    %v2213 = vpop.f32.mrf.mxu0
    %v2214 = vadd.f32 0.0, %v2213
    %v2215 = vpop.f32.mrf.mxu0
    %v2216 = vpop.f32.mrf.mxu0
    %v2217 = vadd.f32 0.0, %v2216
    %v2218 = vpop.f32.mrf.mxu0
    %2219 = vmatprep.mubr.bf16.mxu0 0
    %2220 = vmatmul.mubr.bf16.gmra.mxu0 %v2052
    %v2221 = vpop.f32.mrf.mxu0
    %v2222 = vadd.f32 0.0, %v2221
    %v2223 = vpop.f32.mrf.mxu0
    %v2224 = vpop.f32.mrf.mxu0
    %v2225 = vadd.f32 0.0, %v2224
    %v2226 = vpop.f32.mrf.mxu0
    %2227 = vmatprep.mubr.bf16.mxu0 0
    %2228 = vmatmul.mubr.bf16.gmra.mxu0 %v2055
    %v2229 = vpop.f32.mrf.mxu0
    %v2230 = vadd.f32 0.0, %v2229
    %v2231 = vpop.f32.mrf.mxu0
    %v2232 = vpop.f32.mrf.mxu0
    %v2233 = vadd.f32 0.0, %v2232
    %v2234 = vpop.f32.mrf.mxu0
    %2235 = vmatprep.mubr.bf16.mxu0 0
    %2236 = vmatmul.mubr.bf16.gmra.mxu0 %v2058
    %v2237 = vpop.f32.mrf.mxu0
    %v2238 = vadd.f32 0.0, %v2237
    %v2239 = vpop.f32.mrf.mxu0
    %v2240 = vpop.f32.mrf.mxu0
    %v2241 = vadd.f32 0.0, %v2240
    %v2242 = vpop.f32.mrf.mxu0
    %2243 = vmatprep.mubr.bf16.mxu0 0
    %2244 = vmatmul.mubr.bf16.gmra.mxu0 %v2061
    %v2245 = vpop.f32.mrf.mxu0
    %v2246 = vadd.f32 0.0, %v2245
    %v2247 = vpop.f32.mrf.mxu0
    %v2248 = vpop.f32.mrf.mxu0
    %v2249 = vadd.f32 0.0, %v2248
    %v2250 = vpop.f32.mrf.mxu0
    %2251 = vmatprep.mubr.bf16.mxu0 0
    %2252 = vmatmul.mubr.bf16.gmra.mxu0 %v2064
    %v2253 = vpop.f32.mrf.mxu0
    %v2254 = vadd.f32 0.0, %v2253
    %v2255 = vpop.f32.mrf.mxu0
    %v2256 = vpop.f32.mrf.mxu0
    %v2257 = vadd.f32 0.0, %v2256
    %v2258 = vpop.f32.mrf.mxu0
    %2259 = vmatprep.mubr.bf16.mxu0 0
    %2260 = vmatmul.mubr.bf16.gmra.mxu0 %v2067
    %v2261 = vpop.f32.mrf.mxu0
    %v2262 = vadd.f32 0.0, %v2261
    %v2263 = vpop.f32.mrf.mxu0
    %v2264 = vpop.f32.mrf.mxu0
    %v2265 = vadd.f32 0.0, %v2264
    %v2266 = vpop.f32.mrf.mxu0
    %2267 = vmatprep.mubr.bf16.mxu0 0
    %2268 = vmatmul.mubr.bf16.gmra.mxu0 %v2070
    %v2269 = vpop.f32.mrf.mxu0
    %v2270 = vadd.f32 0.0, %v2269
    %v2271 = vpop.f32.mrf.mxu0
    %v2272 = vpop.f32.mrf.mxu0
    %v2273 = vadd.f32 0.0, %v2272
    %v2274 = vpop.f32.mrf.mxu0
    %2275 = vmatprep.mubr.bf16.mxu0 0
    %2276 = vmatmul.mubr.bf16.gmra.mxu0 %v2073
    %v2277 = vpop.f32.mrf.mxu0
    %v2278 = vadd.f32 0.0, %v2277
    %v2279 = vpop.f32.mrf.mxu0
    %v2280 = vpop.f32.mrf.mxu0
    %v2281 = vadd.f32 0.0, %v2280
    %v2282 = vpop.f32.mrf.mxu0
    %2283 = vmatprep.mubr.bf16.mxu0 0
    %2284 = vmatmul.mubr.bf16.gmra.mxu0 %v2076
    %v2285 = vpop.f32.mrf.mxu0
    %v2286 = vadd.f32 0.0, %v2285
    %v2287 = vpop.f32.mrf.mxu0
    %v2288 = vpop.f32.mrf.mxu0
    %v2289 = vadd.f32 0.0, %v2288
    %v2290 = vpop.f32.mrf.mxu0
    %2291 = vmatprep.mubr.bf16.mxu0 0
    %2292 = vmatmul.mubr.bf16.gmra.mxu0 %v2079
    %v2293 = vpop.f32.mrf.mxu0
    %v2294 = vadd.f32 0.0, %v2293
    %v2295 = vpop.f32.mrf.mxu0
    %v2296 = vpop.f32.mrf.mxu0
    %v2297 = vadd.f32 0.0, %v2296
    %v2298 = vpop.f32.mrf.mxu0
    %2299 = vmatprep.mubr.bf16.mxu0 0
    %2300 = vmatmul.mubr.bf16.gmra.mxu0 %v2082
    %v2301 = vpop.f32.mrf.mxu0
    %v2302 = vadd.f32 0.0, %v2301
    %v2303 = vpop.f32.mrf.mxu0
    %v2304 = vpop.f32.mrf.mxu0
    %v2305 = vadd.f32 0.0, %v2304
    %v2306 = vpop.f32.mrf.mxu0
    %2307 = vmatprep.mubr.bf16.mxu0 0
    %2308 = vmatmul.mubr.bf16.gmra.mxu0 %v2085
    %v2309 = vpop.f32.mrf.mxu0
    %v2310 = vadd.f32 0.0, %v2309
    %v2311 = vpop.f32.mrf.mxu0
    %v2312 = vpop.f32.mrf.mxu0
    %v2313 = vadd.f32 0.0, %v2312
    %v2314 = vpop.f32.mrf.mxu0
    %2315 = vmatprep.mubr.bf16.mxu0 0
    %2316 = vmatmul.mubr.bf16.gmra.mxu0 %v2088
    %v2317 = vpop.f32.mrf.mxu0
    %v2318 = vadd.f32 0.0, %v2317
    %v2319 = vpop.f32.mrf.mxu0
    %v2320 = vpop.f32.mrf.mxu0
    %v2321 = vadd.f32 0.0, %v2320
    %v2322 = vpop.f32.mrf.mxu0
    %2323 = vmatprep.mubr.bf16.mxu0 0
    %2324 = vmatmul.mubr.bf16.gmra.mxu0 %v2091
    %v2325 = vpop.f32.mrf.mxu0
    %v2326 = vadd.f32 0.0, %v2325
    %v2327 = vpop.f32.mrf.mxu0
    %v2328 = vpop.f32.mrf.mxu0
    %v2329 = vadd.f32 0.0, %v2328
    %v2330 = vpop.f32.mrf.mxu0
    %2331 = vmatprep.mubr.bf16.mxu0 0
    %2332 = vmatmul.mubr.bf16.gmra.mxu0 %v2094
    %v2333 = vpop.f32.mrf.mxu0
    %v2334 = vadd.f32 0.0, %v2333
    %v2335 = vpop.f32.mrf.mxu0
    %v2336 = vpop.f32.mrf.mxu0
    %v2337 = vadd.f32 0.0, %v2336
    %v2338 = vpop.f32.mrf.mxu0
    %2339 = vmatprep.mubr.bf16.mxu0 0
    %2340 = vmatmul.mubr.bf16.gmra.mxu0 %v2097
    %v2341 = vpop.f32.mrf.mxu0
    %v2342 = vadd.f32 0.0, %v2341
    %v2343 = vpop.f32.mrf.mxu0
    %v2344 = vpop.f32.mrf.mxu0
    %v2345 = vadd.f32 0.0, %v2344
    %v2346 = vpop.f32.mrf.mxu0
    %2347 = vmatprep.mubr.bf16.mxu0 0
    %2348 = vmatmul.mubr.bf16.gmra.mxu0 %v2100
    %v2349 = vpop.f32.mrf.mxu0
    %v2350 = vadd.f32 0.0, %v2349
    %v2351 = vpop.f32.mrf.mxu0
    %v2352 = vpop.f32.mrf.mxu0
    %v2353 = vadd.f32 0.0, %v2352
    %v2354 = vpop.f32.mrf.mxu0
    %2355 = vmatprep.mubr.bf16.mxu0 0
    %2356 = vmatmul.mubr.bf16.gmra.mxu0 %v2103
    %v2357 = vpop.f32.mrf.mxu0
    %v2358 = vadd.f32 0.0, %v2357
    %v2359 = vpop.f32.mrf.mxu0
    %v2360 = vpop.f32.mrf.mxu0
    %v2361 = vadd.f32 0.0, %v2360
    %v2362 = vpop.f32.mrf.mxu0
    %2363 = vmatprep.mubr.bf16.mxu0 0
    %2364 = vmatmul.mubr.bf16.gmra.mxu0 %v2106
    %v2365 = vpop.f32.mrf.mxu0
    %v2366 = vadd.f32 0.0, %v2365
    %v2367 = vpop.f32.mrf.mxu0
    %v2368 = vpop.f32.mrf.mxu0
    %v2369 = vadd.f32 0.0, %v2368
    %v2370 = vpop.f32.mrf.mxu0
    %2371 = vmatprep.mubr.bf16.mxu0 0
    %2372 = vmatmul.mubr.bf16.gmra.mxu0 %v2109
    %v2373 = vpop.f32.mrf.mxu0
    %v2374 = vadd.f32 0.0, %v2373
    %v2375 = vpop.f32.mrf.mxu0
    %v2376 = vpop.f32.mrf.mxu0
    %v2377 = vadd.f32 0.0, %v2376
    %v2378 = vpop.f32.mrf.mxu0
    %2379 = vmatprep.mubr.bf16.mxu0 0
    %2380 = vmatmul.mubr.bf16.gmra.mxu0 %v2112
    %v2381 = vpop.f32.mrf.mxu0
    %v2382 = vadd.f32 0.0, %v2381
    %v2383 = vpop.f32.mrf.mxu0
    %v2384 = vpop.f32.mrf.mxu0
    %v2385 = vadd.f32 0.0, %v2384
    %v2386 = vpop.f32.mrf.mxu0
    %2387 = vmatprep.mubr.bf16.mxu0 0
    %2388 = vmatmul.mubr.bf16.gmra.mxu0 %v2115
    %v2389 = vpop.f32.mrf.mxu0
    %v2390 = vadd.f32 0.0, %v2389
    %v2391 = vpop.f32.mrf.mxu0
    %v2392 = vpop.f32.mrf.mxu0
    %v2393 = vadd.f32 0.0, %v2392
    %v2394 = vpop.f32.mrf.mxu0
    %2395 = vmatprep.mubr.bf16.mxu0 0
    %2396 = vmatmul.mubr.bf16.gmra.mxu0 %v2118
    %v2397 = vpop.f32.mrf.mxu0
    %v2398 = vadd.f32 0.0, %v2397
    %v2399 = vpop.f32.mrf.mxu0
    %v2400 = vpop.f32.mrf.mxu0
    %v2401 = vadd.f32 0.0, %v2400
    %v2402 = vpop.f32.mrf.mxu0
    %2403 = vmatprep.mubr.bf16.mxu0 0
    %2404 = vmatmul.mubr.bf16.gmra.mxu0 %v2121
    %v2405 = vpop.f32.mrf.mxu0
    %v2406 = vadd.f32 0.0, %v2405
    %v2407 = vpop.f32.mrf.mxu0
    %v2408 = vpop.f32.mrf.mxu0
    %v2409 = vadd.f32 0.0, %v2408
    %v2410 = vpop.f32.mrf.mxu0
    %2411 = vmatprep.mubr.bf16.mxu0 0
    %2412 = vmatmul.mubr.bf16.gmra.mxu0 %v2124
    %v2413 = vpop.f32.mrf.mxu0
    %v2414 = vadd.f32 0.0, %v2413
    %v2415 = vpop.f32.mrf.mxu0
    %v2416 = vpop.f32.mrf.mxu0
    %v2417 = vadd.f32 0.0, %v2416
    %v2418 = vpop.f32.mrf.mxu0
    %2419 = vmatprep.mubr.bf16.mxu0 0
    %2420 = vmatmul.mubr.bf16.gmra.mxu0 %v2127
    %v2421 = vpop.f32.mrf.mxu0
    %v2422 = vadd.f32 0.0, %v2421
    %v2423 = vpop.f32.mrf.mxu0
    %v2424 = vpop.f32.mrf.mxu0
    %v2425 = vadd.f32 0.0, %v2424
    %v2426 = vpop.f32.mrf.mxu0
    %2427 = vmatprep.mubr.bf16.mxu0 0
    %2428 = vmatmul.mubr.bf16.gmra.mxu0 %v2130
    %v2429 = vpop.f32.mrf.mxu0
    %v2430 = vadd.f32 0.0, %v2429
    %v2431 = vpop.f32.mrf.mxu0
    %v2432 = vpop.f32.mrf.mxu0
    %v2433 = vadd.f32 0.0, %v2432
    %v2434 = vpop.f32.mrf.mxu0
    %2435 = vmatprep.mubr.bf16.mxu0 0
    %2436 = vmatmul.mubr.bf16.gmra.mxu0 %v2133
    %v2437 = vpop.f32.mrf.mxu0
    %v2438 = vadd.f32 0.0, %v2437
    %v2439 = vpop.f32.mrf.mxu0
    %v2440 = vpop.f32.mrf.mxu0
    %v2441 = vadd.f32 0.0, %v2440
    %v2442 = vpop.f32.mrf.mxu0
    %2443 = vmatprep.mubr.bf16.mxu0 0
    %2444 = vmatmul.mubr.bf16.gmra.mxu0 %v2136
    %v2445 = vpop.f32.mrf.mxu0
    %v2446 = vadd.f32 0.0, %v2445
    %v2447 = vpop.f32.mrf.mxu0
    %v2448 = vpop.f32.mrf.mxu0
    %v2449 = vadd.f32 0.0, %v2448
    %v2450 = vpop.f32.mrf.mxu0
    %2451 = vmatprep.mubr.bf16.mxu0 0
    %2452 = vmatmul.mubr.bf16.gmra.mxu0 %v2139
    %v2453 = vpop.f32.mrf.mxu0
    %v2454 = vadd.f32 0.0, %v2453
    %v2455 = vpop.f32.mrf.mxu0
    %v2456 = vpop.f32.mrf.mxu0
    %v2457 = vadd.f32 0.0, %v2456
    %v2458 = vpop.f32.mrf.mxu0
    %2459 = vmatprep.mubr.bf16.mxu0 0
    %2460 = vmatmul.mubr.bf16.gmra.mxu0 %v2142
    %v2461 = vpop.f32.mrf.mxu0
    %v2462 = vadd.f32 0.0, %v2461
    %v2463 = vpop.f32.mrf.mxu0
    %v2464 = vpop.f32.mrf.mxu0
    %v2465 = vadd.f32 0.0, %v2464
    %v2466 = vpop.f32.mrf.mxu0
    %2467 = vmatprep.mubr.bf16.mxu0 0
    %2468 = vmatmul.mubr.bf16.gmra.mxu0 %v2145
    %v2469 = vpop.f32.mrf.mxu0
    %v2470 = vadd.f32 0.0, %v2469
    %v2471 = vpop.f32.mrf.mxu0
    %v2472 = vpop.f32.mrf.mxu0
    %v2473 = vadd.f32 0.0, %v2472
    %v2474 = vpop.f32.mrf.mxu0
    %2475 = vmatprep.mubr.bf16.mxu0 0
    %2476 = vmatmul.mubr.bf16.gmra.mxu0 %v2148
    %v2477 = vpop.f32.mrf.mxu0
    %v2478 = vadd.f32 0.0, %v2477
    %v2479 = vpop.f32.mrf.mxu0
    %v2480 = vpop.f32.mrf.mxu0
    %v2481 = vadd.f32 0.0, %v2480
    %v2482 = vpop.f32.mrf.mxu0
    %2483 = vmatprep.mubr.bf16.mxu0 0
    %2484 = vmatmul.mubr.bf16.gmra.mxu0 %v2151
    %v2485 = vpop.f32.mrf.mxu0
    %v2486 = vadd.f32 0.0, %v2485
    %v2487 = vpop.f32.mrf.mxu0
    %v2488 = vpop.f32.mrf.mxu0
    %v2489 = vadd.f32 0.0, %v2488
    %v2490 = vpop.f32.mrf.mxu0
    %2491 = vmatprep.mubr.bf16.mxu0 0
    %2492 = vmatmul.mubr.bf16.gmra.mxu0 %v2154
    %v2493 = vpop.f32.mrf.mxu0
    %v2494 = vadd.f32 0.0, %v2493
    %v2495 = vpop.f32.mrf.mxu0
    %v2496 = vpop.f32.mrf.mxu0
    %v2497 = vadd.f32 0.0, %v2496
    %v2498 = vpop.f32.mrf.mxu0
    %2499 = vmatprep.mubr.bf16.mxu0 0
    %2500 = vmatmul.mubr.bf16.gmra.mxu0 %v2157
    %v2501 = vpop.f32.mrf.mxu0
    %v2502 = vadd.f32 0.0, %v2501
    %v2503 = vpop.f32.mrf.mxu0
    %v2504 = vpop.f32.mrf.mxu0
    %v2505 = vadd.f32 0.0, %v2504
    %v2506 = vpop.f32.mrf.mxu0
    %2507 = vmatprep.mubr.bf16.mxu0 0
    %2508 = vmatmul.mubr.bf16.gmra.mxu0 %v2160
    %v2509 = vpop.f32.mrf.mxu0
    %v2510 = vadd.f32 0.0, %v2509
    %v2511 = vpop.f32.mrf.mxu0
    %v2512 = vpop.f32.mrf.mxu0
    %v2513 = vadd.f32 0.0, %v2512
    %v2514 = vpop.f32.mrf.mxu0
    %2515 = vmatprep.mubr.bf16.mxu0 0
    %2516 = vmatmul.mubr.bf16.gmra.mxu0 %v2163
    %v2517 = vpop.f32.mrf.mxu0
    %v2518 = vadd.f32 0.0, %v2517
    %v2519 = vpop.f32.mrf.mxu0
    %v2520 = vpop.f32.mrf.mxu0
    %v2521 = vadd.f32 0.0, %v2520
    %v2522 = vpop.f32.mrf.mxu0
    %2523 = vmatprep.mubr.bf16.mxu0 0
    %2524 = vmatmul.mubr.bf16.gmra.mxu0 %v2166
    %v2525 = vpop.f32.mrf.mxu0
    %v2526 = vadd.f32 0.0, %v2525
    %v2527 = vpop.f32.mrf.mxu0
    %v2528 = vpop.f32.mrf.mxu0
    %v2529 = vpop.f32.mrf.mxu0
    %2530 = vdwg.mxu0
    %v2531 = vadd.f32 %v1962, %v2206
    %v2532 = vadd.f32 %v1963, %v2209
    %v2533 = vadd.f32 %v1964, %v2214
    %v2534 = vadd.f32 %v1965, %v2217
    %v2535 = vadd.f32 %v1966, %v2222
    %v2536 = vadd.f32 %v1967, %v2225
    %v2537 = vadd.f32 %v1968, %v2230
    %v2538 = vadd.f32 %v1969, %v2233
    %v2539 = vadd.f32 %v1970, %v2238
    %v2540 = vadd.f32 %v1971, %v2241
    %v2541 = vadd.f32 %v1972, %v2246
    %v2542 = vadd.f32 %v1973, %v2249
    %v2543 = vadd.f32 %v1974, %v2254
    %v2544 = vadd.f32 %v1975, %v2257
    %v2545 = vadd.f32 %v1976, %v2262
    %v2546 = vadd.f32 %v1977, %v2265
    %v2547 = vadd.f32 %v1978, %v2270
    %v2548 = vadd.f32 %v1979, %v2273
    %v2549 = vadd.f32 %v1980, %v2278
    %v2550 = vadd.f32 %v1981, %v2281
    %v2551 = vadd.f32 %v1982, %v2286
    %v2552 = vadd.f32 %v1983, %v2289
    %v2553 = vadd.f32 %v1984, %v2294
    %v2554 = vadd.f32 %v1985, %v2297
    %v2555 = vadd.f32 %v1986, %v2302
    %v2556 = vadd.f32 %v1987, %v2305
    %v2557 = vadd.f32 %v1988, %v2310
    %v2558 = vadd.f32 %v1989, %v2313
    %v2559 = vadd.f32 %v1990, %v2318
    %v2560 = vadd.f32 %v1991, %v2321
    %v2561 = vadd.f32 %v1992, %v2326
    %v2562 = vadd.f32 %v1993, %v2329
    %v2563 = vadd.f32 %v1994, %v2334
    %v2564 = vadd.f32 %v1995, %v2337
    %v2565 = vadd.f32 %v1996, %v2342
    %v2566 = vadd.f32 %v1997, %v2345
    %v2567 = vadd.f32 %v1998, %v2350
    %v2568 = vadd.f32 %v1999, %v2353
    %v2569 = vadd.f32 %v2000, %v2358
    %v2570 = vadd.f32 %v2001, %v2361
    %v2571 = vadd.f32 %v2002, %v2366
    %v2572 = vadd.f32 %v2003, %v2369
    %v2573 = vadd.f32 %v2004, %v2374
    %v2574 = vadd.f32 %v2005, %v2377
    %v2575 = vadd.f32 %v2006, %v2382
    %v2576 = vadd.f32 %v2007, %v2385
    %v2577 = vadd.f32 %v2008, %v2390
    %v2578 = vadd.f32 %v2009, %v2393
    %v2579 = vadd.f32 %v2010, %v2398
    %v2580 = vadd.f32 %v2011, %v2401
    %v2581 = vadd.f32 %v2012, %v2406
    %v2582 = vadd.f32 %v2013, %v2409
    %v2583 = vadd.f32 %v2014, %v2414
    %v2584 = vadd.f32 %v2015, %v2417
    %v2585 = vadd.f32 %v2016, %v2422
    %v2586 = vadd.f32 %v2017, %v2425
    %v2587 = vadd.f32 %v2018, %v2430
    %v2588 = vadd.f32 %v2019, %v2433
    %v2589 = vadd.f32 %v2020, %v2438
    %v2590 = vadd.f32 %v2021, %v2441
    %v2591 = vadd.f32 %v2022, %v2446
    %v2592 = vadd.f32 %v2023, %v2449
    %v2593 = vadd.f32 %v2024, %v2454
    %v2594 = vadd.f32 %v2025, %v2457
    %v2595 = vadd.f32 %v2026, %v2462
    %v2596 = vadd.f32 %v2027, %v2465
    %v2597 = vadd.f32 %v2028, %v2470
    %v2598 = vadd.f32 %v2029, %v2473
    %v2599 = vadd.f32 %v2030, %v2478
    %v2600 = vadd.f32 %v2031, %v2481
    %v2601 = vadd.f32 %v2032, %v2486
    %v2602 = vadd.f32 %v2033, %v2489
    %v2603 = vadd.f32 %v2034, %v2494
    %v2604 = vadd.f32 %v2035, %v2497
    %v2605 = vadd.f32 %v2036, %v2502
    %v2606 = vadd.f32 %v2037, %v2505
    %v2607 = vadd.f32 %v2038, %v2510
    %v2608 = vadd.f32 %v2039, %v2513
    %v2609 = vadd.f32 %v2040, %v2518
    %v2610 = vadd.f32 %v2041, %v2521
    %v2611 = vadd.f32 %v2042, %v2526
    %2612 = vst.msk [vmem:[#allocation2] sm:$0xff] %vm52, %v2531
    %2613 = vst.msk [vmem:[#allocation2 + $0x8] sm:$0xff] %vm52, %v2532
    %2614 = vst.msk [vmem:[#allocation2 + $0x10] sm:$0xff] %vm52, %v2533
    %2615 = vst.msk [vmem:[#allocation2 + $0x18] sm:$0xff] %vm52, %v2534
    %2616 = vst.msk [vmem:[#allocation2 + $0x20] sm:$0xff] %vm52, %v2535
    %2617 = vst.msk [vmem:[#allocation2 + $0x28] sm:$0xff] %vm52, %v2536
    %2618 = vst.msk [vmem:[#allocation2 + $0x30] sm:$0xff] %vm52, %v2537
    %2619 = vst.msk [vmem:[#allocation2 + $0x38] sm:$0xff] %vm52, %v2538
    %2620 = vst.msk [vmem:[#allocation2 + $0x40] sm:$0xff] %vm52, %v2539
    %2621 = vst.msk [vmem:[#allocation2 + $0x48] sm:$0xff] %vm52, %v2540
    %2622 = vst.msk [vmem:[#allocation2 + $0x50] sm:$0xff] %vm52, %v2541
    %2623 = vst.msk [vmem:[#allocation2 + $0x58] sm:$0xff] %vm52, %v2542
    %2624 = vst.msk [vmem:[#allocation2 + $0x60] sm:$0xff] %vm52, %v2543
    %2625 = vst.msk [vmem:[#allocation2 + $0x68] sm:$0xff] %vm52, %v2544
    %2626 = vst.msk [vmem:[#allocation2 + $0x70] sm:$0xff] %vm52, %v2545
    %2627 = vst.msk [vmem:[#allocation2 + $0x78] sm:$0xff] %vm52, %v2546
    %2628 = vst.msk [vmem:[#allocation2 + $0x80] sm:$0xff] %vm52, %v2547
    %2629 = vst.msk [vmem:[#allocation2 + $0x88] sm:$0xff] %vm52, %v2548
    %2630 = vst.msk [vmem:[#allocation2 + $0x90] sm:$0xff] %vm52, %v2549
    %2631 = vst.msk [vmem:[#allocation2 + $0x98] sm:$0xff] %vm52, %v2550
    %2632 = vst.msk [vmem:[#allocation2 + $0xa0] sm:$0xff] %vm52, %v2551
    %2633 = vst.msk [vmem:[#allocation2 + $0xa8] sm:$0xff] %vm52, %v2552
    %2634 = vst.msk [vmem:[#allocation2 + $0xb0] sm:$0xff] %vm52, %v2553
    %2635 = vst.msk [vmem:[#allocation2 + $0xb8] sm:$0xff] %vm52, %v2554
    %2636 = vst.msk [vmem:[#allocation2 + $0xc0] sm:$0xff] %vm52, %v2555
    %2637 = vst.msk [vmem:[#allocation2 + $0xc8] sm:$0xff] %vm52, %v2556
    %2638 = vst.msk [vmem:[#allocation2 + $0xd0] sm:$0xff] %vm52, %v2557
    %2639 = vst.msk [vmem:[#allocation2 + $0xd8] sm:$0xff] %vm52, %v2558
    %2640 = vst.msk [vmem:[#allocation2 + $0xe0] sm:$0xff] %vm52, %v2559
    %2641 = vst.msk [vmem:[#allocation2 + $0xe8] sm:$0xff] %vm52, %v2560
    %2642 = vst.msk [vmem:[#allocation2 + $0xf0] sm:$0xff] %vm52, %v2561
    %2643 = vst.msk [vmem:[#allocation2 + $0xf8] sm:$0xff] %vm52, %v2562
    %2644 = vst.msk [vmem:[#allocation2 + $0x100] sm:$0xff] %vm52, %v2563
    %2645 = vst.msk [vmem:[#allocation2 + $0x108] sm:$0xff] %vm52, %v2564
    %2646 = vst.msk [vmem:[#allocation2 + $0x110] sm:$0xff] %vm52, %v2565
    %2647 = vst.msk [vmem:[#allocation2 + $0x118] sm:$0xff] %vm52, %v2566
    %2648 = vst.msk [vmem:[#allocation2 + $0x120] sm:$0xff] %vm52, %v2567
    %2649 = vst.msk [vmem:[#allocation2 + $0x128] sm:$0xff] %vm52, %v2568
    %2650 = vst.msk [vmem:[#allocation2 + $0x130] sm:$0xff] %vm52, %v2569
    %2651 = vst.msk [vmem:[#allocation2 + $0x138] sm:$0xff] %vm52, %v2570
    %2652 = vst.msk [vmem:[#allocation2 + $0x140] sm:$0xff] %vm52, %v2571
    %2653 = vst.msk [vmem:[#allocation2 + $0x148] sm:$0xff] %vm52, %v2572
    %2654 = vst.msk [vmem:[#allocation2 + $0x150] sm:$0xff] %vm52, %v2573
    %2655 = vst.msk [vmem:[#allocation2 + $0x158] sm:$0xff] %vm52, %v2574
    %2656 = vst.msk [vmem:[#allocation2 + $0x160] sm:$0xff] %vm52, %v2575
    %2657 = vst.msk [vmem:[#allocation2 + $0x168] sm:$0xff] %vm52, %v2576
    %2658 = vst.msk [vmem:[#allocation2 + $0x170] sm:$0xff] %vm52, %v2577
    %2659 = vst.msk [vmem:[#allocation2 + $0x178] sm:$0xff] %vm52, %v2578
    %2660 = vst.msk [vmem:[#allocation2 + $0x180] sm:$0xff] %vm52, %v2579
    %2661 = vst.msk [vmem:[#allocation2 + $0x188] sm:$0xff] %vm52, %v2580
    %2662 = vst.msk [vmem:[#allocation2 + $0x190] sm:$0xff] %vm52, %v2581
    %2663 = vst.msk [vmem:[#allocation2 + $0x198] sm:$0xff] %vm52, %v2582
    %2664 = vst.msk [vmem:[#allocation2 + $0x1a0] sm:$0xff] %vm52, %v2583
    %2665 = vst.msk [vmem:[#allocation2 + $0x1a8] sm:$0xff] %vm52, %v2584
    %2666 = vst.msk [vmem:[#allocation2 + $0x1b0] sm:$0xff] %vm52, %v2585
    %2667 = vst.msk [vmem:[#allocation2 + $0x1b8] sm:$0xff] %vm52, %v2586
    %2668 = vst.msk [vmem:[#allocation2 + $0x1c0] sm:$0xff] %vm52, %v2587
    %2669 = vst.msk [vmem:[#allocation2 + $0x1c8] sm:$0xff] %vm52, %v2588
    %2670 = vst.msk [vmem:[#allocation2 + $0x1d0] sm:$0xff] %vm52, %v2589
    %2671 = vst.msk [vmem:[#allocation2 + $0x1d8] sm:$0xff] %vm52, %v2590
    %2672 = vst.msk [vmem:[#allocation2 + $0x1e0] sm:$0xff] %vm52, %v2591
    %2673 = vst.msk [vmem:[#allocation2 + $0x1e8] sm:$0xff] %vm52, %v2592
    %2674 = vst.msk [vmem:[#allocation2 + $0x1f0] sm:$0xff] %vm52, %v2593
    %2675 = vst.msk [vmem:[#allocation2 + $0x1f8] sm:$0xff] %vm52, %v2594
    %2676 = vst.msk [vmem:[#allocation2 + $0x200] sm:$0xff] %vm52, %v2595
    %2677 = vst.msk [vmem:[#allocation2 + $0x208] sm:$0xff] %vm52, %v2596
    %2678 = vst.msk [vmem:[#allocation2 + $0x210] sm:$0xff] %vm52, %v2597
    %2679 = vst.msk [vmem:[#allocation2 + $0x218] sm:$0xff] %vm52, %v2598
    %2680 = vst.msk [vmem:[#allocation2 + $0x220] sm:$0xff] %vm52, %v2599
    %2681 = vst.msk [vmem:[#allocation2 + $0x228] sm:$0xff] %vm52, %v2600
    %2682 = vst.msk [vmem:[#allocation2 + $0x230] sm:$0xff] %vm52, %v2601
    %2683 = vst.msk [vmem:[#allocation2 + $0x238] sm:$0xff] %vm52, %v2602
    %2684 = vst.msk [vmem:[#allocation2 + $0x240] sm:$0xff] %vm52, %v2603
    %2685 = vst.msk [vmem:[#allocation2 + $0x248] sm:$0xff] %vm52, %v2604
    %2686 = vst.msk [vmem:[#allocation2 + $0x250] sm:$0xff] %vm52, %v2605
    %2687 = vst.msk [vmem:[#allocation2 + $0x258] sm:$0xff] %vm52, %v2606
    %2688 = vst.msk [vmem:[#allocation2 + $0x260] sm:$0xff] %vm52, %v2607
    %2689 = vst.msk [vmem:[#allocation2 + $0x268] sm:$0xff] %vm52, %v2608
    %2690 = vst.msk [vmem:[#allocation2 + $0x270] sm:$0xff] %vm52, %v2609
    %2691 = vst.msk [vmem:[#allocation2 + $0x278] sm:$0xff] %vm52, %v2610
    %2692 = vst.msk [vmem:[#allocation2 + $0x280] sm:$0xff] %vm52, %v2611
    %v2693 = vld [vmem:[%s0 + $0x12] sm:$0xff]
    %v2694 = vld [vmem:[%s0 + $0x1a] sm:$0xff]
    %v2695 = vld [vmem:[%s0 + $0x22] sm:$0xff]
    %v2696 = vld [vmem:[%s0 + $0x2a] sm:$0xff]
    %v2697 = vld [vmem:[%s0 + $0x32] sm:$0xff]
    %v2698 = vld [vmem:[%s0 + $0x3a] sm:$0xff]
    %v2699 = vld [vmem:[%s0 + $0x42] sm:$0xff]
    %v2700 = vld [vmem:[%s0 + $0x4a] sm:$0xff]
    %v2701 = vld [vmem:[%s0 + $0x52] sm:$0xff]
    %v2702 = vld [vmem:[%s0 + $0x5a] sm:$0xff]
    %v2703 = vld [vmem:[%s0 + $0x62] sm:$0xff]
    %v2704 = vld [vmem:[%s0 + $0x6a] sm:$0xff]
    %v2705 = vld [vmem:[%s0 + $0x72] sm:$0xff]
    %v2706 = vld [vmem:[%s0 + $0x7a] sm:$0xff]
    %v2707 = vld [vmem:[%s0 + $0x82] sm:$0xff]
    %v2708 = vld [vmem:[%s0 + $0x8a] sm:$0xff]
    %v2709 = vld [vmem:[%s0 + $0x92] sm:$0xff]
    %v2710 = vld [vmem:[%s0 + $0x9a] sm:$0xff]
    %v2711 = vld [vmem:[%s0 + $0xa2] sm:$0xff]
    %v2712 = vld [vmem:[%s0 + $0xaa] sm:$0xff]
    %v2713 = vld [vmem:[%s0 + $0xb2] sm:$0xff]
    %v2714 = vld [vmem:[%s0 + $0xba] sm:$0xff]
    %v2715 = vld [vmem:[%s0 + $0xc2] sm:$0xff]
    %v2716 = vld [vmem:[%s0 + $0xca] sm:$0xff]
    %v2717 = vld [vmem:[%s0 + $0xd2] sm:$0xff]
    %v2718 = vld [vmem:[%s0 + $0xda] sm:$0xff]
    %v2719 = vld [vmem:[%s0 + $0xe2] sm:$0xff]
    %v2720 = vld [vmem:[%s0 + $0xea] sm:$0xff]
    %v2721 = vld [vmem:[%s0 + $0xf2] sm:$0xff]
    %v2722 = vld [vmem:[%s0 + $0xfa] sm:$0xff]
    %v2723 = vld [vmem:[%s0 + $0x102] sm:$0xff]
    %v2724 = vld [vmem:[%s0 + $0x10a] sm:$0xff]
    %v2725 = vld [vmem:[%s0 + $0x112] sm:$0xff]
    %v2726 = vld [vmem:[%s0 + $0x11a] sm:$0xff]
    %v2727 = vld [vmem:[%s0 + $0x122] sm:$0xff]
    %v2728 = vld [vmem:[%s0 + $0x12a] sm:$0xff]
    %v2729 = vld [vmem:[%s0 + $0x132] sm:$0xff]
    %v2730 = vld [vmem:[%s0 + $0x13a] sm:$0xff]
    %v2731 = vld [vmem:[%s0 + $0x142] sm:$0xff]
    %v2732 = vld [vmem:[%s0 + $0x14a] sm:$0xff]
    %v2733 = vld [vmem:[%s0 + $0x152] sm:$0xff]
    %v2734 = vld [vmem:[%s0 + $0x15a] sm:$0xff]
    %v2735 = vld [vmem:[%s0 + $0x162] sm:$0xff]
    %v2736 = vld [vmem:[%s0 + $0x16a] sm:$0xff]
    %v2737 = vld [vmem:[%s0 + $0x172] sm:$0xff]
    %v2738 = vld [vmem:[%s0 + $0x17a] sm:$0xff]
    %v2739 = vld [vmem:[%s0 + $0x182] sm:$0xff]
    %v2740 = vld [vmem:[%s0 + $0x18a] sm:$0xff]
    %v2741 = vld [vmem:[%s0 + $0x192] sm:$0xff]
    %v2742 = vld [vmem:[%s0 + $0x19a] sm:$0xff]
    %v2743 = vld [vmem:[%s0 + $0x1a2] sm:$0xff]
    %v2744 = vld [vmem:[%s0 + $0x1aa] sm:$0xff]
    %v2745 = vld [vmem:[%s0 + $0x1b2] sm:$0xff]
    %v2746 = vld [vmem:[%s0 + $0x1ba] sm:$0xff]
    %v2747 = vld [vmem:[%s0 + $0x1c2] sm:$0xff]
    %v2748 = vld [vmem:[%s0 + $0x1ca] sm:$0xff]
    %v2749 = vld [vmem:[%s0 + $0x1d2] sm:$0xff]
    %v2750 = vld [vmem:[%s0 + $0x1da] sm:$0xff]
    %v2751 = vld [vmem:[%s0 + $0x1e2] sm:$0xff]
    %v2752 = vld [vmem:[%s0 + $0x1ea] sm:$0xff]
    %v2753 = vld [vmem:[%s0 + $0x1f2] sm:$0xff]
    %v2754 = vld [vmem:[%s0 + $0x1fa] sm:$0xff]
    %v2755 = vld [vmem:[%s0 + $0x202] sm:$0xff]
    %v2756 = vld [vmem:[%s0 + $0x20a] sm:$0xff]
    %v2757 = vld [vmem:[%s0 + $0x212] sm:$0xff]
    %v2758 = vld [vmem:[%s0 + $0x21a] sm:$0xff]
    %v2759 = vld [vmem:[%s0 + $0x222] sm:$0xff]
    %v2760 = vld [vmem:[%s0 + $0x22a] sm:$0xff]
    %v2761 = vld [vmem:[%s0 + $0x232] sm:$0xff]
    %v2762 = vld [vmem:[%s0 + $0x23a] sm:$0xff]
    %v2763 = vld [vmem:[%s0 + $0x242] sm:$0xff]
    %v2764 = vld [vmem:[%s0 + $0x24a] sm:$0xff]
    %v2765 = vld [vmem:[%s0 + $0x252] sm:$0xff]
    %v2766 = vld [vmem:[%s0 + $0x25a] sm:$0xff]
    %v2767 = vld [vmem:[%s0 + $0x262] sm:$0xff]
    %v2768 = vld [vmem:[%s0 + $0x26a] sm:$0xff]
    %v2769 = vld [vmem:[%s0 + $0x272] sm:$0xff]
    %v2770 = vld [vmem:[%s0 + $0x27a] sm:$0xff]
    %v2771 = vld [vmem:[%s0 + $0x282] sm:$0xff]
    %v2772 = vld [vmem:[%s0 + $0x28a] sm:$0xff]
    %v2773 = vld [vmem:[%s0 + $0x292] sm:$0xff]
    %v2774 = vpack.c.bf16 %v2694, %v2693
    %v2775 = vpack.c.bf16 %v2696, %v2695
    %v2776 = vpack.c.bf16 %v2698, %v2697
    %v2777 = vpack.c.bf16 %v2700, %v2699
    %v2778 = vpack.c.bf16 %v2702, %v2701
    %v2779 = vpack.c.bf16 %v2704, %v2703
    %v2780 = vpack.c.bf16 %v2706, %v2705
    %v2781 = vpack.c.bf16 %v2708, %v2707
    %v2782 = vpack.c.bf16 %v2710, %v2709
    %v2783 = vpack.c.bf16 %v2712, %v2711
    %v2784 = vpack.c.bf16 %v2714, %v2713
    %v2785 = vpack.c.bf16 %v2716, %v2715
    %v2786 = vpack.c.bf16 %v2718, %v2717
    %v2787 = vpack.c.bf16 %v2720, %v2719
    %v2788 = vpack.c.bf16 %v2722, %v2721
    %v2789 = vpack.c.bf16 %v2724, %v2723
    %v2790 = vpack.c.bf16 %v2726, %v2725
    %v2791 = vpack.c.bf16 %v2728, %v2727
    %v2792 = vpack.c.bf16 %v2730, %v2729
    %v2793 = vpack.c.bf16 %v2732, %v2731
    %v2794 = vpack.c.bf16 %v2734, %v2733
    %v2795 = vpack.c.bf16 %v2736, %v2735
    %v2796 = vpack.c.bf16 %v2738, %v2737
    %v2797 = vpack.c.bf16 %v2740, %v2739
    %v2798 = vpack.c.bf16 %v2742, %v2741
    %v2799 = vpack.c.bf16 %v2744, %v2743
    %v2800 = vpack.c.bf16 %v2746, %v2745
    %v2801 = vpack.c.bf16 %v2748, %v2747
    %v2802 = vpack.c.bf16 %v2750, %v2749
    %v2803 = vpack.c.bf16 %v2752, %v2751
    %v2804 = vpack.c.bf16 %v2754, %v2753
    %v2805 = vpack.c.bf16 %v2756, %v2755
    %v2806 = vpack.c.bf16 %v2758, %v2757
    %v2807 = vpack.c.bf16 %v2760, %v2759
    %v2808 = vpack.c.bf16 %v2762, %v2761
    %v2809 = vpack.c.bf16 %v2764, %v2763
    %v2810 = vpack.c.bf16 %v2766, %v2765
    %v2811 = vpack.c.bf16 %v2768, %v2767
    %v2812 = vpack.c.bf16 %v2770, %v2769
    %v2813 = vpack.c.bf16 %v2772, %v2771
    %v2814 = vpack.c.bf16 %v2773, %v2773
    %v2815 = vld [vmem:[#allocation2] sm:$0xff]
    %v2816 = vld [vmem:[#allocation2 + $0x8] sm:$0xff]
    %v2817 = vld [vmem:[#allocation2 + $0x10] sm:$0xff]
    %v2818 = vld [vmem:[#allocation2 + $0x18] sm:$0xff]
    %v2819 = vld [vmem:[#allocation2 + $0x20] sm:$0xff]
    %v2820 = vld [vmem:[#allocation2 + $0x28] sm:$0xff]
    %v2821 = vld [vmem:[#allocation2 + $0x30] sm:$0xff]
    %v2822 = vld [vmem:[#allocation2 + $0x38] sm:$0xff]
    %v2823 = vld [vmem:[#allocation2 + $0x40] sm:$0xff]
    %v2824 = vld [vmem:[#allocation2 + $0x48] sm:$0xff]
    %v2825 = vld [vmem:[#allocation2 + $0x50] sm:$0xff]
    %v2826 = vld [vmem:[#allocation2 + $0x58] sm:$0xff]
    %v2827 = vld [vmem:[#allocation2 + $0x60] sm:$0xff]
    %v2828 = vld [vmem:[#allocation2 + $0x68] sm:$0xff]
    %v2829 = vld [vmem:[#allocation2 + $0x70] sm:$0xff]
    %v2830 = vld [vmem:[#allocation2 + $0x78] sm:$0xff]
    %v2831 = vld [vmem:[#allocation2 + $0x80] sm:$0xff]
    %v2832 = vld [vmem:[#allocation2 + $0x88] sm:$0xff]
    %v2833 = vld [vmem:[#allocation2 + $0x90] sm:$0xff]
    %v2834 = vld [vmem:[#allocation2 + $0x98] sm:$0xff]
    %v2835 = vld [vmem:[#allocation2 + $0xa0] sm:$0xff]
    %v2836 = vld [vmem:[#allocation2 + $0xa8] sm:$0xff]
    %v2837 = vld [vmem:[#allocation2 + $0xb0] sm:$0xff]
    %v2838 = vld [vmem:[#allocation2 + $0xb8] sm:$0xff]
    %v2839 = vld [vmem:[#allocation2 + $0xc0] sm:$0xff]
    %v2840 = vld [vmem:[#allocation2 + $0xc8] sm:$0xff]
    %v2841 = vld [vmem:[#allocation2 + $0xd0] sm:$0xff]
    %v2842 = vld [vmem:[#allocation2 + $0xd8] sm:$0xff]
    %v2843 = vld [vmem:[#allocation2 + $0xe0] sm:$0xff]
    %v2844 = vld [vmem:[#allocation2 + $0xe8] sm:$0xff]
    %v2845 = vld [vmem:[#allocation2 + $0xf0] sm:$0xff]
    %v2846 = vld [vmem:[#allocation2 + $0xf8] sm:$0xff]
    %v2847 = vld [vmem:[#allocation2 + $0x100] sm:$0xff]
    %v2848 = vld [vmem:[#allocation2 + $0x108] sm:$0xff]
    %v2849 = vld [vmem:[#allocation2 + $0x110] sm:$0xff]
    %v2850 = vld [vmem:[#allocation2 + $0x118] sm:$0xff]
    %v2851 = vld [vmem:[#allocation2 + $0x120] sm:$0xff]
    %v2852 = vld [vmem:[#allocation2 + $0x128] sm:$0xff]
    %v2853 = vld [vmem:[#allocation2 + $0x130] sm:$0xff]
    %v2854 = vld [vmem:[#allocation2 + $0x138] sm:$0xff]
    %v2855 = vld [vmem:[#allocation2 + $0x140] sm:$0xff]
    %v2856 = vld [vmem:[#allocation2 + $0x148] sm:$0xff]
    %v2857 = vld [vmem:[#allocation2 + $0x150] sm:$0xff]
    %v2858 = vld [vmem:[#allocation2 + $0x158] sm:$0xff]
    %v2859 = vld [vmem:[#allocation2 + $0x160] sm:$0xff]
    %v2860 = vld [vmem:[#allocation2 + $0x168] sm:$0xff]
    %v2861 = vld [vmem:[#allocation2 + $0x170] sm:$0xff]
    %v2862 = vld [vmem:[#allocation2 + $0x178] sm:$0xff]
    %v2863 = vld [vmem:[#allocation2 + $0x180] sm:$0xff]
    %v2864 = vld [vmem:[#allocation2 + $0x188] sm:$0xff]
    %v2865 = vld [vmem:[#allocation2 + $0x190] sm:$0xff]
    %v2866 = vld [vmem:[#allocation2 + $0x198] sm:$0xff]
    %v2867 = vld [vmem:[#allocation2 + $0x1a0] sm:$0xff]
    %v2868 = vld [vmem:[#allocation2 + $0x1a8] sm:$0xff]
    %v2869 = vld [vmem:[#allocation2 + $0x1b0] sm:$0xff]
    %v2870 = vld [vmem:[#allocation2 + $0x1b8] sm:$0xff]
    %v2871 = vld [vmem:[#allocation2 + $0x1c0] sm:$0xff]
    %v2872 = vld [vmem:[#allocation2 + $0x1c8] sm:$0xff]
    %v2873 = vld [vmem:[#allocation2 + $0x1d0] sm:$0xff]
    %v2874 = vld [vmem:[#allocation2 + $0x1d8] sm:$0xff]
    %v2875 = vld [vmem:[#allocation2 + $0x1e0] sm:$0xff]
    %v2876 = vld [vmem:[#allocation2 + $0x1e8] sm:$0xff]
    %v2877 = vld [vmem:[#allocation2 + $0x1f0] sm:$0xff]
    %v2878 = vld [vmem:[#allocation2 + $0x1f8] sm:$0xff]
    %v2879 = vld [vmem:[#allocation2 + $0x200] sm:$0xff]
    %v2880 = vld [vmem:[#allocation2 + $0x208] sm:$0xff]
    %v2881 = vld [vmem:[#allocation2 + $0x210] sm:$0xff]
    %v2882 = vld [vmem:[#allocation2 + $0x218] sm:$0xff]
    %v2883 = vld [vmem:[#allocation2 + $0x220] sm:$0xff]
    %v2884 = vld [vmem:[#allocation2 + $0x228] sm:$0xff]
    %v2885 = vld [vmem:[#allocation2 + $0x230] sm:$0xff]
    %v2886 = vld [vmem:[#allocation2 + $0x238] sm:$0xff]
    %v2887 = vld [vmem:[#allocation2 + $0x240] sm:$0xff]
    %v2888 = vld [vmem:[#allocation2 + $0x248] sm:$0xff]
    %v2889 = vld [vmem:[#allocation2 + $0x250] sm:$0xff]
    %v2890 = vld [vmem:[#allocation2 + $0x258] sm:$0xff]
    %v2891 = vld [vmem:[#allocation2 + $0x260] sm:$0xff]
    %v2892 = vld [vmem:[#allocation2 + $0x268] sm:$0xff]
    %v2893 = vld [vmem:[#allocation2 + $0x270] sm:$0xff]
    %v2894 = vld [vmem:[#allocation2 + $0x278] sm:$0xff]
    %v2895 = vld [vmem:[#allocation2 + $0x280] sm:$0xff]
    %s2896 = scalar_lea.vmem %s2, 12
    %v2897 = vld [vmem:[%s2896] sm:$0xf]
    %v2899 = vsel %vm52, %v2774, 0
    %v2902 = vsel %vm52, %v2775, 0
    %v2905 = vsel %vm52, %v2776, 0
    %v2908 = vsel %vm52, %v2777, 0
    %v2911 = vsel %vm52, %v2778, 0
    %v2914 = vsel %vm52, %v2779, 0
    %v2917 = vsel %vm52, %v2780, 0
    %v2920 = vsel %vm52, %v2781, 0
    %v2923 = vsel %vm52, %v2782, 0
    %v2926 = vsel %vm52, %v2783, 0
    %v2929 = vsel %vm52, %v2784, 0
    %v2932 = vsel %vm52, %v2785, 0
    %v2935 = vsel %vm52, %v2786, 0
    %v2938 = vsel %vm52, %v2787, 0
    %v2941 = vsel %vm52, %v2788, 0
    %v2944 = vsel %vm52, %v2789, 0
    %v2947 = vsel %vm52, %v2790, 0
    %v2950 = vsel %vm52, %v2791, 0
    %v2953 = vsel %vm52, %v2792, 0
    %v2956 = vsel %vm52, %v2793, 0
    %v2959 = vsel %vm52, %v2794, 0
    %v2962 = vsel %vm52, %v2795, 0
    %v2965 = vsel %vm52, %v2796, 0
    %v2968 = vsel %vm52, %v2797, 0
    %v2971 = vsel %vm52, %v2798, 0
    %v2974 = vsel %vm52, %v2799, 0
    %v2977 = vsel %vm52, %v2800, 0
    %v2980 = vsel %vm52, %v2801, 0
    %v2983 = vsel %vm52, %v2802, 0
    %v2986 = vsel %vm52, %v2803, 0
    %v2989 = vsel %vm52, %v2804, 0
    %v2992 = vsel %vm52, %v2805, 0
    %v2995 = vsel %vm52, %v2806, 0
    %v2998 = vsel %vm52, %v2807, 0
    %v3001 = vsel %vm52, %v2808, 0
    %v3004 = vsel %vm52, %v2809, 0
    %v3007 = vsel %vm52, %v2810, 0
    %v3010 = vsel %vm52, %v2811, 0
    %v3013 = vsel %vm52, %v2812, 0
    %v3016 = vsel %vm52, %v2813, 0
    %v3019 = vsel %vm52, %v2814, 0
    %v3022 = vsel %vm461, %v2897, 0
    %3024 = vmatprep.subr.bf16.mxu0 0
    %3025 = vmatpush1.bf16.msra.mxu0 0
    %3026 = vmatprep.subr.bf16.mxu0 0
    %3027 = vmatpush1.bf16.msra.mxu0 0
    %3028 = vmatprep.subr.bf16.mxu0 0
    %3029 = vmatpush1.bf16.msra.mxu0 0
    %3030 = vmatprep.subr.bf16.mxu0 0
    %3031 = vmatpush1.bf16.msra.mxu0 0
    %3032 = vmatprep.subr.bf16.mxu0 0
    %3033 = vmatpush1.bf16.msra.mxu0 0
    %3034 = vmatprep.subr.bf16.mxu0 0
    %3035 = vmatpush1.bf16.msra.mxu0 0
    %3036 = vmatprep.subr.bf16.mxu0 0
    %3037 = vmatpush1.bf16.msra.mxu0 0
    %3038 = vmatprep.subr.bf16.mxu0 0
    %3039 = vmatpush1.bf16.msra.mxu0 %v3022
    %3040 = vmatprep.subr.bf16.mxu0 0
    %3041 = vmatpush2.bf16.msra.mxu0 0
    %3042 = vmatprep.subr.bf16.mxu0 0
    %3043 = vmatpush2.bf16.msra.mxu0 0
    %3044 = vmatprep.subr.bf16.mxu0 0
    %3045 = vmatpush2.bf16.msra.mxu0 0
    %3046 = vmatprep.subr.bf16.mxu0 0
    %3047 = vmatpush2.bf16.msra.mxu0 0
    %3048 = vmatprep.subr.bf16.mxu0 0
    %3049 = vmatpush2.bf16.msra.mxu0 0
    %3050 = vmatprep.subr.bf16.mxu0 0
    %3051 = vmatpush2.bf16.msra.mxu0 0
    %3052 = vmatprep.subr.bf16.mxu0 0
    %3053 = vmatpush2.bf16.msra.mxu0 0
    %3054 = vmatprep.subr.bf16.mxu0 0
    %3055 = vmatpush2.bf16.msra.mxu0 0
    %3056 = vmatprep.mubr.bf16.mxu0 0
    %3057 = vmatmul.mubr.bf16.gmra.mxu0 %v2899
    %v3058 = vpop.f32.mrf.mxu0
    %v3059 = vadd.f32 0.0, %v3058
    %v3060 = vpop.f32.mrf.mxu0
    %v3061 = vpop.f32.mrf.mxu0
    %v3062 = vadd.f32 0.0, %v3061
    %v3063 = vpop.f32.mrf.mxu0
    %3064 = vmatprep.mubr.bf16.mxu0 0
    %3065 = vmatmul.mubr.bf16.gmra.mxu0 %v2902
    %v3066 = vpop.f32.mrf.mxu0
    %v3067 = vadd.f32 0.0, %v3066
    %v3068 = vpop.f32.mrf.mxu0
    %v3069 = vpop.f32.mrf.mxu0
    %v3070 = vadd.f32 0.0, %v3069
    %v3071 = vpop.f32.mrf.mxu0
    %3072 = vmatprep.mubr.bf16.mxu0 0
    %3073 = vmatmul.mubr.bf16.gmra.mxu0 %v2905
    %v3074 = vpop.f32.mrf.mxu0
    %v3075 = vadd.f32 0.0, %v3074
    %v3076 = vpop.f32.mrf.mxu0
    %v3077 = vpop.f32.mrf.mxu0
    %v3078 = vadd.f32 0.0, %v3077
    %v3079 = vpop.f32.mrf.mxu0
    %3080 = vmatprep.mubr.bf16.mxu0 0
    %3081 = vmatmul.mubr.bf16.gmra.mxu0 %v2908
    %v3082 = vpop.f32.mrf.mxu0
    %v3083 = vadd.f32 0.0, %v3082
    %v3084 = vpop.f32.mrf.mxu0
    %v3085 = vpop.f32.mrf.mxu0
    %v3086 = vadd.f32 0.0, %v3085
    %v3087 = vpop.f32.mrf.mxu0
    %3088 = vmatprep.mubr.bf16.mxu0 0
    %3089 = vmatmul.mubr.bf16.gmra.mxu0 %v2911
    %v3090 = vpop.f32.mrf.mxu0
    %v3091 = vadd.f32 0.0, %v3090
    %v3092 = vpop.f32.mrf.mxu0
    %v3093 = vpop.f32.mrf.mxu0
    %v3094 = vadd.f32 0.0, %v3093
    %v3095 = vpop.f32.mrf.mxu0
    %3096 = vmatprep.mubr.bf16.mxu0 0
    %3097 = vmatmul.mubr.bf16.gmra.mxu0 %v2914
    %v3098 = vpop.f32.mrf.mxu0
    %v3099 = vadd.f32 0.0, %v3098
    %v3100 = vpop.f32.mrf.mxu0
    %v3101 = vpop.f32.mrf.mxu0
    %v3102 = vadd.f32 0.0, %v3101
    %v3103 = vpop.f32.mrf.mxu0
    %3104 = vmatprep.mubr.bf16.mxu0 0
    %3105 = vmatmul.mubr.bf16.gmra.mxu0 %v2917
    %v3106 = vpop.f32.mrf.mxu0
    %v3107 = vadd.f32 0.0, %v3106
    %v3108 = vpop.f32.mrf.mxu0
    %v3109 = vpop.f32.mrf.mxu0
    %v3110 = vadd.f32 0.0, %v3109
    %v3111 = vpop.f32.mrf.mxu0
    %3112 = vmatprep.mubr.bf16.mxu0 0
    %3113 = vmatmul.mubr.bf16.gmra.mxu0 %v2920
    %v3114 = vpop.f32.mrf.mxu0
    %v3115 = vadd.f32 0.0, %v3114
    %v3116 = vpop.f32.mrf.mxu0
    %v3117 = vpop.f32.mrf.mxu0
    %v3118 = vadd.f32 0.0, %v3117
    %v3119 = vpop.f32.mrf.mxu0
    %3120 = vmatprep.mubr.bf16.mxu0 0
    %3121 = vmatmul.mubr.bf16.gmra.mxu0 %v2923
    %v3122 = vpop.f32.mrf.mxu0
    %v3123 = vadd.f32 0.0, %v3122
    %v3124 = vpop.f32.mrf.mxu0
    %v3125 = vpop.f32.mrf.mxu0
    %v3126 = vadd.f32 0.0, %v3125
    %v3127 = vpop.f32.mrf.mxu0
    %3128 = vmatprep.mubr.bf16.mxu0 0
    %3129 = vmatmul.mubr.bf16.gmra.mxu0 %v2926
    %v3130 = vpop.f32.mrf.mxu0
    %v3131 = vadd.f32 0.0, %v3130
    %v3132 = vpop.f32.mrf.mxu0
    %v3133 = vpop.f32.mrf.mxu0
    %v3134 = vadd.f32 0.0, %v3133
    %v3135 = vpop.f32.mrf.mxu0
    %3136 = vmatprep.mubr.bf16.mxu0 0
    %3137 = vmatmul.mubr.bf16.gmra.mxu0 %v2929
    %v3138 = vpop.f32.mrf.mxu0
    %v3139 = vadd.f32 0.0, %v3138
    %v3140 = vpop.f32.mrf.mxu0
    %v3141 = vpop.f32.mrf.mxu0
    %v3142 = vadd.f32 0.0, %v3141
    %v3143 = vpop.f32.mrf.mxu0
    %3144 = vmatprep.mubr.bf16.mxu0 0
    %3145 = vmatmul.mubr.bf16.gmra.mxu0 %v2932
    %v3146 = vpop.f32.mrf.mxu0
    %v3147 = vadd.f32 0.0, %v3146
    %v3148 = vpop.f32.mrf.mxu0
    %v3149 = vpop.f32.mrf.mxu0
    %v3150 = vadd.f32 0.0, %v3149
    %v3151 = vpop.f32.mrf.mxu0
    %3152 = vmatprep.mubr.bf16.mxu0 0
    %3153 = vmatmul.mubr.bf16.gmra.mxu0 %v2935
    %v3154 = vpop.f32.mrf.mxu0
    %v3155 = vadd.f32 0.0, %v3154
    %v3156 = vpop.f32.mrf.mxu0
    %v3157 = vpop.f32.mrf.mxu0
    %v3158 = vadd.f32 0.0, %v3157
    %v3159 = vpop.f32.mrf.mxu0
    %3160 = vmatprep.mubr.bf16.mxu0 0
    %3161 = vmatmul.mubr.bf16.gmra.mxu0 %v2938
    %v3162 = vpop.f32.mrf.mxu0
    %v3163 = vadd.f32 0.0, %v3162
    %v3164 = vpop.f32.mrf.mxu0
    %v3165 = vpop.f32.mrf.mxu0
    %v3166 = vadd.f32 0.0, %v3165
    %v3167 = vpop.f32.mrf.mxu0
    %3168 = vmatprep.mubr.bf16.mxu0 0
    %3169 = vmatmul.mubr.bf16.gmra.mxu0 %v2941
    %v3170 = vpop.f32.mrf.mxu0
    %v3171 = vadd.f32 0.0, %v3170
    %v3172 = vpop.f32.mrf.mxu0
    %v3173 = vpop.f32.mrf.mxu0
    %v3174 = vadd.f32 0.0, %v3173
    %v3175 = vpop.f32.mrf.mxu0
    %3176 = vmatprep.mubr.bf16.mxu0 0
    %3177 = vmatmul.mubr.bf16.gmra.mxu0 %v2944
    %v3178 = vpop.f32.mrf.mxu0
    %v3179 = vadd.f32 0.0, %v3178
    %v3180 = vpop.f32.mrf.mxu0
    %v3181 = vpop.f32.mrf.mxu0
    %v3182 = vadd.f32 0.0, %v3181
    %v3183 = vpop.f32.mrf.mxu0
    %3184 = vmatprep.mubr.bf16.mxu0 0
    %3185 = vmatmul.mubr.bf16.gmra.mxu0 %v2947
    %v3186 = vpop.f32.mrf.mxu0
    %v3187 = vadd.f32 0.0, %v3186
    %v3188 = vpop.f32.mrf.mxu0
    %v3189 = vpop.f32.mrf.mxu0
    %v3190 = vadd.f32 0.0, %v3189
    %v3191 = vpop.f32.mrf.mxu0
    %3192 = vmatprep.mubr.bf16.mxu0 0
    %3193 = vmatmul.mubr.bf16.gmra.mxu0 %v2950
    %v3194 = vpop.f32.mrf.mxu0
    %v3195 = vadd.f32 0.0, %v3194
    %v3196 = vpop.f32.mrf.mxu0
    %v3197 = vpop.f32.mrf.mxu0
    %v3198 = vadd.f32 0.0, %v3197
    %v3199 = vpop.f32.mrf.mxu0
    %3200 = vmatprep.mubr.bf16.mxu0 0
    %3201 = vmatmul.mubr.bf16.gmra.mxu0 %v2953
    %v3202 = vpop.f32.mrf.mxu0
    %v3203 = vadd.f32 0.0, %v3202
    %v3204 = vpop.f32.mrf.mxu0
    %v3205 = vpop.f32.mrf.mxu0
    %v3206 = vadd.f32 0.0, %v3205
    %v3207 = vpop.f32.mrf.mxu0
    %3208 = vmatprep.mubr.bf16.mxu0 0
    %3209 = vmatmul.mubr.bf16.gmra.mxu0 %v2956
    %v3210 = vpop.f32.mrf.mxu0
    %v3211 = vadd.f32 0.0, %v3210
    %v3212 = vpop.f32.mrf.mxu0
    %v3213 = vpop.f32.mrf.mxu0
    %v3214 = vadd.f32 0.0, %v3213
    %v3215 = vpop.f32.mrf.mxu0
    %3216 = vmatprep.mubr.bf16.mxu0 0
    %3217 = vmatmul.mubr.bf16.gmra.mxu0 %v2959
    %v3218 = vpop.f32.mrf.mxu0
    %v3219 = vadd.f32 0.0, %v3218
    %v3220 = vpop.f32.mrf.mxu0
    %v3221 = vpop.f32.mrf.mxu0
    %v3222 = vadd.f32 0.0, %v3221
    %v3223 = vpop.f32.mrf.mxu0
    %3224 = vmatprep.mubr.bf16.mxu0 0
    %3225 = vmatmul.mubr.bf16.gmra.mxu0 %v2962
    %v3226 = vpop.f32.mrf.mxu0
    %v3227 = vadd.f32 0.0, %v3226
    %v3228 = vpop.f32.mrf.mxu0
    %v3229 = vpop.f32.mrf.mxu0
    %v3230 = vadd.f32 0.0, %v3229
    %v3231 = vpop.f32.mrf.mxu0
    %3232 = vmatprep.mubr.bf16.mxu0 0
    %3233 = vmatmul.mubr.bf16.gmra.mxu0 %v2965
    %v3234 = vpop.f32.mrf.mxu0
    %v3235 = vadd.f32 0.0, %v3234
    %v3236 = vpop.f32.mrf.mxu0
    %v3237 = vpop.f32.mrf.mxu0
    %v3238 = vadd.f32 0.0, %v3237
    %v3239 = vpop.f32.mrf.mxu0
    %3240 = vmatprep.mubr.bf16.mxu0 0
    %3241 = vmatmul.mubr.bf16.gmra.mxu0 %v2968
    %v3242 = vpop.f32.mrf.mxu0
    %v3243 = vadd.f32 0.0, %v3242
    %v3244 = vpop.f32.mrf.mxu0
    %v3245 = vpop.f32.mrf.mxu0
    %v3246 = vadd.f32 0.0, %v3245
    %v3247 = vpop.f32.mrf.mxu0
    %3248 = vmatprep.mubr.bf16.mxu0 0
    %3249 = vmatmul.mubr.bf16.gmra.mxu0 %v2971
    %v3250 = vpop.f32.mrf.mxu0
    %v3251 = vadd.f32 0.0, %v3250
    %v3252 = vpop.f32.mrf.mxu0
    %v3253 = vpop.f32.mrf.mxu0
    %v3254 = vadd.f32 0.0, %v3253
    %v3255 = vpop.f32.mrf.mxu0
    %3256 = vmatprep.mubr.bf16.mxu0 0
    %3257 = vmatmul.mubr.bf16.gmra.mxu0 %v2974
    %v3258 = vpop.f32.mrf.mxu0
    %v3259 = vadd.f32 0.0, %v3258
    %v3260 = vpop.f32.mrf.mxu0
    %v3261 = vpop.f32.mrf.mxu0
    %v3262 = vadd.f32 0.0, %v3261
    %v3263 = vpop.f32.mrf.mxu0
    %3264 = vmatprep.mubr.bf16.mxu0 0
    %3265 = vmatmul.mubr.bf16.gmra.mxu0 %v2977
    %v3266 = vpop.f32.mrf.mxu0
    %v3267 = vadd.f32 0.0, %v3266
    %v3268 = vpop.f32.mrf.mxu0
    %v3269 = vpop.f32.mrf.mxu0
    %v3270 = vadd.f32 0.0, %v3269
    %v3271 = vpop.f32.mrf.mxu0
    %3272 = vmatprep.mubr.bf16.mxu0 0
    %3273 = vmatmul.mubr.bf16.gmra.mxu0 %v2980
    %v3274 = vpop.f32.mrf.mxu0
    %v3275 = vadd.f32 0.0, %v3274
    %v3276 = vpop.f32.mrf.mxu0
    %v3277 = vpop.f32.mrf.mxu0
    %v3278 = vadd.f32 0.0, %v3277
    %v3279 = vpop.f32.mrf.mxu0
    %3280 = vmatprep.mubr.bf16.mxu0 0
    %3281 = vmatmul.mubr.bf16.gmra.mxu0 %v2983
    %v3282 = vpop.f32.mrf.mxu0
    %v3283 = vadd.f32 0.0, %v3282
    %v3284 = vpop.f32.mrf.mxu0
    %v3285 = vpop.f32.mrf.mxu0
    %v3286 = vadd.f32 0.0, %v3285
    %v3287 = vpop.f32.mrf.mxu0
    %3288 = vmatprep.mubr.bf16.mxu0 0
    %3289 = vmatmul.mubr.bf16.gmra.mxu0 %v2986
    %v3290 = vpop.f32.mrf.mxu0
    %v3291 = vadd.f32 0.0, %v3290
    %v3292 = vpop.f32.mrf.mxu0
    %v3293 = vpop.f32.mrf.mxu0
    %v3294 = vadd.f32 0.0, %v3293
    %v3295 = vpop.f32.mrf.mxu0
    %3296 = vmatprep.mubr.bf16.mxu0 0
    %3297 = vmatmul.mubr.bf16.gmra.mxu0 %v2989
    %v3298 = vpop.f32.mrf.mxu0
    %v3299 = vadd.f32 0.0, %v3298
    %v3300 = vpop.f32.mrf.mxu0
    %v3301 = vpop.f32.mrf.mxu0
    %v3302 = vadd.f32 0.0, %v3301
    %v3303 = vpop.f32.mrf.mxu0
    %3304 = vmatprep.mubr.bf16.mxu0 0
    %3305 = vmatmul.mubr.bf16.gmra.mxu0 %v2992
    %v3306 = vpop.f32.mrf.mxu0
    %v3307 = vadd.f32 0.0, %v3306
    %v3308 = vpop.f32.mrf.mxu0
    %v3309 = vpop.f32.mrf.mxu0
    %v3310 = vadd.f32 0.0, %v3309
    %v3311 = vpop.f32.mrf.mxu0
    %3312 = vmatprep.mubr.bf16.mxu0 0
    %3313 = vmatmul.mubr.bf16.gmra.mxu0 %v2995
    %v3314 = vpop.f32.mrf.mxu0
    %v3315 = vadd.f32 0.0, %v3314
    %v3316 = vpop.f32.mrf.mxu0
    %v3317 = vpop.f32.mrf.mxu0
    %v3318 = vadd.f32 0.0, %v3317
    %v3319 = vpop.f32.mrf.mxu0
    %3320 = vmatprep.mubr.bf16.mxu0 0
    %3321 = vmatmul.mubr.bf16.gmra.mxu0 %v2998
    %v3322 = vpop.f32.mrf.mxu0
    %v3323 = vadd.f32 0.0, %v3322
    %v3324 = vpop.f32.mrf.mxu0
    %v3325 = vpop.f32.mrf.mxu0
    %v3326 = vadd.f32 0.0, %v3325
    %v3327 = vpop.f32.mrf.mxu0
    %3328 = vmatprep.mubr.bf16.mxu0 0
    %3329 = vmatmul.mubr.bf16.gmra.mxu0 %v3001
    %v3330 = vpop.f32.mrf.mxu0
    %v3331 = vadd.f32 0.0, %v3330
    %v3332 = vpop.f32.mrf.mxu0
    %v3333 = vpop.f32.mrf.mxu0
    %v3334 = vadd.f32 0.0, %v3333
    %v3335 = vpop.f32.mrf.mxu0
    %3336 = vmatprep.mubr.bf16.mxu0 0
    %3337 = vmatmul.mubr.bf16.gmra.mxu0 %v3004
    %v3338 = vpop.f32.mrf.mxu0
    %v3339 = vadd.f32 0.0, %v3338
    %v3340 = vpop.f32.mrf.mxu0
    %v3341 = vpop.f32.mrf.mxu0
    %v3342 = vadd.f32 0.0, %v3341
    %v3343 = vpop.f32.mrf.mxu0
    %3344 = vmatprep.mubr.bf16.mxu0 0
    %3345 = vmatmul.mubr.bf16.gmra.mxu0 %v3007
    %v3346 = vpop.f32.mrf.mxu0
    %v3347 = vadd.f32 0.0, %v3346
    %v3348 = vpop.f32.mrf.mxu0
    %v3349 = vpop.f32.mrf.mxu0
    %v3350 = vadd.f32 0.0, %v3349
    %v3351 = vpop.f32.mrf.mxu0
    %3352 = vmatprep.mubr.bf16.mxu0 0
    %3353 = vmatmul.mubr.bf16.gmra.mxu0 %v3010
    %v3354 = vpop.f32.mrf.mxu0
    %v3355 = vadd.f32 0.0, %v3354
    %v3356 = vpop.f32.mrf.mxu0
    %v3357 = vpop.f32.mrf.mxu0
    %v3358 = vadd.f32 0.0, %v3357
    %v3359 = vpop.f32.mrf.mxu0
    %3360 = vmatprep.mubr.bf16.mxu0 0
    %3361 = vmatmul.mubr.bf16.gmra.mxu0 %v3013
    %v3362 = vpop.f32.mrf.mxu0
    %v3363 = vadd.f32 0.0, %v3362
    %v3364 = vpop.f32.mrf.mxu0
    %v3365 = vpop.f32.mrf.mxu0
    %v3366 = vadd.f32 0.0, %v3365
    %v3367 = vpop.f32.mrf.mxu0
    %3368 = vmatprep.mubr.bf16.mxu0 0
    %3369 = vmatmul.mubr.bf16.gmra.mxu0 %v3016
    %v3370 = vpop.f32.mrf.mxu0
    %v3371 = vadd.f32 0.0, %v3370
    %v3372 = vpop.f32.mrf.mxu0
    %v3373 = vpop.f32.mrf.mxu0
    %v3374 = vadd.f32 0.0, %v3373
    %v3375 = vpop.f32.mrf.mxu0
    %3376 = vmatprep.mubr.bf16.mxu0 0
    %3377 = vmatmul.mubr.bf16.gmra.mxu0 %v3019
    %v3378 = vpop.f32.mrf.mxu0
    %v3379 = vadd.f32 0.0, %v3378
    %v3380 = vpop.f32.mrf.mxu0
    %v3381 = vpop.f32.mrf.mxu0
    %v3382 = vpop.f32.mrf.mxu0
    %3383 = vdwg.mxu0
    %v3384 = vadd.f32 %v2815, %v3059
    %v3385 = vadd.f32 %v2816, %v3062
    %v3386 = vadd.f32 %v2817, %v3067
    %v3387 = vadd.f32 %v2818, %v3070
    %v3388 = vadd.f32 %v2819, %v3075
    %v3389 = vadd.f32 %v2820, %v3078
    %v3390 = vadd.f32 %v2821, %v3083
    %v3391 = vadd.f32 %v2822, %v3086
    %v3392 = vadd.f32 %v2823, %v3091
    %v3393 = vadd.f32 %v2824, %v3094
    %v3394 = vadd.f32 %v2825, %v3099
    %v3395 = vadd.f32 %v2826, %v3102
    %v3396 = vadd.f32 %v2827, %v3107
    %v3397 = vadd.f32 %v2828, %v3110
    %v3398 = vadd.f32 %v2829, %v3115
    %v3399 = vadd.f32 %v2830, %v3118
    %v3400 = vadd.f32 %v2831, %v3123
    %v3401 = vadd.f32 %v2832, %v3126
    %v3402 = vadd.f32 %v2833, %v3131
    %v3403 = vadd.f32 %v2834, %v3134
    %v3404 = vadd.f32 %v2835, %v3139
    %v3405 = vadd.f32 %v2836, %v3142
    %v3406 = vadd.f32 %v2837, %v3147
    %v3407 = vadd.f32 %v2838, %v3150
    %v3408 = vadd.f32 %v2839, %v3155
    %v3409 = vadd.f32 %v2840, %v3158
    %v3410 = vadd.f32 %v2841, %v3163
    %v3411 = vadd.f32 %v2842, %v3166
    %v3412 = vadd.f32 %v2843, %v3171
    %v3413 = vadd.f32 %v2844, %v3174
    %v3414 = vadd.f32 %v2845, %v3179
    %v3415 = vadd.f32 %v2846, %v3182
    %v3416 = vadd.f32 %v2847, %v3187
    %v3417 = vadd.f32 %v2848, %v3190
    %v3418 = vadd.f32 %v2849, %v3195
    %v3419 = vadd.f32 %v2850, %v3198
    %v3420 = vadd.f32 %v2851, %v3203
    %v3421 = vadd.f32 %v2852, %v3206
    %v3422 = vadd.f32 %v2853, %v3211
    %v3423 = vadd.f32 %v2854, %v3214
    %v3424 = vadd.f32 %v2855, %v3219
    %v3425 = vadd.f32 %v2856, %v3222
    %v3426 = vadd.f32 %v2857, %v3227
    %v3427 = vadd.f32 %v2858, %v3230
    %v3428 = vadd.f32 %v2859, %v3235
    %v3429 = vadd.f32 %v2860, %v3238
    %v3430 = vadd.f32 %v2861, %v3243
    %v3431 = vadd.f32 %v2862, %v3246
    %v3432 = vadd.f32 %v2863, %v3251
    %v3433 = vadd.f32 %v2864, %v3254
    %v3434 = vadd.f32 %v2865, %v3259
    %v3435 = vadd.f32 %v2866, %v3262
    %v3436 = vadd.f32 %v2867, %v3267
    %v3437 = vadd.f32 %v2868, %v3270
    %v3438 = vadd.f32 %v2869, %v3275
    %v3439 = vadd.f32 %v2870, %v3278
    %v3440 = vadd.f32 %v2871, %v3283
    %v3441 = vadd.f32 %v2872, %v3286
    %v3442 = vadd.f32 %v2873, %v3291
    %v3443 = vadd.f32 %v2874, %v3294
    %v3444 = vadd.f32 %v2875, %v3299
    %v3445 = vadd.f32 %v2876, %v3302
    %v3446 = vadd.f32 %v2877, %v3307
    %v3447 = vadd.f32 %v2878, %v3310
    %v3448 = vadd.f32 %v2879, %v3315
    %v3449 = vadd.f32 %v2880, %v3318
    %v3450 = vadd.f32 %v2881, %v3323
    %v3451 = vadd.f32 %v2882, %v3326
    %v3452 = vadd.f32 %v2883, %v3331
    %v3453 = vadd.f32 %v2884, %v3334
    %v3454 = vadd.f32 %v2885, %v3339
    %v3455 = vadd.f32 %v2886, %v3342
    %v3456 = vadd.f32 %v2887, %v3347
    %v3457 = vadd.f32 %v2888, %v3350
    %v3458 = vadd.f32 %v2889, %v3355
    %v3459 = vadd.f32 %v2890, %v3358
    %v3460 = vadd.f32 %v2891, %v3363
    %v3461 = vadd.f32 %v2892, %v3366
    %v3462 = vadd.f32 %v2893, %v3371
    %v3463 = vadd.f32 %v2894, %v3374
    %v3464 = vadd.f32 %v2895, %v3379
    %3465 = vst.msk [vmem:[#allocation2] sm:$0xff] %vm52, %v3384
    %3466 = vst.msk [vmem:[#allocation2 + $0x8] sm:$0xff] %vm52, %v3385
    %3467 = vst.msk [vmem:[#allocation2 + $0x10] sm:$0xff] %vm52, %v3386
    %3468 = vst.msk [vmem:[#allocation2 + $0x18] sm:$0xff] %vm52, %v3387
    %3469 = vst.msk [vmem:[#allocation2 + $0x20] sm:$0xff] %vm52, %v3388
    %3470 = vst.msk [vmem:[#allocation2 + $0x28] sm:$0xff] %vm52, %v3389
    %3471 = vst.msk [vmem:[#allocation2 + $0x30] sm:$0xff] %vm52, %v3390
    %3472 = vst.msk [vmem:[#allocation2 + $0x38] sm:$0xff] %vm52, %v3391
    %3473 = vst.msk [vmem:[#allocation2 + $0x40] sm:$0xff] %vm52, %v3392
    %3474 = vst.msk [vmem:[#allocation2 + $0x48] sm:$0xff] %vm52, %v3393
    %3475 = vst.msk [vmem:[#allocation2 + $0x50] sm:$0xff] %vm52, %v3394
    %3476 = vst.msk [vmem:[#allocation2 + $0x58] sm:$0xff] %vm52, %v3395
    %3477 = vst.msk [vmem:[#allocation2 + $0x60] sm:$0xff] %vm52, %v3396
    %3478 = vst.msk [vmem:[#allocation2 + $0x68] sm:$0xff] %vm52, %v3397
    %3479 = vst.msk [vmem:[#allocation2 + $0x70] sm:$0xff] %vm52, %v3398
    %3480 = vst.msk [vmem:[#allocation2 + $0x78] sm:$0xff] %vm52, %v3399
    %3481 = vst.msk [vmem:[#allocation2 + $0x80] sm:$0xff] %vm52, %v3400
    %3482 = vst.msk [vmem:[#allocation2 + $0x88] sm:$0xff] %vm52, %v3401
    %3483 = vst.msk [vmem:[#allocation2 + $0x90] sm:$0xff] %vm52, %v3402
    %3484 = vst.msk [vmem:[#allocation2 + $0x98] sm:$0xff] %vm52, %v3403
    %3485 = vst.msk [vmem:[#allocation2 + $0xa0] sm:$0xff] %vm52, %v3404
    %3486 = vst.msk [vmem:[#allocation2 + $0xa8] sm:$0xff] %vm52, %v3405
    %3487 = vst.msk [vmem:[#allocation2 + $0xb0] sm:$0xff] %vm52, %v3406
    %3488 = vst.msk [vmem:[#allocation2 + $0xb8] sm:$0xff] %vm52, %v3407
    %3489 = vst.msk [vmem:[#allocation2 + $0xc0] sm:$0xff] %vm52, %v3408
    %3490 = vst.msk [vmem:[#allocation2 + $0xc8] sm:$0xff] %vm52, %v3409
    %3491 = vst.msk [vmem:[#allocation2 + $0xd0] sm:$0xff] %vm52, %v3410
    %3492 = vst.msk [vmem:[#allocation2 + $0xd8] sm:$0xff] %vm52, %v3411
    %3493 = vst.msk [vmem:[#allocation2 + $0xe0] sm:$0xff] %vm52, %v3412
    %3494 = vst.msk [vmem:[#allocation2 + $0xe8] sm:$0xff] %vm52, %v3413
    %3495 = vst.msk [vmem:[#allocation2 + $0xf0] sm:$0xff] %vm52, %v3414
    %3496 = vst.msk [vmem:[#allocation2 + $0xf8] sm:$0xff] %vm52, %v3415
    %3497 = vst.msk [vmem:[#allocation2 + $0x100] sm:$0xff] %vm52, %v3416
    %3498 = vst.msk [vmem:[#allocation2 + $0x108] sm:$0xff] %vm52, %v3417
    %3499 = vst.msk [vmem:[#allocation2 + $0x110] sm:$0xff] %vm52, %v3418
    %3500 = vst.msk [vmem:[#allocation2 + $0x118] sm:$0xff] %vm52, %v3419
    %3501 = vst.msk [vmem:[#allocation2 + $0x120] sm:$0xff] %vm52, %v3420
    %3502 = vst.msk [vmem:[#allocation2 + $0x128] sm:$0xff] %vm52, %v3421
    %3503 = vst.msk [vmem:[#allocation2 + $0x130] sm:$0xff] %vm52, %v3422
    %3504 = vst.msk [vmem:[#allocation2 + $0x138] sm:$0xff] %vm52, %v3423
    %3505 = vst.msk [vmem:[#allocation2 + $0x140] sm:$0xff] %vm52, %v3424
    %3506 = vst.msk [vmem:[#allocation2 + $0x148] sm:$0xff] %vm52, %v3425
    %3507 = vst.msk [vmem:[#allocation2 + $0x150] sm:$0xff] %vm52, %v3426
    %3508 = vst.msk [vmem:[#allocation2 + $0x158] sm:$0xff] %vm52, %v3427
    %3509 = vst.msk [vmem:[#allocation2 + $0x160] sm:$0xff] %vm52, %v3428
    %3510 = vst.msk [vmem:[#allocation2 + $0x168] sm:$0xff] %vm52, %v3429
    %3511 = vst.msk [vmem:[#allocation2 + $0x170] sm:$0xff] %vm52, %v3430
    %3512 = vst.msk [vmem:[#allocation2 + $0x178] sm:$0xff] %vm52, %v3431
    %3513 = vst.msk [vmem:[#allocation2 + $0x180] sm:$0xff] %vm52, %v3432
    %3514 = vst.msk [vmem:[#allocation2 + $0x188] sm:$0xff] %vm52, %v3433
    %3515 = vst.msk [vmem:[#allocation2 + $0x190] sm:$0xff] %vm52, %v3434
    %3516 = vst.msk [vmem:[#allocation2 + $0x198] sm:$0xff] %vm52, %v3435
    %3517 = vst.msk [vmem:[#allocation2 + $0x1a0] sm:$0xff] %vm52, %v3436
    %3518 = vst.msk [vmem:[#allocation2 + $0x1a8] sm:$0xff] %vm52, %v3437
    %3519 = vst.msk [vmem:[#allocation2 + $0x1b0] sm:$0xff] %vm52, %v3438
    %3520 = vst.msk [vmem:[#allocation2 + $0x1b8] sm:$0xff] %vm52, %v3439
    %3521 = vst.msk [vmem:[#allocation2 + $0x1c0] sm:$0xff] %vm52, %v3440
    %3522 = vst.msk [vmem:[#allocation2 + $0x1c8] sm:$0xff] %vm52, %v3441
    %3523 = vst.msk [vmem:[#allocation2 + $0x1d0] sm:$0xff] %vm52, %v3442
    %3524 = vst.msk [vmem:[#allocation2 + $0x1d8] sm:$0xff] %vm52, %v3443
    %3525 = vst.msk [vmem:[#allocation2 + $0x1e0] sm:$0xff] %vm52, %v3444
    %3526 = vst.msk [vmem:[#allocation2 + $0x1e8] sm:$0xff] %vm52, %v3445
    %3527 = vst.msk [vmem:[#allocation2 + $0x1f0] sm:$0xff] %vm52, %v3446
    %3528 = vst.msk [vmem:[#allocation2 + $0x1f8] sm:$0xff] %vm52, %v3447
    %3529 = vst.msk [vmem:[#allocation2 + $0x200] sm:$0xff] %vm52, %v3448
    %3530 = vst.msk [vmem:[#allocation2 + $0x208] sm:$0xff] %vm52, %v3449
    %3531 = vst.msk [vmem:[#allocation2 + $0x210] sm:$0xff] %vm52, %v3450
    %3532 = vst.msk [vmem:[#allocation2 + $0x218] sm:$0xff] %vm52, %v3451
    %3533 = vst.msk [vmem:[#allocation2 + $0x220] sm:$0xff] %vm52, %v3452
    %3534 = vst.msk [vmem:[#allocation2 + $0x228] sm:$0xff] %vm52, %v3453
    %3535 = vst.msk [vmem:[#allocation2 + $0x230] sm:$0xff] %vm52, %v3454
    %3536 = vst.msk [vmem:[#allocation2 + $0x238] sm:$0xff] %vm52, %v3455
    %3537 = vst.msk [vmem:[#allocation2 + $0x240] sm:$0xff] %vm52, %v3456
    %3538 = vst.msk [vmem:[#allocation2 + $0x248] sm:$0xff] %vm52, %v3457
    %3539 = vst.msk [vmem:[#allocation2 + $0x250] sm:$0xff] %vm52, %v3458
    %3540 = vst.msk [vmem:[#allocation2 + $0x258] sm:$0xff] %vm52, %v3459
    %3541 = vst.msk [vmem:[#allocation2 + $0x260] sm:$0xff] %vm52, %v3460
    %3542 = vst.msk [vmem:[#allocation2 + $0x268] sm:$0xff] %vm52, %v3461
    %3543 = vst.msk [vmem:[#allocation2 + $0x270] sm:$0xff] %vm52, %v3462
    %3544 = vst.msk [vmem:[#allocation2 + $0x278] sm:$0xff] %vm52, %v3463
    %3545 = vst.msk [vmem:[#allocation2 + $0x280] sm:$0xff] %vm52, %v3464
    %v3546 = vld [vmem:[%s0 + $0x13] sm:$0xff]
    %v3547 = vld [vmem:[%s0 + $0x1b] sm:$0xff]
    %v3548 = vld [vmem:[%s0 + $0x23] sm:$0xff]
    %v3549 = vld [vmem:[%s0 + $0x2b] sm:$0xff]
    %v3550 = vld [vmem:[%s0 + $0x33] sm:$0xff]
    %v3551 = vld [vmem:[%s0 + $0x3b] sm:$0xff]
    %v3552 = vld [vmem:[%s0 + $0x43] sm:$0xff]
    %v3553 = vld [vmem:[%s0 + $0x4b] sm:$0xff]
    %v3554 = vld [vmem:[%s0 + $0x53] sm:$0xff]
    %v3555 = vld [vmem:[%s0 + $0x5b] sm:$0xff]
    %v3556 = vld [vmem:[%s0 + $0x63] sm:$0xff]
    %v3557 = vld [vmem:[%s0 + $0x6b] sm:$0xff]
    %v3558 = vld [vmem:[%s0 + $0x73] sm:$0xff]
    %v3559 = vld [vmem:[%s0 + $0x7b] sm:$0xff]
    %v3560 = vld [vmem:[%s0 + $0x83] sm:$0xff]
    %v3561 = vld [vmem:[%s0 + $0x8b] sm:$0xff]
    %v3562 = vld [vmem:[%s0 + $0x93] sm:$0xff]
    %v3563 = vld [vmem:[%s0 + $0x9b] sm:$0xff]
    %v3564 = vld [vmem:[%s0 + $0xa3] sm:$0xff]
    %v3565 = vld [vmem:[%s0 + $0xab] sm:$0xff]
    %v3566 = vld [vmem:[%s0 + $0xb3] sm:$0xff]
    %v3567 = vld [vmem:[%s0 + $0xbb] sm:$0xff]
    %v3568 = vld [vmem:[%s0 + $0xc3] sm:$0xff]
    %v3569 = vld [vmem:[%s0 + $0xcb] sm:$0xff]
    %v3570 = vld [vmem:[%s0 + $0xd3] sm:$0xff]
    %v3571 = vld [vmem:[%s0 + $0xdb] sm:$0xff]
    %v3572 = vld [vmem:[%s0 + $0xe3] sm:$0xff]
    %v3573 = vld [vmem:[%s0 + $0xeb] sm:$0xff]
    %v3574 = vld [vmem:[%s0 + $0xf3] sm:$0xff]
    %v3575 = vld [vmem:[%s0 + $0xfb] sm:$0xff]
    %v3576 = vld [vmem:[%s0 + $0x103] sm:$0xff]
    %v3577 = vld [vmem:[%s0 + $0x10b] sm:$0xff]
    %v3578 = vld [vmem:[%s0 + $0x113] sm:$0xff]
    %v3579 = vld [vmem:[%s0 + $0x11b] sm:$0xff]
    %v3580 = vld [vmem:[%s0 + $0x123] sm:$0xff]
    %v3581 = vld [vmem:[%s0 + $0x12b] sm:$0xff]
    %v3582 = vld [vmem:[%s0 + $0x133] sm:$0xff]
    %v3583 = vld [vmem:[%s0 + $0x13b] sm:$0xff]
    %v3584 = vld [vmem:[%s0 + $0x143] sm:$0xff]
    %v3585 = vld [vmem:[%s0 + $0x14b] sm:$0xff]
    %v3586 = vld [vmem:[%s0 + $0x153] sm:$0xff]
    %v3587 = vld [vmem:[%s0 + $0x15b] sm:$0xff]
    %v3588 = vld [vmem:[%s0 + $0x163] sm:$0xff]
    %v3589 = vld [vmem:[%s0 + $0x16b] sm:$0xff]
    %v3590 = vld [vmem:[%s0 + $0x173] sm:$0xff]
    %v3591 = vld [vmem:[%s0 + $0x17b] sm:$0xff]
    %v3592 = vld [vmem:[%s0 + $0x183] sm:$0xff]
    %v3593 = vld [vmem:[%s0 + $0x18b] sm:$0xff]
    %v3594 = vld [vmem:[%s0 + $0x193] sm:$0xff]
    %v3595 = vld [vmem:[%s0 + $0x19b] sm:$0xff]
    %v3596 = vld [vmem:[%s0 + $0x1a3] sm:$0xff]
    %v3597 = vld [vmem:[%s0 + $0x1ab] sm:$0xff]
    %v3598 = vld [vmem:[%s0 + $0x1b3] sm:$0xff]
    %v3599 = vld [vmem:[%s0 + $0x1bb] sm:$0xff]
    %v3600 = vld [vmem:[%s0 + $0x1c3] sm:$0xff]
    %v3601 = vld [vmem:[%s0 + $0x1cb] sm:$0xff]
    %v3602 = vld [vmem:[%s0 + $0x1d3] sm:$0xff]
    %v3603 = vld [vmem:[%s0 + $0x1db] sm:$0xff]
    %v3604 = vld [vmem:[%s0 + $0x1e3] sm:$0xff]
    %v3605 = vld [vmem:[%s0 + $0x1eb] sm:$0xff]
    %v3606 = vld [vmem:[%s0 + $0x1f3] sm:$0xff]
    %v3607 = vld [vmem:[%s0 + $0x1fb] sm:$0xff]
    %v3608 = vld [vmem:[%s0 + $0x203] sm:$0xff]
    %v3609 = vld [vmem:[%s0 + $0x20b] sm:$0xff]
    %v3610 = vld [vmem:[%s0 + $0x213] sm:$0xff]
    %v3611 = vld [vmem:[%s0 + $0x21b] sm:$0xff]
    %v3612 = vld [vmem:[%s0 + $0x223] sm:$0xff]
    %v3613 = vld [vmem:[%s0 + $0x22b] sm:$0xff]
    %v3614 = vld [vmem:[%s0 + $0x233] sm:$0xff]
    %v3615 = vld [vmem:[%s0 + $0x23b] sm:$0xff]
    %v3616 = vld [vmem:[%s0 + $0x243] sm:$0xff]
    %v3617 = vld [vmem:[%s0 + $0x24b] sm:$0xff]
    %v3618 = vld [vmem:[%s0 + $0x253] sm:$0xff]
    %v3619 = vld [vmem:[%s0 + $0x25b] sm:$0xff]
    %v3620 = vld [vmem:[%s0 + $0x263] sm:$0xff]
    %v3621 = vld [vmem:[%s0 + $0x26b] sm:$0xff]
    %v3622 = vld [vmem:[%s0 + $0x273] sm:$0xff]
    %v3623 = vld [vmem:[%s0 + $0x27b] sm:$0xff]
    %v3624 = vld [vmem:[%s0 + $0x283] sm:$0xff]
    %v3625 = vld [vmem:[%s0 + $0x28b] sm:$0xff]
    %v3626 = vld [vmem:[%s0 + $0x293] sm:$0xff]
    %v3627 = vpack.c.bf16 %v3547, %v3546
    %v3628 = vpack.c.bf16 %v3549, %v3548
    %v3629 = vpack.c.bf16 %v3551, %v3550
    %v3630 = vpack.c.bf16 %v3553, %v3552
    %v3631 = vpack.c.bf16 %v3555, %v3554
    %v3632 = vpack.c.bf16 %v3557, %v3556
    %v3633 = vpack.c.bf16 %v3559, %v3558
    %v3634 = vpack.c.bf16 %v3561, %v3560
    %v3635 = vpack.c.bf16 %v3563, %v3562
    %v3636 = vpack.c.bf16 %v3565, %v3564
    %v3637 = vpack.c.bf16 %v3567, %v3566
    %v3638 = vpack.c.bf16 %v3569, %v3568
    %v3639 = vpack.c.bf16 %v3571, %v3570
    %v3640 = vpack.c.bf16 %v3573, %v3572
    %v3641 = vpack.c.bf16 %v3575, %v3574
    %v3642 = vpack.c.bf16 %v3577, %v3576
    %v3643 = vpack.c.bf16 %v3579, %v3578
    %v3644 = vpack.c.bf16 %v3581, %v3580
    %v3645 = vpack.c.bf16 %v3583, %v3582
    %v3646 = vpack.c.bf16 %v3585, %v3584
    %v3647 = vpack.c.bf16 %v3587, %v3586
    %v3648 = vpack.c.bf16 %v3589, %v3588
    %v3649 = vpack.c.bf16 %v3591, %v3590
    %v3650 = vpack.c.bf16 %v3593, %v3592
    %v3651 = vpack.c.bf16 %v3595, %v3594
    %v3652 = vpack.c.bf16 %v3597, %v3596
    %v3653 = vpack.c.bf16 %v3599, %v3598
    %v3654 = vpack.c.bf16 %v3601, %v3600
    %v3655 = vpack.c.bf16 %v3603, %v3602
    %v3656 = vpack.c.bf16 %v3605, %v3604
    %v3657 = vpack.c.bf16 %v3607, %v3606
    %v3658 = vpack.c.bf16 %v3609, %v3608
    %v3659 = vpack.c.bf16 %v3611, %v3610
    %v3660 = vpack.c.bf16 %v3613, %v3612
    %v3661 = vpack.c.bf16 %v3615, %v3614
    %v3662 = vpack.c.bf16 %v3617, %v3616
    %v3663 = vpack.c.bf16 %v3619, %v3618
    %v3664 = vpack.c.bf16 %v3621, %v3620
    %v3665 = vpack.c.bf16 %v3623, %v3622
    %v3666 = vpack.c.bf16 %v3625, %v3624
    %v3667 = vpack.c.bf16 %v3626, %v3626
    %v3668 = vld [vmem:[#allocation2] sm:$0xff]
    %v3669 = vld [vmem:[#allocation2 + $0x8] sm:$0xff]
    %v3670 = vld [vmem:[#allocation2 + $0x10] sm:$0xff]
    %v3671 = vld [vmem:[#allocation2 + $0x18] sm:$0xff]
    %v3672 = vld [vmem:[#allocation2 + $0x20] sm:$0xff]
    %v3673 = vld [vmem:[#allocation2 + $0x28] sm:$0xff]
    %v3674 = vld [vmem:[#allocation2 + $0x30] sm:$0xff]
    %v3675 = vld [vmem:[#allocation2 + $0x38] sm:$0xff]
    %v3676 = vld [vmem:[#allocation2 + $0x40] sm:$0xff]
    %v3677 = vld [vmem:[#allocation2 + $0x48] sm:$0xff]
    %v3678 = vld [vmem:[#allocation2 + $0x50] sm:$0xff]
    %v3679 = vld [vmem:[#allocation2 + $0x58] sm:$0xff]
    %v3680 = vld [vmem:[#allocation2 + $0x60] sm:$0xff]
    %v3681 = vld [vmem:[#allocation2 + $0x68] sm:$0xff]
    %v3682 = vld [vmem:[#allocation2 + $0x70] sm:$0xff]
    %v3683 = vld [vmem:[#allocation2 + $0x78] sm:$0xff]
    %v3684 = vld [vmem:[#allocation2 + $0x80] sm:$0xff]
    %v3685 = vld [vmem:[#allocation2 + $0x88] sm:$0xff]
    %v3686 = vld [vmem:[#allocation2 + $0x90] sm:$0xff]
    %v3687 = vld [vmem:[#allocation2 + $0x98] sm:$0xff]
    %v3688 = vld [vmem:[#allocation2 + $0xa0] sm:$0xff]
    %v3689 = vld [vmem:[#allocation2 + $0xa8] sm:$0xff]
    %v3690 = vld [vmem:[#allocation2 + $0xb0] sm:$0xff]
    %v3691 = vld [vmem:[#allocation2 + $0xb8] sm:$0xff]
    %v3692 = vld [vmem:[#allocation2 + $0xc0] sm:$0xff]
    %v3693 = vld [vmem:[#allocation2 + $0xc8] sm:$0xff]
    %v3694 = vld [vmem:[#allocation2 + $0xd0] sm:$0xff]
    %v3695 = vld [vmem:[#allocation2 + $0xd8] sm:$0xff]
    %v3696 = vld [vmem:[#allocation2 + $0xe0] sm:$0xff]
    %v3697 = vld [vmem:[#allocation2 + $0xe8] sm:$0xff]
    %v3698 = vld [vmem:[#allocation2 + $0xf0] sm:$0xff]
    %v3699 = vld [vmem:[#allocation2 + $0xf8] sm:$0xff]
    %v3700 = vld [vmem:[#allocation2 + $0x100] sm:$0xff]
    %v3701 = vld [vmem:[#allocation2 + $0x108] sm:$0xff]
    %v3702 = vld [vmem:[#allocation2 + $0x110] sm:$0xff]
    %v3703 = vld [vmem:[#allocation2 + $0x118] sm:$0xff]
    %v3704 = vld [vmem:[#allocation2 + $0x120] sm:$0xff]
    %v3705 = vld [vmem:[#allocation2 + $0x128] sm:$0xff]
    %v3706 = vld [vmem:[#allocation2 + $0x130] sm:$0xff]
    %v3707 = vld [vmem:[#allocation2 + $0x138] sm:$0xff]
    %v3708 = vld [vmem:[#allocation2 + $0x140] sm:$0xff]
    %v3709 = vld [vmem:[#allocation2 + $0x148] sm:$0xff]
    %v3710 = vld [vmem:[#allocation2 + $0x150] sm:$0xff]
    %v3711 = vld [vmem:[#allocation2 + $0x158] sm:$0xff]
    %v3712 = vld [vmem:[#allocation2 + $0x160] sm:$0xff]
    %v3713 = vld [vmem:[#allocation2 + $0x168] sm:$0xff]
    %v3714 = vld [vmem:[#allocation2 + $0x170] sm:$0xff]
    %v3715 = vld [vmem:[#allocation2 + $0x178] sm:$0xff]
    %v3716 = vld [vmem:[#allocation2 + $0x180] sm:$0xff]
    %v3717 = vld [vmem:[#allocation2 + $0x188] sm:$0xff]
    %v3718 = vld [vmem:[#allocation2 + $0x190] sm:$0xff]
    %v3719 = vld [vmem:[#allocation2 + $0x198] sm:$0xff]
    %v3720 = vld [vmem:[#allocation2 + $0x1a0] sm:$0xff]
    %v3721 = vld [vmem:[#allocation2 + $0x1a8] sm:$0xff]
    %v3722 = vld [vmem:[#allocation2 + $0x1b0] sm:$0xff]
    %v3723 = vld [vmem:[#allocation2 + $0x1b8] sm:$0xff]
    %v3724 = vld [vmem:[#allocation2 + $0x1c0] sm:$0xff]
    %v3725 = vld [vmem:[#allocation2 + $0x1c8] sm:$0xff]
    %v3726 = vld [vmem:[#allocation2 + $0x1d0] sm:$0xff]
    %v3727 = vld [vmem:[#allocation2 + $0x1d8] sm:$0xff]
    %v3728 = vld [vmem:[#allocation2 + $0x1e0] sm:$0xff]
    %v3729 = vld [vmem:[#allocation2 + $0x1e8] sm:$0xff]
    %v3730 = vld [vmem:[#allocation2 + $0x1f0] sm:$0xff]
    %v3731 = vld [vmem:[#allocation2 + $0x1f8] sm:$0xff]
    %v3732 = vld [vmem:[#allocation2 + $0x200] sm:$0xff]
    %v3733 = vld [vmem:[#allocation2 + $0x208] sm:$0xff]
    %v3734 = vld [vmem:[#allocation2 + $0x210] sm:$0xff]
    %v3735 = vld [vmem:[#allocation2 + $0x218] sm:$0xff]
    %v3736 = vld [vmem:[#allocation2 + $0x220] sm:$0xff]
    %v3737 = vld [vmem:[#allocation2 + $0x228] sm:$0xff]
    %v3738 = vld [vmem:[#allocation2 + $0x230] sm:$0xff]
    %v3739 = vld [vmem:[#allocation2 + $0x238] sm:$0xff]
    %v3740 = vld [vmem:[#allocation2 + $0x240] sm:$0xff]
    %v3741 = vld [vmem:[#allocation2 + $0x248] sm:$0xff]
    %v3742 = vld [vmem:[#allocation2 + $0x250] sm:$0xff]
    %v3743 = vld [vmem:[#allocation2 + $0x258] sm:$0xff]
    %v3744 = vld [vmem:[#allocation2 + $0x260] sm:$0xff]
    %v3745 = vld [vmem:[#allocation2 + $0x268] sm:$0xff]
    %v3746 = vld [vmem:[#allocation2 + $0x270] sm:$0xff]
    %v3747 = vld [vmem:[#allocation2 + $0x278] sm:$0xff]
    %v3748 = vld [vmem:[#allocation2 + $0x280] sm:$0xff]
    %s3749 = scalar_lea.vmem %s2, 16
    %v3750 = vld [vmem:[%s3749] sm:$0xf]
    %v3752 = vsel %vm52, %v3627, 0
    %v3755 = vsel %vm52, %v3628, 0
    %v3758 = vsel %vm52, %v3629, 0
    %v3761 = vsel %vm52, %v3630, 0
    %v3764 = vsel %vm52, %v3631, 0
    %v3767 = vsel %vm52, %v3632, 0
    %v3770 = vsel %vm52, %v3633, 0
    %v3773 = vsel %vm52, %v3634, 0
    %v3776 = vsel %vm52, %v3635, 0
    %v3779 = vsel %vm52, %v3636, 0
    %v3782 = vsel %vm52, %v3637, 0
    %v3785 = vsel %vm52, %v3638, 0
    %v3788 = vsel %vm52, %v3639, 0
    %v3791 = vsel %vm52, %v3640, 0
    %v3794 = vsel %vm52, %v3641, 0
    %v3797 = vsel %vm52, %v3642, 0
    %v3800 = vsel %vm52, %v3643, 0
    %v3803 = vsel %vm52, %v3644, 0
    %v3806 = vsel %vm52, %v3645, 0
    %v3809 = vsel %vm52, %v3646, 0
    %v3812 = vsel %vm52, %v3647, 0
    %v3815 = vsel %vm52, %v3648, 0
    %v3818 = vsel %vm52, %v3649, 0
    %v3821 = vsel %vm52, %v3650, 0
    %v3824 = vsel %vm52, %v3651, 0
    %v3827 = vsel %vm52, %v3652, 0
    %v3830 = vsel %vm52, %v3653, 0
    %v3833 = vsel %vm52, %v3654, 0
    %v3836 = vsel %vm52, %v3655, 0
    %v3839 = vsel %vm52, %v3656, 0
    %v3842 = vsel %vm52, %v3657, 0
    %v3845 = vsel %vm52, %v3658, 0
    %v3848 = vsel %vm52, %v3659, 0
    %v3851 = vsel %vm52, %v3660, 0
    %v3854 = vsel %vm52, %v3661, 0
    %v3857 = vsel %vm52, %v3662, 0
    %v3860 = vsel %vm52, %v3663, 0
    %v3863 = vsel %vm52, %v3664, 0
    %v3866 = vsel %vm52, %v3665, 0
    %v3869 = vsel %vm52, %v3666, 0
    %v3872 = vsel %vm52, %v3667, 0
    %v3875 = vsel %vm461, %v3750, 0
    %3877 = vmatprep.subr.bf16.mxu0 0
    %3878 = vmatpush1.bf16.msra.mxu0 0
    %3879 = vmatprep.subr.bf16.mxu0 0
    %3880 = vmatpush1.bf16.msra.mxu0 0
    %3881 = vmatprep.subr.bf16.mxu0 0
    %3882 = vmatpush1.bf16.msra.mxu0 0
    %3883 = vmatprep.subr.bf16.mxu0 0
    %3884 = vmatpush1.bf16.msra.mxu0 0
    %3885 = vmatprep.subr.bf16.mxu0 0
    %3886 = vmatpush1.bf16.msra.mxu0 0
    %3887 = vmatprep.subr.bf16.mxu0 0
    %3888 = vmatpush1.bf16.msra.mxu0 0
    %3889 = vmatprep.subr.bf16.mxu0 0
    %3890 = vmatpush1.bf16.msra.mxu0 0
    %3891 = vmatprep.subr.bf16.mxu0 0
    %3892 = vmatpush1.bf16.msra.mxu0 %v3875
    %3893 = vmatprep.subr.bf16.mxu0 0
    %3894 = vmatpush2.bf16.msra.mxu0 0
    %3895 = vmatprep.subr.bf16.mxu0 0
    %3896 = vmatpush2.bf16.msra.mxu0 0
    %3897 = vmatprep.subr.bf16.mxu0 0
    %3898 = vmatpush2.bf16.msra.mxu0 0
    %3899 = vmatprep.subr.bf16.mxu0 0
    %3900 = vmatpush2.bf16.msra.mxu0 0
    %3901 = vmatprep.subr.bf16.mxu0 0
    %3902 = vmatpush2.bf16.msra.mxu0 0
    %3903 = vmatprep.subr.bf16.mxu0 0
    %3904 = vmatpush2.bf16.msra.mxu0 0
    %3905 = vmatprep.subr.bf16.mxu0 0
    %3906 = vmatpush2.bf16.msra.mxu0 0
    %3907 = vmatprep.subr.bf16.mxu0 0
    %3908 = vmatpush2.bf16.msra.mxu0 0
    %3909 = vmatprep.mubr.bf16.mxu0 0
    %3910 = vmatmul.mubr.bf16.gmra.mxu0 %v3752
    %v3911 = vpop.f32.mrf.mxu0
    %v3912 = vadd.f32 0.0, %v3911
    %v3913 = vpop.f32.mrf.mxu0
    %v3914 = vpop.f32.mrf.mxu0
    %v3915 = vadd.f32 0.0, %v3914
    %v3916 = vpop.f32.mrf.mxu0
    %3917 = vmatprep.mubr.bf16.mxu0 0
    %3918 = vmatmul.mubr.bf16.gmra.mxu0 %v3755
    %v3919 = vpop.f32.mrf.mxu0
    %v3920 = vadd.f32 0.0, %v3919
    %v3921 = vpop.f32.mrf.mxu0
    %v3922 = vpop.f32.mrf.mxu0
    %v3923 = vadd.f32 0.0, %v3922
    %v3924 = vpop.f32.mrf.mxu0
    %3925 = vmatprep.mubr.bf16.mxu0 0
    %3926 = vmatmul.mubr.bf16.gmra.mxu0 %v3758
    %v3927 = vpop.f32.mrf.mxu0
    %v3928 = vadd.f32 0.0, %v3927
    %v3929 = vpop.f32.mrf.mxu0
    %v3930 = vpop.f32.mrf.mxu0
    %v3931 = vadd.f32 0.0, %v3930
    %v3932 = vpop.f32.mrf.mxu0
    %3933 = vmatprep.mubr.bf16.mxu0 0
    %3934 = vmatmul.mubr.bf16.gmra.mxu0 %v3761
    %v3935 = vpop.f32.mrf.mxu0
    %v3936 = vadd.f32 0.0, %v3935
    %v3937 = vpop.f32.mrf.mxu0
    %v3938 = vpop.f32.mrf.mxu0
    %v3939 = vadd.f32 0.0, %v3938
    %v3940 = vpop.f32.mrf.mxu0
    %3941 = vmatprep.mubr.bf16.mxu0 0
    %3942 = vmatmul.mubr.bf16.gmra.mxu0 %v3764
    %v3943 = vpop.f32.mrf.mxu0
    %v3944 = vadd.f32 0.0, %v3943
    %v3945 = vpop.f32.mrf.mxu0
    %v3946 = vpop.f32.mrf.mxu0
    %v3947 = vadd.f32 0.0, %v3946
    %v3948 = vpop.f32.mrf.mxu0
    %3949 = vmatprep.mubr.bf16.mxu0 0
    %3950 = vmatmul.mubr.bf16.gmra.mxu0 %v3767
    %v3951 = vpop.f32.mrf.mxu0
    %v3952 = vadd.f32 0.0, %v3951
    %v3953 = vpop.f32.mrf.mxu0
    %v3954 = vpop.f32.mrf.mxu0
    %v3955 = vadd.f32 0.0, %v3954
    %v3956 = vpop.f32.mrf.mxu0
    %3957 = vmatprep.mubr.bf16.mxu0 0
    %3958 = vmatmul.mubr.bf16.gmra.mxu0 %v3770
    %v3959 = vpop.f32.mrf.mxu0
    %v3960 = vadd.f32 0.0, %v3959
    %v3961 = vpop.f32.mrf.mxu0
    %v3962 = vpop.f32.mrf.mxu0
    %v3963 = vadd.f32 0.0, %v3962
    %v3964 = vpop.f32.mrf.mxu0
    %3965 = vmatprep.mubr.bf16.mxu0 0
    %3966 = vmatmul.mubr.bf16.gmra.mxu0 %v3773
    %v3967 = vpop.f32.mrf.mxu0
    %v3968 = vadd.f32 0.0, %v3967
    %v3969 = vpop.f32.mrf.mxu0
    %v3970 = vpop.f32.mrf.mxu0
    %v3971 = vadd.f32 0.0, %v3970
    %v3972 = vpop.f32.mrf.mxu0
    %3973 = vmatprep.mubr.bf16.mxu0 0
    %3974 = vmatmul.mubr.bf16.gmra.mxu0 %v3776
    %v3975 = vpop.f32.mrf.mxu0
    %v3976 = vadd.f32 0.0, %v3975
    %v3977 = vpop.f32.mrf.mxu0
    %v3978 = vpop.f32.mrf.mxu0
    %v3979 = vadd.f32 0.0, %v3978
    %v3980 = vpop.f32.mrf.mxu0
    %3981 = vmatprep.mubr.bf16.mxu0 0
    %3982 = vmatmul.mubr.bf16.gmra.mxu0 %v3779
    %v3983 = vpop.f32.mrf.mxu0
    %v3984 = vadd.f32 0.0, %v3983
    %v3985 = vpop.f32.mrf.mxu0
    %v3986 = vpop.f32.mrf.mxu0
    %v3987 = vadd.f32 0.0, %v3986
    %v3988 = vpop.f32.mrf.mxu0
    %3989 = vmatprep.mubr.bf16.mxu0 0
    %3990 = vmatmul.mubr.bf16.gmra.mxu0 %v3782
    %v3991 = vpop.f32.mrf.mxu0
    %v3992 = vadd.f32 0.0, %v3991
    %v3993 = vpop.f32.mrf.mxu0
    %v3994 = vpop.f32.mrf.mxu0
    %v3995 = vadd.f32 0.0, %v3994
    %v3996 = vpop.f32.mrf.mxu0
    %3997 = vmatprep.mubr.bf16.mxu0 0
    %3998 = vmatmul.mubr.bf16.gmra.mxu0 %v3785
    %v3999 = vpop.f32.mrf.mxu0
    %v4000 = vadd.f32 0.0, %v3999
    %v4001 = vpop.f32.mrf.mxu0
    %v4002 = vpop.f32.mrf.mxu0
    %v4003 = vadd.f32 0.0, %v4002
    %v4004 = vpop.f32.mrf.mxu0
    %4005 = vmatprep.mubr.bf16.mxu0 0
    %4006 = vmatmul.mubr.bf16.gmra.mxu0 %v3788
    %v4007 = vpop.f32.mrf.mxu0
    %v4008 = vadd.f32 0.0, %v4007
    %v4009 = vpop.f32.mrf.mxu0
    %v4010 = vpop.f32.mrf.mxu0
    %v4011 = vadd.f32 0.0, %v4010
    %v4012 = vpop.f32.mrf.mxu0
    %4013 = vmatprep.mubr.bf16.mxu0 0
    %4014 = vmatmul.mubr.bf16.gmra.mxu0 %v3791
    %v4015 = vpop.f32.mrf.mxu0
    %v4016 = vadd.f32 0.0, %v4015
    %v4017 = vpop.f32.mrf.mxu0
    %v4018 = vpop.f32.mrf.mxu0
    %v4019 = vadd.f32 0.0, %v4018
    %v4020 = vpop.f32.mrf.mxu0
    %4021 = vmatprep.mubr.bf16.mxu0 0
    %4022 = vmatmul.mubr.bf16.gmra.mxu0 %v3794
    %v4023 = vpop.f32.mrf.mxu0
    %v4024 = vadd.f32 0.0, %v4023
    %v4025 = vpop.f32.mrf.mxu0
    %v4026 = vpop.f32.mrf.mxu0
    %v4027 = vadd.f32 0.0, %v4026
    %v4028 = vpop.f32.mrf.mxu0
    %4029 = vmatprep.mubr.bf16.mxu0 0
    %4030 = vmatmul.mubr.bf16.gmra.mxu0 %v3797
    %v4031 = vpop.f32.mrf.mxu0
    %v4032 = vadd.f32 0.0, %v4031
    %v4033 = vpop.f32.mrf.mxu0
    %v4034 = vpop.f32.mrf.mxu0
    %v4035 = vadd.f32 0.0, %v4034
    %v4036 = vpop.f32.mrf.mxu0
    %4037 = vmatprep.mubr.bf16.mxu0 0
    %4038 = vmatmul.mubr.bf16.gmra.mxu0 %v3800
    %v4039 = vpop.f32.mrf.mxu0
    %v4040 = vadd.f32 0.0, %v4039
    %v4041 = vpop.f32.mrf.mxu0
    %v4042 = vpop.f32.mrf.mxu0
    %v4043 = vadd.f32 0.0, %v4042
    %v4044 = vpop.f32.mrf.mxu0
    %4045 = vmatprep.mubr.bf16.mxu0 0
    %4046 = vmatmul.mubr.bf16.gmra.mxu0 %v3803
    %v4047 = vpop.f32.mrf.mxu0
    %v4048 = vadd.f32 0.0, %v4047
    %v4049 = vpop.f32.mrf.mxu0
    %v4050 = vpop.f32.mrf.mxu0
    %v4051 = vadd.f32 0.0, %v4050
    %v4052 = vpop.f32.mrf.mxu0
    %4053 = vmatprep.mubr.bf16.mxu0 0
    %4054 = vmatmul.mubr.bf16.gmra.mxu0 %v3806
    %v4055 = vpop.f32.mrf.mxu0
    %v4056 = vadd.f32 0.0, %v4055
    %v4057 = vpop.f32.mrf.mxu0
    %v4058 = vpop.f32.mrf.mxu0
    %v4059 = vadd.f32 0.0, %v4058
    %v4060 = vpop.f32.mrf.mxu0
    %4061 = vmatprep.mubr.bf16.mxu0 0
    %4062 = vmatmul.mubr.bf16.gmra.mxu0 %v3809
    %v4063 = vpop.f32.mrf.mxu0
    %v4064 = vadd.f32 0.0, %v4063
    %v4065 = vpop.f32.mrf.mxu0
    %v4066 = vpop.f32.mrf.mxu0
    %v4067 = vadd.f32 0.0, %v4066
    %v4068 = vpop.f32.mrf.mxu0
    %4069 = vmatprep.mubr.bf16.mxu0 0
    %4070 = vmatmul.mubr.bf16.gmra.mxu0 %v3812
    %v4071 = vpop.f32.mrf.mxu0
    %v4072 = vadd.f32 0.0, %v4071
    %v4073 = vpop.f32.mrf.mxu0
    %v4074 = vpop.f32.mrf.mxu0
    %v4075 = vadd.f32 0.0, %v4074
    %v4076 = vpop.f32.mrf.mxu0
    %4077 = vmatprep.mubr.bf16.mxu0 0
    %4078 = vmatmul.mubr.bf16.gmra.mxu0 %v3815
    %v4079 = vpop.f32.mrf.mxu0
    %v4080 = vadd.f32 0.0, %v4079
    %v4081 = vpop.f32.mrf.mxu0
    %v4082 = vpop.f32.mrf.mxu0
    %v4083 = vadd.f32 0.0, %v4082
    %v4084 = vpop.f32.mrf.mxu0
    %4085 = vmatprep.mubr.bf16.mxu0 0
    %4086 = vmatmul.mubr.bf16.gmra.mxu0 %v3818
    %v4087 = vpop.f32.mrf.mxu0
    %v4088 = vadd.f32 0.0, %v4087
    %v4089 = vpop.f32.mrf.mxu0
    %v4090 = vpop.f32.mrf.mxu0
    %v4091 = vadd.f32 0.0, %v4090
    %v4092 = vpop.f32.mrf.mxu0
    %4093 = vmatprep.mubr.bf16.mxu0 0
    %4094 = vmatmul.mubr.bf16.gmra.mxu0 %v3821
    %v4095 = vpop.f32.mrf.mxu0
    %v4096 = vadd.f32 0.0, %v4095
    %v4097 = vpop.f32.mrf.mxu0
    %v4098 = vpop.f32.mrf.mxu0
    %v4099 = vadd.f32 0.0, %v4098
    %v4100 = vpop.f32.mrf.mxu0
    %4101 = vmatprep.mubr.bf16.mxu0 0
    %4102 = vmatmul.mubr.bf16.gmra.mxu0 %v3824
    %v4103 = vpop.f32.mrf.mxu0
    %v4104 = vadd.f32 0.0, %v4103
    %v4105 = vpop.f32.mrf.mxu0
    %v4106 = vpop.f32.mrf.mxu0
    %v4107 = vadd.f32 0.0, %v4106
    %v4108 = vpop.f32.mrf.mxu0
    %4109 = vmatprep.mubr.bf16.mxu0 0
    %4110 = vmatmul.mubr.bf16.gmra.mxu0 %v3827
    %v4111 = vpop.f32.mrf.mxu0
    %v4112 = vadd.f32 0.0, %v4111
    %v4113 = vpop.f32.mrf.mxu0
    %v4114 = vpop.f32.mrf.mxu0
    %v4115 = vadd.f32 0.0, %v4114
    %v4116 = vpop.f32.mrf.mxu0
    %4117 = vmatprep.mubr.bf16.mxu0 0
    %4118 = vmatmul.mubr.bf16.gmra.mxu0 %v3830
    %v4119 = vpop.f32.mrf.mxu0
    %v4120 = vadd.f32 0.0, %v4119
    %v4121 = vpop.f32.mrf.mxu0
    %v4122 = vpop.f32.mrf.mxu0
    %v4123 = vadd.f32 0.0, %v4122
    %v4124 = vpop.f32.mrf.mxu0
    %4125 = vmatprep.mubr.bf16.mxu0 0
    %4126 = vmatmul.mubr.bf16.gmra.mxu0 %v3833
    %v4127 = vpop.f32.mrf.mxu0
    %v4128 = vadd.f32 0.0, %v4127
    %v4129 = vpop.f32.mrf.mxu0
    %v4130 = vpop.f32.mrf.mxu0
    %v4131 = vadd.f32 0.0, %v4130
    %v4132 = vpop.f32.mrf.mxu0
    %4133 = vmatprep.mubr.bf16.mxu0 0
    %4134 = vmatmul.mubr.bf16.gmra.mxu0 %v3836
    %v4135 = vpop.f32.mrf.mxu0
    %v4136 = vadd.f32 0.0, %v4135
    %v4137 = vpop.f32.mrf.mxu0
    %v4138 = vpop.f32.mrf.mxu0
    %v4139 = vadd.f32 0.0, %v4138
    %v4140 = vpop.f32.mrf.mxu0
    %4141 = vmatprep.mubr.bf16.mxu0 0
    %4142 = vmatmul.mubr.bf16.gmra.mxu0 %v3839
    %v4143 = vpop.f32.mrf.mxu0
    %v4144 = vadd.f32 0.0, %v4143
    %v4145 = vpop.f32.mrf.mxu0
    %v4146 = vpop.f32.mrf.mxu0
    %v4147 = vadd.f32 0.0, %v4146
    %v4148 = vpop.f32.mrf.mxu0
    %4149 = vmatprep.mubr.bf16.mxu0 0
    %4150 = vmatmul.mubr.bf16.gmra.mxu0 %v3842
    %v4151 = vpop.f32.mrf.mxu0
    %v4152 = vadd.f32 0.0, %v4151
    %v4153 = vpop.f32.mrf.mxu0
    %v4154 = vpop.f32.mrf.mxu0
    %v4155 = vadd.f32 0.0, %v4154
    %v4156 = vpop.f32.mrf.mxu0
    %4157 = vmatprep.mubr.bf16.mxu0 0
    %4158 = vmatmul.mubr.bf16.gmra.mxu0 %v3845
    %v4159 = vpop.f32.mrf.mxu0
    %v4160 = vadd.f32 0.0, %v4159
    %v4161 = vpop.f32.mrf.mxu0
    %v4162 = vpop.f32.mrf.mxu0
    %v4163 = vadd.f32 0.0, %v4162
    %v4164 = vpop.f32.mrf.mxu0
    %4165 = vmatprep.mubr.bf16.mxu0 0
    %4166 = vmatmul.mubr.bf16.gmra.mxu0 %v3848
    %v4167 = vpop.f32.mrf.mxu0
    %v4168 = vadd.f32 0.0, %v4167
    %v4169 = vpop.f32.mrf.mxu0
    %v4170 = vpop.f32.mrf.mxu0
    %v4171 = vadd.f32 0.0, %v4170
    %v4172 = vpop.f32.mrf.mxu0
    %4173 = vmatprep.mubr.bf16.mxu0 0
    %4174 = vmatmul.mubr.bf16.gmra.mxu0 %v3851
    %v4175 = vpop.f32.mrf.mxu0
    %v4176 = vadd.f32 0.0, %v4175
    %v4177 = vpop.f32.mrf.mxu0
    %v4178 = vpop.f32.mrf.mxu0
    %v4179 = vadd.f32 0.0, %v4178
    %v4180 = vpop.f32.mrf.mxu0
    %4181 = vmatprep.mubr.bf16.mxu0 0
    %4182 = vmatmul.mubr.bf16.gmra.mxu0 %v3854
    %v4183 = vpop.f32.mrf.mxu0
    %v4184 = vadd.f32 0.0, %v4183
    %v4185 = vpop.f32.mrf.mxu0
    %v4186 = vpop.f32.mrf.mxu0
    %v4187 = vadd.f32 0.0, %v4186
    %v4188 = vpop.f32.mrf.mxu0
    %4189 = vmatprep.mubr.bf16.mxu0 0
    %4190 = vmatmul.mubr.bf16.gmra.mxu0 %v3857
    %v4191 = vpop.f32.mrf.mxu0
    %v4192 = vadd.f32 0.0, %v4191
    %v4193 = vpop.f32.mrf.mxu0
    %v4194 = vpop.f32.mrf.mxu0
    %v4195 = vadd.f32 0.0, %v4194
    %v4196 = vpop.f32.mrf.mxu0
    %4197 = vmatprep.mubr.bf16.mxu0 0
    %4198 = vmatmul.mubr.bf16.gmra.mxu0 %v3860
    %v4199 = vpop.f32.mrf.mxu0
    %v4200 = vadd.f32 0.0, %v4199
    %v4201 = vpop.f32.mrf.mxu0
    %v4202 = vpop.f32.mrf.mxu0
    %v4203 = vadd.f32 0.0, %v4202
    %v4204 = vpop.f32.mrf.mxu0
    %4205 = vmatprep.mubr.bf16.mxu0 0
    %4206 = vmatmul.mubr.bf16.gmra.mxu0 %v3863
    %v4207 = vpop.f32.mrf.mxu0
    %v4208 = vadd.f32 0.0, %v4207
    %v4209 = vpop.f32.mrf.mxu0
    %v4210 = vpop.f32.mrf.mxu0
    %v4211 = vadd.f32 0.0, %v4210
    %v4212 = vpop.f32.mrf.mxu0
    %4213 = vmatprep.mubr.bf16.mxu0 0
    %4214 = vmatmul.mubr.bf16.gmra.mxu0 %v3866
    %v4215 = vpop.f32.mrf.mxu0
    %v4216 = vadd.f32 0.0, %v4215
    %v4217 = vpop.f32.mrf.mxu0
    %v4218 = vpop.f32.mrf.mxu0
    %v4219 = vadd.f32 0.0, %v4218
    %v4220 = vpop.f32.mrf.mxu0
    %4221 = vmatprep.mubr.bf16.mxu0 0
    %4222 = vmatmul.mubr.bf16.gmra.mxu0 %v3869
    %v4223 = vpop.f32.mrf.mxu0
    %v4224 = vadd.f32 0.0, %v4223
    %v4225 = vpop.f32.mrf.mxu0
    %v4226 = vpop.f32.mrf.mxu0
    %v4227 = vadd.f32 0.0, %v4226
    %v4228 = vpop.f32.mrf.mxu0
    %4229 = vmatprep.mubr.bf16.mxu0 0
    %4230 = vmatmul.mubr.bf16.gmra.mxu0 %v3872
    %v4231 = vpop.f32.mrf.mxu0
    %v4232 = vadd.f32 0.0, %v4231
    %v4233 = vpop.f32.mrf.mxu0
    %v4234 = vpop.f32.mrf.mxu0
    %v4235 = vpop.f32.mrf.mxu0
    %4236 = vdwg.mxu0
    %v4237 = vadd.f32 %v3668, %v3912
    %v4238 = vadd.f32 %v3669, %v3915
    %v4239 = vadd.f32 %v3670, %v3920
    %v4240 = vadd.f32 %v3671, %v3923
    %v4241 = vadd.f32 %v3672, %v3928
    %v4242 = vadd.f32 %v3673, %v3931
    %v4243 = vadd.f32 %v3674, %v3936
    %v4244 = vadd.f32 %v3675, %v3939
    %v4245 = vadd.f32 %v3676, %v3944
    %v4246 = vadd.f32 %v3677, %v3947
    %v4247 = vadd.f32 %v3678, %v3952
    %v4248 = vadd.f32 %v3679, %v3955
    %v4249 = vadd.f32 %v3680, %v3960
    %v4250 = vadd.f32 %v3681, %v3963
    %v4251 = vadd.f32 %v3682, %v3968
    %v4252 = vadd.f32 %v3683, %v3971
    %v4253 = vadd.f32 %v3684, %v3976
    %v4254 = vadd.f32 %v3685, %v3979
    %v4255 = vadd.f32 %v3686, %v3984
    %v4256 = vadd.f32 %v3687, %v3987
    %v4257 = vadd.f32 %v3688, %v3992
    %v4258 = vadd.f32 %v3689, %v3995
    %v4259 = vadd.f32 %v3690, %v4000
    %v4260 = vadd.f32 %v3691, %v4003
    %v4261 = vadd.f32 %v3692, %v4008
    %v4262 = vadd.f32 %v3693, %v4011
    %v4263 = vadd.f32 %v3694, %v4016
    %v4264 = vadd.f32 %v3695, %v4019
    %v4265 = vadd.f32 %v3696, %v4024
    %v4266 = vadd.f32 %v3697, %v4027
    %v4267 = vadd.f32 %v3698, %v4032
    %v4268 = vadd.f32 %v3699, %v4035
    %v4269 = vadd.f32 %v3700, %v4040
    %v4270 = vadd.f32 %v3701, %v4043
    %v4271 = vadd.f32 %v3702, %v4048
    %v4272 = vadd.f32 %v3703, %v4051
    %v4273 = vadd.f32 %v3704, %v4056
    %v4274 = vadd.f32 %v3705, %v4059
    %v4275 = vadd.f32 %v3706, %v4064
    %v4276 = vadd.f32 %v3707, %v4067
    %v4277 = vadd.f32 %v3708, %v4072
    %v4278 = vadd.f32 %v3709, %v4075
    %v4279 = vadd.f32 %v3710, %v4080
    %v4280 = vadd.f32 %v3711, %v4083
    %v4281 = vadd.f32 %v3712, %v4088
    %v4282 = vadd.f32 %v3713, %v4091
    %v4283 = vadd.f32 %v3714, %v4096
    %v4284 = vadd.f32 %v3715, %v4099
    %v4285 = vadd.f32 %v3716, %v4104
    %v4286 = vadd.f32 %v3717, %v4107
    %v4287 = vadd.f32 %v3718, %v4112
    %v4288 = vadd.f32 %v3719, %v4115
    %v4289 = vadd.f32 %v3720, %v4120
    %v4290 = vadd.f32 %v3721, %v4123
    %v4291 = vadd.f32 %v3722, %v4128
    %v4292 = vadd.f32 %v3723, %v4131
    %v4293 = vadd.f32 %v3724, %v4136
    %v4294 = vadd.f32 %v3725, %v4139
    %v4295 = vadd.f32 %v3726, %v4144
    %v4296 = vadd.f32 %v3727, %v4147
    %v4297 = vadd.f32 %v3728, %v4152
    %v4298 = vadd.f32 %v3729, %v4155
    %v4299 = vadd.f32 %v3730, %v4160
    %v4300 = vadd.f32 %v3731, %v4163
    %v4301 = vadd.f32 %v3732, %v4168
    %v4302 = vadd.f32 %v3733, %v4171
    %v4303 = vadd.f32 %v3734, %v4176
    %v4304 = vadd.f32 %v3735, %v4179
    %v4305 = vadd.f32 %v3736, %v4184
    %v4306 = vadd.f32 %v3737, %v4187
    %v4307 = vadd.f32 %v3738, %v4192
    %v4308 = vadd.f32 %v3739, %v4195
    %v4309 = vadd.f32 %v3740, %v4200
    %v4310 = vadd.f32 %v3741, %v4203
    %v4311 = vadd.f32 %v3742, %v4208
    %v4312 = vadd.f32 %v3743, %v4211
    %v4313 = vadd.f32 %v3744, %v4216
    %v4314 = vadd.f32 %v3745, %v4219
    %v4315 = vadd.f32 %v3746, %v4224
    %v4316 = vadd.f32 %v3747, %v4227
    %v4317 = vadd.f32 %v3748, %v4232
    %4318 = vst.msk [vmem:[#allocation2] sm:$0xff] %vm52, %v4237
    %4319 = vst.msk [vmem:[#allocation2 + $0x8] sm:$0xff] %vm52, %v4238
    %4320 = vst.msk [vmem:[#allocation2 + $0x10] sm:$0xff] %vm52, %v4239
    %4321 = vst.msk [vmem:[#allocation2 + $0x18] sm:$0xff] %vm52, %v4240
    %4322 = vst.msk [vmem:[#allocation2 + $0x20] sm:$0xff] %vm52, %v4241
    %4323 = vst.msk [vmem:[#allocation2 + $0x28] sm:$0xff] %vm52, %v4242
    %4324 = vst.msk [vmem:[#allocation2 + $0x30] sm:$0xff] %vm52, %v4243
    %4325 = vst.msk [vmem:[#allocation2 + $0x38] sm:$0xff] %vm52, %v4244
    %4326 = vst.msk [vmem:[#allocation2 + $0x40] sm:$0xff] %vm52, %v4245
    %4327 = vst.msk [vmem:[#allocation2 + $0x48] sm:$0xff] %vm52, %v4246
    %4328 = vst.msk [vmem:[#allocation2 + $0x50] sm:$0xff] %vm52, %v4247
    %4329 = vst.msk [vmem:[#allocation2 + $0x58] sm:$0xff] %vm52, %v4248
    %4330 = vst.msk [vmem:[#allocation2 + $0x60] sm:$0xff] %vm52, %v4249
    %4331 = vst.msk [vmem:[#allocation2 + $0x68] sm:$0xff] %vm52, %v4250
    %4332 = vst.msk [vmem:[#allocation2 + $0x70] sm:$0xff] %vm52, %v4251
    %4333 = vst.msk [vmem:[#allocation2 + $0x78] sm:$0xff] %vm52, %v4252
    %4334 = vst.msk [vmem:[#allocation2 + $0x80] sm:$0xff] %vm52, %v4253
    %4335 = vst.msk [vmem:[#allocation2 + $0x88] sm:$0xff] %vm52, %v4254
    %4336 = vst.msk [vmem:[#allocation2 + $0x90] sm:$0xff] %vm52, %v4255
    %4337 = vst.msk [vmem:[#allocation2 + $0x98] sm:$0xff] %vm52, %v4256
    %4338 = vst.msk [vmem:[#allocation2 + $0xa0] sm:$0xff] %vm52, %v4257
    %4339 = vst.msk [vmem:[#allocation2 + $0xa8] sm:$0xff] %vm52, %v4258
    %4340 = vst.msk [vmem:[#allocation2 + $0xb0] sm:$0xff] %vm52, %v4259
    %4341 = vst.msk [vmem:[#allocation2 + $0xb8] sm:$0xff] %vm52, %v4260
    %4342 = vst.msk [vmem:[#allocation2 + $0xc0] sm:$0xff] %vm52, %v4261
    %4343 = vst.msk [vmem:[#allocation2 + $0xc8] sm:$0xff] %vm52, %v4262
    %4344 = vst.msk [vmem:[#allocation2 + $0xd0] sm:$0xff] %vm52, %v4263
    %4345 = vst.msk [vmem:[#allocation2 + $0xd8] sm:$0xff] %vm52, %v4264
    %4346 = vst.msk [vmem:[#allocation2 + $0xe0] sm:$0xff] %vm52, %v4265
    %4347 = vst.msk [vmem:[#allocation2 + $0xe8] sm:$0xff] %vm52, %v4266
    %4348 = vst.msk [vmem:[#allocation2 + $0xf0] sm:$0xff] %vm52, %v4267
    %4349 = vst.msk [vmem:[#allocation2 + $0xf8] sm:$0xff] %vm52, %v4268
    %4350 = vst.msk [vmem:[#allocation2 + $0x100] sm:$0xff] %vm52, %v4269
    %4351 = vst.msk [vmem:[#allocation2 + $0x108] sm:$0xff] %vm52, %v4270
    %4352 = vst.msk [vmem:[#allocation2 + $0x110] sm:$0xff] %vm52, %v4271
    %4353 = vst.msk [vmem:[#allocation2 + $0x118] sm:$0xff] %vm52, %v4272
    %4354 = vst.msk [vmem:[#allocation2 + $0x120] sm:$0xff] %vm52, %v4273
    %4355 = vst.msk [vmem:[#allocation2 + $0x128] sm:$0xff] %vm52, %v4274
    %4356 = vst.msk [vmem:[#allocation2 + $0x130] sm:$0xff] %vm52, %v4275
    %4357 = vst.msk [vmem:[#allocation2 + $0x138] sm:$0xff] %vm52, %v4276
    %4358 = vst.msk [vmem:[#allocation2 + $0x140] sm:$0xff] %vm52, %v4277
    %4359 = vst.msk [vmem:[#allocation2 + $0x148] sm:$0xff] %vm52, %v4278
    %4360 = vst.msk [vmem:[#allocation2 + $0x150] sm:$0xff] %vm52, %v4279
    %4361 = vst.msk [vmem:[#allocation2 + $0x158] sm:$0xff] %vm52, %v4280
    %4362 = vst.msk [vmem:[#allocation2 + $0x160] sm:$0xff] %vm52, %v4281
    %4363 = vst.msk [vmem:[#allocation2 + $0x168] sm:$0xff] %vm52, %v4282
    %4364 = vst.msk [vmem:[#allocation2 + $0x170] sm:$0xff] %vm52, %v4283
    %4365 = vst.msk [vmem:[#allocation2 + $0x178] sm:$0xff] %vm52, %v4284
    %4366 = vst.msk [vmem:[#allocation2 + $0x180] sm:$0xff] %vm52, %v4285
    %4367 = vst.msk [vmem:[#allocation2 + $0x188] sm:$0xff] %vm52, %v4286
    %4368 = vst.msk [vmem:[#allocation2 + $0x190] sm:$0xff] %vm52, %v4287
    %4369 = vst.msk [vmem:[#allocation2 + $0x198] sm:$0xff] %vm52, %v4288
    %4370 = vst.msk [vmem:[#allocation2 + $0x1a0] sm:$0xff] %vm52, %v4289
    %4371 = vst.msk [vmem:[#allocation2 + $0x1a8] sm:$0xff] %vm52, %v4290
    %4372 = vst.msk [vmem:[#allocation2 + $0x1b0] sm:$0xff] %vm52, %v4291
    %4373 = vst.msk [vmem:[#allocation2 + $0x1b8] sm:$0xff] %vm52, %v4292
    %4374 = vst.msk [vmem:[#allocation2 + $0x1c0] sm:$0xff] %vm52, %v4293
    %4375 = vst.msk [vmem:[#allocation2 + $0x1c8] sm:$0xff] %vm52, %v4294
    %4376 = vst.msk [vmem:[#allocation2 + $0x1d0] sm:$0xff] %vm52, %v4295
    %4377 = vst.msk [vmem:[#allocation2 + $0x1d8] sm:$0xff] %vm52, %v4296
    %4378 = vst.msk [vmem:[#allocation2 + $0x1e0] sm:$0xff] %vm52, %v4297
    %4379 = vst.msk [vmem:[#allocation2 + $0x1e8] sm:$0xff] %vm52, %v4298
    %4380 = vst.msk [vmem:[#allocation2 + $0x1f0] sm:$0xff] %vm52, %v4299
    %4381 = vst.msk [vmem:[#allocation2 + $0x1f8] sm:$0xff] %vm52, %v4300
    %4382 = vst.msk [vmem:[#allocation2 + $0x200] sm:$0xff] %vm52, %v4301
    %4383 = vst.msk [vmem:[#allocation2 + $0x208] sm:$0xff] %vm52, %v4302
    %4384 = vst.msk [vmem:[#allocation2 + $0x210] sm:$0xff] %vm52, %v4303
    %4385 = vst.msk [vmem:[#allocation2 + $0x218] sm:$0xff] %vm52, %v4304
    %4386 = vst.msk [vmem:[#allocation2 + $0x220] sm:$0xff] %vm52, %v4305
    %4387 = vst.msk [vmem:[#allocation2 + $0x228] sm:$0xff] %vm52, %v4306
    %4388 = vst.msk [vmem:[#allocation2 + $0x230] sm:$0xff] %vm52, %v4307
    %4389 = vst.msk [vmem:[#allocation2 + $0x238] sm:$0xff] %vm52, %v4308
    %4390 = vst.msk [vmem:[#allocation2 + $0x240] sm:$0xff] %vm52, %v4309
    %4391 = vst.msk [vmem:[#allocation2 + $0x248] sm:$0xff] %vm52, %v4310
    %4392 = vst.msk [vmem:[#allocation2 + $0x250] sm:$0xff] %vm52, %v4311
    %4393 = vst.msk [vmem:[#allocation2 + $0x258] sm:$0xff] %vm52, %v4312
    %4394 = vst.msk [vmem:[#allocation2 + $0x260] sm:$0xff] %vm52, %v4313
    %4395 = vst.msk [vmem:[#allocation2 + $0x268] sm:$0xff] %vm52, %v4314
    %4396 = vst.msk [vmem:[#allocation2 + $0x270] sm:$0xff] %vm52, %v4315
    %4397 = vst.msk [vmem:[#allocation2 + $0x278] sm:$0xff] %vm52, %v4316
    %4398 = vst.msk [vmem:[#allocation2 + $0x280] sm:$0xff] %vm52, %v4317
    %v4399 = vld [vmem:[%s0 + $0x14] sm:$0xff]
    %v4400 = vld [vmem:[%s0 + $0x1c] sm:$0xff]
    %v4401 = vld [vmem:[%s0 + $0x24] sm:$0xff]
    %v4402 = vld [vmem:[%s0 + $0x2c] sm:$0xff]
    %v4403 = vld [vmem:[%s0 + $0x34] sm:$0xff]
    %v4404 = vld [vmem:[%s0 + $0x3c] sm:$0xff]
    %v4405 = vld [vmem:[%s0 + $0x44] sm:$0xff]
    %v4406 = vld [vmem:[%s0 + $0x4c] sm:$0xff]
    %v4407 = vld [vmem:[%s0 + $0x54] sm:$0xff]
    %v4408 = vld [vmem:[%s0 + $0x5c] sm:$0xff]
    %v4409 = vld [vmem:[%s0 + $0x64] sm:$0xff]
    %v4410 = vld [vmem:[%s0 + $0x6c] sm:$0xff]
    %v4411 = vld [vmem:[%s0 + $0x74] sm:$0xff]
    %v4412 = vld [vmem:[%s0 + $0x7c] sm:$0xff]
    %v4413 = vld [vmem:[%s0 + $0x84] sm:$0xff]
    %v4414 = vld [vmem:[%s0 + $0x8c] sm:$0xff]
    %v4415 = vld [vmem:[%s0 + $0x94] sm:$0xff]
    %v4416 = vld [vmem:[%s0 + $0x9c] sm:$0xff]
    %v4417 = vld [vmem:[%s0 + $0xa4] sm:$0xff]
    %v4418 = vld [vmem:[%s0 + $0xac] sm:$0xff]
    %v4419 = vld [vmem:[%s0 + $0xb4] sm:$0xff]
    %v4420 = vld [vmem:[%s0 + $0xbc] sm:$0xff]
    %v4421 = vld [vmem:[%s0 + $0xc4] sm:$0xff]
    %v4422 = vld [vmem:[%s0 + $0xcc] sm:$0xff]
    %v4423 = vld [vmem:[%s0 + $0xd4] sm:$0xff]
    %v4424 = vld [vmem:[%s0 + $0xdc] sm:$0xff]
    %v4425 = vld [vmem:[%s0 + $0xe4] sm:$0xff]
    %v4426 = vld [vmem:[%s0 + $0xec] sm:$0xff]
    %v4427 = vld [vmem:[%s0 + $0xf4] sm:$0xff]
    %v4428 = vld [vmem:[%s0 + $0xfc] sm:$0xff]
    %v4429 = vld [vmem:[%s0 + $0x104] sm:$0xff]
    %v4430 = vld [vmem:[%s0 + $0x10c] sm:$0xff]
    %v4431 = vld [vmem:[%s0 + $0x114] sm:$0xff]
    %v4432 = vld [vmem:[%s0 + $0x11c] sm:$0xff]
    %v4433 = vld [vmem:[%s0 + $0x124] sm:$0xff]
    %v4434 = vld [vmem:[%s0 + $0x12c] sm:$0xff]
    %v4435 = vld [vmem:[%s0 + $0x134] sm:$0xff]
    %v4436 = vld [vmem:[%s0 + $0x13c] sm:$0xff]
    %v4437 = vld [vmem:[%s0 + $0x144] sm:$0xff]
    %v4438 = vld [vmem:[%s0 + $0x14c] sm:$0xff]
    %v4439 = vld [vmem:[%s0 + $0x154] sm:$0xff]
    %v4440 = vld [vmem:[%s0 + $0x15c] sm:$0xff]
    %v4441 = vld [vmem:[%s0 + $0x164] sm:$0xff]
    %v4442 = vld [vmem:[%s0 + $0x16c] sm:$0xff]
    %v4443 = vld [vmem:[%s0 + $0x174] sm:$0xff]
    %v4444 = vld [vmem:[%s0 + $0x17c] sm:$0xff]
    %v4445 = vld [vmem:[%s0 + $0x184] sm:$0xff]
    %v4446 = vld [vmem:[%s0 + $0x18c] sm:$0xff]
    %v4447 = vld [vmem:[%s0 + $0x194] sm:$0xff]
    %v4448 = vld [vmem:[%s0 + $0x19c] sm:$0xff]
    %v4449 = vld [vmem:[%s0 + $0x1a4] sm:$0xff]
    %v4450 = vld [vmem:[%s0 + $0x1ac] sm:$0xff]
    %v4451 = vld [vmem:[%s0 + $0x1b4] sm:$0xff]
    %v4452 = vld [vmem:[%s0 + $0x1bc] sm:$0xff]
    %v4453 = vld [vmem:[%s0 + $0x1c4] sm:$0xff]
    %v4454 = vld [vmem:[%s0 + $0x1cc] sm:$0xff]
    %v4455 = vld [vmem:[%s0 + $0x1d4] sm:$0xff]
    %v4456 = vld [vmem:[%s0 + $0x1dc] sm:$0xff]
    %v4457 = vld [vmem:[%s0 + $0x1e4] sm:$0xff]
    %v4458 = vld [vmem:[%s0 + $0x1ec] sm:$0xff]
    %v4459 = vld [vmem:[%s0 + $0x1f4] sm:$0xff]
    %v4460 = vld [vmem:[%s0 + $0x1fc] sm:$0xff]
    %v4461 = vld [vmem:[%s0 + $0x204] sm:$0xff]
    %v4462 = vld [vmem:[%s0 + $0x20c] sm:$0xff]
    %v4463 = vld [vmem:[%s0 + $0x214] sm:$0xff]
    %v4464 = vld [vmem:[%s0 + $0x21c] sm:$0xff]
    %v4465 = vld [vmem:[%s0 + $0x224] sm:$0xff]
    %v4466 = vld [vmem:[%s0 + $0x22c] sm:$0xff]
    %v4467 = vld [vmem:[%s0 + $0x234] sm:$0xff]
    %v4468 = vld [vmem:[%s0 + $0x23c] sm:$0xff]
    %v4469 = vld [vmem:[%s0 + $0x244] sm:$0xff]
    %v4470 = vld [vmem:[%s0 + $0x24c] sm:$0xff]
    %v4471 = vld [vmem:[%s0 + $0x254] sm:$0xff]
    %v4472 = vld [vmem:[%s0 + $0x25c] sm:$0xff]
    %v4473 = vld [vmem:[%s0 + $0x264] sm:$0xff]
    %v4474 = vld [vmem:[%s0 + $0x26c] sm:$0xff]
    %v4475 = vld [vmem:[%s0 + $0x274] sm:$0xff]
    %v4476 = vld [vmem:[%s0 + $0x27c] sm:$0xff]
    %v4477 = vld [vmem:[%s0 + $0x284] sm:$0xff]
    %v4478 = vld [vmem:[%s0 + $0x28c] sm:$0xff]
    %v4479 = vld [vmem:[%s0 + $0x294] sm:$0xff]
    %v4480 = vpack.c.bf16 %v4400, %v4399
    %v4481 = vpack.c.bf16 %v4402, %v4401
    %v4482 = vpack.c.bf16 %v4404, %v4403
    %v4483 = vpack.c.bf16 %v4406, %v4405
    %v4484 = vpack.c.bf16 %v4408, %v4407
    %v4485 = vpack.c.bf16 %v4410, %v4409
    %v4486 = vpack.c.bf16 %v4412, %v4411
    %v4487 = vpack.c.bf16 %v4414, %v4413
    %v4488 = vpack.c.bf16 %v4416, %v4415
    %v4489 = vpack.c.bf16 %v4418, %v4417
    %v4490 = vpack.c.bf16 %v4420, %v4419
    %v4491 = vpack.c.bf16 %v4422, %v4421
    %v4492 = vpack.c.bf16 %v4424, %v4423
    %v4493 = vpack.c.bf16 %v4426, %v4425
    %v4494 = vpack.c.bf16 %v4428, %v4427
    %v4495 = vpack.c.bf16 %v4430, %v4429
    %v4496 = vpack.c.bf16 %v4432, %v4431
    %v4497 = vpack.c.bf16 %v4434, %v4433
    %v4498 = vpack.c.bf16 %v4436, %v4435
    %v4499 = vpack.c.bf16 %v4438, %v4437
    %v4500 = vpack.c.bf16 %v4440, %v4439
    %v4501 = vpack.c.bf16 %v4442, %v4441
    %v4502 = vpack.c.bf16 %v4444, %v4443
    %v4503 = vpack.c.bf16 %v4446, %v4445
    %v4504 = vpack.c.bf16 %v4448, %v4447
    %v4505 = vpack.c.bf16 %v4450, %v4449
    %v4506 = vpack.c.bf16 %v4452, %v4451
    %v4507 = vpack.c.bf16 %v4454, %v4453
    %v4508 = vpack.c.bf16 %v4456, %v4455
    %v4509 = vpack.c.bf16 %v4458, %v4457
    %v4510 = vpack.c.bf16 %v4460, %v4459
    %v4511 = vpack.c.bf16 %v4462, %v4461
    %v4512 = vpack.c.bf16 %v4464, %v4463
    %v4513 = vpack.c.bf16 %v4466, %v4465
    %v4514 = vpack.c.bf16 %v4468, %v4467
    %v4515 = vpack.c.bf16 %v4470, %v4469
    %v4516 = vpack.c.bf16 %v4472, %v4471
    %v4517 = vpack.c.bf16 %v4474, %v4473
    %v4518 = vpack.c.bf16 %v4476, %v4475
    %v4519 = vpack.c.bf16 %v4478, %v4477
    %v4520 = vpack.c.bf16 %v4479, %v4479
    %v4521 = vld [vmem:[#allocation2] sm:$0xff]
    %v4522 = vld [vmem:[#allocation2 + $0x8] sm:$0xff]
    %v4523 = vld [vmem:[#allocation2 + $0x10] sm:$0xff]
    %v4524 = vld [vmem:[#allocation2 + $0x18] sm:$0xff]
    %v4525 = vld [vmem:[#allocation2 + $0x20] sm:$0xff]
    %v4526 = vld [vmem:[#allocation2 + $0x28] sm:$0xff]
    %v4527 = vld [vmem:[#allocation2 + $0x30] sm:$0xff]
    %v4528 = vld [vmem:[#allocation2 + $0x38] sm:$0xff]
    %v4529 = vld [vmem:[#allocation2 + $0x40] sm:$0xff]
    %v4530 = vld [vmem:[#allocation2 + $0x48] sm:$0xff]
    %v4531 = vld [vmem:[#allocation2 + $0x50] sm:$0xff]
    %v4532 = vld [vmem:[#allocation2 + $0x58] sm:$0xff]
    %v4533 = vld [vmem:[#allocation2 + $0x60] sm:$0xff]
    %v4534 = vld [vmem:[#allocation2 + $0x68] sm:$0xff]
    %v4535 = vld [vmem:[#allocation2 + $0x70] sm:$0xff]
    %v4536 = vld [vmem:[#allocation2 + $0x78] sm:$0xff]
    %v4537 = vld [vmem:[#allocation2 + $0x80] sm:$0xff]
    %v4538 = vld [vmem:[#allocation2 + $0x88] sm:$0xff]
    %v4539 = vld [vmem:[#allocation2 + $0x90] sm:$0xff]
    %v4540 = vld [vmem:[#allocation2 + $0x98] sm:$0xff]
    %v4541 = vld [vmem:[#allocation2 + $0xa0] sm:$0xff]
    %v4542 = vld [vmem:[#allocation2 + $0xa8] sm:$0xff]
    %v4543 = vld [vmem:[#allocation2 + $0xb0] sm:$0xff]
    %v4544 = vld [vmem:[#allocation2 + $0xb8] sm:$0xff]
    %v4545 = vld [vmem:[#allocation2 + $0xc0] sm:$0xff]
    %v4546 = vld [vmem:[#allocation2 + $0xc8] sm:$0xff]
    %v4547 = vld [vmem:[#allocation2 + $0xd0] sm:$0xff]
    %v4548 = vld [vmem:[#allocation2 + $0xd8] sm:$0xff]
    %v4549 = vld [vmem:[#allocation2 + $0xe0] sm:$0xff]
    %v4550 = vld [vmem:[#allocation2 + $0xe8] sm:$0xff]
    %v4551 = vld [vmem:[#allocation2 + $0xf0] sm:$0xff]
    %v4552 = vld [vmem:[#allocation2 + $0xf8] sm:$0xff]
    %v4553 = vld [vmem:[#allocation2 + $0x100] sm:$0xff]
    %v4554 = vld [vmem:[#allocation2 + $0x108] sm:$0xff]
    %v4555 = vld [vmem:[#allocation2 + $0x110] sm:$0xff]
    %v4556 = vld [vmem:[#allocation2 + $0x118] sm:$0xff]
    %v4557 = vld [vmem:[#allocation2 + $0x120] sm:$0xff]
    %v4558 = vld [vmem:[#allocation2 + $0x128] sm:$0xff]
    %v4559 = vld [vmem:[#allocation2 + $0x130] sm:$0xff]
    %v4560 = vld [vmem:[#allocation2 + $0x138] sm:$0xff]
    %v4561 = vld [vmem:[#allocation2 + $0x140] sm:$0xff]
    %v4562 = vld [vmem:[#allocation2 + $0x148] sm:$0xff]
    %v4563 = vld [vmem:[#allocation2 + $0x150] sm:$0xff]
    %v4564 = vld [vmem:[#allocation2 + $0x158] sm:$0xff]
    %v4565 = vld [vmem:[#allocation2 + $0x160] sm:$0xff]
    %v4566 = vld [vmem:[#allocation2 + $0x168] sm:$0xff]
    %v4567 = vld [vmem:[#allocation2 + $0x170] sm:$0xff]
    %v4568 = vld [vmem:[#allocation2 + $0x178] sm:$0xff]
    %v4569 = vld [vmem:[#allocation2 + $0x180] sm:$0xff]
    %v4570 = vld [vmem:[#allocation2 + $0x188] sm:$0xff]
    %v4571 = vld [vmem:[#allocation2 + $0x190] sm:$0xff]
    %v4572 = vld [vmem:[#allocation2 + $0x198] sm:$0xff]
    %v4573 = vld [vmem:[#allocation2 + $0x1a0] sm:$0xff]
    %v4574 = vld [vmem:[#allocation2 + $0x1a8] sm:$0xff]
    %v4575 = vld [vmem:[#allocation2 + $0x1b0] sm:$0xff]
    %v4576 = vld [vmem:[#allocation2 + $0x1b8] sm:$0xff]
    %v4577 = vld [vmem:[#allocation2 + $0x1c0] sm:$0xff]
    %v4578 = vld [vmem:[#allocation2 + $0x1c8] sm:$0xff]
    %v4579 = vld [vmem:[#allocation2 + $0x1d0] sm:$0xff]
    %v4580 = vld [vmem:[#allocation2 + $0x1d8] sm:$0xff]
    %v4581 = vld [vmem:[#allocation2 + $0x1e0] sm:$0xff]
    %v4582 = vld [vmem:[#allocation2 + $0x1e8] sm:$0xff]
    %v4583 = vld [vmem:[#allocation2 + $0x1f0] sm:$0xff]
    %v4584 = vld [vmem:[#allocation2 + $0x1f8] sm:$0xff]
    %v4585 = vld [vmem:[#allocation2 + $0x200] sm:$0xff]
    %v4586 = vld [vmem:[#allocation2 + $0x208] sm:$0xff]
    %v4587 = vld [vmem:[#allocation2 + $0x210] sm:$0xff]
    %v4588 = vld [vmem:[#allocation2 + $0x218] sm:$0xff]
    %v4589 = vld [vmem:[#allocation2 + $0x220] sm:$0xff]
    %v4590 = vld [vmem:[#allocation2 + $0x228] sm:$0xff]
    %v4591 = vld [vmem:[#allocation2 + $0x230] sm:$0xff]
    %v4592 = vld [vmem:[#allocation2 + $0x238] sm:$0xff]
    %v4593 = vld [vmem:[#allocation2 + $0x240] sm:$0xff]
    %v4594 = vld [vmem:[#allocation2 + $0x248] sm:$0xff]
    %v4595 = vld [vmem:[#allocation2 + $0x250] sm:$0xff]
    %v4596 = vld [vmem:[#allocation2 + $0x258] sm:$0xff]
    %v4597 = vld [vmem:[#allocation2 + $0x260] sm:$0xff]
    %v4598 = vld [vmem:[#allocation2 + $0x268] sm:$0xff]
    %v4599 = vld [vmem:[#allocation2 + $0x270] sm:$0xff]
    %v4600 = vld [vmem:[#allocation2 + $0x278] sm:$0xff]
    %v4601 = vld [vmem:[#allocation2 + $0x280] sm:$0xff]
    %s4602 = scalar_lea.vmem %s2, 20
    %v4603 = vld [vmem:[%s4602] sm:$0xf]
    %v4605 = vsel %vm52, %v4480, 0
    %v4608 = vsel %vm52, %v4481, 0
    %v4611 = vsel %vm52, %v4482, 0
    %v4614 = vsel %vm52, %v4483, 0
    %v4617 = vsel %vm52, %v4484, 0
    %v4620 = vsel %vm52, %v4485, 0
    %v4623 = vsel %vm52, %v4486, 0
    %v4626 = vsel %vm52, %v4487, 0
    %v4629 = vsel %vm52, %v4488, 0
    %v4632 = vsel %vm52, %v4489, 0
    %v4635 = vsel %vm52, %v4490, 0
    %v4638 = vsel %vm52, %v4491, 0
    %v4641 = vsel %vm52, %v4492, 0
    %v4644 = vsel %vm52, %v4493, 0
    %v4647 = vsel %vm52, %v4494, 0
    %v4650 = vsel %vm52, %v4495, 0
    %v4653 = vsel %vm52, %v4496, 0
    %v4656 = vsel %vm52, %v4497, 0
    %v4659 = vsel %vm52, %v4498, 0
    %v4662 = vsel %vm52, %v4499, 0
    %v4665 = vsel %vm52, %v4500, 0
    %v4668 = vsel %vm52, %v4501, 0
    %v4671 = vsel %vm52, %v4502, 0
    %v4674 = vsel %vm52, %v4503, 0
    %v4677 = vsel %vm52, %v4504, 0
    %v4680 = vsel %vm52, %v4505, 0
    %v4683 = vsel %vm52, %v4506, 0
    %v4686 = vsel %vm52, %v4507, 0
    %v4689 = vsel %vm52, %v4508, 0
    %v4692 = vsel %vm52, %v4509, 0
    %v4695 = vsel %vm52, %v4510, 0
    %v4698 = vsel %vm52, %v4511, 0
    %v4701 = vsel %vm52, %v4512, 0
    %v4704 = vsel %vm52, %v4513, 0
    %v4707 = vsel %vm52, %v4514, 0
    %v4710 = vsel %vm52, %v4515, 0
    %v4713 = vsel %vm52, %v4516, 0
    %v4716 = vsel %vm52, %v4517, 0
    %v4719 = vsel %vm52, %v4518, 0
    %v4722 = vsel %vm52, %v4519, 0
    %v4725 = vsel %vm52, %v4520, 0
    %v4728 = vsel %vm461, %v4603, 0
    %4730 = vmatprep.subr.bf16.mxu0 0
    %4731 = vmatpush1.bf16.msra.mxu0 0
    %4732 = vmatprep.subr.bf16.mxu0 0
    %4733 = vmatpush1.bf16.msra.mxu0 0
    %4734 = vmatprep.subr.bf16.mxu0 0
    %4735 = vmatpush1.bf16.msra.mxu0 0
    %4736 = vmatprep.subr.bf16.mxu0 0
    %4737 = vmatpush1.bf16.msra.mxu0 0
    %4738 = vmatprep.subr.bf16.mxu0 0
    %4739 = vmatpush1.bf16.msra.mxu0 0
    %4740 = vmatprep.subr.bf16.mxu0 0
    %4741 = vmatpush1.bf16.msra.mxu0 0
    %4742 = vmatprep.subr.bf16.mxu0 0
    %4743 = vmatpush1.bf16.msra.mxu0 0
    %4744 = vmatprep.subr.bf16.mxu0 0
    %4745 = vmatpush1.bf16.msra.mxu0 %v4728
    %4746 = vmatprep.subr.bf16.mxu0 0
    %4747 = vmatpush2.bf16.msra.mxu0 0
    %4748 = vmatprep.subr.bf16.mxu0 0
    %4749 = vmatpush2.bf16.msra.mxu0 0
    %4750 = vmatprep.subr.bf16.mxu0 0
    %4751 = vmatpush2.bf16.msra.mxu0 0
    %4752 = vmatprep.subr.bf16.mxu0 0
    %4753 = vmatpush2.bf16.msra.mxu0 0
    %4754 = vmatprep.subr.bf16.mxu0 0
    %4755 = vmatpush2.bf16.msra.mxu0 0
    %4756 = vmatprep.subr.bf16.mxu0 0
    %4757 = vmatpush2.bf16.msra.mxu0 0
    %4758 = vmatprep.subr.bf16.mxu0 0
    %4759 = vmatpush2.bf16.msra.mxu0 0
    %4760 = vmatprep.subr.bf16.mxu0 0
    %4761 = vmatpush2.bf16.msra.mxu0 0
    %4762 = vmatprep.mubr.bf16.mxu0 0
    %4763 = vmatmul.mubr.bf16.gmra.mxu0 %v4605
    %v4764 = vpop.f32.mrf.mxu0
    %v4765 = vadd.f32 0.0, %v4764
    %v4766 = vpop.f32.mrf.mxu0
    %v4767 = vpop.f32.mrf.mxu0
    %v4768 = vadd.f32 0.0, %v4767
    %v4769 = vpop.f32.mrf.mxu0
    %4770 = vmatprep.mubr.bf16.mxu0 0
    %4771 = vmatmul.mubr.bf16.gmra.mxu0 %v4608
    %v4772 = vpop.f32.mrf.mxu0
    %v4773 = vadd.f32 0.0, %v4772
    %v4774 = vpop.f32.mrf.mxu0
    %v4775 = vpop.f32.mrf.mxu0
    %v4776 = vadd.f32 0.0, %v4775
    %v4777 = vpop.f32.mrf.mxu0
    %4778 = vmatprep.mubr.bf16.mxu0 0
    %4779 = vmatmul.mubr.bf16.gmra.mxu0 %v4611
    %v4780 = vpop.f32.mrf.mxu0
    %v4781 = vadd.f32 0.0, %v4780
    %v4782 = vpop.f32.mrf.mxu0
    %v4783 = vpop.f32.mrf.mxu0
    %v4784 = vadd.f32 0.0, %v4783
    %v4785 = vpop.f32.mrf.mxu0
    %4786 = vmatprep.mubr.bf16.mxu0 0
    %4787 = vmatmul.mubr.bf16.gmra.mxu0 %v4614
    %v4788 = vpop.f32.mrf.mxu0
    %v4789 = vadd.f32 0.0, %v4788
    %v4790 = vpop.f32.mrf.mxu0
    %v4791 = vpop.f32.mrf.mxu0
    %v4792 = vadd.f32 0.0, %v4791
    %v4793 = vpop.f32.mrf.mxu0
    %4794 = vmatprep.mubr.bf16.mxu0 0
    %4795 = vmatmul.mubr.bf16.gmra.mxu0 %v4617
    %v4796 = vpop.f32.mrf.mxu0
    %v4797 = vadd.f32 0.0, %v4796
    %v4798 = vpop.f32.mrf.mxu0
    %v4799 = vpop.f32.mrf.mxu0
    %v4800 = vadd.f32 0.0, %v4799
    %v4801 = vpop.f32.mrf.mxu0
    %4802 = vmatprep.mubr.bf16.mxu0 0
    %4803 = vmatmul.mubr.bf16.gmra.mxu0 %v4620
    %v4804 = vpop.f32.mrf.mxu0
    %v4805 = vadd.f32 0.0, %v4804
    %v4806 = vpop.f32.mrf.mxu0
    %v4807 = vpop.f32.mrf.mxu0
    %v4808 = vadd.f32 0.0, %v4807
    %v4809 = vpop.f32.mrf.mxu0
    %4810 = vmatprep.mubr.bf16.mxu0 0
    %4811 = vmatmul.mubr.bf16.gmra.mxu0 %v4623
    %v4812 = vpop.f32.mrf.mxu0
    %v4813 = vadd.f32 0.0, %v4812
    %v4814 = vpop.f32.mrf.mxu0
    %v4815 = vpop.f32.mrf.mxu0
    %v4816 = vadd.f32 0.0, %v4815
    %v4817 = vpop.f32.mrf.mxu0
    %4818 = vmatprep.mubr.bf16.mxu0 0
    %4819 = vmatmul.mubr.bf16.gmra.mxu0 %v4626
    %v4820 = vpop.f32.mrf.mxu0
    %v4821 = vadd.f32 0.0, %v4820
    %v4822 = vpop.f32.mrf.mxu0
    %v4823 = vpop.f32.mrf.mxu0
    %v4824 = vadd.f32 0.0, %v4823
    %v4825 = vpop.f32.mrf.mxu0
    %4826 = vmatprep.mubr.bf16.mxu0 0
    %4827 = vmatmul.mubr.bf16.gmra.mxu0 %v4629
    %v4828 = vpop.f32.mrf.mxu0
    %v4829 = vadd.f32 0.0, %v4828
    %v4830 = vpop.f32.mrf.mxu0
    %v4831 = vpop.f32.mrf.mxu0
    %v4832 = vadd.f32 0.0, %v4831
    %v4833 = vpop.f32.mrf.mxu0
    %4834 = vmatprep.mubr.bf16.mxu0 0
    %4835 = vmatmul.mubr.bf16.gmra.mxu0 %v4632
    %v4836 = vpop.f32.mrf.mxu0
    %v4837 = vadd.f32 0.0, %v4836
    %v4838 = vpop.f32.mrf.mxu0
    %v4839 = vpop.f32.mrf.mxu0
    %v4840 = vadd.f32 0.0, %v4839
    %v4841 = vpop.f32.mrf.mxu0
    %4842 = vmatprep.mubr.bf16.mxu0 0
    %4843 = vmatmul.mubr.bf16.gmra.mxu0 %v4635
    %v4844 = vpop.f32.mrf.mxu0
    %v4845 = vadd.f32 0.0, %v4844
    %v4846 = vpop.f32.mrf.mxu0
    %v4847 = vpop.f32.mrf.mxu0
    %v4848 = vadd.f32 0.0, %v4847
    %v4849 = vpop.f32.mrf.mxu0
    %4850 = vmatprep.mubr.bf16.mxu0 0
    %4851 = vmatmul.mubr.bf16.gmra.mxu0 %v4638
    %v4852 = vpop.f32.mrf.mxu0
    %v4853 = vadd.f32 0.0, %v4852
    %v4854 = vpop.f32.mrf.mxu0
    %v4855 = vpop.f32.mrf.mxu0
    %v4856 = vadd.f32 0.0, %v4855
    %v4857 = vpop.f32.mrf.mxu0
    %4858 = vmatprep.mubr.bf16.mxu0 0
    %4859 = vmatmul.mubr.bf16.gmra.mxu0 %v4641
    %v4860 = vpop.f32.mrf.mxu0
    %v4861 = vadd.f32 0.0, %v4860
    %v4862 = vpop.f32.mrf.mxu0
    %v4863 = vpop.f32.mrf.mxu0
    %v4864 = vadd.f32 0.0, %v4863
    %v4865 = vpop.f32.mrf.mxu0
    %4866 = vmatprep.mubr.bf16.mxu0 0
    %4867 = vmatmul.mubr.bf16.gmra.mxu0 %v4644
    %v4868 = vpop.f32.mrf.mxu0
    %v4869 = vadd.f32 0.0, %v4868
    %v4870 = vpop.f32.mrf.mxu0
    %v4871 = vpop.f32.mrf.mxu0
    %v4872 = vadd.f32 0.0, %v4871
    %v4873 = vpop.f32.mrf.mxu0
    %4874 = vmatprep.mubr.bf16.mxu0 0
    %4875 = vmatmul.mubr.bf16.gmra.mxu0 %v4647
    %v4876 = vpop.f32.mrf.mxu0
    %v4877 = vadd.f32 0.0, %v4876
    %v4878 = vpop.f32.mrf.mxu0
    %v4879 = vpop.f32.mrf.mxu0
    %v4880 = vadd.f32 0.0, %v4879
    %v4881 = vpop.f32.mrf.mxu0
    %4882 = vmatprep.mubr.bf16.mxu0 0
    %4883 = vmatmul.mubr.bf16.gmra.mxu0 %v4650
    %v4884 = vpop.f32.mrf.mxu0
    %v4885 = vadd.f32 0.0, %v4884
    %v4886 = vpop.f32.mrf.mxu0
    %v4887 = vpop.f32.mrf.mxu0
    %v4888 = vadd.f32 0.0, %v4887
    %v4889 = vpop.f32.mrf.mxu0
    %4890 = vmatprep.mubr.bf16.mxu0 0
    %4891 = vmatmul.mubr.bf16.gmra.mxu0 %v4653
    %v4892 = vpop.f32.mrf.mxu0
    %v4893 = vadd.f32 0.0, %v4892
    %v4894 = vpop.f32.mrf.mxu0
    %v4895 = vpop.f32.mrf.mxu0
    %v4896 = vadd.f32 0.0, %v4895
    %v4897 = vpop.f32.mrf.mxu0
    %4898 = vmatprep.mubr.bf16.mxu0 0
    %4899 = vmatmul.mubr.bf16.gmra.mxu0 %v4656
    %v4900 = vpop.f32.mrf.mxu0
    %v4901 = vadd.f32 0.0, %v4900
    %v4902 = vpop.f32.mrf.mxu0
    %v4903 = vpop.f32.mrf.mxu0
    %v4904 = vadd.f32 0.0, %v4903
    %v4905 = vpop.f32.mrf.mxu0
    %4906 = vmatprep.mubr.bf16.mxu0 0
    %4907 = vmatmul.mubr.bf16.gmra.mxu0 %v4659
    %v4908 = vpop.f32.mrf.mxu0
    %v4909 = vadd.f32 0.0, %v4908
    %v4910 = vpop.f32.mrf.mxu0
    %v4911 = vpop.f32.mrf.mxu0
    %v4912 = vadd.f32 0.0, %v4911
    %v4913 = vpop.f32.mrf.mxu0
    %4914 = vmatprep.mubr.bf16.mxu0 0
    %4915 = vmatmul.mubr.bf16.gmra.mxu0 %v4662
    %v4916 = vpop.f32.mrf.mxu0
    %v4917 = vadd.f32 0.0, %v4916
    %v4918 = vpop.f32.mrf.mxu0
    %v4919 = vpop.f32.mrf.mxu0
    %v4920 = vadd.f32 0.0, %v4919
    %v4921 = vpop.f32.mrf.mxu0
    %4922 = vmatprep.mubr.bf16.mxu0 0
    %4923 = vmatmul.mubr.bf16.gmra.mxu0 %v4665
    %v4924 = vpop.f32.mrf.mxu0
    %v4925 = vadd.f32 0.0, %v4924
    %v4926 = vpop.f32.mrf.mxu0
    %v4927 = vpop.f32.mrf.mxu0
    %v4928 = vadd.f32 0.0, %v4927
    %v4929 = vpop.f32.mrf.mxu0
    %4930 = vmatprep.mubr.bf16.mxu0 0
    %4931 = vmatmul.mubr.bf16.gmra.mxu0 %v4668
    %v4932 = vpop.f32.mrf.mxu0
    %v4933 = vadd.f32 0.0, %v4932
    %v4934 = vpop.f32.mrf.mxu0
    %v4935 = vpop.f32.mrf.mxu0
    %v4936 = vadd.f32 0.0, %v4935
    %v4937 = vpop.f32.mrf.mxu0
    %4938 = vmatprep.mubr.bf16.mxu0 0
    %4939 = vmatmul.mubr.bf16.gmra.mxu0 %v4671
    %v4940 = vpop.f32.mrf.mxu0
    %v4941 = vadd.f32 0.0, %v4940
    %v4942 = vpop.f32.mrf.mxu0
    %v4943 = vpop.f32.mrf.mxu0
    %v4944 = vadd.f32 0.0, %v4943
    %v4945 = vpop.f32.mrf.mxu0
    %4946 = vmatprep.mubr.bf16.mxu0 0
    %4947 = vmatmul.mubr.bf16.gmra.mxu0 %v4674
    %v4948 = vpop.f32.mrf.mxu0
    %v4949 = vadd.f32 0.0, %v4948
    %v4950 = vpop.f32.mrf.mxu0
    %v4951 = vpop.f32.mrf.mxu0
    %v4952 = vadd.f32 0.0, %v4951
    %v4953 = vpop.f32.mrf.mxu0
    %4954 = vmatprep.mubr.bf16.mxu0 0
    %4955 = vmatmul.mubr.bf16.gmra.mxu0 %v4677
    %v4956 = vpop.f32.mrf.mxu0
    %v4957 = vadd.f32 0.0, %v4956
    %v4958 = vpop.f32.mrf.mxu0
    %v4959 = vpop.f32.mrf.mxu0
    %v4960 = vadd.f32 0.0, %v4959
    %v4961 = vpop.f32.mrf.mxu0
    %4962 = vmatprep.mubr.bf16.mxu0 0
    %4963 = vmatmul.mubr.bf16.gmra.mxu0 %v4680
    %v4964 = vpop.f32.mrf.mxu0
    %v4965 = vadd.f32 0.0, %v4964
    %v4966 = vpop.f32.mrf.mxu0
    %v4967 = vpop.f32.mrf.mxu0
    %v4968 = vadd.f32 0.0, %v4967
    %v4969 = vpop.f32.mrf.mxu0
    %4970 = vmatprep.mubr.bf16.mxu0 0
    %4971 = vmatmul.mubr.bf16.gmra.mxu0 %v4683
    %v4972 = vpop.f32.mrf.mxu0
    %v4973 = vadd.f32 0.0, %v4972
    %v4974 = vpop.f32.mrf.mxu0
    %v4975 = vpop.f32.mrf.mxu0
    %v4976 = vadd.f32 0.0, %v4975
    %v4977 = vpop.f32.mrf.mxu0
    %4978 = vmatprep.mubr.bf16.mxu0 0
    %4979 = vmatmul.mubr.bf16.gmra.mxu0 %v4686
    %v4980 = vpop.f32.mrf.mxu0
    %v4981 = vadd.f32 0.0, %v4980
    %v4982 = vpop.f32.mrf.mxu0
    %v4983 = vpop.f32.mrf.mxu0
    %v4984 = vadd.f32 0.0, %v4983
    %v4985 = vpop.f32.mrf.mxu0
    %4986 = vmatprep.mubr.bf16.mxu0 0
    %4987 = vmatmul.mubr.bf16.gmra.mxu0 %v4689
    %v4988 = vpop.f32.mrf.mxu0
    %v4989 = vadd.f32 0.0, %v4988
    %v4990 = vpop.f32.mrf.mxu0
    %v4991 = vpop.f32.mrf.mxu0
    %v4992 = vadd.f32 0.0, %v4991
    %v4993 = vpop.f32.mrf.mxu0
    %4994 = vmatprep.mubr.bf16.mxu0 0
    %4995 = vmatmul.mubr.bf16.gmra.mxu0 %v4692
    %v4996 = vpop.f32.mrf.mxu0
    %v4997 = vadd.f32 0.0, %v4996
    %v4998 = vpop.f32.mrf.mxu0
    %v4999 = vpop.f32.mrf.mxu0
    %v5000 = vadd.f32 0.0, %v4999
    %v5001 = vpop.f32.mrf.mxu0
    %5002 = vmatprep.mubr.bf16.mxu0 0
    %5003 = vmatmul.mubr.bf16.gmra.mxu0 %v4695
    %v5004 = vpop.f32.mrf.mxu0
    %v5005 = vadd.f32 0.0, %v5004
    %v5006 = vpop.f32.mrf.mxu0
    %v5007 = vpop.f32.mrf.mxu0
    %v5008 = vadd.f32 0.0, %v5007
    %v5009 = vpop.f32.mrf.mxu0
    %5010 = vmatprep.mubr.bf16.mxu0 0
    %5011 = vmatmul.mubr.bf16.gmra.mxu0 %v4698
    %v5012 = vpop.f32.mrf.mxu0
    %v5013 = vadd.f32 0.0, %v5012
    %v5014 = vpop.f32.mrf.mxu0
    %v5015 = vpop.f32.mrf.mxu0
    %v5016 = vadd.f32 0.0, %v5015
    %v5017 = vpop.f32.mrf.mxu0
    %5018 = vmatprep.mubr.bf16.mxu0 0
    %5019 = vmatmul.mubr.bf16.gmra.mxu0 %v4701
    %v5020 = vpop.f32.mrf.mxu0
    %v5021 = vadd.f32 0.0, %v5020
    %v5022 = vpop.f32.mrf.mxu0
    %v5023 = vpop.f32.mrf.mxu0
    %v5024 = vadd.f32 0.0, %v5023
    %v5025 = vpop.f32.mrf.mxu0
    %5026 = vmatprep.mubr.bf16.mxu0 0
    %5027 = vmatmul.mubr.bf16.gmra.mxu0 %v4704
    %v5028 = vpop.f32.mrf.mxu0
    %v5029 = vadd.f32 0.0, %v5028
    %v5030 = vpop.f32.mrf.mxu0
    %v5031 = vpop.f32.mrf.mxu0
    %v5032 = vadd.f32 0.0, %v5031
    %v5033 = vpop.f32.mrf.mxu0
    %5034 = vmatprep.mubr.bf16.mxu0 0
    %5035 = vmatmul.mubr.bf16.gmra.mxu0 %v4707
    %v5036 = vpop.f32.mrf.mxu0
    %v5037 = vadd.f32 0.0, %v5036
    %v5038 = vpop.f32.mrf.mxu0
    %v5039 = vpop.f32.mrf.mxu0
    %v5040 = vadd.f32 0.0, %v5039
    %v5041 = vpop.f32.mrf.mxu0
    %5042 = vmatprep.mubr.bf16.mxu0 0
    %5043 = vmatmul.mubr.bf16.gmra.mxu0 %v4710
    %v5044 = vpop.f32.mrf.mxu0
    %v5045 = vadd.f32 0.0, %v5044
    %v5046 = vpop.f32.mrf.mxu0
    %v5047 = vpop.f32.mrf.mxu0
    %v5048 = vadd.f32 0.0, %v5047
    %v5049 = vpop.f32.mrf.mxu0
    %5050 = vmatprep.mubr.bf16.mxu0 0
    %5051 = vmatmul.mubr.bf16.gmra.mxu0 %v4713
    %v5052 = vpop.f32.mrf.mxu0
    %v5053 = vadd.f32 0.0, %v5052
    %v5054 = vpop.f32.mrf.mxu0
    %v5055 = vpop.f32.mrf.mxu0
    %v5056 = vadd.f32 0.0, %v5055
    %v5057 = vpop.f32.mrf.mxu0
    %5058 = vmatprep.mubr.bf16.mxu0 0
    %5059 = vmatmul.mubr.bf16.gmra.mxu0 %v4716
    %v5060 = vpop.f32.mrf.mxu0
    %v5061 = vadd.f32 0.0, %v5060
    %v5062 = vpop.f32.mrf.mxu0
    %v5063 = vpop.f32.mrf.mxu0
    %v5064 = vadd.f32 0.0, %v5063
    %v5065 = vpop.f32.mrf.mxu0
    %5066 = vmatprep.mubr.bf16.mxu0 0
    %5067 = vmatmul.mubr.bf16.gmra.mxu0 %v4719
    %v5068 = vpop.f32.mrf.mxu0
    %v5069 = vadd.f32 0.0, %v5068
    %v5070 = vpop.f32.mrf.mxu0
    %v5071 = vpop.f32.mrf.mxu0
    %v5072 = vadd.f32 0.0, %v5071
    %v5073 = vpop.f32.mrf.mxu0
    %5074 = vmatprep.mubr.bf16.mxu0 0
    %5075 = vmatmul.mubr.bf16.gmra.mxu0 %v4722
    %v5076 = vpop.f32.mrf.mxu0
    %v5077 = vadd.f32 0.0, %v5076
    %v5078 = vpop.f32.mrf.mxu0
    %v5079 = vpop.f32.mrf.mxu0
    %v5080 = vadd.f32 0.0, %v5079
    %v5081 = vpop.f32.mrf.mxu0
    %5082 = vmatprep.mubr.bf16.mxu0 0
    %5083 = vmatmul.mubr.bf16.gmra.mxu0 %v4725
    %v5084 = vpop.f32.mrf.mxu0
    %v5085 = vadd.f32 0.0, %v5084
    %v5086 = vpop.f32.mrf.mxu0
    %v5087 = vpop.f32.mrf.mxu0
    %v5088 = vpop.f32.mrf.mxu0
    %5089 = vdwg.mxu0
    %v5090 = vadd.f32 %v4521, %v4765
    %v5091 = vadd.f32 %v4522, %v4768
    %v5092 = vadd.f32 %v4523, %v4773
    %v5093 = vadd.f32 %v4524, %v4776
    %v5094 = vadd.f32 %v4525, %v4781
    %v5095 = vadd.f32 %v4526, %v4784
    %v5096 = vadd.f32 %v4527, %v4789
    %v5097 = vadd.f32 %v4528, %v4792
    %v5098 = vadd.f32 %v4529, %v4797
    %v5099 = vadd.f32 %v4530, %v4800
    %v5100 = vadd.f32 %v4531, %v4805
    %v5101 = vadd.f32 %v4532, %v4808
    %v5102 = vadd.f32 %v4533, %v4813
    %v5103 = vadd.f32 %v4534, %v4816
    %v5104 = vadd.f32 %v4535, %v4821
    %v5105 = vadd.f32 %v4536, %v4824
    %v5106 = vadd.f32 %v4537, %v4829
    %v5107 = vadd.f32 %v4538, %v4832
    %v5108 = vadd.f32 %v4539, %v4837
    %v5109 = vadd.f32 %v4540, %v4840
    %v5110 = vadd.f32 %v4541, %v4845
    %v5111 = vadd.f32 %v4542, %v4848
    %v5112 = vadd.f32 %v4543, %v4853
    %v5113 = vadd.f32 %v4544, %v4856
    %v5114 = vadd.f32 %v4545, %v4861
    %v5115 = vadd.f32 %v4546, %v4864
    %v5116 = vadd.f32 %v4547, %v4869
    %v5117 = vadd.f32 %v4548, %v4872
    %v5118 = vadd.f32 %v4549, %v4877
    %v5119 = vadd.f32 %v4550, %v4880
    %v5120 = vadd.f32 %v4551, %v4885
    %v5121 = vadd.f32 %v4552, %v4888
    %v5122 = vadd.f32 %v4553, %v4893
    %v5123 = vadd.f32 %v4554, %v4896
    %v5124 = vadd.f32 %v4555, %v4901
    %v5125 = vadd.f32 %v4556, %v4904
    %v5126 = vadd.f32 %v4557, %v4909
    %v5127 = vadd.f32 %v4558, %v4912
    %v5128 = vadd.f32 %v4559, %v4917
    %v5129 = vadd.f32 %v4560, %v4920
    %v5130 = vadd.f32 %v4561, %v4925
    %v5131 = vadd.f32 %v4562, %v4928
    %v5132 = vadd.f32 %v4563, %v4933
    %v5133 = vadd.f32 %v4564, %v4936
    %v5134 = vadd.f32 %v4565, %v4941
    %v5135 = vadd.f32 %v4566, %v4944
    %v5136 = vadd.f32 %v4567, %v4949
    %v5137 = vadd.f32 %v4568, %v4952
    %v5138 = vadd.f32 %v4569, %v4957
    %v5139 = vadd.f32 %v4570, %v4960
    %v5140 = vadd.f32 %v4571, %v4965
    %v5141 = vadd.f32 %v4572, %v4968
    %v5142 = vadd.f32 %v4573, %v4973
    %v5143 = vadd.f32 %v4574, %v4976
    %v5144 = vadd.f32 %v4575, %v4981
    %v5145 = vadd.f32 %v4576, %v4984
    %v5146 = vadd.f32 %v4577, %v4989
    %v5147 = vadd.f32 %v4578, %v4992
    %v5148 = vadd.f32 %v4579, %v4997
    %v5149 = vadd.f32 %v4580, %v5000
    %v5150 = vadd.f32 %v4581, %v5005
    %v5151 = vadd.f32 %v4582, %v5008
    %v5152 = vadd.f32 %v4583, %v5013
    %v5153 = vadd.f32 %v4584, %v5016
    %v5154 = vadd.f32 %v4585, %v5021
    %v5155 = vadd.f32 %v4586, %v5024
    %v5156 = vadd.f32 %v4587, %v5029
    %v5157 = vadd.f32 %v4588, %v5032
    %v5158 = vadd.f32 %v4589, %v5037
    %v5159 = vadd.f32 %v4590, %v5040
    %v5160 = vadd.f32 %v4591, %v5045
    %v5161 = vadd.f32 %v4592, %v5048
    %v5162 = vadd.f32 %v4593, %v5053
    %v5163 = vadd.f32 %v4594, %v5056
    %v5164 = vadd.f32 %v4595, %v5061
    %v5165 = vadd.f32 %v4596, %v5064
    %v5166 = vadd.f32 %v4597, %v5069
    %v5167 = vadd.f32 %v4598, %v5072
    %v5168 = vadd.f32 %v4599, %v5077
    %v5169 = vadd.f32 %v4600, %v5080
    %v5170 = vadd.f32 %v4601, %v5085
    %5171 = vst.msk [vmem:[#allocation2] sm:$0xff] %vm52, %v5090
    %5172 = vst.msk [vmem:[#allocation2 + $0x8] sm:$0xff] %vm52, %v5091
    %5173 = vst.msk [vmem:[#allocation2 + $0x10] sm:$0xff] %vm52, %v5092
    %5174 = vst.msk [vmem:[#allocation2 + $0x18] sm:$0xff] %vm52, %v5093
    %5175 = vst.msk [vmem:[#allocation2 + $0x20] sm:$0xff] %vm52, %v5094
    %5176 = vst.msk [vmem:[#allocation2 + $0x28] sm:$0xff] %vm52, %v5095
    %5177 = vst.msk [vmem:[#allocation2 + $0x30] sm:$0xff] %vm52, %v5096
    %5178 = vst.msk [vmem:[#allocation2 + $0x38] sm:$0xff] %vm52, %v5097
    %5179 = vst.msk [vmem:[#allocation2 + $0x40] sm:$0xff] %vm52, %v5098
    %5180 = vst.msk [vmem:[#allocation2 + $0x48] sm:$0xff] %vm52, %v5099
    %5181 = vst.msk [vmem:[#allocation2 + $0x50] sm:$0xff] %vm52, %v5100
    %5182 = vst.msk [vmem:[#allocation2 + $0x58] sm:$0xff] %vm52, %v5101
    %5183 = vst.msk [vmem:[#allocation2 + $0x60] sm:$0xff] %vm52, %v5102
    %5184 = vst.msk [vmem:[#allocation2 + $0x68] sm:$0xff] %vm52, %v5103
    %5185 = vst.msk [vmem:[#allocation2 + $0x70] sm:$0xff] %vm52, %v5104
    %5186 = vst.msk [vmem:[#allocation2 + $0x78] sm:$0xff] %vm52, %v5105
    %5187 = vst.msk [vmem:[#allocation2 + $0x80] sm:$0xff] %vm52, %v5106
    %5188 = vst.msk [vmem:[#allocation2 + $0x88] sm:$0xff] %vm52, %v5107
    %5189 = vst.msk [vmem:[#allocation2 + $0x90] sm:$0xff] %vm52, %v5108
    %5190 = vst.msk [vmem:[#allocation2 + $0x98] sm:$0xff] %vm52, %v5109
    %5191 = vst.msk [vmem:[#allocation2 + $0xa0] sm:$0xff] %vm52, %v5110
    %5192 = vst.msk [vmem:[#allocation2 + $0xa8] sm:$0xff] %vm52, %v5111
    %5193 = vst.msk [vmem:[#allocation2 + $0xb0] sm:$0xff] %vm52, %v5112
    %5194 = vst.msk [vmem:[#allocation2 + $0xb8] sm:$0xff] %vm52, %v5113
    %5195 = vst.msk [vmem:[#allocation2 + $0xc0] sm:$0xff] %vm52, %v5114
    %5196 = vst.msk [vmem:[#allocation2 + $0xc8] sm:$0xff] %vm52, %v5115
    %5197 = vst.msk [vmem:[#allocation2 + $0xd0] sm:$0xff] %vm52, %v5116
    %5198 = vst.msk [vmem:[#allocation2 + $0xd8] sm:$0xff] %vm52, %v5117
    %5199 = vst.msk [vmem:[#allocation2 + $0xe0] sm:$0xff] %vm52, %v5118
    %5200 = vst.msk [vmem:[#allocation2 + $0xe8] sm:$0xff] %vm52, %v5119
    %5201 = vst.msk [vmem:[#allocation2 + $0xf0] sm:$0xff] %vm52, %v5120
    %5202 = vst.msk [vmem:[#allocation2 + $0xf8] sm:$0xff] %vm52, %v5121
    %5203 = vst.msk [vmem:[#allocation2 + $0x100] sm:$0xff] %vm52, %v5122
    %5204 = vst.msk [vmem:[#allocation2 + $0x108] sm:$0xff] %vm52, %v5123
    %5205 = vst.msk [vmem:[#allocation2 + $0x110] sm:$0xff] %vm52, %v5124
    %5206 = vst.msk [vmem:[#allocation2 + $0x118] sm:$0xff] %vm52, %v5125
    %5207 = vst.msk [vmem:[#allocation2 + $0x120] sm:$0xff] %vm52, %v5126
    %5208 = vst.msk [vmem:[#allocation2 + $0x128] sm:$0xff] %vm52, %v5127
    %5209 = vst.msk [vmem:[#allocation2 + $0x130] sm:$0xff] %vm52, %v5128
    %5210 = vst.msk [vmem:[#allocation2 + $0x138] sm:$0xff] %vm52, %v5129
    %5211 = vst.msk [vmem:[#allocation2 + $0x140] sm:$0xff] %vm52, %v5130
    %5212 = vst.msk [vmem:[#allocation2 + $0x148] sm:$0xff] %vm52, %v5131
    %5213 = vst.msk [vmem:[#allocation2 + $0x150] sm:$0xff] %vm52, %v5132
    %5214 = vst.msk [vmem:[#allocation2 + $0x158] sm:$0xff] %vm52, %v5133
    %5215 = vst.msk [vmem:[#allocation2 + $0x160] sm:$0xff] %vm52, %v5134
    %5216 = vst.msk [vmem:[#allocation2 + $0x168] sm:$0xff] %vm52, %v5135
    %5217 = vst.msk [vmem:[#allocation2 + $0x170] sm:$0xff] %vm52, %v5136
    %5218 = vst.msk [vmem:[#allocation2 + $0x178] sm:$0xff] %vm52, %v5137
    %5219 = vst.msk [vmem:[#allocation2 + $0x180] sm:$0xff] %vm52, %v5138
    %5220 = vst.msk [vmem:[#allocation2 + $0x188] sm:$0xff] %vm52, %v5139
    %5221 = vst.msk [vmem:[#allocation2 + $0x190] sm:$0xff] %vm52, %v5140
    %5222 = vst.msk [vmem:[#allocation2 + $0x198] sm:$0xff] %vm52, %v5141
    %5223 = vst.msk [vmem:[#allocation2 + $0x1a0] sm:$0xff] %vm52, %v5142
    %5224 = vst.msk [vmem:[#allocation2 + $0x1a8] sm:$0xff] %vm52, %v5143
    %5225 = vst.msk [vmem:[#allocation2 + $0x1b0] sm:$0xff] %vm52, %v5144
    %5226 = vst.msk [vmem:[#allocation2 + $0x1b8] sm:$0xff] %vm52, %v5145
    %5227 = vst.msk [vmem:[#allocation2 + $0x1c0] sm:$0xff] %vm52, %v5146
    %5228 = vst.msk [vmem:[#allocation2 + $0x1c8] sm:$0xff] %vm52, %v5147
    %5229 = vst.msk [vmem:[#allocation2 + $0x1d0] sm:$0xff] %vm52, %v5148
    %5230 = vst.msk [vmem:[#allocation2 + $0x1d8] sm:$0xff] %vm52, %v5149
    %5231 = vst.msk [vmem:[#allocation2 + $0x1e0] sm:$0xff] %vm52, %v5150
    %5232 = vst.msk [vmem:[#allocation2 + $0x1e8] sm:$0xff] %vm52, %v5151
    %5233 = vst.msk [vmem:[#allocation2 + $0x1f0] sm:$0xff] %vm52, %v5152
    %5234 = vst.msk [vmem:[#allocation2 + $0x1f8] sm:$0xff] %vm52, %v5153
    %5235 = vst.msk [vmem:[#allocation2 + $0x200] sm:$0xff] %vm52, %v5154
    %5236 = vst.msk [vmem:[#allocation2 + $0x208] sm:$0xff] %vm52, %v5155
    %5237 = vst.msk [vmem:[#allocation2 + $0x210] sm:$0xff] %vm52, %v5156
    %5238 = vst.msk [vmem:[#allocation2 + $0x218] sm:$0xff] %vm52, %v5157
    %5239 = vst.msk [vmem:[#allocation2 + $0x220] sm:$0xff] %vm52, %v5158
    %5240 = vst.msk [vmem:[#allocation2 + $0x228] sm:$0xff] %vm52, %v5159
    %5241 = vst.msk [vmem:[#allocation2 + $0x230] sm:$0xff] %vm52, %v5160
    %5242 = vst.msk [vmem:[#allocation2 + $0x238] sm:$0xff] %vm52, %v5161
    %5243 = vst.msk [vmem:[#allocation2 + $0x240] sm:$0xff] %vm52, %v5162
    %5244 = vst.msk [vmem:[#allocation2 + $0x248] sm:$0xff] %vm52, %v5163
    %5245 = vst.msk [vmem:[#allocation2 + $0x250] sm:$0xff] %vm52, %v5164
    %5246 = vst.msk [vmem:[#allocation2 + $0x258] sm:$0xff] %vm52, %v5165
    %5247 = vst.msk [vmem:[#allocation2 + $0x260] sm:$0xff] %vm52, %v5166
    %5248 = vst.msk [vmem:[#allocation2 + $0x268] sm:$0xff] %vm52, %v5167
    %5249 = vst.msk [vmem:[#allocation2 + $0x270] sm:$0xff] %vm52, %v5168
    %5250 = vst.msk [vmem:[#allocation2 + $0x278] sm:$0xff] %vm52, %v5169
    %5251 = vst.msk [vmem:[#allocation2 + $0x280] sm:$0xff] %vm52, %v5170
    %v5252 = vld [vmem:[%s0 + $0x24] sm:$0xff]
    %v5253 = vld [vmem:[%s0 + $0x2c] sm:$0xff]
    %v5254 = vld [vmem:[%s0 + $0x34] sm:$0xff]
    %v5255 = vld [vmem:[%s0 + $0x3c] sm:$0xff]
    %v5256 = vld [vmem:[%s0 + $0x44] sm:$0xff]
    %v5257 = vld [vmem:[%s0 + $0x4c] sm:$0xff]
    %v5258 = vld [vmem:[%s0 + $0x54] sm:$0xff]
    %v5259 = vld [vmem:[%s0 + $0x5c] sm:$0xff]
    %v5260 = vld [vmem:[%s0 + $0x64] sm:$0xff]
    %v5261 = vld [vmem:[%s0 + $0x6c] sm:$0xff]
    %v5262 = vld [vmem:[%s0 + $0x74] sm:$0xff]
    %v5263 = vld [vmem:[%s0 + $0x7c] sm:$0xff]
    %v5264 = vld [vmem:[%s0 + $0x84] sm:$0xff]
    %v5265 = vld [vmem:[%s0 + $0x8c] sm:$0xff]
    %v5266 = vld [vmem:[%s0 + $0x94] sm:$0xff]
    %v5267 = vld [vmem:[%s0 + $0x9c] sm:$0xff]
    %v5268 = vld [vmem:[%s0 + $0xa4] sm:$0xff]
    %v5269 = vld [vmem:[%s0 + $0xac] sm:$0xff]
    %v5270 = vld [vmem:[%s0 + $0xb4] sm:$0xff]
    %v5271 = vld [vmem:[%s0 + $0xbc] sm:$0xff]
    %v5272 = vld [vmem:[%s0 + $0xc4] sm:$0xff]
    %v5273 = vld [vmem:[%s0 + $0xcc] sm:$0xff]
    %v5274 = vld [vmem:[%s0 + $0xd4] sm:$0xff]
    %v5275 = vld [vmem:[%s0 + $0xdc] sm:$0xff]
    %v5276 = vld [vmem:[%s0 + $0xe4] sm:$0xff]
    %v5277 = vld [vmem:[%s0 + $0xec] sm:$0xff]
    %v5278 = vld [vmem:[%s0 + $0xf4] sm:$0xff]
    %v5279 = vld [vmem:[%s0 + $0xfc] sm:$0xff]
    %v5280 = vld [vmem:[%s0 + $0x104] sm:$0xff]
    %v5281 = vld [vmem:[%s0 + $0x10c] sm:$0xff]
    %v5282 = vld [vmem:[%s0 + $0x114] sm:$0xff]
    %v5283 = vld [vmem:[%s0 + $0x11c] sm:$0xff]
    %v5284 = vld [vmem:[%s0 + $0x124] sm:$0xff]
    %v5285 = vld [vmem:[%s0 + $0x12c] sm:$0xff]
    %v5286 = vld [vmem:[%s0 + $0x134] sm:$0xff]
    %v5287 = vld [vmem:[%s0 + $0x13c] sm:$0xff]
    %v5288 = vld [vmem:[%s0 + $0x144] sm:$0xff]
    %v5289 = vld [vmem:[%s0 + $0x14c] sm:$0xff]
    %v5290 = vld [vmem:[%s0 + $0x154] sm:$0xff]
    %v5291 = vld [vmem:[%s0 + $0x15c] sm:$0xff]
    %v5292 = vld [vmem:[%s0 + $0x164] sm:$0xff]
    %v5293 = vld [vmem:[%s0 + $0x16c] sm:$0xff]
    %v5294 = vld [vmem:[%s0 + $0x174] sm:$0xff]
    %v5295 = vld [vmem:[%s0 + $0x17c] sm:$0xff]
    %v5296 = vld [vmem:[%s0 + $0x184] sm:$0xff]
    %v5297 = vld [vmem:[%s0 + $0x18c] sm:$0xff]
    %v5298 = vld [vmem:[%s0 + $0x194] sm:$0xff]
    %v5299 = vld [vmem:[%s0 + $0x19c] sm:$0xff]
    %v5300 = vld [vmem:[%s0 + $0x1a4] sm:$0xff]
    %v5301 = vld [vmem:[%s0 + $0x1ac] sm:$0xff]
    %v5302 = vld [vmem:[%s0 + $0x1b4] sm:$0xff]
    %v5303 = vld [vmem:[%s0 + $0x1bc] sm:$0xff]
    %v5304 = vld [vmem:[%s0 + $0x1c4] sm:$0xff]
    %v5305 = vld [vmem:[%s0 + $0x1cc] sm:$0xff]
    %v5306 = vld [vmem:[%s0 + $0x1d4] sm:$0xff]
    %v5307 = vld [vmem:[%s0 + $0x1dc] sm:$0xff]
    %v5308 = vld [vmem:[%s0 + $0x1e4] sm:$0xff]
    %v5309 = vld [vmem:[%s0 + $0x1ec] sm:$0xff]
    %v5310 = vld [vmem:[%s0 + $0x1f4] sm:$0xff]
    %v5311 = vld [vmem:[%s0 + $0x1fc] sm:$0xff]
    %v5312 = vld [vmem:[%s0 + $0x204] sm:$0xff]
    %v5313 = vld [vmem:[%s0 + $0x20c] sm:$0xff]
    %v5314 = vld [vmem:[%s0 + $0x214] sm:$0xff]
    %v5315 = vld [vmem:[%s0 + $0x21c] sm:$0xff]
    %v5316 = vld [vmem:[%s0 + $0x224] sm:$0xff]
    %v5317 = vld [vmem:[%s0 + $0x22c] sm:$0xff]
    %v5318 = vld [vmem:[%s0 + $0x234] sm:$0xff]
    %v5319 = vld [vmem:[%s0 + $0x23c] sm:$0xff]
    %v5320 = vld [vmem:[%s0 + $0x244] sm:$0xff]
    %v5321 = vld [vmem:[%s0 + $0x24c] sm:$0xff]
    %v5322 = vld [vmem:[%s0 + $0x254] sm:$0xff]
    %v5323 = vld [vmem:[%s0 + $0x25c] sm:$0xff]
    %v5324 = vld [vmem:[%s0 + $0x264] sm:$0xff]
    %v5325 = vld [vmem:[%s0 + $0x26c] sm:$0xff]
    %v5326 = vld [vmem:[%s0 + $0x274] sm:$0xff]
    %v5327 = vld [vmem:[%s0 + $0x27c] sm:$0xff]
    %v5328 = vld [vmem:[%s0 + $0x284] sm:$0xff]
    %v5329 = vld [vmem:[%s0 + $0x28c] sm:$0xff]
    %v5330 = vld [vmem:[%s0 + $0x294] sm:$0xff]
    %v5331 = vld [vmem:[%s0 + $0x29c] sm:$0xff]
    %v5332 = vld [vmem:[%s0 + $0x2a4] sm:$0xff]
    %v5333 = vpack.c.bf16 %v5253, %v5252
    %v5334 = vpack.c.bf16 %v5255, %v5254
    %v5335 = vpack.c.bf16 %v5257, %v5256
    %v5336 = vpack.c.bf16 %v5259, %v5258
    %v5337 = vpack.c.bf16 %v5261, %v5260
    %v5338 = vpack.c.bf16 %v5263, %v5262
    %v5339 = vpack.c.bf16 %v5265, %v5264
    %v5340 = vpack.c.bf16 %v5267, %v5266
    %v5341 = vpack.c.bf16 %v5269, %v5268
    %v5342 = vpack.c.bf16 %v5271, %v5270
    %v5343 = vpack.c.bf16 %v5273, %v5272
    %v5344 = vpack.c.bf16 %v5275, %v5274
    %v5345 = vpack.c.bf16 %v5277, %v5276
    %v5346 = vpack.c.bf16 %v5279, %v5278
    %v5347 = vpack.c.bf16 %v5281, %v5280
    %v5348 = vpack.c.bf16 %v5283, %v5282
    %v5349 = vpack.c.bf16 %v5285, %v5284
    %v5350 = vpack.c.bf16 %v5287, %v5286
    %v5351 = vpack.c.bf16 %v5289, %v5288
    %v5352 = vpack.c.bf16 %v5291, %v5290
    %v5353 = vpack.c.bf16 %v5293, %v5292
    %v5354 = vpack.c.bf16 %v5295, %v5294
    %v5355 = vpack.c.bf16 %v5297, %v5296
    %v5356 = vpack.c.bf16 %v5299, %v5298
    %v5357 = vpack.c.bf16 %v5301, %v5300
    %v5358 = vpack.c.bf16 %v5303, %v5302
    %v5359 = vpack.c.bf16 %v5305, %v5304
    %v5360 = vpack.c.bf16 %v5307, %v5306
    %v5361 = vpack.c.bf16 %v5309, %v5308
    %v5362 = vpack.c.bf16 %v5311, %v5310
    %v5363 = vpack.c.bf16 %v5313, %v5312
    %v5364 = vpack.c.bf16 %v5315, %v5314
    %v5365 = vpack.c.bf16 %v5317, %v5316
    %v5366 = vpack.c.bf16 %v5319, %v5318
    %v5367 = vpack.c.bf16 %v5321, %v5320
    %v5368 = vpack.c.bf16 %v5323, %v5322
    %v5369 = vpack.c.bf16 %v5325, %v5324
    %v5370 = vpack.c.bf16 %v5327, %v5326
    %v5371 = vpack.c.bf16 %v5329, %v5328
    %v5372 = vpack.c.bf16 %v5331, %v5330
    %v5373 = vpack.c.bf16 %v5332, %v5332
    %v5374 = vld [vmem:[#allocation2] sm:$0xff]
    %v5375 = vld [vmem:[#allocation2 + $0x8] sm:$0xff]
    %v5376 = vld [vmem:[#allocation2 + $0x10] sm:$0xff]
    %v5377 = vld [vmem:[#allocation2 + $0x18] sm:$0xff]
    %v5378 = vld [vmem:[#allocation2 + $0x20] sm:$0xff]
    %v5379 = vld [vmem:[#allocation2 + $0x28] sm:$0xff]
    %v5380 = vld [vmem:[#allocation2 + $0x30] sm:$0xff]
    %v5381 = vld [vmem:[#allocation2 + $0x38] sm:$0xff]
    %v5382 = vld [vmem:[#allocation2 + $0x40] sm:$0xff]
    %v5383 = vld [vmem:[#allocation2 + $0x48] sm:$0xff]
    %v5384 = vld [vmem:[#allocation2 + $0x50] sm:$0xff]
    %v5385 = vld [vmem:[#allocation2 + $0x58] sm:$0xff]
    %v5386 = vld [vmem:[#allocation2 + $0x60] sm:$0xff]
    %v5387 = vld [vmem:[#allocation2 + $0x68] sm:$0xff]
    %v5388 = vld [vmem:[#allocation2 + $0x70] sm:$0xff]
    %v5389 = vld [vmem:[#allocation2 + $0x78] sm:$0xff]
    %v5390 = vld [vmem:[#allocation2 + $0x80] sm:$0xff]
    %v5391 = vld [vmem:[#allocation2 + $0x88] sm:$0xff]
    %v5392 = vld [vmem:[#allocation2 + $0x90] sm:$0xff]
    %v5393 = vld [vmem:[#allocation2 + $0x98] sm:$0xff]
    %v5394 = vld [vmem:[#allocation2 + $0xa0] sm:$0xff]
    %v5395 = vld [vmem:[#allocation2 + $0xa8] sm:$0xff]
    %v5396 = vld [vmem:[#allocation2 + $0xb0] sm:$0xff]
    %v5397 = vld [vmem:[#allocation2 + $0xb8] sm:$0xff]
    %v5398 = vld [vmem:[#allocation2 + $0xc0] sm:$0xff]
    %v5399 = vld [vmem:[#allocation2 + $0xc8] sm:$0xff]
    %v5400 = vld [vmem:[#allocation2 + $0xd0] sm:$0xff]
    %v5401 = vld [vmem:[#allocation2 + $0xd8] sm:$0xff]
    %v5402 = vld [vmem:[#allocation2 + $0xe0] sm:$0xff]
    %v5403 = vld [vmem:[#allocation2 + $0xe8] sm:$0xff]
    %v5404 = vld [vmem:[#allocation2 + $0xf0] sm:$0xff]
    %v5405 = vld [vmem:[#allocation2 + $0xf8] sm:$0xff]
    %v5406 = vld [vmem:[#allocation2 + $0x100] sm:$0xff]
    %v5407 = vld [vmem:[#allocation2 + $0x108] sm:$0xff]
    %v5408 = vld [vmem:[#allocation2 + $0x110] sm:$0xff]
    %v5409 = vld [vmem:[#allocation2 + $0x118] sm:$0xff]
    %v5410 = vld [vmem:[#allocation2 + $0x120] sm:$0xff]
    %v5411 = vld [vmem:[#allocation2 + $0x128] sm:$0xff]
    %v5412 = vld [vmem:[#allocation2 + $0x130] sm:$0xff]
    %v5413 = vld [vmem:[#allocation2 + $0x138] sm:$0xff]
    %v5414 = vld [vmem:[#allocation2 + $0x140] sm:$0xff]
    %v5415 = vld [vmem:[#allocation2 + $0x148] sm:$0xff]
    %v5416 = vld [vmem:[#allocation2 + $0x150] sm:$0xff]
    %v5417 = vld [vmem:[#allocation2 + $0x158] sm:$0xff]
    %v5418 = vld [vmem:[#allocation2 + $0x160] sm:$0xff]
    %v5419 = vld [vmem:[#allocation2 + $0x168] sm:$0xff]
    %v5420 = vld [vmem:[#allocation2 + $0x170] sm:$0xff]
    %v5421 = vld [vmem:[#allocation2 + $0x178] sm:$0xff]
    %v5422 = vld [vmem:[#allocation2 + $0x180] sm:$0xff]
    %v5423 = vld [vmem:[#allocation2 + $0x188] sm:$0xff]
    %v5424 = vld [vmem:[#allocation2 + $0x190] sm:$0xff]
    %v5425 = vld [vmem:[#allocation2 + $0x198] sm:$0xff]
    %v5426 = vld [vmem:[#allocation2 + $0x1a0] sm:$0xff]
    %v5427 = vld [vmem:[#allocation2 + $0x1a8] sm:$0xff]
    %v5428 = vld [vmem:[#allocation2 + $0x1b0] sm:$0xff]
    %v5429 = vld [vmem:[#allocation2 + $0x1b8] sm:$0xff]
    %v5430 = vld [vmem:[#allocation2 + $0x1c0] sm:$0xff]
    %v5431 = vld [vmem:[#allocation2 + $0x1c8] sm:$0xff]
    %v5432 = vld [vmem:[#allocation2 + $0x1d0] sm:$0xff]
    %v5433 = vld [vmem:[#allocation2 + $0x1d8] sm:$0xff]
    %v5434 = vld [vmem:[#allocation2 + $0x1e0] sm:$0xff]
    %v5435 = vld [vmem:[#allocation2 + $0x1e8] sm:$0xff]
    %v5436 = vld [vmem:[#allocation2 + $0x1f0] sm:$0xff]
    %v5437 = vld [vmem:[#allocation2 + $0x1f8] sm:$0xff]
    %v5438 = vld [vmem:[#allocation2 + $0x200] sm:$0xff]
    %v5439 = vld [vmem:[#allocation2 + $0x208] sm:$0xff]
    %v5440 = vld [vmem:[#allocation2 + $0x210] sm:$0xff]
    %v5441 = vld [vmem:[#allocation2 + $0x218] sm:$0xff]
    %v5442 = vld [vmem:[#allocation2 + $0x220] sm:$0xff]
    %v5443 = vld [vmem:[#allocation2 + $0x228] sm:$0xff]
    %v5444 = vld [vmem:[#allocation2 + $0x230] sm:$0xff]
    %v5445 = vld [vmem:[#allocation2 + $0x238] sm:$0xff]
    %v5446 = vld [vmem:[#allocation2 + $0x240] sm:$0xff]
    %v5447 = vld [vmem:[#allocation2 + $0x248] sm:$0xff]
    %v5448 = vld [vmem:[#allocation2 + $0x250] sm:$0xff]
    %v5449 = vld [vmem:[#allocation2 + $0x258] sm:$0xff]
    %v5450 = vld [vmem:[#allocation2 + $0x260] sm:$0xff]
    %v5451 = vld [vmem:[#allocation2 + $0x268] sm:$0xff]
    %v5452 = vld [vmem:[#allocation2 + $0x270] sm:$0xff]
    %v5453 = vld [vmem:[#allocation2 + $0x278] sm:$0xff]
    %v5454 = vld [vmem:[#allocation2 + $0x280] sm:$0xff]
    %s5455 = scalar_lea.vmem %s2, 24
    %v5456 = vld [vmem:[%s5455] sm:$0xf]
    %v5458 = vsel %vm52, %v5333, 0
    %v5461 = vsel %vm52, %v5334, 0
    %v5464 = vsel %vm52, %v5335, 0
    %v5467 = vsel %vm52, %v5336, 0
    %v5470 = vsel %vm52, %v5337, 0
    %v5473 = vsel %vm52, %v5338, 0
    %v5476 = vsel %vm52, %v5339, 0
    %v5479 = vsel %vm52, %v5340, 0
    %v5482 = vsel %vm52, %v5341, 0
    %v5485 = vsel %vm52, %v5342, 0
    %v5488 = vsel %vm52, %v5343, 0
    %v5491 = vsel %vm52, %v5344, 0
    %v5494 = vsel %vm52, %v5345, 0
    %v5497 = vsel %vm52, %v5346, 0
    %v5500 = vsel %vm52, %v5347, 0
    %v5503 = vsel %vm52, %v5348, 0
    %v5506 = vsel %vm52, %v5349, 0
    %v5509 = vsel %vm52, %v5350, 0
    %v5512 = vsel %vm52, %v5351, 0
    %v5515 = vsel %vm52, %v5352, 0
    %v5518 = vsel %vm52, %v5353, 0
    %v5521 = vsel %vm52, %v5354, 0
    %v5524 = vsel %vm52, %v5355, 0
    %v5527 = vsel %vm52, %v5356, 0
    %v5530 = vsel %vm52, %v5357, 0
    %v5533 = vsel %vm52, %v5358, 0
    %v5536 = vsel %vm52, %v5359, 0
    %v5539 = vsel %vm52, %v5360, 0
    %v5542 = vsel %vm52, %v5361, 0
    %v5545 = vsel %vm52, %v5362, 0
    %v5548 = vsel %vm52, %v5363, 0
    %v5551 = vsel %vm52, %v5364, 0
    %v5554 = vsel %vm52, %v5365, 0
    %v5557 = vsel %vm52, %v5366, 0
    %v5560 = vsel %vm52, %v5367, 0
    %v5563 = vsel %vm52, %v5368, 0
    %v5566 = vsel %vm52, %v5369, 0
    %v5569 = vsel %vm52, %v5370, 0
    %v5572 = vsel %vm52, %v5371, 0
    %v5575 = vsel %vm52, %v5372, 0
    %v5578 = vsel %vm52, %v5373, 0
    %v5581 = vsel %vm461, %v5456, 0
    %5583 = vmatprep.subr.bf16.mxu0 0
    %5584 = vmatpush1.bf16.msra.mxu0 0
    %5585 = vmatprep.subr.bf16.mxu0 0
    %5586 = vmatpush1.bf16.msra.mxu0 0
    %5587 = vmatprep.subr.bf16.mxu0 0
    %5588 = vmatpush1.bf16.msra.mxu0 0
    %5589 = vmatprep.subr.bf16.mxu0 0
    %5590 = vmatpush1.bf16.msra.mxu0 0
    %5591 = vmatprep.subr.bf16.mxu0 0
    %5592 = vmatpush1.bf16.msra.mxu0 0
    %5593 = vmatprep.subr.bf16.mxu0 0
    %5594 = vmatpush1.bf16.msra.mxu0 0
    %5595 = vmatprep.subr.bf16.mxu0 0
    %5596 = vmatpush1.bf16.msra.mxu0 0
    %5597 = vmatprep.subr.bf16.mxu0 0
    %5598 = vmatpush1.bf16.msra.mxu0 %v5581
    %5599 = vmatprep.subr.bf16.mxu0 0
    %5600 = vmatpush2.bf16.msra.mxu0 0
    %5601 = vmatprep.subr.bf16.mxu0 0
    %5602 = vmatpush2.bf16.msra.mxu0 0
    %5603 = vmatprep.subr.bf16.mxu0 0
    %5604 = vmatpush2.bf16.msra.mxu0 0
    %5605 = vmatprep.subr.bf16.mxu0 0
    %5606 = vmatpush2.bf16.msra.mxu0 0
    %5607 = vmatprep.subr.bf16.mxu0 0
    %5608 = vmatpush2.bf16.msra.mxu0 0
    %5609 = vmatprep.subr.bf16.mxu0 0
    %5610 = vmatpush2.bf16.msra.mxu0 0
    %5611 = vmatprep.subr.bf16.mxu0 0
    %5612 = vmatpush2.bf16.msra.mxu0 0
    %5613 = vmatprep.subr.bf16.mxu0 0
    %5614 = vmatpush2.bf16.msra.mxu0 0
    %5615 = vmatprep.mubr.bf16.mxu0 0
    %5616 = vmatmul.mubr.bf16.gmra.mxu0 %v5458
    %v5617 = vpop.f32.mrf.mxu0
    %v5618 = vadd.f32 0.0, %v5617
    %v5619 = vpop.f32.mrf.mxu0
    %v5620 = vpop.f32.mrf.mxu0
    %v5621 = vadd.f32 0.0, %v5620
    %v5622 = vpop.f32.mrf.mxu0
    %5623 = vmatprep.mubr.bf16.mxu0 0
    %5624 = vmatmul.mubr.bf16.gmra.mxu0 %v5461
    %v5625 = vpop.f32.mrf.mxu0
    %v5626 = vadd.f32 0.0, %v5625
    %v5627 = vpop.f32.mrf.mxu0
    %v5628 = vpop.f32.mrf.mxu0
    %v5629 = vadd.f32 0.0, %v5628
    %v5630 = vpop.f32.mrf.mxu0
    %5631 = vmatprep.mubr.bf16.mxu0 0
    %5632 = vmatmul.mubr.bf16.gmra.mxu0 %v5464
    %v5633 = vpop.f32.mrf.mxu0
    %v5634 = vadd.f32 0.0, %v5633
    %v5635 = vpop.f32.mrf.mxu0
    %v5636 = vpop.f32.mrf.mxu0
    %v5637 = vadd.f32 0.0, %v5636
    %v5638 = vpop.f32.mrf.mxu0
    %5639 = vmatprep.mubr.bf16.mxu0 0
    %5640 = vmatmul.mubr.bf16.gmra.mxu0 %v5467
    %v5641 = vpop.f32.mrf.mxu0
    %v5642 = vadd.f32 0.0, %v5641
    %v5643 = vpop.f32.mrf.mxu0
    %v5644 = vpop.f32.mrf.mxu0
    %v5645 = vadd.f32 0.0, %v5644
    %v5646 = vpop.f32.mrf.mxu0
    %5647 = vmatprep.mubr.bf16.mxu0 0
    %5648 = vmatmul.mubr.bf16.gmra.mxu0 %v5470
    %v5649 = vpop.f32.mrf.mxu0
    %v5650 = vadd.f32 0.0, %v5649
    %v5651 = vpop.f32.mrf.mxu0
    %v5652 = vpop.f32.mrf.mxu0
    %v5653 = vadd.f32 0.0, %v5652
    %v5654 = vpop.f32.mrf.mxu0
    %5655 = vmatprep.mubr.bf16.mxu0 0
    %5656 = vmatmul.mubr.bf16.gmra.mxu0 %v5473
    %v5657 = vpop.f32.mrf.mxu0
    %v5658 = vadd.f32 0.0, %v5657
    %v5659 = vpop.f32.mrf.mxu0
    %v5660 = vpop.f32.mrf.mxu0
    %v5661 = vadd.f32 0.0, %v5660
    %v5662 = vpop.f32.mrf.mxu0
    %5663 = vmatprep.mubr.bf16.mxu0 0
    %5664 = vmatmul.mubr.bf16.gmra.mxu0 %v5476
    %v5665 = vpop.f32.mrf.mxu0
    %v5666 = vadd.f32 0.0, %v5665
    %v5667 = vpop.f32.mrf.mxu0
    %v5668 = vpop.f32.mrf.mxu0
    %v5669 = vadd.f32 0.0, %v5668
    %v5670 = vpop.f32.mrf.mxu0
    %5671 = vmatprep.mubr.bf16.mxu0 0
    %5672 = vmatmul.mubr.bf16.gmra.mxu0 %v5479
    %v5673 = vpop.f32.mrf.mxu0
    %v5674 = vadd.f32 0.0, %v5673
    %v5675 = vpop.f32.mrf.mxu0
    %v5676 = vpop.f32.mrf.mxu0
    %v5677 = vadd.f32 0.0, %v5676
    %v5678 = vpop.f32.mrf.mxu0
    %5679 = vmatprep.mubr.bf16.mxu0 0
    %5680 = vmatmul.mubr.bf16.gmra.mxu0 %v5482
    %v5681 = vpop.f32.mrf.mxu0
    %v5682 = vadd.f32 0.0, %v5681
    %v5683 = vpop.f32.mrf.mxu0
    %v5684 = vpop.f32.mrf.mxu0
    %v5685 = vadd.f32 0.0, %v5684
    %v5686 = vpop.f32.mrf.mxu0
    %5687 = vmatprep.mubr.bf16.mxu0 0
    %5688 = vmatmul.mubr.bf16.gmra.mxu0 %v5485
    %v5689 = vpop.f32.mrf.mxu0
    %v5690 = vadd.f32 0.0, %v5689
    %v5691 = vpop.f32.mrf.mxu0
    %v5692 = vpop.f32.mrf.mxu0
    %v5693 = vadd.f32 0.0, %v5692
    %v5694 = vpop.f32.mrf.mxu0
    %5695 = vmatprep.mubr.bf16.mxu0 0
    %5696 = vmatmul.mubr.bf16.gmra.mxu0 %v5488
    %v5697 = vpop.f32.mrf.mxu0
    %v5698 = vadd.f32 0.0, %v5697
    %v5699 = vpop.f32.mrf.mxu0
    %v5700 = vpop.f32.mrf.mxu0
    %v5701 = vadd.f32 0.0, %v5700
    %v5702 = vpop.f32.mrf.mxu0
    %5703 = vmatprep.mubr.bf16.mxu0 0
    %5704 = vmatmul.mubr.bf16.gmra.mxu0 %v5491
    %v5705 = vpop.f32.mrf.mxu0
    %v5706 = vadd.f32 0.0, %v5705
    %v5707 = vpop.f32.mrf.mxu0
    %v5708 = vpop.f32.mrf.mxu0
    %v5709 = vadd.f32 0.0, %v5708
    %v5710 = vpop.f32.mrf.mxu0
    %5711 = vmatprep.mubr.bf16.mxu0 0
    %5712 = vmatmul.mubr.bf16.gmra.mxu0 %v5494
    %v5713 = vpop.f32.mrf.mxu0
    %v5714 = vadd.f32 0.0, %v5713
    %v5715 = vpop.f32.mrf.mxu0
    %v5716 = vpop.f32.mrf.mxu0
    %v5717 = vadd.f32 0.0, %v5716
    %v5718 = vpop.f32.mrf.mxu0
    %5719 = vmatprep.mubr.bf16.mxu0 0
    %5720 = vmatmul.mubr.bf16.gmra.mxu0 %v5497
    %v5721 = vpop.f32.mrf.mxu0
    %v5722 = vadd.f32 0.0, %v5721
    %v5723 = vpop.f32.mrf.mxu0
    %v5724 = vpop.f32.mrf.mxu0
    %v5725 = vadd.f32 0.0, %v5724
    %v5726 = vpop.f32.mrf.mxu0
    %5727 = vmatprep.mubr.bf16.mxu0 0
    %5728 = vmatmul.mubr.bf16.gmra.mxu0 %v5500
    %v5729 = vpop.f32.mrf.mxu0
    %v5730 = vadd.f32 0.0, %v5729
    %v5731 = vpop.f32.mrf.mxu0
    %v5732 = vpop.f32.mrf.mxu0
    %v5733 = vadd.f32 0.0, %v5732
    %v5734 = vpop.f32.mrf.mxu0
    %5735 = vmatprep.mubr.bf16.mxu0 0
    %5736 = vmatmul.mubr.bf16.gmra.mxu0 %v5503
    %v5737 = vpop.f32.mrf.mxu0
    %v5738 = vadd.f32 0.0, %v5737
    %v5739 = vpop.f32.mrf.mxu0
    %v5740 = vpop.f32.mrf.mxu0
    %v5741 = vadd.f32 0.0, %v5740
    %v5742 = vpop.f32.mrf.mxu0
    %5743 = vmatprep.mubr.bf16.mxu0 0
    %5744 = vmatmul.mubr.bf16.gmra.mxu0 %v5506
    %v5745 = vpop.f32.mrf.mxu0
    %v5746 = vadd.f32 0.0, %v5745
    %v5747 = vpop.f32.mrf.mxu0
    %v5748 = vpop.f32.mrf.mxu0
    %v5749 = vadd.f32 0.0, %v5748
    %v5750 = vpop.f32.mrf.mxu0
    %5751 = vmatprep.mubr.bf16.mxu0 0
    %5752 = vmatmul.mubr.bf16.gmra.mxu0 %v5509
    %v5753 = vpop.f32.mrf.mxu0
    %v5754 = vadd.f32 0.0, %v5753
    %v5755 = vpop.f32.mrf.mxu0
    %v5756 = vpop.f32.mrf.mxu0
    %v5757 = vadd.f32 0.0, %v5756
    %v5758 = vpop.f32.mrf.mxu0
    %5759 = vmatprep.mubr.bf16.mxu0 0
    %5760 = vmatmul.mubr.bf16.gmra.mxu0 %v5512
    %v5761 = vpop.f32.mrf.mxu0
    %v5762 = vadd.f32 0.0, %v5761
    %v5763 = vpop.f32.mrf.mxu0
    %v5764 = vpop.f32.mrf.mxu0
    %v5765 = vadd.f32 0.0, %v5764
    %v5766 = vpop.f32.mrf.mxu0
    %5767 = vmatprep.mubr.bf16.mxu0 0
    %5768 = vmatmul.mubr.bf16.gmra.mxu0 %v5515
    %v5769 = vpop.f32.mrf.mxu0
    %v5770 = vadd.f32 0.0, %v5769
    %v5771 = vpop.f32.mrf.mxu0
    %v5772 = vpop.f32.mrf.mxu0
    %v5773 = vadd.f32 0.0, %v5772
    %v5774 = vpop.f32.mrf.mxu0
    %5775 = vmatprep.mubr.bf16.mxu0 0
    %5776 = vmatmul.mubr.bf16.gmra.mxu0 %v5518
    %v5777 = vpop.f32.mrf.mxu0
    %v5778 = vadd.f32 0.0, %v5777
    %v5779 = vpop.f32.mrf.mxu0
    %v5780 = vpop.f32.mrf.mxu0
    %v5781 = vadd.f32 0.0, %v5780
    %v5782 = vpop.f32.mrf.mxu0
    %5783 = vmatprep.mubr.bf16.mxu0 0
    %5784 = vmatmul.mubr.bf16.gmra.mxu0 %v5521
    %v5785 = vpop.f32.mrf.mxu0
    %v5786 = vadd.f32 0.0, %v5785
    %v5787 = vpop.f32.mrf.mxu0
    %v5788 = vpop.f32.mrf.mxu0
    %v5789 = vadd.f32 0.0, %v5788
    %v5790 = vpop.f32.mrf.mxu0
    %5791 = vmatprep.mubr.bf16.mxu0 0
    %5792 = vmatmul.mubr.bf16.gmra.mxu0 %v5524
    %v5793 = vpop.f32.mrf.mxu0
    %v5794 = vadd.f32 0.0, %v5793
    %v5795 = vpop.f32.mrf.mxu0
    %v5796 = vpop.f32.mrf.mxu0
    %v5797 = vadd.f32 0.0, %v5796
    %v5798 = vpop.f32.mrf.mxu0
    %5799 = vmatprep.mubr.bf16.mxu0 0
    %5800 = vmatmul.mubr.bf16.gmra.mxu0 %v5527
    %v5801 = vpop.f32.mrf.mxu0
    %v5802 = vadd.f32 0.0, %v5801
    %v5803 = vpop.f32.mrf.mxu0
    %v5804 = vpop.f32.mrf.mxu0
    %v5805 = vadd.f32 0.0, %v5804
    %v5806 = vpop.f32.mrf.mxu0
    %5807 = vmatprep.mubr.bf16.mxu0 0
    %5808 = vmatmul.mubr.bf16.gmra.mxu0 %v5530
    %v5809 = vpop.f32.mrf.mxu0
    %v5810 = vadd.f32 0.0, %v5809
    %v5811 = vpop.f32.mrf.mxu0
    %v5812 = vpop.f32.mrf.mxu0
    %v5813 = vadd.f32 0.0, %v5812
    %v5814 = vpop.f32.mrf.mxu0
    %5815 = vmatprep.mubr.bf16.mxu0 0
    %5816 = vmatmul.mubr.bf16.gmra.mxu0 %v5533
    %v5817 = vpop.f32.mrf.mxu0
    %v5818 = vadd.f32 0.0, %v5817
    %v5819 = vpop.f32.mrf.mxu0
    %v5820 = vpop.f32.mrf.mxu0
    %v5821 = vadd.f32 0.0, %v5820
    %v5822 = vpop.f32.mrf.mxu0
    %5823 = vmatprep.mubr.bf16.mxu0 0
    %5824 = vmatmul.mubr.bf16.gmra.mxu0 %v5536
    %v5825 = vpop.f32.mrf.mxu0
    %v5826 = vadd.f32 0.0, %v5825
    %v5827 = vpop.f32.mrf.mxu0
    %v5828 = vpop.f32.mrf.mxu0
    %v5829 = vadd.f32 0.0, %v5828
    %v5830 = vpop.f32.mrf.mxu0
    %5831 = vmatprep.mubr.bf16.mxu0 0
    %5832 = vmatmul.mubr.bf16.gmra.mxu0 %v5539
    %v5833 = vpop.f32.mrf.mxu0
    %v5834 = vadd.f32 0.0, %v5833
    %v5835 = vpop.f32.mrf.mxu0
    %v5836 = vpop.f32.mrf.mxu0
    %v5837 = vadd.f32 0.0, %v5836
    %v5838 = vpop.f32.mrf.mxu0
    %5839 = vmatprep.mubr.bf16.mxu0 0
    %5840 = vmatmul.mubr.bf16.gmra.mxu0 %v5542
    %v5841 = vpop.f32.mrf.mxu0
    %v5842 = vadd.f32 0.0, %v5841
    %v5843 = vpop.f32.mrf.mxu0
    %v5844 = vpop.f32.mrf.mxu0
    %v5845 = vadd.f32 0.0, %v5844
    %v5846 = vpop.f32.mrf.mxu0
    %5847 = vmatprep.mubr.bf16.mxu0 0
    %5848 = vmatmul.mubr.bf16.gmra.mxu0 %v5545
    %v5849 = vpop.f32.mrf.mxu0
    %v5850 = vadd.f32 0.0, %v5849
    %v5851 = vpop.f32.mrf.mxu0
    %v5852 = vpop.f32.mrf.mxu0
    %v5853 = vadd.f32 0.0, %v5852
    %v5854 = vpop.f32.mrf.mxu0
    %5855 = vmatprep.mubr.bf16.mxu0 0
    %5856 = vmatmul.mubr.bf16.gmra.mxu0 %v5548
    %v5857 = vpop.f32.mrf.mxu0
    %v5858 = vadd.f32 0.0, %v5857
    %v5859 = vpop.f32.mrf.mxu0
    %v5860 = vpop.f32.mrf.mxu0
    %v5861 = vadd.f32 0.0, %v5860
    %v5862 = vpop.f32.mrf.mxu0
    %5863 = vmatprep.mubr.bf16.mxu0 0
    %5864 = vmatmul.mubr.bf16.gmra.mxu0 %v5551
    %v5865 = vpop.f32.mrf.mxu0
    %v5866 = vadd.f32 0.0, %v5865
    %v5867 = vpop.f32.mrf.mxu0
    %v5868 = vpop.f32.mrf.mxu0
    %v5869 = vadd.f32 0.0, %v5868
    %v5870 = vpop.f32.mrf.mxu0
    %5871 = vmatprep.mubr.bf16.mxu0 0
    %5872 = vmatmul.mubr.bf16.gmra.mxu0 %v5554
    %v5873 = vpop.f32.mrf.mxu0
    %v5874 = vadd.f32 0.0, %v5873
    %v5875 = vpop.f32.mrf.mxu0
    %v5876 = vpop.f32.mrf.mxu0
    %v5877 = vadd.f32 0.0, %v5876
    %v5878 = vpop.f32.mrf.mxu0
    %5879 = vmatprep.mubr.bf16.mxu0 0
    %5880 = vmatmul.mubr.bf16.gmra.mxu0 %v5557
    %v5881 = vpop.f32.mrf.mxu0
    %v5882 = vadd.f32 0.0, %v5881
    %v5883 = vpop.f32.mrf.mxu0
    %v5884 = vpop.f32.mrf.mxu0
    %v5885 = vadd.f32 0.0, %v5884
    %v5886 = vpop.f32.mrf.mxu0
    %5887 = vmatprep.mubr.bf16.mxu0 0
    %5888 = vmatmul.mubr.bf16.gmra.mxu0 %v5560
    %v5889 = vpop.f32.mrf.mxu0
    %v5890 = vadd.f32 0.0, %v5889
    %v5891 = vpop.f32.mrf.mxu0
    %v5892 = vpop.f32.mrf.mxu0
    %v5893 = vadd.f32 0.0, %v5892
    %v5894 = vpop.f32.mrf.mxu0
    %5895 = vmatprep.mubr.bf16.mxu0 0
    %5896 = vmatmul.mubr.bf16.gmra.mxu0 %v5563
    %v5897 = vpop.f32.mrf.mxu0
    %v5898 = vadd.f32 0.0, %v5897
    %v5899 = vpop.f32.mrf.mxu0
    %v5900 = vpop.f32.mrf.mxu0
    %v5901 = vadd.f32 0.0, %v5900
    %v5902 = vpop.f32.mrf.mxu0
    %5903 = vmatprep.mubr.bf16.mxu0 0
    %5904 = vmatmul.mubr.bf16.gmra.mxu0 %v5566
    %v5905 = vpop.f32.mrf.mxu0
    %v5906 = vadd.f32 0.0, %v5905
    %v5907 = vpop.f32.mrf.mxu0
    %v5908 = vpop.f32.mrf.mxu0
    %v5909 = vadd.f32 0.0, %v5908
    %v5910 = vpop.f32.mrf.mxu0
    %5911 = vmatprep.mubr.bf16.mxu0 0
    %5912 = vmatmul.mubr.bf16.gmra.mxu0 %v5569
    %v5913 = vpop.f32.mrf.mxu0
    %v5914 = vadd.f32 0.0, %v5913
    %v5915 = vpop.f32.mrf.mxu0
    %v5916 = vpop.f32.mrf.mxu0
    %v5917 = vadd.f32 0.0, %v5916
    %v5918 = vpop.f32.mrf.mxu0
    %5919 = vmatprep.mubr.bf16.mxu0 0
    %5920 = vmatmul.mubr.bf16.gmra.mxu0 %v5572
    %v5921 = vpop.f32.mrf.mxu0
    %v5922 = vadd.f32 0.0, %v5921
    %v5923 = vpop.f32.mrf.mxu0
    %v5924 = vpop.f32.mrf.mxu0
    %v5925 = vadd.f32 0.0, %v5924
    %v5926 = vpop.f32.mrf.mxu0
    %5927 = vmatprep.mubr.bf16.mxu0 0
    %5928 = vmatmul.mubr.bf16.gmra.mxu0 %v5575
    %v5929 = vpop.f32.mrf.mxu0
    %v5930 = vadd.f32 0.0, %v5929
    %v5931 = vpop.f32.mrf.mxu0
    %v5932 = vpop.f32.mrf.mxu0
    %v5933 = vadd.f32 0.0, %v5932
    %v5934 = vpop.f32.mrf.mxu0
    %5935 = vmatprep.mubr.bf16.mxu0 0
    %5936 = vmatmul.mubr.bf16.gmra.mxu0 %v5578
    %v5937 = vpop.f32.mrf.mxu0
    %v5938 = vadd.f32 0.0, %v5937
    %v5939 = vpop.f32.mrf.mxu0
    %v5940 = vpop.f32.mrf.mxu0
    %v5941 = vpop.f32.mrf.mxu0
    %5942 = vdwg.mxu0
    %v5943 = vadd.f32 %v5374, %v5618
    %v5944 = vadd.f32 %v5375, %v5621
    %v5945 = vadd.f32 %v5376, %v5626
    %v5946 = vadd.f32 %v5377, %v5629
    %v5947 = vadd.f32 %v5378, %v5634
    %v5948 = vadd.f32 %v5379, %v5637
    %v5949 = vadd.f32 %v5380, %v5642
    %v5950 = vadd.f32 %v5381, %v5645
    %v5951 = vadd.f32 %v5382, %v5650
    %v5952 = vadd.f32 %v5383, %v5653
    %v5953 = vadd.f32 %v5384, %v5658
    %v5954 = vadd.f32 %v5385, %v5661
    %v5955 = vadd.f32 %v5386, %v5666
    %v5956 = vadd.f32 %v5387, %v5669
    %v5957 = vadd.f32 %v5388, %v5674
    %v5958 = vadd.f32 %v5389, %v5677
    %v5959 = vadd.f32 %v5390, %v5682
    %v5960 = vadd.f32 %v5391, %v5685
    %v5961 = vadd.f32 %v5392, %v5690
    %v5962 = vadd.f32 %v5393, %v5693
    %v5963 = vadd.f32 %v5394, %v5698
    %v5964 = vadd.f32 %v5395, %v5701
    %v5965 = vadd.f32 %v5396, %v5706
    %v5966 = vadd.f32 %v5397, %v5709
    %v5967 = vadd.f32 %v5398, %v5714
    %v5968 = vadd.f32 %v5399, %v5717
    %v5969 = vadd.f32 %v5400, %v5722
    %v5970 = vadd.f32 %v5401, %v5725
    %v5971 = vadd.f32 %v5402, %v5730
    %v5972 = vadd.f32 %v5403, %v5733
    %v5973 = vadd.f32 %v5404, %v5738
    %v5974 = vadd.f32 %v5405, %v5741
    %v5975 = vadd.f32 %v5406, %v5746
    %v5976 = vadd.f32 %v5407, %v5749
    %v5977 = vadd.f32 %v5408, %v5754
    %v5978 = vadd.f32 %v5409, %v5757
    %v5979 = vadd.f32 %v5410, %v5762
    %v5980 = vadd.f32 %v5411, %v5765
    %v5981 = vadd.f32 %v5412, %v5770
    %v5982 = vadd.f32 %v5413, %v5773
    %v5983 = vadd.f32 %v5414, %v5778
    %v5984 = vadd.f32 %v5415, %v5781
    %v5985 = vadd.f32 %v5416, %v5786
    %v5986 = vadd.f32 %v5417, %v5789
    %v5987 = vadd.f32 %v5418, %v5794
    %v5988 = vadd.f32 %v5419, %v5797
    %v5989 = vadd.f32 %v5420, %v5802
    %v5990 = vadd.f32 %v5421, %v5805
    %v5991 = vadd.f32 %v5422, %v5810
    %v5992 = vadd.f32 %v5423, %v5813
    %v5993 = vadd.f32 %v5424, %v5818
    %v5994 = vadd.f32 %v5425, %v5821
    %v5995 = vadd.f32 %v5426, %v5826
    %v5996 = vadd.f32 %v5427, %v5829
    %v5997 = vadd.f32 %v5428, %v5834
    %v5998 = vadd.f32 %v5429, %v5837
    %v5999 = vadd.f32 %v5430, %v5842
    %v6000 = vadd.f32 %v5431, %v5845
    %v6001 = vadd.f32 %v5432, %v5850
    %v6002 = vadd.f32 %v5433, %v5853
    %v6003 = vadd.f32 %v5434, %v5858
    %v6004 = vadd.f32 %v5435, %v5861
    %v6005 = vadd.f32 %v5436, %v5866
    %v6006 = vadd.f32 %v5437, %v5869
    %v6007 = vadd.f32 %v5438, %v5874
    %v6008 = vadd.f32 %v5439, %v5877
    %v6009 = vadd.f32 %v5440, %v5882
    %v6010 = vadd.f32 %v5441, %v5885
    %v6011 = vadd.f32 %v5442, %v5890
    %v6012 = vadd.f32 %v5443, %v5893
    %v6013 = vadd.f32 %v5444, %v5898
    %v6014 = vadd.f32 %v5445, %v5901
    %v6015 = vadd.f32 %v5446, %v5906
    %v6016 = vadd.f32 %v5447, %v5909
    %v6017 = vadd.f32 %v5448, %v5914
    %v6018 = vadd.f32 %v5449, %v5917
    %v6019 = vadd.f32 %v5450, %v5922
    %v6020 = vadd.f32 %v5451, %v5925
    %v6021 = vadd.f32 %v5452, %v5930
    %v6022 = vadd.f32 %v5453, %v5933
    %v6023 = vadd.f32 %v5454, %v5938
    %6024 = vst.msk [vmem:[#allocation2] sm:$0xff] %vm52, %v5943
    %6025 = vst.msk [vmem:[#allocation2 + $0x8] sm:$0xff] %vm52, %v5944
    %6026 = vst.msk [vmem:[#allocation2 + $0x10] sm:$0xff] %vm52, %v5945
    %6027 = vst.msk [vmem:[#allocation2 + $0x18] sm:$0xff] %vm52, %v5946
    %6028 = vst.msk [vmem:[#allocation2 + $0x20] sm:$0xff] %vm52, %v5947
    %6029 = vst.msk [vmem:[#allocation2 + $0x28] sm:$0xff] %vm52, %v5948
    %6030 = vst.msk [vmem:[#allocation2 + $0x30] sm:$0xff] %vm52, %v5949
    %6031 = vst.msk [vmem:[#allocation2 + $0x38] sm:$0xff] %vm52, %v5950
    %6032 = vst.msk [vmem:[#allocation2 + $0x40] sm:$0xff] %vm52, %v5951
    %6033 = vst.msk [vmem:[#allocation2 + $0x48] sm:$0xff] %vm52, %v5952
    %6034 = vst.msk [vmem:[#allocation2 + $0x50] sm:$0xff] %vm52, %v5953
    %6035 = vst.msk [vmem:[#allocation2 + $0x58] sm:$0xff] %vm52, %v5954
    %6036 = vst.msk [vmem:[#allocation2 + $0x60] sm:$0xff] %vm52, %v5955
    %6037 = vst.msk [vmem:[#allocation2 + $0x68] sm:$0xff] %vm52, %v5956
    %6038 = vst.msk [vmem:[#allocation2 + $0x70] sm:$0xff] %vm52, %v5957
    %6039 = vst.msk [vmem:[#allocation2 + $0x78] sm:$0xff] %vm52, %v5958
    %6040 = vst.msk [vmem:[#allocation2 + $0x80] sm:$0xff] %vm52, %v5959
    %6041 = vst.msk [vmem:[#allocation2 + $0x88] sm:$0xff] %vm52, %v5960
    %6042 = vst.msk [vmem:[#allocation2 + $0x90] sm:$0xff] %vm52, %v5961
    %6043 = vst.msk [vmem:[#allocation2 + $0x98] sm:$0xff] %vm52, %v5962
    %6044 = vst.msk [vmem:[#allocation2 + $0xa0] sm:$0xff] %vm52, %v5963
    %6045 = vst.msk [vmem:[#allocation2 + $0xa8] sm:$0xff] %vm52, %v5964
    %6046 = vst.msk [vmem:[#allocation2 + $0xb0] sm:$0xff] %vm52, %v5965
    %6047 = vst.msk [vmem:[#allocation2 + $0xb8] sm:$0xff] %vm52, %v5966
    %6048 = vst.msk [vmem:[#allocation2 + $0xc0] sm:$0xff] %vm52, %v5967
    %6049 = vst.msk [vmem:[#allocation2 + $0xc8] sm:$0xff] %vm52, %v5968
    %6050 = vst.msk [vmem:[#allocation2 + $0xd0] sm:$0xff] %vm52, %v5969
    %6051 = vst.msk [vmem:[#allocation2 + $0xd8] sm:$0xff] %vm52, %v5970
    %6052 = vst.msk [vmem:[#allocation2 + $0xe0] sm:$0xff] %vm52, %v5971
    %6053 = vst.msk [vmem:[#allocation2 + $0xe8] sm:$0xff] %vm52, %v5972
    %6054 = vst.msk [vmem:[#allocation2 + $0xf0] sm:$0xff] %vm52, %v5973
    %6055 = vst.msk [vmem:[#allocation2 + $0xf8] sm:$0xff] %vm52, %v5974
    %6056 = vst.msk [vmem:[#allocation2 + $0x100] sm:$0xff] %vm52, %v5975
    %6057 = vst.msk [vmem:[#allocation2 + $0x108] sm:$0xff] %vm52, %v5976
    %6058 = vst.msk [vmem:[#allocation2 + $0x110] sm:$0xff] %vm52, %v5977
    %6059 = vst.msk [vmem:[#allocation2 + $0x118] sm:$0xff] %vm52, %v5978
    %6060 = vst.msk [vmem:[#allocation2 + $0x120] sm:$0xff] %vm52, %v5979
    %6061 = vst.msk [vmem:[#allocation2 + $0x128] sm:$0xff] %vm52, %v5980
    %6062 = vst.msk [vmem:[#allocation2 + $0x130] sm:$0xff] %vm52, %v5981
    %6063 = vst.msk [vmem:[#allocation2 + $0x138] sm:$0xff] %vm52, %v5982
    %6064 = vst.msk [vmem:[#allocation2 + $0x140] sm:$0xff] %vm52, %v5983
    %6065 = vst.msk [vmem:[#allocation2 + $0x148] sm:$0xff] %vm52, %v5984
    %6066 = vst.msk [vmem:[#allocation2 + $0x150] sm:$0xff] %vm52, %v5985
    %6067 = vst.msk [vmem:[#allocation2 + $0x158] sm:$0xff] %vm52, %v5986
    %6068 = vst.msk [vmem:[#allocation2 + $0x160] sm:$0xff] %vm52, %v5987
    %6069 = vst.msk [vmem:[#allocation2 + $0x168] sm:$0xff] %vm52, %v5988
    %6070 = vst.msk [vmem:[#allocation2 + $0x170] sm:$0xff] %vm52, %v5989
    %6071 = vst.msk [vmem:[#allocation2 + $0x178] sm:$0xff] %vm52, %v5990
    %6072 = vst.msk [vmem:[#allocation2 + $0x180] sm:$0xff] %vm52, %v5991
    %6073 = vst.msk [vmem:[#allocation2 + $0x188] sm:$0xff] %vm52, %v5992
    %6074 = vst.msk [vmem:[#allocation2 + $0x190] sm:$0xff] %vm52, %v5993
    %6075 = vst.msk [vmem:[#allocation2 + $0x198] sm:$0xff] %vm52, %v5994
    %6076 = vst.msk [vmem:[#allocation2 + $0x1a0] sm:$0xff] %vm52, %v5995
    %6077 = vst.msk [vmem:[#allocation2 + $0x1a8] sm:$0xff] %vm52, %v5996
    %6078 = vst.msk [vmem:[#allocation2 + $0x1b0] sm:$0xff] %vm52, %v5997
    %6079 = vst.msk [vmem:[#allocation2 + $0x1b8] sm:$0xff] %vm52, %v5998
    %6080 = vst.msk [vmem:[#allocation2 + $0x1c0] sm:$0xff] %vm52, %v5999
    %6081 = vst.msk [vmem:[#allocation2 + $0x1c8] sm:$0xff] %vm52, %v6000
    %6082 = vst.msk [vmem:[#allocation2 + $0x1d0] sm:$0xff] %vm52, %v6001
    %6083 = vst.msk [vmem:[#allocation2 + $0x1d8] sm:$0xff] %vm52, %v6002
    %6084 = vst.msk [vmem:[#allocation2 + $0x1e0] sm:$0xff] %vm52, %v6003
    %6085 = vst.msk [vmem:[#allocation2 + $0x1e8] sm:$0xff] %vm52, %v6004
    %6086 = vst.msk [vmem:[#allocation2 + $0x1f0] sm:$0xff] %vm52, %v6005
    %6087 = vst.msk [vmem:[#allocation2 + $0x1f8] sm:$0xff] %vm52, %v6006
    %6088 = vst.msk [vmem:[#allocation2 + $0x200] sm:$0xff] %vm52, %v6007
    %6089 = vst.msk [vmem:[#allocation2 + $0x208] sm:$0xff] %vm52, %v6008
    %6090 = vst.msk [vmem:[#allocation2 + $0x210] sm:$0xff] %vm52, %v6009
    %6091 = vst.msk [vmem:[#allocation2 + $0x218] sm:$0xff] %vm52, %v6010
    %6092 = vst.msk [vmem:[#allocation2 + $0x220] sm:$0xff] %vm52, %v6011
    %6093 = vst.msk [vmem:[#allocation2 + $0x228] sm:$0xff] %vm52, %v6012
    %6094 = vst.msk [vmem:[#allocation2 + $0x230] sm:$0xff] %vm52, %v6013
    %6095 = vst.msk [vmem:[#allocation2 + $0x238] sm:$0xff] %vm52, %v6014
    %6096 = vst.msk [vmem:[#allocation2 + $0x240] sm:$0xff] %vm52, %v6015
    %6097 = vst.msk [vmem:[#allocation2 + $0x248] sm:$0xff] %vm52, %v6016
    %6098 = vst.msk [vmem:[#allocation2 + $0x250] sm:$0xff] %vm52, %v6017
    %6099 = vst.msk [vmem:[#allocation2 + $0x258] sm:$0xff] %vm52, %v6018
    %6100 = vst.msk [vmem:[#allocation2 + $0x260] sm:$0xff] %vm52, %v6019
    %6101 = vst.msk [vmem:[#allocation2 + $0x268] sm:$0xff] %vm52, %v6020
    %6102 = vst.msk [vmem:[#allocation2 + $0x270] sm:$0xff] %vm52, %v6021
    %6103 = vst.msk [vmem:[#allocation2 + $0x278] sm:$0xff] %vm52, %v6022
    %6104 = vst.msk [vmem:[#allocation2 + $0x280] sm:$0xff] %vm52, %v6023
    %v6105 = vld [vmem:[%s0 + $0x25] sm:$0xff]
    %v6106 = vld [vmem:[%s0 + $0x2d] sm:$0xff]
    %v6107 = vld [vmem:[%s0 + $0x35] sm:$0xff]
    %v6108 = vld [vmem:[%s0 + $0x3d] sm:$0xff]
    %v6109 = vld [vmem:[%s0 + $0x45] sm:$0xff]
    %v6110 = vld [vmem:[%s0 + $0x4d] sm:$0xff]
    %v6111 = vld [vmem:[%s0 + $0x55] sm:$0xff]
    %v6112 = vld [vmem:[%s0 + $0x5d] sm:$0xff]
    %v6113 = vld [vmem:[%s0 + $0x65] sm:$0xff]
    %v6114 = vld [vmem:[%s0 + $0x6d] sm:$0xff]
    %v6115 = vld [vmem:[%s0 + $0x75] sm:$0xff]
    %v6116 = vld [vmem:[%s0 + $0x7d] sm:$0xff]
    %v6117 = vld [vmem:[%s0 + $0x85] sm:$0xff]
    %v6118 = vld [vmem:[%s0 + $0x8d] sm:$0xff]
    %v6119 = vld [vmem:[%s0 + $0x95] sm:$0xff]
    %v6120 = vld [vmem:[%s0 + $0x9d] sm:$0xff]
    %v6121 = vld [vmem:[%s0 + $0xa5] sm:$0xff]
    %v6122 = vld [vmem:[%s0 + $0xad] sm:$0xff]
    %v6123 = vld [vmem:[%s0 + $0xb5] sm:$0xff]
    %v6124 = vld [vmem:[%s0 + $0xbd] sm:$0xff]
    %v6125 = vld [vmem:[%s0 + $0xc5] sm:$0xff]
    %v6126 = vld [vmem:[%s0 + $0xcd] sm:$0xff]
    %v6127 = vld [vmem:[%s0 + $0xd5] sm:$0xff]
    %v6128 = vld [vmem:[%s0 + $0xdd] sm:$0xff]
    %v6129 = vld [vmem:[%s0 + $0xe5] sm:$0xff]
    %v6130 = vld [vmem:[%s0 + $0xed] sm:$0xff]
    %v6131 = vld [vmem:[%s0 + $0xf5] sm:$0xff]
    %v6132 = vld [vmem:[%s0 + $0xfd] sm:$0xff]
    %v6133 = vld [vmem:[%s0 + $0x105] sm:$0xff]
    %v6134 = vld [vmem:[%s0 + $0x10d] sm:$0xff]
    %v6135 = vld [vmem:[%s0 + $0x115] sm:$0xff]
    %v6136 = vld [vmem:[%s0 + $0x11d] sm:$0xff]
    %v6137 = vld [vmem:[%s0 + $0x125] sm:$0xff]
    %v6138 = vld [vmem:[%s0 + $0x12d] sm:$0xff]
    %v6139 = vld [vmem:[%s0 + $0x135] sm:$0xff]
    %v6140 = vld [vmem:[%s0 + $0x13d] sm:$0xff]
    %v6141 = vld [vmem:[%s0 + $0x145] sm:$0xff]
    %v6142 = vld [vmem:[%s0 + $0x14d] sm:$0xff]
    %v6143 = vld [vmem:[%s0 + $0x155] sm:$0xff]
    %v6144 = vld [vmem:[%s0 + $0x15d] sm:$0xff]
    %v6145 = vld [vmem:[%s0 + $0x165] sm:$0xff]
    %v6146 = vld [vmem:[%s0 + $0x16d] sm:$0xff]
    %v6147 = vld [vmem:[%s0 + $0x175] sm:$0xff]
    %v6148 = vld [vmem:[%s0 + $0x17d] sm:$0xff]
    %v6149 = vld [vmem:[%s0 + $0x185] sm:$0xff]
    %v6150 = vld [vmem:[%s0 + $0x18d] sm:$0xff]
    %v6151 = vld [vmem:[%s0 + $0x195] sm:$0xff]
    %v6152 = vld [vmem:[%s0 + $0x19d] sm:$0xff]
    %v6153 = vld [vmem:[%s0 + $0x1a5] sm:$0xff]
    %v6154 = vld [vmem:[%s0 + $0x1ad] sm:$0xff]
    %v6155 = vld [vmem:[%s0 + $0x1b5] sm:$0xff]
    %v6156 = vld [vmem:[%s0 + $0x1bd] sm:$0xff]
    %v6157 = vld [vmem:[%s0 + $0x1c5] sm:$0xff]
    %v6158 = vld [vmem:[%s0 + $0x1cd] sm:$0xff]
    %v6159 = vld [vmem:[%s0 + $0x1d5] sm:$0xff]
    %v6160 = vld [vmem:[%s0 + $0x1dd] sm:$0xff]
    %v6161 = vld [vmem:[%s0 + $0x1e5] sm:$0xff]
    %v6162 = vld [vmem:[%s0 + $0x1ed] sm:$0xff]
    %v6163 = vld [vmem:[%s0 + $0x1f5] sm:$0xff]
    %v6164 = vld [vmem:[%s0 + $0x1fd] sm:$0xff]
    %v6165 = vld [vmem:[%s0 + $0x205] sm:$0xff]
    %v6166 = vld [vmem:[%s0 + $0x20d] sm:$0xff]
    %v6167 = vld [vmem:[%s0 + $0x215] sm:$0xff]
    %v6168 = vld [vmem:[%s0 + $0x21d] sm:$0xff]
    %v6169 = vld [vmem:[%s0 + $0x225] sm:$0xff]
    %v6170 = vld [vmem:[%s0 + $0x22d] sm:$0xff]
    %v6171 = vld [vmem:[%s0 + $0x235] sm:$0xff]
    %v6172 = vld [vmem:[%s0 + $0x23d] sm:$0xff]
    %v6173 = vld [vmem:[%s0 + $0x245] sm:$0xff]
    %v6174 = vld [vmem:[%s0 + $0x24d] sm:$0xff]
    %v6175 = vld [vmem:[%s0 + $0x255] sm:$0xff]
    %v6176 = vld [vmem:[%s0 + $0x25d] sm:$0xff]
    %v6177 = vld [vmem:[%s0 + $0x265] sm:$0xff]
    %v6178 = vld [vmem:[%s0 + $0x26d] sm:$0xff]
    %v6179 = vld [vmem:[%s0 + $0x275] sm:$0xff]
    %v6180 = vld [vmem:[%s0 + $0x27d] sm:$0xff]
    %v6181 = vld [vmem:[%s0 + $0x285] sm:$0xff]
    %v6182 = vld [vmem:[%s0 + $0x28d] sm:$0xff]
    %v6183 = vld [vmem:[%s0 + $0x295] sm:$0xff]
    %v6184 = vld [vmem:[%s0 + $0x29d] sm:$0xff]
    %v6185 = vld [vmem:[%s0 + $0x2a5] sm:$0xff]
    %v6186 = vpack.c.bf16 %v6106, %v6105
    %v6187 = vpack.c.bf16 %v6108, %v6107
    %v6188 = vpack.c.bf16 %v6110, %v6109
    %v6189 = vpack.c.bf16 %v6112, %v6111
    %v6190 = vpack.c.bf16 %v6114, %v6113
    %v6191 = vpack.c.bf16 %v6116, %v6115
    %v6192 = vpack.c.bf16 %v6118, %v6117
    %v6193 = vpack.c.bf16 %v6120, %v6119
    %v6194 = vpack.c.bf16 %v6122, %v6121
    %v6195 = vpack.c.bf16 %v6124, %v6123
    %v6196 = vpack.c.bf16 %v6126, %v6125
    %v6197 = vpack.c.bf16 %v6128, %v6127
    %v6198 = vpack.c.bf16 %v6130, %v6129
    %v6199 = vpack.c.bf16 %v6132, %v6131
    %v6200 = vpack.c.bf16 %v6134, %v6133
    %v6201 = vpack.c.bf16 %v6136, %v6135
    %v6202 = vpack.c.bf16 %v6138, %v6137
    %v6203 = vpack.c.bf16 %v6140, %v6139
    %v6204 = vpack.c.bf16 %v6142, %v6141
    %v6205 = vpack.c.bf16 %v6144, %v6143
    %v6206 = vpack.c.bf16 %v6146, %v6145
    %v6207 = vpack.c.bf16 %v6148, %v6147
    %v6208 = vpack.c.bf16 %v6150, %v6149
    %v6209 = vpack.c.bf16 %v6152, %v6151
    %v6210 = vpack.c.bf16 %v6154, %v6153
    %v6211 = vpack.c.bf16 %v6156, %v6155
    %v6212 = vpack.c.bf16 %v6158, %v6157
    %v6213 = vpack.c.bf16 %v6160, %v6159
    %v6214 = vpack.c.bf16 %v6162, %v6161
    %v6215 = vpack.c.bf16 %v6164, %v6163
    %v6216 = vpack.c.bf16 %v6166, %v6165
    %v6217 = vpack.c.bf16 %v6168, %v6167
    %v6218 = vpack.c.bf16 %v6170, %v6169
    %v6219 = vpack.c.bf16 %v6172, %v6171
    %v6220 = vpack.c.bf16 %v6174, %v6173
    %v6221 = vpack.c.bf16 %v6176, %v6175
    %v6222 = vpack.c.bf16 %v6178, %v6177
    %v6223 = vpack.c.bf16 %v6180, %v6179
    %v6224 = vpack.c.bf16 %v6182, %v6181
    %v6225 = vpack.c.bf16 %v6184, %v6183
    %v6226 = vpack.c.bf16 %v6185, %v6185
    %v6227 = vld [vmem:[#allocation2] sm:$0xff]
    %v6228 = vld [vmem:[#allocation2 + $0x8] sm:$0xff]
    %v6229 = vld [vmem:[#allocation2 + $0x10] sm:$0xff]
    %v6230 = vld [vmem:[#allocation2 + $0x18] sm:$0xff]
    %v6231 = vld [vmem:[#allocation2 + $0x20] sm:$0xff]
    %v6232 = vld [vmem:[#allocation2 + $0x28] sm:$0xff]
    %v6233 = vld [vmem:[#allocation2 + $0x30] sm:$0xff]
    %v6234 = vld [vmem:[#allocation2 + $0x38] sm:$0xff]
    %v6235 = vld [vmem:[#allocation2 + $0x40] sm:$0xff]
    %v6236 = vld [vmem:[#allocation2 + $0x48] sm:$0xff]
    %v6237 = vld [vmem:[#allocation2 + $0x50] sm:$0xff]
    %v6238 = vld [vmem:[#allocation2 + $0x58] sm:$0xff]
    %v6239 = vld [vmem:[#allocation2 + $0x60] sm:$0xff]
    %v6240 = vld [vmem:[#allocation2 + $0x68] sm:$0xff]
    %v6241 = vld [vmem:[#allocation2 + $0x70] sm:$0xff]
    %v6242 = vld [vmem:[#allocation2 + $0x78] sm:$0xff]
    %v6243 = vld [vmem:[#allocation2 + $0x80] sm:$0xff]
    %v6244 = vld [vmem:[#allocation2 + $0x88] sm:$0xff]
    %v6245 = vld [vmem:[#allocation2 + $0x90] sm:$0xff]
    %v6246 = vld [vmem:[#allocation2 + $0x98] sm:$0xff]
    %v6247 = vld [vmem:[#allocation2 + $0xa0] sm:$0xff]
    %v6248 = vld [vmem:[#allocation2 + $0xa8] sm:$0xff]
    %v6249 = vld [vmem:[#allocation2 + $0xb0] sm:$0xff]
    %v6250 = vld [vmem:[#allocation2 + $0xb8] sm:$0xff]
    %v6251 = vld [vmem:[#allocation2 + $0xc0] sm:$0xff]
    %v6252 = vld [vmem:[#allocation2 + $0xc8] sm:$0xff]
    %v6253 = vld [vmem:[#allocation2 + $0xd0] sm:$0xff]
    %v6254 = vld [vmem:[#allocation2 + $0xd8] sm:$0xff]
    %v6255 = vld [vmem:[#allocation2 + $0xe0] sm:$0xff]
    %v6256 = vld [vmem:[#allocation2 + $0xe8] sm:$0xff]
    %v6257 = vld [vmem:[#allocation2 + $0xf0] sm:$0xff]
    %v6258 = vld [vmem:[#allocation2 + $0xf8] sm:$0xff]
    %v6259 = vld [vmem:[#allocation2 + $0x100] sm:$0xff]
    %v6260 = vld [vmem:[#allocation2 + $0x108] sm:$0xff]
    %v6261 = vld [vmem:[#allocation2 + $0x110] sm:$0xff]
    %v6262 = vld [vmem:[#allocation2 + $0x118] sm:$0xff]
    %v6263 = vld [vmem:[#allocation2 + $0x120] sm:$0xff]
    %v6264 = vld [vmem:[#allocation2 + $0x128] sm:$0xff]
    %v6265 = vld [vmem:[#allocation2 + $0x130] sm:$0xff]
    %v6266 = vld [vmem:[#allocation2 + $0x138] sm:$0xff]
    %v6267 = vld [vmem:[#allocation2 + $0x140] sm:$0xff]
    %v6268 = vld [vmem:[#allocation2 + $0x148] sm:$0xff]
    %v6269 = vld [vmem:[#allocation2 + $0x150] sm:$0xff]
    %v6270 = vld [vmem:[#allocation2 + $0x158] sm:$0xff]
    %v6271 = vld [vmem:[#allocation2 + $0x160] sm:$0xff]
    %v6272 = vld [vmem:[#allocation2 + $0x168] sm:$0xff]
    %v6273 = vld [vmem:[#allocation2 + $0x170] sm:$0xff]
    %v6274 = vld [vmem:[#allocation2 + $0x178] sm:$0xff]
    %v6275 = vld [vmem:[#allocation2 + $0x180] sm:$0xff]
    %v6276 = vld [vmem:[#allocation2 + $0x188] sm:$0xff]
    %v6277 = vld [vmem:[#allocation2 + $0x190] sm:$0xff]
    %v6278 = vld [vmem:[#allocation2 + $0x198] sm:$0xff]
    %v6279 = vld [vmem:[#allocation2 + $0x1a0] sm:$0xff]
    %v6280 = vld [vmem:[#allocation2 + $0x1a8] sm:$0xff]
    %v6281 = vld [vmem:[#allocation2 + $0x1b0] sm:$0xff]
    %v6282 = vld [vmem:[#allocation2 + $0x1b8] sm:$0xff]
    %v6283 = vld [vmem:[#allocation2 + $0x1c0] sm:$0xff]
    %v6284 = vld [vmem:[#allocation2 + $0x1c8] sm:$0xff]
    %v6285 = vld [vmem:[#allocation2 + $0x1d0] sm:$0xff]
    %v6286 = vld [vmem:[#allocation2 + $0x1d8] sm:$0xff]
    %v6287 = vld [vmem:[#allocation2 + $0x1e0] sm:$0xff]
    %v6288 = vld [vmem:[#allocation2 + $0x1e8] sm:$0xff]
    %v6289 = vld [vmem:[#allocation2 + $0x1f0] sm:$0xff]
    %v6290 = vld [vmem:[#allocation2 + $0x1f8] sm:$0xff]
    %v6291 = vld [vmem:[#allocation2 + $0x200] sm:$0xff]
    %v6292 = vld [vmem:[#allocation2 + $0x208] sm:$0xff]
    %v6293 = vld [vmem:[#allocation2 + $0x210] sm:$0xff]
    %v6294 = vld [vmem:[#allocation2 + $0x218] sm:$0xff]
    %v6295 = vld [vmem:[#allocation2 + $0x220] sm:$0xff]
    %v6296 = vld [vmem:[#allocation2 + $0x228] sm:$0xff]
    %v6297 = vld [vmem:[#allocation2 + $0x230] sm:$0xff]
    %v6298 = vld [vmem:[#allocation2 + $0x238] sm:$0xff]
    %v6299 = vld [vmem:[#allocation2 + $0x240] sm:$0xff]
    %v6300 = vld [vmem:[#allocation2 + $0x248] sm:$0xff]
    %v6301 = vld [vmem:[#allocation2 + $0x250] sm:$0xff]
    %v6302 = vld [vmem:[#allocation2 + $0x258] sm:$0xff]
    %v6303 = vld [vmem:[#allocation2 + $0x260] sm:$0xff]
    %v6304 = vld [vmem:[#allocation2 + $0x268] sm:$0xff]
    %v6305 = vld [vmem:[#allocation2 + $0x270] sm:$0xff]
    %v6306 = vld [vmem:[#allocation2 + $0x278] sm:$0xff]
    %v6307 = vld [vmem:[#allocation2 + $0x280] sm:$0xff]
    %s6308 = scalar_lea.vmem %s2, 28
    %v6309 = vld [vmem:[%s6308] sm:$0xf]
    %v6311 = vsel %vm52, %v6186, 0
    %v6314 = vsel %vm52, %v6187, 0
    %v6317 = vsel %vm52, %v6188, 0
    %v6320 = vsel %vm52, %v6189, 0
    %v6323 = vsel %vm52, %v6190, 0
    %v6326 = vsel %vm52, %v6191, 0
    %v6329 = vsel %vm52, %v6192, 0
    %v6332 = vsel %vm52, %v6193, 0
    %v6335 = vsel %vm52, %v6194, 0
    %v6338 = vsel %vm52, %v6195, 0
    %v6341 = vsel %vm52, %v6196, 0
    %v6344 = vsel %vm52, %v6197, 0
    %v6347 = vsel %vm52, %v6198, 0
    %v6350 = vsel %vm52, %v6199, 0
    %v6353 = vsel %vm52, %v6200, 0
    %v6356 = vsel %vm52, %v6201, 0
    %v6359 = vsel %vm52, %v6202, 0
    %v6362 = vsel %vm52, %v6203, 0
    %v6365 = vsel %vm52, %v6204, 0
    %v6368 = vsel %vm52, %v6205, 0
    %v6371 = vsel %vm52, %v6206, 0
    %v6374 = vsel %vm52, %v6207, 0
    %v6377 = vsel %vm52, %v6208, 0
    %v6380 = vsel %vm52, %v6209, 0
    %v6383 = vsel %vm52, %v6210, 0
    %v6386 = vsel %vm52, %v6211, 0
    %v6389 = vsel %vm52, %v6212, 0
    %v6392 = vsel %vm52, %v6213, 0
    %v6395 = vsel %vm52, %v6214, 0
    %v6398 = vsel %vm52, %v6215, 0
    %v6401 = vsel %vm52, %v6216, 0
    %v6404 = vsel %vm52, %v6217, 0
    %v6407 = vsel %vm52, %v6218, 0
    %v6410 = vsel %vm52, %v6219, 0
    %v6413 = vsel %vm52, %v6220, 0
    %v6416 = vsel %vm52, %v6221, 0
    %v6419 = vsel %vm52, %v6222, 0
    %v6422 = vsel %vm52, %v6223, 0
    %v6425 = vsel %vm52, %v6224, 0
    %v6428 = vsel %vm52, %v6225, 0
    %v6431 = vsel %vm52, %v6226, 0
    %v6434 = vsel %vm461, %v6309, 0
    %6436 = vmatprep.subr.bf16.mxu0 0
    %6437 = vmatpush1.bf16.msra.mxu0 0
    %6438 = vmatprep.subr.bf16.mxu0 0
    %6439 = vmatpush1.bf16.msra.mxu0 0
    %6440 = vmatprep.subr.bf16.mxu0 0
    %6441 = vmatpush1.bf16.msra.mxu0 0
    %6442 = vmatprep.subr.bf16.mxu0 0
    %6443 = vmatpush1.bf16.msra.mxu0 0
    %6444 = vmatprep.subr.bf16.mxu0 0
    %6445 = vmatpush1.bf16.msra.mxu0 0
    %6446 = vmatprep.subr.bf16.mxu0 0
    %6447 = vmatpush1.bf16.msra.mxu0 0
    %6448 = vmatprep.subr.bf16.mxu0 0
    %6449 = vmatpush1.bf16.msra.mxu0 0
    %6450 = vmatprep.subr.bf16.mxu0 0
    %6451 = vmatpush1.bf16.msra.mxu0 %v6434
    %6452 = vmatprep.subr.bf16.mxu0 0
    %6453 = vmatpush2.bf16.msra.mxu0 0
    %6454 = vmatprep.subr.bf16.mxu0 0
    %6455 = vmatpush2.bf16.msra.mxu0 0
    %6456 = vmatprep.subr.bf16.mxu0 0
    %6457 = vmatpush2.bf16.msra.mxu0 0
    %6458 = vmatprep.subr.bf16.mxu0 0
    %6459 = vmatpush2.bf16.msra.mxu0 0
    %6460 = vmatprep.subr.bf16.mxu0 0
    %6461 = vmatpush2.bf16.msra.mxu0 0
    %6462 = vmatprep.subr.bf16.mxu0 0
    %6463 = vmatpush2.bf16.msra.mxu0 0
    %6464 = vmatprep.subr.bf16.mxu0 0
    %6465 = vmatpush2.bf16.msra.mxu0 0
    %6466 = vmatprep.subr.bf16.mxu0 0
    %6467 = vmatpush2.bf16.msra.mxu0 0
    %6468 = vmatprep.mubr.bf16.mxu0 0
    %6469 = vmatmul.mubr.bf16.gmra.mxu0 %v6311
    %v6470 = vpop.f32.mrf.mxu0
    %v6471 = vadd.f32 0.0, %v6470
    %v6472 = vpop.f32.mrf.mxu0
    %v6473 = vpop.f32.mrf.mxu0
    %v6474 = vadd.f32 0.0, %v6473
    %v6475 = vpop.f32.mrf.mxu0
    %6476 = vmatprep.mubr.bf16.mxu0 0
    %6477 = vmatmul.mubr.bf16.gmra.mxu0 %v6314
    %v6478 = vpop.f32.mrf.mxu0
    %v6479 = vadd.f32 0.0, %v6478
    %v6480 = vpop.f32.mrf.mxu0
    %v6481 = vpop.f32.mrf.mxu0
    %v6482 = vadd.f32 0.0, %v6481
    %v6483 = vpop.f32.mrf.mxu0
    %6484 = vmatprep.mubr.bf16.mxu0 0
    %6485 = vmatmul.mubr.bf16.gmra.mxu0 %v6317
    %v6486 = vpop.f32.mrf.mxu0
    %v6487 = vadd.f32 0.0, %v6486
    %v6488 = vpop.f32.mrf.mxu0
    %v6489 = vpop.f32.mrf.mxu0
    %v6490 = vadd.f32 0.0, %v6489
    %v6491 = vpop.f32.mrf.mxu0
    %6492 = vmatprep.mubr.bf16.mxu0 0
    %6493 = vmatmul.mubr.bf16.gmra.mxu0 %v6320
    %v6494 = vpop.f32.mrf.mxu0
    %v6495 = vadd.f32 0.0, %v6494
    %v6496 = vpop.f32.mrf.mxu0
    %v6497 = vpop.f32.mrf.mxu0
    %v6498 = vadd.f32 0.0, %v6497
    %v6499 = vpop.f32.mrf.mxu0
    %6500 = vmatprep.mubr.bf16.mxu0 0
    %6501 = vmatmul.mubr.bf16.gmra.mxu0 %v6323
    %v6502 = vpop.f32.mrf.mxu0
    %v6503 = vadd.f32 0.0, %v6502
    %v6504 = vpop.f32.mrf.mxu0
    %v6505 = vpop.f32.mrf.mxu0
    %v6506 = vadd.f32 0.0, %v6505
    %v6507 = vpop.f32.mrf.mxu0
    %6508 = vmatprep.mubr.bf16.mxu0 0
    %6509 = vmatmul.mubr.bf16.gmra.mxu0 %v6326
    %v6510 = vpop.f32.mrf.mxu0
    %v6511 = vadd.f32 0.0, %v6510
    %v6512 = vpop.f32.mrf.mxu0
    %v6513 = vpop.f32.mrf.mxu0
    %v6514 = vadd.f32 0.0, %v6513
    %v6515 = vpop.f32.mrf.mxu0
    %6516 = vmatprep.mubr.bf16.mxu0 0
    %6517 = vmatmul.mubr.bf16.gmra.mxu0 %v6329
    %v6518 = vpop.f32.mrf.mxu0
    %v6519 = vadd.f32 0.0, %v6518
    %v6520 = vpop.f32.mrf.mxu0
    %v6521 = vpop.f32.mrf.mxu0
    %v6522 = vadd.f32 0.0, %v6521
    %v6523 = vpop.f32.mrf.mxu0
    %6524 = vmatprep.mubr.bf16.mxu0 0
    %6525 = vmatmul.mubr.bf16.gmra.mxu0 %v6332
    %v6526 = vpop.f32.mrf.mxu0
    %v6527 = vadd.f32 0.0, %v6526
    %v6528 = vpop.f32.mrf.mxu0
    %v6529 = vpop.f32.mrf.mxu0
    %v6530 = vadd.f32 0.0, %v6529
    %v6531 = vpop.f32.mrf.mxu0
    %6532 = vmatprep.mubr.bf16.mxu0 0
    %6533 = vmatmul.mubr.bf16.gmra.mxu0 %v6335
    %v6534 = vpop.f32.mrf.mxu0
    %v6535 = vadd.f32 0.0, %v6534
    %v6536 = vpop.f32.mrf.mxu0
    %v6537 = vpop.f32.mrf.mxu0
    %v6538 = vadd.f32 0.0, %v6537
    %v6539 = vpop.f32.mrf.mxu0
    %6540 = vmatprep.mubr.bf16.mxu0 0
    %6541 = vmatmul.mubr.bf16.gmra.mxu0 %v6338
    %v6542 = vpop.f32.mrf.mxu0
    %v6543 = vadd.f32 0.0, %v6542
    %v6544 = vpop.f32.mrf.mxu0
    %v6545 = vpop.f32.mrf.mxu0
    %v6546 = vadd.f32 0.0, %v6545
    %v6547 = vpop.f32.mrf.mxu0
    %6548 = vmatprep.mubr.bf16.mxu0 0
    %6549 = vmatmul.mubr.bf16.gmra.mxu0 %v6341
    %v6550 = vpop.f32.mrf.mxu0
    %v6551 = vadd.f32 0.0, %v6550
    %v6552 = vpop.f32.mrf.mxu0
    %v6553 = vpop.f32.mrf.mxu0
    %v6554 = vadd.f32 0.0, %v6553
    %v6555 = vpop.f32.mrf.mxu0
    %6556 = vmatprep.mubr.bf16.mxu0 0
    %6557 = vmatmul.mubr.bf16.gmra.mxu0 %v6344
    %v6558 = vpop.f32.mrf.mxu0
    %v6559 = vadd.f32 0.0, %v6558
    %v6560 = vpop.f32.mrf.mxu0
    %v6561 = vpop.f32.mrf.mxu0
    %v6562 = vadd.f32 0.0, %v6561
    %v6563 = vpop.f32.mrf.mxu0
    %6564 = vmatprep.mubr.bf16.mxu0 0
    %6565 = vmatmul.mubr.bf16.gmra.mxu0 %v6347
    %v6566 = vpop.f32.mrf.mxu0
    %v6567 = vadd.f32 0.0, %v6566
    %v6568 = vpop.f32.mrf.mxu0
    %v6569 = vpop.f32.mrf.mxu0
    %v6570 = vadd.f32 0.0, %v6569
    %v6571 = vpop.f32.mrf.mxu0
    %6572 = vmatprep.mubr.bf16.mxu0 0
    %6573 = vmatmul.mubr.bf16.gmra.mxu0 %v6350
    %v6574 = vpop.f32.mrf.mxu0
    %v6575 = vadd.f32 0.0, %v6574
    %v6576 = vpop.f32.mrf.mxu0
    %v6577 = vpop.f32.mrf.mxu0
    %v6578 = vadd.f32 0.0, %v6577
    %v6579 = vpop.f32.mrf.mxu0
    %6580 = vmatprep.mubr.bf16.mxu0 0
    %6581 = vmatmul.mubr.bf16.gmra.mxu0 %v6353
    %v6582 = vpop.f32.mrf.mxu0
    %v6583 = vadd.f32 0.0, %v6582
    %v6584 = vpop.f32.mrf.mxu0
    %v6585 = vpop.f32.mrf.mxu0
    %v6586 = vadd.f32 0.0, %v6585
    %v6587 = vpop.f32.mrf.mxu0
    %6588 = vmatprep.mubr.bf16.mxu0 0
    %6589 = vmatmul.mubr.bf16.gmra.mxu0 %v6356
    %v6590 = vpop.f32.mrf.mxu0
    %v6591 = vadd.f32 0.0, %v6590
    %v6592 = vpop.f32.mrf.mxu0
    %v6593 = vpop.f32.mrf.mxu0
    %v6594 = vadd.f32 0.0, %v6593
    %v6595 = vpop.f32.mrf.mxu0
    %6596 = vmatprep.mubr.bf16.mxu0 0
    %6597 = vmatmul.mubr.bf16.gmra.mxu0 %v6359
    %v6598 = vpop.f32.mrf.mxu0
    %v6599 = vadd.f32 0.0, %v6598
    %v6600 = vpop.f32.mrf.mxu0
    %v6601 = vpop.f32.mrf.mxu0
    %v6602 = vadd.f32 0.0, %v6601
    %v6603 = vpop.f32.mrf.mxu0
    %6604 = vmatprep.mubr.bf16.mxu0 0
    %6605 = vmatmul.mubr.bf16.gmra.mxu0 %v6362
    %v6606 = vpop.f32.mrf.mxu0
    %v6607 = vadd.f32 0.0, %v6606
    %v6608 = vpop.f32.mrf.mxu0
    %v6609 = vpop.f32.mrf.mxu0
    %v6610 = vadd.f32 0.0, %v6609
    %v6611 = vpop.f32.mrf.mxu0
    %6612 = vmatprep.mubr.bf16.mxu0 0
    %6613 = vmatmul.mubr.bf16.gmra.mxu0 %v6365
    %v6614 = vpop.f32.mrf.mxu0
    %v6615 = vadd.f32 0.0, %v6614
    %v6616 = vpop.f32.mrf.mxu0
    %v6617 = vpop.f32.mrf.mxu0
    %v6618 = vadd.f32 0.0, %v6617
    %v6619 = vpop.f32.mrf.mxu0
    %6620 = vmatprep.mubr.bf16.mxu0 0
    %6621 = vmatmul.mubr.bf16.gmra.mxu0 %v6368
    %v6622 = vpop.f32.mrf.mxu0
    %v6623 = vadd.f32 0.0, %v6622
    %v6624 = vpop.f32.mrf.mxu0
    %v6625 = vpop.f32.mrf.mxu0
    %v6626 = vadd.f32 0.0, %v6625
    %v6627 = vpop.f32.mrf.mxu0
    %6628 = vmatprep.mubr.bf16.mxu0 0
    %6629 = vmatmul.mubr.bf16.gmra.mxu0 %v6371
    %v6630 = vpop.f32.mrf.mxu0
    %v6631 = vadd.f32 0.0, %v6630
    %v6632 = vpop.f32.mrf.mxu0
    %v6633 = vpop.f32.mrf.mxu0
    %v6634 = vadd.f32 0.0, %v6633
    %v6635 = vpop.f32.mrf.mxu0
    %6636 = vmatprep.mubr.bf16.mxu0 0
    %6637 = vmatmul.mubr.bf16.gmra.mxu0 %v6374
    %v6638 = vpop.f32.mrf.mxu0
    %v6639 = vadd.f32 0.0, %v6638
    %v6640 = vpop.f32.mrf.mxu0
    %v6641 = vpop.f32.mrf.mxu0
    %v6642 = vadd.f32 0.0, %v6641
    %v6643 = vpop.f32.mrf.mxu0
    %6644 = vmatprep.mubr.bf16.mxu0 0
    %6645 = vmatmul.mubr.bf16.gmra.mxu0 %v6377
    %v6646 = vpop.f32.mrf.mxu0
    %v6647 = vadd.f32 0.0, %v6646
    %v6648 = vpop.f32.mrf.mxu0
    %v6649 = vpop.f32.mrf.mxu0
    %v6650 = vadd.f32 0.0, %v6649
    %v6651 = vpop.f32.mrf.mxu0
    %6652 = vmatprep.mubr.bf16.mxu0 0
    %6653 = vmatmul.mubr.bf16.gmra.mxu0 %v6380
    %v6654 = vpop.f32.mrf.mxu0
    %v6655 = vadd.f32 0.0, %v6654
    %v6656 = vpop.f32.mrf.mxu0
    %v6657 = vpop.f32.mrf.mxu0
    %v6658 = vadd.f32 0.0, %v6657
    %v6659 = vpop.f32.mrf.mxu0
    %6660 = vmatprep.mubr.bf16.mxu0 0
    %6661 = vmatmul.mubr.bf16.gmra.mxu0 %v6383
    %v6662 = vpop.f32.mrf.mxu0
    %v6663 = vadd.f32 0.0, %v6662
    %v6664 = vpop.f32.mrf.mxu0
    %v6665 = vpop.f32.mrf.mxu0
    %v6666 = vadd.f32 0.0, %v6665
    %v6667 = vpop.f32.mrf.mxu0
    %6668 = vmatprep.mubr.bf16.mxu0 0
    %6669 = vmatmul.mubr.bf16.gmra.mxu0 %v6386
    %v6670 = vpop.f32.mrf.mxu0
    %v6671 = vadd.f32 0.0, %v6670
    %v6672 = vpop.f32.mrf.mxu0
    %v6673 = vpop.f32.mrf.mxu0
    %v6674 = vadd.f32 0.0, %v6673
    %v6675 = vpop.f32.mrf.mxu0
    %6676 = vmatprep.mubr.bf16.mxu0 0
    %6677 = vmatmul.mubr.bf16.gmra.mxu0 %v6389
    %v6678 = vpop.f32.mrf.mxu0
    %v6679 = vadd.f32 0.0, %v6678
    %v6680 = vpop.f32.mrf.mxu0
    %v6681 = vpop.f32.mrf.mxu0
    %v6682 = vadd.f32 0.0, %v6681
    %v6683 = vpop.f32.mrf.mxu0
    %6684 = vmatprep.mubr.bf16.mxu0 0
    %6685 = vmatmul.mubr.bf16.gmra.mxu0 %v6392
    %v6686 = vpop.f32.mrf.mxu0
    %v6687 = vadd.f32 0.0, %v6686
    %v6688 = vpop.f32.mrf.mxu0
    %v6689 = vpop.f32.mrf.mxu0
    %v6690 = vadd.f32 0.0, %v6689
    %v6691 = vpop.f32.mrf.mxu0
    %6692 = vmatprep.mubr.bf16.mxu0 0
    %6693 = vmatmul.mubr.bf16.gmra.mxu0 %v6395
    %v6694 = vpop.f32.mrf.mxu0
    %v6695 = vadd.f32 0.0, %v6694
    %v6696 = vpop.f32.mrf.mxu0
    %v6697 = vpop.f32.mrf.mxu0
    %v6698 = vadd.f32 0.0, %v6697
    %v6699 = vpop.f32.mrf.mxu0
    %6700 = vmatprep.mubr.bf16.mxu0 0
    %6701 = vmatmul.mubr.bf16.gmra.mxu0 %v6398
    %v6702 = vpop.f32.mrf.mxu0
    %v6703 = vadd.f32 0.0, %v6702
    %v6704 = vpop.f32.mrf.mxu0
    %v6705 = vpop.f32.mrf.mxu0
    %v6706 = vadd.f32 0.0, %v6705
    %v6707 = vpop.f32.mrf.mxu0
    %6708 = vmatprep.mubr.bf16.mxu0 0
    %6709 = vmatmul.mubr.bf16.gmra.mxu0 %v6401
    %v6710 = vpop.f32.mrf.mxu0
    %v6711 = vadd.f32 0.0, %v6710
    %v6712 = vpop.f32.mrf.mxu0
    %v6713 = vpop.f32.mrf.mxu0
    %v6714 = vadd.f32 0.0, %v6713
    %v6715 = vpop.f32.mrf.mxu0
    %6716 = vmatprep.mubr.bf16.mxu0 0
    %6717 = vmatmul.mubr.bf16.gmra.mxu0 %v6404
    %v6718 = vpop.f32.mrf.mxu0
    %v6719 = vadd.f32 0.0, %v6718
    %v6720 = vpop.f32.mrf.mxu0
    %v6721 = vpop.f32.mrf.mxu0
    %v6722 = vadd.f32 0.0, %v6721
    %v6723 = vpop.f32.mrf.mxu0
    %6724 = vmatprep.mubr.bf16.mxu0 0
    %6725 = vmatmul.mubr.bf16.gmra.mxu0 %v6407
    %v6726 = vpop.f32.mrf.mxu0
    %v6727 = vadd.f32 0.0, %v6726
    %v6728 = vpop.f32.mrf.mxu0
    %v6729 = vpop.f32.mrf.mxu0
    %v6730 = vadd.f32 0.0, %v6729
    %v6731 = vpop.f32.mrf.mxu0
    %6732 = vmatprep.mubr.bf16.mxu0 0
    %6733 = vmatmul.mubr.bf16.gmra.mxu0 %v6410
    %v6734 = vpop.f32.mrf.mxu0
    %v6735 = vadd.f32 0.0, %v6734
    %v6736 = vpop.f32.mrf.mxu0
    %v6737 = vpop.f32.mrf.mxu0
    %v6738 = vadd.f32 0.0, %v6737
    %v6739 = vpop.f32.mrf.mxu0
    %6740 = vmatprep.mubr.bf16.mxu0 0
    %6741 = vmatmul.mubr.bf16.gmra.mxu0 %v6413
    %v6742 = vpop.f32.mrf.mxu0
    %v6743 = vadd.f32 0.0, %v6742
    %v6744 = vpop.f32.mrf.mxu0
    %v6745 = vpop.f32.mrf.mxu0
    %v6746 = vadd.f32 0.0, %v6745
    %v6747 = vpop.f32.mrf.mxu0
    %6748 = vmatprep.mubr.bf16.mxu0 0
    %6749 = vmatmul.mubr.bf16.gmra.mxu0 %v6416
    %v6750 = vpop.f32.mrf.mxu0
    %v6751 = vadd.f32 0.0, %v6750
    %v6752 = vpop.f32.mrf.mxu0
    %v6753 = vpop.f32.mrf.mxu0
    %v6754 = vadd.f32 0.0, %v6753
    %v6755 = vpop.f32.mrf.mxu0
    %6756 = vmatprep.mubr.bf16.mxu0 0
    %6757 = vmatmul.mubr.bf16.gmra.mxu0 %v6419
    %v6758 = vpop.f32.mrf.mxu0
    %v6759 = vadd.f32 0.0, %v6758
    %v6760 = vpop.f32.mrf.mxu0
    %v6761 = vpop.f32.mrf.mxu0
    %v6762 = vadd.f32 0.0, %v6761
    %v6763 = vpop.f32.mrf.mxu0
    %6764 = vmatprep.mubr.bf16.mxu0 0
    %6765 = vmatmul.mubr.bf16.gmra.mxu0 %v6422
    %v6766 = vpop.f32.mrf.mxu0
    %v6767 = vadd.f32 0.0, %v6766
    %v6768 = vpop.f32.mrf.mxu0
    %v6769 = vpop.f32.mrf.mxu0
    %v6770 = vadd.f32 0.0, %v6769
    %v6771 = vpop.f32.mrf.mxu0
    %6772 = vmatprep.mubr.bf16.mxu0 0
    %6773 = vmatmul.mubr.bf16.gmra.mxu0 %v6425
    %v6774 = vpop.f32.mrf.mxu0
    %v6775 = vadd.f32 0.0, %v6774
    %v6776 = vpop.f32.mrf.mxu0
    %v6777 = vpop.f32.mrf.mxu0
    %v6778 = vadd.f32 0.0, %v6777
    %v6779 = vpop.f32.mrf.mxu0
    %6780 = vmatprep.mubr.bf16.mxu0 0
    %6781 = vmatmul.mubr.bf16.gmra.mxu0 %v6428
    %v6782 = vpop.f32.mrf.mxu0
    %v6783 = vadd.f32 0.0, %v6782
    %v6784 = vpop.f32.mrf.mxu0
    %v6785 = vpop.f32.mrf.mxu0
    %v6786 = vadd.f32 0.0, %v6785
    %v6787 = vpop.f32.mrf.mxu0
    %6788 = vmatprep.mubr.bf16.mxu0 0
    %6789 = vmatmul.mubr.bf16.gmra.mxu0 %v6431
    %v6790 = vpop.f32.mrf.mxu0
    %v6791 = vadd.f32 0.0, %v6790
    %v6792 = vpop.f32.mrf.mxu0
    %v6793 = vpop.f32.mrf.mxu0
    %v6794 = vpop.f32.mrf.mxu0
    %6795 = vdwg.mxu0
    %v6796 = vadd.f32 %v6227, %v6471
    %v6797 = vadd.f32 %v6228, %v6474
    %v6798 = vadd.f32 %v6229, %v6479
    %v6799 = vadd.f32 %v6230, %v6482
    %v6800 = vadd.f32 %v6231, %v6487
    %v6801 = vadd.f32 %v6232, %v6490
    %v6802 = vadd.f32 %v6233, %v6495
    %v6803 = vadd.f32 %v6234, %v6498
    %v6804 = vadd.f32 %v6235, %v6503
    %v6805 = vadd.f32 %v6236, %v6506
    %v6806 = vadd.f32 %v6237, %v6511
    %v6807 = vadd.f32 %v6238, %v6514
    %v6808 = vadd.f32 %v6239, %v6519
    %v6809 = vadd.f32 %v6240, %v6522
    %v6810 = vadd.f32 %v6241, %v6527
    %v6811 = vadd.f32 %v6242, %v6530
    %v6812 = vadd.f32 %v6243, %v6535
    %v6813 = vadd.f32 %v6244, %v6538
    %v6814 = vadd.f32 %v6245, %v6543
    %v6815 = vadd.f32 %v6246, %v6546
    %v6816 = vadd.f32 %v6247, %v6551
    %v6817 = vadd.f32 %v6248, %v6554
    %v6818 = vadd.f32 %v6249, %v6559
    %v6819 = vadd.f32 %v6250, %v6562
    %v6820 = vadd.f32 %v6251, %v6567
    %v6821 = vadd.f32 %v6252, %v6570
    %v6822 = vadd.f32 %v6253, %v6575
    %v6823 = vadd.f32 %v6254, %v6578
    %v6824 = vadd.f32 %v6255, %v6583
    %v6825 = vadd.f32 %v6256, %v6586
    %v6826 = vadd.f32 %v6257, %v6591
    %v6827 = vadd.f32 %v6258, %v6594
    %v6828 = vadd.f32 %v6259, %v6599
    %v6829 = vadd.f32 %v6260, %v6602
    %v6830 = vadd.f32 %v6261, %v6607
    %v6831 = vadd.f32 %v6262, %v6610
    %v6832 = vadd.f32 %v6263, %v6615
    %v6833 = vadd.f32 %v6264, %v6618
    %v6834 = vadd.f32 %v6265, %v6623
    %v6835 = vadd.f32 %v6266, %v6626
    %v6836 = vadd.f32 %v6267, %v6631
    %v6837 = vadd.f32 %v6268, %v6634
    %v6838 = vadd.f32 %v6269, %v6639
    %v6839 = vadd.f32 %v6270, %v6642
    %v6840 = vadd.f32 %v6271, %v6647
    %v6841 = vadd.f32 %v6272, %v6650
    %v6842 = vadd.f32 %v6273, %v6655
    %v6843 = vadd.f32 %v6274, %v6658
    %v6844 = vadd.f32 %v6275, %v6663
    %v6845 = vadd.f32 %v6276, %v6666
    %v6846 = vadd.f32 %v6277, %v6671
    %v6847 = vadd.f32 %v6278, %v6674
    %v6848 = vadd.f32 %v6279, %v6679
    %v6849 = vadd.f32 %v6280, %v6682
    %v6850 = vadd.f32 %v6281, %v6687
    %v6851 = vadd.f32 %v6282, %v6690
    %v6852 = vadd.f32 %v6283, %v6695
    %v6853 = vadd.f32 %v6284, %v6698
    %v6854 = vadd.f32 %v6285, %v6703
    %v6855 = vadd.f32 %v6286, %v6706
    %v6856 = vadd.f32 %v6287, %v6711
    %v6857 = vadd.f32 %v6288, %v6714
    %v6858 = vadd.f32 %v6289, %v6719
    %v6859 = vadd.f32 %v6290, %v6722
    %v6860 = vadd.f32 %v6291, %v6727
    %v6861 = vadd.f32 %v6292, %v6730
    %v6862 = vadd.f32 %v6293, %v6735
    %v6863 = vadd.f32 %v6294, %v6738
    %v6864 = vadd.f32 %v6295, %v6743
    %v6865 = vadd.f32 %v6296, %v6746
    %v6866 = vadd.f32 %v6297, %v6751
    %v6867 = vadd.f32 %v6298, %v6754
    %v6868 = vadd.f32 %v6299, %v6759
    %v6869 = vadd.f32 %v6300, %v6762
    %v6870 = vadd.f32 %v6301, %v6767
    %v6871 = vadd.f32 %v6302, %v6770
    %v6872 = vadd.f32 %v6303, %v6775
    %v6873 = vadd.f32 %v6304, %v6778
    %v6874 = vadd.f32 %v6305, %v6783
    %v6875 = vadd.f32 %v6306, %v6786
    %v6876 = vadd.f32 %v6307, %v6791
    %6877 = vst.msk [vmem:[#allocation2] sm:$0xff] %vm52, %v6796
    %6878 = vst.msk [vmem:[#allocation2 + $0x8] sm:$0xff] %vm52, %v6797
    %6879 = vst.msk [vmem:[#allocation2 + $0x10] sm:$0xff] %vm52, %v6798
    %6880 = vst.msk [vmem:[#allocation2 + $0x18] sm:$0xff] %vm52, %v6799
    %6881 = vst.msk [vmem:[#allocation2 + $0x20] sm:$0xff] %vm52, %v6800
    %6882 = vst.msk [vmem:[#allocation2 + $0x28] sm:$0xff] %vm52, %v6801
    %6883 = vst.msk [vmem:[#allocation2 + $0x30] sm:$0xff] %vm52, %v6802
    %6884 = vst.msk [vmem:[#allocation2 + $0x38] sm:$0xff] %vm52, %v6803
    %6885 = vst.msk [vmem:[#allocation2 + $0x40] sm:$0xff] %vm52, %v6804
    %6886 = vst.msk [vmem:[#allocation2 + $0x48] sm:$0xff] %vm52, %v6805
    %6887 = vst.msk [vmem:[#allocation2 + $0x50] sm:$0xff] %vm52, %v6806
    %6888 = vst.msk [vmem:[#allocation2 + $0x58] sm:$0xff] %vm52, %v6807
    %6889 = vst.msk [vmem:[#allocation2 + $0x60] sm:$0xff] %vm52, %v6808
    %6890 = vst.msk [vmem:[#allocation2 + $0x68] sm:$0xff] %vm52, %v6809
    %6891 = vst.msk [vmem:[#allocation2 + $0x70] sm:$0xff] %vm52, %v6810
    %6892 = vst.msk [vmem:[#allocation2 + $0x78] sm:$0xff] %vm52, %v6811
    %6893 = vst.msk [vmem:[#allocation2 + $0x80] sm:$0xff] %vm52, %v6812
    %6894 = vst.msk [vmem:[#allocation2 + $0x88] sm:$0xff] %vm52, %v6813
    %6895 = vst.msk [vmem:[#allocation2 + $0x90] sm:$0xff] %vm52, %v6814
    %6896 = vst.msk [vmem:[#allocation2 + $0x98] sm:$0xff] %vm52, %v6815
    %6897 = vst.msk [vmem:[#allocation2 + $0xa0] sm:$0xff] %vm52, %v6816
    %6898 = vst.msk [vmem:[#allocation2 + $0xa8] sm:$0xff] %vm52, %v6817
    %6899 = vst.msk [vmem:[#allocation2 + $0xb0] sm:$0xff] %vm52, %v6818
    %6900 = vst.msk [vmem:[#allocation2 + $0xb8] sm:$0xff] %vm52, %v6819
    %6901 = vst.msk [vmem:[#allocation2 + $0xc0] sm:$0xff] %vm52, %v6820
    %6902 = vst.msk [vmem:[#allocation2 + $0xc8] sm:$0xff] %vm52, %v6821
    %6903 = vst.msk [vmem:[#allocation2 + $0xd0] sm:$0xff] %vm52, %v6822
    %6904 = vst.msk [vmem:[#allocation2 + $0xd8] sm:$0xff] %vm52, %v6823
    %6905 = vst.msk [vmem:[#allocation2 + $0xe0] sm:$0xff] %vm52, %v6824
    %6906 = vst.msk [vmem:[#allocation2 + $0xe8] sm:$0xff] %vm52, %v6825
    %6907 = vst.msk [vmem:[#allocation2 + $0xf0] sm:$0xff] %vm52, %v6826
    %6908 = vst.msk [vmem:[#allocation2 + $0xf8] sm:$0xff] %vm52, %v6827
    %6909 = vst.msk [vmem:[#allocation2 + $0x100] sm:$0xff] %vm52, %v6828
    %6910 = vst.msk [vmem:[#allocation2 + $0x108] sm:$0xff] %vm52, %v6829
    %6911 = vst.msk [vmem:[#allocation2 + $0x110] sm:$0xff] %vm52, %v6830
    %6912 = vst.msk [vmem:[#allocation2 + $0x118] sm:$0xff] %vm52, %v6831
    %6913 = vst.msk [vmem:[#allocation2 + $0x120] sm:$0xff] %vm52, %v6832
    %6914 = vst.msk [vmem:[#allocation2 + $0x128] sm:$0xff] %vm52, %v6833
    %6915 = vst.msk [vmem:[#allocation2 + $0x130] sm:$0xff] %vm52, %v6834
    %6916 = vst.msk [vmem:[#allocation2 + $0x138] sm:$0xff] %vm52, %v6835
    %6917 = vst.msk [vmem:[#allocation2 + $0x140] sm:$0xff] %vm52, %v6836
    %6918 = vst.msk [vmem:[#allocation2 + $0x148] sm:$0xff] %vm52, %v6837
    %6919 = vst.msk [vmem:[#allocation2 + $0x150] sm:$0xff] %vm52, %v6838
    %6920 = vst.msk [vmem:[#allocation2 + $0x158] sm:$0xff] %vm52, %v6839
    %6921 = vst.msk [vmem:[#allocation2 + $0x160] sm:$0xff] %vm52, %v6840
    %6922 = vst.msk [vmem:[#allocation2 + $0x168] sm:$0xff] %vm52, %v6841
    %6923 = vst.msk [vmem:[#allocation2 + $0x170] sm:$0xff] %vm52, %v6842
    %6924 = vst.msk [vmem:[#allocation2 + $0x178] sm:$0xff] %vm52, %v6843
    %6925 = vst.msk [vmem:[#allocation2 + $0x180] sm:$0xff] %vm52, %v6844
    %6926 = vst.msk [vmem:[#allocation2 + $0x188] sm:$0xff] %vm52, %v6845
    %6927 = vst.msk [vmem:[#allocation2 + $0x190] sm:$0xff] %vm52, %v6846
    %6928 = vst.msk [vmem:[#allocation2 + $0x198] sm:$0xff] %vm52, %v6847
    %6929 = vst.msk [vmem:[#allocation2 + $0x1a0] sm:$0xff] %vm52, %v6848
    %6930 = vst.msk [vmem:[#allocation2 + $0x1a8] sm:$0xff] %vm52, %v6849
    %6931 = vst.msk [vmem:[#allocation2 + $0x1b0] sm:$0xff] %vm52, %v6850
    %6932 = vst.msk [vmem:[#allocation2 + $0x1b8] sm:$0xff] %vm52, %v6851
    %6933 = vst.msk [vmem:[#allocation2 + $0x1c0] sm:$0xff] %vm52, %v6852
    %6934 = vst.msk [vmem:[#allocation2 + $0x1c8] sm:$0xff] %vm52, %v6853
    %6935 = vst.msk [vmem:[#allocation2 + $0x1d0] sm:$0xff] %vm52, %v6854
    %6936 = vst.msk [vmem:[#allocation2 + $0x1d8] sm:$0xff] %vm52, %v6855
    %6937 = vst.msk [vmem:[#allocation2 + $0x1e0] sm:$0xff] %vm52, %v6856
    %6938 = vst.msk [vmem:[#allocation2 + $0x1e8] sm:$0xff] %vm52, %v6857
    %6939 = vst.msk [vmem:[#allocation2 + $0x1f0] sm:$0xff] %vm52, %v6858
    %6940 = vst.msk [vmem:[#allocation2 + $0x1f8] sm:$0xff] %vm52, %v6859
    %6941 = vst.msk [vmem:[#allocation2 + $0x200] sm:$0xff] %vm52, %v6860
    %6942 = vst.msk [vmem:[#allocation2 + $0x208] sm:$0xff] %vm52, %v6861
    %6943 = vst.msk [vmem:[#allocation2 + $0x210] sm:$0xff] %vm52, %v6862
    %6944 = vst.msk [vmem:[#allocation2 + $0x218] sm:$0xff] %vm52, %v6863
    %6945 = vst.msk [vmem:[#allocation2 + $0x220] sm:$0xff] %vm52, %v6864
    %6946 = vst.msk [vmem:[#allocation2 + $0x228] sm:$0xff] %vm52, %v6865
    %6947 = vst.msk [vmem:[#allocation2 + $0x230] sm:$0xff] %vm52, %v6866
    %6948 = vst.msk [vmem:[#allocation2 + $0x238] sm:$0xff] %vm52, %v6867
    %6949 = vst.msk [vmem:[#allocation2 + $0x240] sm:$0xff] %vm52, %v6868
    %6950 = vst.msk [vmem:[#allocation2 + $0x248] sm:$0xff] %vm52, %v6869
    %6951 = vst.msk [vmem:[#allocation2 + $0x250] sm:$0xff] %vm52, %v6870
    %6952 = vst.msk [vmem:[#allocation2 + $0x258] sm:$0xff] %vm52, %v6871
    %6953 = vst.msk [vmem:[#allocation2 + $0x260] sm:$0xff] %vm52, %v6872
    %6954 = vst.msk [vmem:[#allocation2 + $0x268] sm:$0xff] %vm52, %v6873
    %6955 = vst.msk [vmem:[#allocation2 + $0x270] sm:$0xff] %vm52, %v6874
    %6956 = vst.msk [vmem:[#allocation2 + $0x278] sm:$0xff] %vm52, %v6875
    %6957 = vst.msk [vmem:[#allocation2 + $0x280] sm:$0xff] %vm52, %v6876
    %v6958 = vld [vmem:[%s0 + $0x26] sm:$0xff]
    %v6959 = vld [vmem:[%s0 + $0x2e] sm:$0xff]
    %v6960 = vld [vmem:[%s0 + $0x36] sm:$0xff]
    %v6961 = vld [vmem:[%s0 + $0x3e] sm:$0xff]
    %v6962 = vld [vmem:[%s0 + $0x46] sm:$0xff]
    %v6963 = vld [vmem:[%s0 + $0x4e] sm:$0xff]
    %v6964 = vld [vmem:[%s0 + $0x56] sm:$0xff]
    %v6965 = vld [vmem:[%s0 + $0x5e] sm:$0xff]
    %v6966 = vld [vmem:[%s0 + $0x66] sm:$0xff]
    %v6967 = vld [vmem:[%s0 + $0x6e] sm:$0xff]
    %v6968 = vld [vmem:[%s0 + $0x76] sm:$0xff]
    %v6969 = vld [vmem:[%s0 + $0x7e] sm:$0xff]
    %v6970 = vld [vmem:[%s0 + $0x86] sm:$0xff]
    %v6971 = vld [vmem:[%s0 + $0x8e] sm:$0xff]
    %v6972 = vld [vmem:[%s0 + $0x96] sm:$0xff]
    %v6973 = vld [vmem:[%s0 + $0x9e] sm:$0xff]
    %v6974 = vld [vmem:[%s0 + $0xa6] sm:$0xff]
    %v6975 = vld [vmem:[%s0 + $0xae] sm:$0xff]
    %v6976 = vld [vmem:[%s0 + $0xb6] sm:$0xff]
    %v6977 = vld [vmem:[%s0 + $0xbe] sm:$0xff]
    %v6978 = vld [vmem:[%s0 + $0xc6] sm:$0xff]
    %v6979 = vld [vmem:[%s0 + $0xce] sm:$0xff]
    %v6980 = vld [vmem:[%s0 + $0xd6] sm:$0xff]
    %v6981 = vld [vmem:[%s0 + $0xde] sm:$0xff]
    %v6982 = vld [vmem:[%s0 + $0xe6] sm:$0xff]
    %v6983 = vld [vmem:[%s0 + $0xee] sm:$0xff]
    %v6984 = vld [vmem:[%s0 + $0xf6] sm:$0xff]
    %v6985 = vld [vmem:[%s0 + $0xfe] sm:$0xff]
    %v6986 = vld [vmem:[%s0 + $0x106] sm:$0xff]
    %v6987 = vld [vmem:[%s0 + $0x10e] sm:$0xff]
    %v6988 = vld [vmem:[%s0 + $0x116] sm:$0xff]
    %v6989 = vld [vmem:[%s0 + $0x11e] sm:$0xff]
    %v6990 = vld [vmem:[%s0 + $0x126] sm:$0xff]
    %v6991 = vld [vmem:[%s0 + $0x12e] sm:$0xff]
    %v6992 = vld [vmem:[%s0 + $0x136] sm:$0xff]
    %v6993 = vld [vmem:[%s0 + $0x13e] sm:$0xff]
    %v6994 = vld [vmem:[%s0 + $0x146] sm:$0xff]
    %v6995 = vld [vmem:[%s0 + $0x14e] sm:$0xff]
    %v6996 = vld [vmem:[%s0 + $0x156] sm:$0xff]
    %v6997 = vld [vmem:[%s0 + $0x15e] sm:$0xff]
    %v6998 = vld [vmem:[%s0 + $0x166] sm:$0xff]
    %v6999 = vld [vmem:[%s0 + $0x16e] sm:$0xff]
    %v7000 = vld [vmem:[%s0 + $0x176] sm:$0xff]
    %v7001 = vld [vmem:[%s0 + $0x17e] sm:$0xff]
    %v7002 = vld [vmem:[%s0 + $0x186] sm:$0xff]
    %v7003 = vld [vmem:[%s0 + $0x18e] sm:$0xff]
    %v7004 = vld [vmem:[%s0 + $0x196] sm:$0xff]
    %v7005 = vld [vmem:[%s0 + $0x19e] sm:$0xff]
    %v7006 = vld [vmem:[%s0 + $0x1a6] sm:$0xff]
    %v7007 = vld [vmem:[%s0 + $0x1ae] sm:$0xff]
    %v7008 = vld [vmem:[%s0 + $0x1b6] sm:$0xff]
    %v7009 = vld [vmem:[%s0 + $0x1be] sm:$0xff]
    %v7010 = vld [vmem:[%s0 + $0x1c6] sm:$0xff]
    %v7011 = vld [vmem:[%s0 + $0x1ce] sm:$0xff]
    %v7012 = vld [vmem:[%s0 + $0x1d6] sm:$0xff]
    %v7013 = vld [vmem:[%s0 + $0x1de] sm:$0xff]
    %v7014 = vld [vmem:[%s0 + $0x1e6] sm:$0xff]
    %v7015 = vld [vmem:[%s0 + $0x1ee] sm:$0xff]
    %v7016 = vld [vmem:[%s0 + $0x1f6] sm:$0xff]
    %v7017 = vld [vmem:[%s0 + $0x1fe] sm:$0xff]
    %v7018 = vld [vmem:[%s0 + $0x206] sm:$0xff]
    %v7019 = vld [vmem:[%s0 + $0x20e] sm:$0xff]
    %v7020 = vld [vmem:[%s0 + $0x216] sm:$0xff]
    %v7021 = vld [vmem:[%s0 + $0x21e] sm:$0xff]
    %v7022 = vld [vmem:[%s0 + $0x226] sm:$0xff]
    %v7023 = vld [vmem:[%s0 + $0x22e] sm:$0xff]
    %v7024 = vld [vmem:[%s0 + $0x236] sm:$0xff]
    %v7025 = vld [vmem:[%s0 + $0x23e] sm:$0xff]
    %v7026 = vld [vmem:[%s0 + $0x246] sm:$0xff]
    %v7027 = vld [vmem:[%s0 + $0x24e] sm:$0xff]
    %v7028 = vld [vmem:[%s0 + $0x256] sm:$0xff]
    %v7029 = vld [vmem:[%s0 + $0x25e] sm:$0xff]
    %v7030 = vld [vmem:[%s0 + $0x266] sm:$0xff]
    %v7031 = vld [vmem:[%s0 + $0x26e] sm:$0xff]
    %v7032 = vld [vmem:[%s0 + $0x276] sm:$0xff]
    %v7033 = vld [vmem:[%s0 + $0x27e] sm:$0xff]
    %v7034 = vld [vmem:[%s0 + $0x286] sm:$0xff]
    %v7035 = vld [vmem:[%s0 + $0x28e] sm:$0xff]
    %v7036 = vld [vmem:[%s0 + $0x296] sm:$0xff]
    %v7037 = vld [vmem:[%s0 + $0x29e] sm:$0xff]
    %v7038 = vld [vmem:[%s0 + $0x2a6] sm:$0xff]
    %v7039 = vpack.c.bf16 %v6959, %v6958
    %v7040 = vpack.c.bf16 %v6961, %v6960
    %v7041 = vpack.c.bf16 %v6963, %v6962
    %v7042 = vpack.c.bf16 %v6965, %v6964
    %v7043 = vpack.c.bf16 %v6967, %v6966
    %v7044 = vpack.c.bf16 %v6969, %v6968
    %v7045 = vpack.c.bf16 %v6971, %v6970
    %v7046 = vpack.c.bf16 %v6973, %v6972
    %v7047 = vpack.c.bf16 %v6975, %v6974
    %v7048 = vpack.c.bf16 %v6977, %v6976
    %v7049 = vpack.c.bf16 %v6979, %v6978
    %v7050 = vpack.c.bf16 %v6981, %v6980
    %v7051 = vpack.c.bf16 %v6983, %v6982
    %v7052 = vpack.c.bf16 %v6985, %v6984
    %v7053 = vpack.c.bf16 %v6987, %v6986
    %v7054 = vpack.c.bf16 %v6989, %v6988
    %v7055 = vpack.c.bf16 %v6991, %v6990
    %v7056 = vpack.c.bf16 %v6993, %v6992
    %v7057 = vpack.c.bf16 %v6995, %v6994
    %v7058 = vpack.c.bf16 %v6997, %v6996
    %v7059 = vpack.c.bf16 %v6999, %v6998
    %v7060 = vpack.c.bf16 %v7001, %v7000
    %v7061 = vpack.c.bf16 %v7003, %v7002
    %v7062 = vpack.c.bf16 %v7005, %v7004
    %v7063 = vpack.c.bf16 %v7007, %v7006
    %v7064 = vpack.c.bf16 %v7009, %v7008
    %v7065 = vpack.c.bf16 %v7011, %v7010
    %v7066 = vpack.c.bf16 %v7013, %v7012
    %v7067 = vpack.c.bf16 %v7015, %v7014
    %v7068 = vpack.c.bf16 %v7017, %v7016
    %v7069 = vpack.c.bf16 %v7019, %v7018
    %v7070 = vpack.c.bf16 %v7021, %v7020
    %v7071 = vpack.c.bf16 %v7023, %v7022
    %v7072 = vpack.c.bf16 %v7025, %v7024
    %v7073 = vpack.c.bf16 %v7027, %v7026
    %v7074 = vpack.c.bf16 %v7029, %v7028
    %v7075 = vpack.c.bf16 %v7031, %v7030
    %v7076 = vpack.c.bf16 %v7033, %v7032
    %v7077 = vpack.c.bf16 %v7035, %v7034
    %v7078 = vpack.c.bf16 %v7037, %v7036
    %v7079 = vpack.c.bf16 %v7038, %v7038
    %v7080 = vld [vmem:[#allocation2] sm:$0xff]
    %v7081 = vld [vmem:[#allocation2 + $0x8] sm:$0xff]
    %v7082 = vld [vmem:[#allocation2 + $0x10] sm:$0xff]
    %v7083 = vld [vmem:[#allocation2 + $0x18] sm:$0xff]
    %v7084 = vld [vmem:[#allocation2 + $0x20] sm:$0xff]
    %v7085 = vld [vmem:[#allocation2 + $0x28] sm:$0xff]
    %v7086 = vld [vmem:[#allocation2 + $0x30] sm:$0xff]
    %v7087 = vld [vmem:[#allocation2 + $0x38] sm:$0xff]
    %v7088 = vld [vmem:[#allocation2 + $0x40] sm:$0xff]
    %v7089 = vld [vmem:[#allocation2 + $0x48] sm:$0xff]
    %v7090 = vld [vmem:[#allocation2 + $0x50] sm:$0xff]
    %v7091 = vld [vmem:[#allocation2 + $0x58] sm:$0xff]
    %v7092 = vld [vmem:[#allocation2 + $0x60] sm:$0xff]
    %v7093 = vld [vmem:[#allocation2 + $0x68] sm:$0xff]
    %v7094 = vld [vmem:[#allocation2 + $0x70] sm:$0xff]
    %v7095 = vld [vmem:[#allocation2 + $0x78] sm:$0xff]
    %v7096 = vld [vmem:[#allocation2 + $0x80] sm:$0xff]
    %v7097 = vld [vmem:[#allocation2 + $0x88] sm:$0xff]
    %v7098 = vld [vmem:[#allocation2 + $0x90] sm:$0xff]
    %v7099 = vld [vmem:[#allocation2 + $0x98] sm:$0xff]
    %v7100 = vld [vmem:[#allocation2 + $0xa0] sm:$0xff]
    %v7101 = vld [vmem:[#allocation2 + $0xa8] sm:$0xff]
    %v7102 = vld [vmem:[#allocation2 + $0xb0] sm:$0xff]
    %v7103 = vld [vmem:[#allocation2 + $0xb8] sm:$0xff]
    %v7104 = vld [vmem:[#allocation2 + $0xc0] sm:$0xff]
    %v7105 = vld [vmem:[#allocation2 + $0xc8] sm:$0xff]
    %v7106 = vld [vmem:[#allocation2 + $0xd0] sm:$0xff]
    %v7107 = vld [vmem:[#allocation2 + $0xd8] sm:$0xff]
    %v7108 = vld [vmem:[#allocation2 + $0xe0] sm:$0xff]
    %v7109 = vld [vmem:[#allocation2 + $0xe8] sm:$0xff]
    %v7110 = vld [vmem:[#allocation2 + $0xf0] sm:$0xff]
    %v7111 = vld [vmem:[#allocation2 + $0xf8] sm:$0xff]
    %v7112 = vld [vmem:[#allocation2 + $0x100] sm:$0xff]
    %v7113 = vld [vmem:[#allocation2 + $0x108] sm:$0xff]
    %v7114 = vld [vmem:[#allocation2 + $0x110] sm:$0xff]
    %v7115 = vld [vmem:[#allocation2 + $0x118] sm:$0xff]
    %v7116 = vld [vmem:[#allocation2 + $0x120] sm:$0xff]
    %v7117 = vld [vmem:[#allocation2 + $0x128] sm:$0xff]
    %v7118 = vld [vmem:[#allocation2 + $0x130] sm:$0xff]
    %v7119 = vld [vmem:[#allocation2 + $0x138] sm:$0xff]
    %v7120 = vld [vmem:[#allocation2 + $0x140] sm:$0xff]
    %v7121 = vld [vmem:[#allocation2 + $0x148] sm:$0xff]
    %v7122 = vld [vmem:[#allocation2 + $0x150] sm:$0xff]
    %v7123 = vld [vmem:[#allocation2 + $0x158] sm:$0xff]
    %v7124 = vld [vmem:[#allocation2 + $0x160] sm:$0xff]
    %v7125 = vld [vmem:[#allocation2 + $0x168] sm:$0xff]
    %v7126 = vld [vmem:[#allocation2 + $0x170] sm:$0xff]
    %v7127 = vld [vmem:[#allocation2 + $0x178] sm:$0xff]
    %v7128 = vld [vmem:[#allocation2 + $0x180] sm:$0xff]
    %v7129 = vld [vmem:[#allocation2 + $0x188] sm:$0xff]
    %v7130 = vld [vmem:[#allocation2 + $0x190] sm:$0xff]
    %v7131 = vld [vmem:[#allocation2 + $0x198] sm:$0xff]
    %v7132 = vld [vmem:[#allocation2 + $0x1a0] sm:$0xff]
    %v7133 = vld [vmem:[#allocation2 + $0x1a8] sm:$0xff]
    %v7134 = vld [vmem:[#allocation2 + $0x1b0] sm:$0xff]
    %v7135 = vld [vmem:[#allocation2 + $0x1b8] sm:$0xff]
    %v7136 = vld [vmem:[#allocation2 + $0x1c0] sm:$0xff]
    %v7137 = vld [vmem:[#allocation2 + $0x1c8] sm:$0xff]
    %v7138 = vld [vmem:[#allocation2 + $0x1d0] sm:$0xff]
    %v7139 = vld [vmem:[#allocation2 + $0x1d8] sm:$0xff]
    %v7140 = vld [vmem:[#allocation2 + $0x1e0] sm:$0xff]
    %v7141 = vld [vmem:[#allocation2 + $0x1e8] sm:$0xff]
    %v7142 = vld [vmem:[#allocation2 + $0x1f0] sm:$0xff]
    %v7143 = vld [vmem:[#allocation2 + $0x1f8] sm:$0xff]
    %v7144 = vld [vmem:[#allocation2 + $0x200] sm:$0xff]
    %v7145 = vld [vmem:[#allocation2 + $0x208] sm:$0xff]
    %v7146 = vld [vmem:[#allocation2 + $0x210] sm:$0xff]
    %v7147 = vld [vmem:[#allocation2 + $0x218] sm:$0xff]
    %v7148 = vld [vmem:[#allocation2 + $0x220] sm:$0xff]
    %v7149 = vld [vmem:[#allocation2 + $0x228] sm:$0xff]
    %v7150 = vld [vmem:[#allocation2 + $0x230] sm:$0xff]
    %v7151 = vld [vmem:[#allocation2 + $0x238] sm:$0xff]
    %v7152 = vld [vmem:[#allocation2 + $0x240] sm:$0xff]
    %v7153 = vld [vmem:[#allocation2 + $0x248] sm:$0xff]
    %v7154 = vld [vmem:[#allocation2 + $0x250] sm:$0xff]
    %v7155 = vld [vmem:[#allocation2 + $0x258] sm:$0xff]
    %v7156 = vld [vmem:[#allocation2 + $0x260] sm:$0xff]
    %v7157 = vld [vmem:[#allocation2 + $0x268] sm:$0xff]
    %v7158 = vld [vmem:[#allocation2 + $0x270] sm:$0xff]
    %v7159 = vld [vmem:[#allocation2 + $0x278] sm:$0xff]
    %v7160 = vld [vmem:[#allocation2 + $0x280] sm:$0xff]
    %s7161 = scalar_lea.vmem %s2, 32
    %v7162 = vld [vmem:[%s7161] sm:$0xf]
    %v7164 = vsel %vm52, %v7039, 0
    %v7167 = vsel %vm52, %v7040, 0
    %v7170 = vsel %vm52, %v7041, 0
    %v7173 = vsel %vm52, %v7042, 0
    %v7176 = vsel %vm52, %v7043, 0
    %v7179 = vsel %vm52, %v7044, 0
    %v7182 = vsel %vm52, %v7045, 0
    %v7185 = vsel %vm52, %v7046, 0
    %v7188 = vsel %vm52, %v7047, 0
    %v7191 = vsel %vm52, %v7048, 0
    %v7194 = vsel %vm52, %v7049, 0
    %v7197 = vsel %vm52, %v7050, 0
    %v7200 = vsel %vm52, %v7051, 0
    %v7203 = vsel %vm52, %v7052, 0
    %v7206 = vsel %vm52, %v7053, 0
    %v7209 = vsel %vm52, %v7054, 0
    %v7212 = vsel %vm52, %v7055, 0
    %v7215 = vsel %vm52, %v7056, 0
    %v7218 = vsel %vm52, %v7057, 0
    %v7221 = vsel %vm52, %v7058, 0
    %v7224 = vsel %vm52, %v7059, 0
    %v7227 = vsel %vm52, %v7060, 0
    %v7230 = vsel %vm52, %v7061, 0
    %v7233 = vsel %vm52, %v7062, 0
    %v7236 = vsel %vm52, %v7063, 0
    %v7239 = vsel %vm52, %v7064, 0
    %v7242 = vsel %vm52, %v7065, 0
    %v7245 = vsel %vm52, %v7066, 0
    %v7248 = vsel %vm52, %v7067, 0
    %v7251 = vsel %vm52, %v7068, 0
    %v7254 = vsel %vm52, %v7069, 0
    %v7257 = vsel %vm52, %v7070, 0
    %v7260 = vsel %vm52, %v7071, 0
    %v7263 = vsel %vm52, %v7072, 0
    %v7266 = vsel %vm52, %v7073, 0
    %v7269 = vsel %vm52, %v7074, 0
    %v7272 = vsel %vm52, %v7075, 0
    %v7275 = vsel %vm52, %v7076, 0
    %v7278 = vsel %vm52, %v7077, 0
    %v7281 = vsel %vm52, %v7078, 0
    %v7284 = vsel %vm52, %v7079, 0
    %v7287 = vsel %vm461, %v7162, 0
    %7289 = vmatprep.subr.bf16.mxu0 0
    %7290 = vmatpush1.bf16.msra.mxu0 0
    %7291 = vmatprep.subr.bf16.mxu0 0
    %7292 = vmatpush1.bf16.msra.mxu0 0
    %7293 = vmatprep.subr.bf16.mxu0 0
    %7294 = vmatpush1.bf16.msra.mxu0 0
    %7295 = vmatprep.subr.bf16.mxu0 0
    %7296 = vmatpush1.bf16.msra.mxu0 0
    %7297 = vmatprep.subr.bf16.mxu0 0
    %7298 = vmatpush1.bf16.msra.mxu0 0
    %7299 = vmatprep.subr.bf16.mxu0 0
    %7300 = vmatpush1.bf16.msra.mxu0 0
    %7301 = vmatprep.subr.bf16.mxu0 0
    %7302 = vmatpush1.bf16.msra.mxu0 0
    %7303 = vmatprep.subr.bf16.mxu0 0
    %7304 = vmatpush1.bf16.msra.mxu0 %v7287
    %7305 = vmatprep.subr.bf16.mxu0 0
    %7306 = vmatpush2.bf16.msra.mxu0 0
    %7307 = vmatprep.subr.bf16.mxu0 0
    %7308 = vmatpush2.bf16.msra.mxu0 0
    %7309 = vmatprep.subr.bf16.mxu0 0
    %7310 = vmatpush2.bf16.msra.mxu0 0
    %7311 = vmatprep.subr.bf16.mxu0 0
    %7312 = vmatpush2.bf16.msra.mxu0 0
    %7313 = vmatprep.subr.bf16.mxu0 0
    %7314 = vmatpush2.bf16.msra.mxu0 0
    %7315 = vmatprep.subr.bf16.mxu0 0
    %7316 = vmatpush2.bf16.msra.mxu0 0
    %7317 = vmatprep.subr.bf16.mxu0 0
    %7318 = vmatpush2.bf16.msra.mxu0 0
    %7319 = vmatprep.subr.bf16.mxu0 0
    %7320 = vmatpush2.bf16.msra.mxu0 0
    %7321 = vmatprep.mubr.bf16.mxu0 0
    %7322 = vmatmul.mubr.bf16.gmra.mxu0 %v7164
    %v7323 = vpop.f32.mrf.mxu0
    %v7324 = vadd.f32 0.0, %v7323
    %v7325 = vpop.f32.mrf.mxu0
    %v7326 = vpop.f32.mrf.mxu0
    %v7327 = vadd.f32 0.0, %v7326
    %v7328 = vpop.f32.mrf.mxu0
    %7329 = vmatprep.mubr.bf16.mxu0 0
    %7330 = vmatmul.mubr.bf16.gmra.mxu0 %v7167
    %v7331 = vpop.f32.mrf.mxu0
    %v7332 = vadd.f32 0.0, %v7331
    %v7333 = vpop.f32.mrf.mxu0
    %v7334 = vpop.f32.mrf.mxu0
    %v7335 = vadd.f32 0.0, %v7334
    %v7336 = vpop.f32.mrf.mxu0
    %7337 = vmatprep.mubr.bf16.mxu0 0
    %7338 = vmatmul.mubr.bf16.gmra.mxu0 %v7170
    %v7339 = vpop.f32.mrf.mxu0
    %v7340 = vadd.f32 0.0, %v7339
    %v7341 = vpop.f32.mrf.mxu0
    %v7342 = vpop.f32.mrf.mxu0
    %v7343 = vadd.f32 0.0, %v7342
    %v7344 = vpop.f32.mrf.mxu0
    %7345 = vmatprep.mubr.bf16.mxu0 0
    %7346 = vmatmul.mubr.bf16.gmra.mxu0 %v7173
    %v7347 = vpop.f32.mrf.mxu0
    %v7348 = vadd.f32 0.0, %v7347
    %v7349 = vpop.f32.mrf.mxu0
    %v7350 = vpop.f32.mrf.mxu0
    %v7351 = vadd.f32 0.0, %v7350
    %v7352 = vpop.f32.mrf.mxu0
    %7353 = vmatprep.mubr.bf16.mxu0 0
    %7354 = vmatmul.mubr.bf16.gmra.mxu0 %v7176
    %v7355 = vpop.f32.mrf.mxu0
    %v7356 = vadd.f32 0.0, %v7355
    %v7357 = vpop.f32.mrf.mxu0
    %v7358 = vpop.f32.mrf.mxu0
    %v7359 = vadd.f32 0.0, %v7358
    %v7360 = vpop.f32.mrf.mxu0
    %7361 = vmatprep.mubr.bf16.mxu0 0
    %7362 = vmatmul.mubr.bf16.gmra.mxu0 %v7179
    %v7363 = vpop.f32.mrf.mxu0
    %v7364 = vadd.f32 0.0, %v7363
    %v7365 = vpop.f32.mrf.mxu0
    %v7366 = vpop.f32.mrf.mxu0
    %v7367 = vadd.f32 0.0, %v7366
    %v7368 = vpop.f32.mrf.mxu0
    %7369 = vmatprep.mubr.bf16.mxu0 0
    %7370 = vmatmul.mubr.bf16.gmra.mxu0 %v7182
    %v7371 = vpop.f32.mrf.mxu0
    %v7372 = vadd.f32 0.0, %v7371
    %v7373 = vpop.f32.mrf.mxu0
    %v7374 = vpop.f32.mrf.mxu0
    %v7375 = vadd.f32 0.0, %v7374
    %v7376 = vpop.f32.mrf.mxu0
    %7377 = vmatprep.mubr.bf16.mxu0 0
    %7378 = vmatmul.mubr.bf16.gmra.mxu0 %v7185
    %v7379 = vpop.f32.mrf.mxu0
    %v7380 = vadd.f32 0.0, %v7379
    %v7381 = vpop.f32.mrf.mxu0
    %v7382 = vpop.f32.mrf.mxu0
    %v7383 = vadd.f32 0.0, %v7382
    %v7384 = vpop.f32.mrf.mxu0
    %7385 = vmatprep.mubr.bf16.mxu0 0
    %7386 = vmatmul.mubr.bf16.gmra.mxu0 %v7188
    %v7387 = vpop.f32.mrf.mxu0
    %v7388 = vadd.f32 0.0, %v7387
    %v7389 = vpop.f32.mrf.mxu0
    %v7390 = vpop.f32.mrf.mxu0
    %v7391 = vadd.f32 0.0, %v7390
    %v7392 = vpop.f32.mrf.mxu0
    %7393 = vmatprep.mubr.bf16.mxu0 0
    %7394 = vmatmul.mubr.bf16.gmra.mxu0 %v7191
    %v7395 = vpop.f32.mrf.mxu0
    %v7396 = vadd.f32 0.0, %v7395
    %v7397 = vpop.f32.mrf.mxu0
    %v7398 = vpop.f32.mrf.mxu0
    %v7399 = vadd.f32 0.0, %v7398
    %v7400 = vpop.f32.mrf.mxu0
    %7401 = vmatprep.mubr.bf16.mxu0 0
    %7402 = vmatmul.mubr.bf16.gmra.mxu0 %v7194
    %v7403 = vpop.f32.mrf.mxu0
    %v7404 = vadd.f32 0.0, %v7403
    %v7405 = vpop.f32.mrf.mxu0
    %v7406 = vpop.f32.mrf.mxu0
    %v7407 = vadd.f32 0.0, %v7406
    %v7408 = vpop.f32.mrf.mxu0
    %7409 = vmatprep.mubr.bf16.mxu0 0
    %7410 = vmatmul.mubr.bf16.gmra.mxu0 %v7197
    %v7411 = vpop.f32.mrf.mxu0
    %v7412 = vadd.f32 0.0, %v7411
    %v7413 = vpop.f32.mrf.mxu0
    %v7414 = vpop.f32.mrf.mxu0
    %v7415 = vadd.f32 0.0, %v7414
    %v7416 = vpop.f32.mrf.mxu0
    %7417 = vmatprep.mubr.bf16.mxu0 0
    %7418 = vmatmul.mubr.bf16.gmra.mxu0 %v7200
    %v7419 = vpop.f32.mrf.mxu0
    %v7420 = vadd.f32 0.0, %v7419
    %v7421 = vpop.f32.mrf.mxu0
    %v7422 = vpop.f32.mrf.mxu0
    %v7423 = vadd.f32 0.0, %v7422
    %v7424 = vpop.f32.mrf.mxu0
    %7425 = vmatprep.mubr.bf16.mxu0 0
    %7426 = vmatmul.mubr.bf16.gmra.mxu0 %v7203
    %v7427 = vpop.f32.mrf.mxu0
    %v7428 = vadd.f32 0.0, %v7427
    %v7429 = vpop.f32.mrf.mxu0
    %v7430 = vpop.f32.mrf.mxu0
    %v7431 = vadd.f32 0.0, %v7430
    %v7432 = vpop.f32.mrf.mxu0
    %7433 = vmatprep.mubr.bf16.mxu0 0
    %7434 = vmatmul.mubr.bf16.gmra.mxu0 %v7206
    %v7435 = vpop.f32.mrf.mxu0
    %v7436 = vadd.f32 0.0, %v7435
    %v7437 = vpop.f32.mrf.mxu0
    %v7438 = vpop.f32.mrf.mxu0
    %v7439 = vadd.f32 0.0, %v7438
    %v7440 = vpop.f32.mrf.mxu0
    %7441 = vmatprep.mubr.bf16.mxu0 0
    %7442 = vmatmul.mubr.bf16.gmra.mxu0 %v7209
    %v7443 = vpop.f32.mrf.mxu0
    %v7444 = vadd.f32 0.0, %v7443
    %v7445 = vpop.f32.mrf.mxu0
    %v7446 = vpop.f32.mrf.mxu0
    %v7447 = vadd.f32 0.0, %v7446
    %v7448 = vpop.f32.mrf.mxu0
    %7449 = vmatprep.mubr.bf16.mxu0 0
    %7450 = vmatmul.mubr.bf16.gmra.mxu0 %v7212
    %v7451 = vpop.f32.mrf.mxu0
    %v7452 = vadd.f32 0.0, %v7451
    %v7453 = vpop.f32.mrf.mxu0
    %v7454 = vpop.f32.mrf.mxu0
    %v7455 = vadd.f32 0.0, %v7454
    %v7456 = vpop.f32.mrf.mxu0
    %7457 = vmatprep.mubr.bf16.mxu0 0
    %7458 = vmatmul.mubr.bf16.gmra.mxu0 %v7215
    %v7459 = vpop.f32.mrf.mxu0
    %v7460 = vadd.f32 0.0, %v7459
    %v7461 = vpop.f32.mrf.mxu0
    %v7462 = vpop.f32.mrf.mxu0
    %v7463 = vadd.f32 0.0, %v7462
    %v7464 = vpop.f32.mrf.mxu0
    %7465 = vmatprep.mubr.bf16.mxu0 0
    %7466 = vmatmul.mubr.bf16.gmra.mxu0 %v7218
    %v7467 = vpop.f32.mrf.mxu0
    %v7468 = vadd.f32 0.0, %v7467
    %v7469 = vpop.f32.mrf.mxu0
    %v7470 = vpop.f32.mrf.mxu0
    %v7471 = vadd.f32 0.0, %v7470
    %v7472 = vpop.f32.mrf.mxu0
    %7473 = vmatprep.mubr.bf16.mxu0 0
    %7474 = vmatmul.mubr.bf16.gmra.mxu0 %v7221
    %v7475 = vpop.f32.mrf.mxu0
    %v7476 = vadd.f32 0.0, %v7475
    %v7477 = vpop.f32.mrf.mxu0
    %v7478 = vpop.f32.mrf.mxu0
    %v7479 = vadd.f32 0.0, %v7478
    %v7480 = vpop.f32.mrf.mxu0
    %7481 = vmatprep.mubr.bf16.mxu0 0
    %7482 = vmatmul.mubr.bf16.gmra.mxu0 %v7224
    %v7483 = vpop.f32.mrf.mxu0
    %v7484 = vadd.f32 0.0, %v7483
    %v7485 = vpop.f32.mrf.mxu0
    %v7486 = vpop.f32.mrf.mxu0
    %v7487 = vadd.f32 0.0, %v7486
    %v7488 = vpop.f32.mrf.mxu0
    %7489 = vmatprep.mubr.bf16.mxu0 0
    %7490 = vmatmul.mubr.bf16.gmra.mxu0 %v7227
    %v7491 = vpop.f32.mrf.mxu0
    %v7492 = vadd.f32 0.0, %v7491
    %v7493 = vpop.f32.mrf.mxu0
    %v7494 = vpop.f32.mrf.mxu0
    %v7495 = vadd.f32 0.0, %v7494
    %v7496 = vpop.f32.mrf.mxu0
    %7497 = vmatprep.mubr.bf16.mxu0 0
    %7498 = vmatmul.mubr.bf16.gmra.mxu0 %v7230
    %v7499 = vpop.f32.mrf.mxu0
    %v7500 = vadd.f32 0.0, %v7499
    %v7501 = vpop.f32.mrf.mxu0
    %v7502 = vpop.f32.mrf.mxu0
    %v7503 = vadd.f32 0.0, %v7502
    %v7504 = vpop.f32.mrf.mxu0
    %7505 = vmatprep.mubr.bf16.mxu0 0
    %7506 = vmatmul.mubr.bf16.gmra.mxu0 %v7233
    %v7507 = vpop.f32.mrf.mxu0
    %v7508 = vadd.f32 0.0, %v7507
    %v7509 = vpop.f32.mrf.mxu0
    %v7510 = vpop.f32.mrf.mxu0
    %v7511 = vadd.f32 0.0, %v7510
    %v7512 = vpop.f32.mrf.mxu0
    %7513 = vmatprep.mubr.bf16.mxu0 0
    %7514 = vmatmul.mubr.bf16.gmra.mxu0 %v7236
    %v7515 = vpop.f32.mrf.mxu0
    %v7516 = vadd.f32 0.0, %v7515
    %v7517 = vpop.f32.mrf.mxu0
    %v7518 = vpop.f32.mrf.mxu0
    %v7519 = vadd.f32 0.0, %v7518
    %v7520 = vpop.f32.mrf.mxu0
    %7521 = vmatprep.mubr.bf16.mxu0 0
    %7522 = vmatmul.mubr.bf16.gmra.mxu0 %v7239
    %v7523 = vpop.f32.mrf.mxu0
    %v7524 = vadd.f32 0.0, %v7523
    %v7525 = vpop.f32.mrf.mxu0
    %v7526 = vpop.f32.mrf.mxu0
    %v7527 = vadd.f32 0.0, %v7526
    %v7528 = vpop.f32.mrf.mxu0
    %7529 = vmatprep.mubr.bf16.mxu0 0
    %7530 = vmatmul.mubr.bf16.gmra.mxu0 %v7242
    %v7531 = vpop.f32.mrf.mxu0
    %v7532 = vadd.f32 0.0, %v7531
    %v7533 = vpop.f32.mrf.mxu0
    %v7534 = vpop.f32.mrf.mxu0
    %v7535 = vadd.f32 0.0, %v7534
    %v7536 = vpop.f32.mrf.mxu0
    %7537 = vmatprep.mubr.bf16.mxu0 0
    %7538 = vmatmul.mubr.bf16.gmra.mxu0 %v7245
    %v7539 = vpop.f32.mrf.mxu0
    %v7540 = vadd.f32 0.0, %v7539
    %v7541 = vpop.f32.mrf.mxu0
    %v7542 = vpop.f32.mrf.mxu0
    %v7543 = vadd.f32 0.0, %v7542
    %v7544 = vpop.f32.mrf.mxu0
    %7545 = vmatprep.mubr.bf16.mxu0 0
    %7546 = vmatmul.mubr.bf16.gmra.mxu0 %v7248
    %v7547 = vpop.f32.mrf.mxu0
    %v7548 = vadd.f32 0.0, %v7547
    %v7549 = vpop.f32.mrf.mxu0
    %v7550 = vpop.f32.mrf.mxu0
    %v7551 = vadd.f32 0.0, %v7550
    %v7552 = vpop.f32.mrf.mxu0
    %7553 = vmatprep.mubr.bf16.mxu0 0
    %7554 = vmatmul.mubr.bf16.gmra.mxu0 %v7251
    %v7555 = vpop.f32.mrf.mxu0
    %v7556 = vadd.f32 0.0, %v7555
    %v7557 = vpop.f32.mrf.mxu0
    %v7558 = vpop.f32.mrf.mxu0
    %v7559 = vadd.f32 0.0, %v7558
    %v7560 = vpop.f32.mrf.mxu0
    %7561 = vmatprep.mubr.bf16.mxu0 0
    %7562 = vmatmul.mubr.bf16.gmra.mxu0 %v7254
    %v7563 = vpop.f32.mrf.mxu0
    %v7564 = vadd.f32 0.0, %v7563
    %v7565 = vpop.f32.mrf.mxu0
    %v7566 = vpop.f32.mrf.mxu0
    %v7567 = vadd.f32 0.0, %v7566
    %v7568 = vpop.f32.mrf.mxu0
    %7569 = vmatprep.mubr.bf16.mxu0 0
    %7570 = vmatmul.mubr.bf16.gmra.mxu0 %v7257
    %v7571 = vpop.f32.mrf.mxu0
    %v7572 = vadd.f32 0.0, %v7571
    %v7573 = vpop.f32.mrf.mxu0
    %v7574 = vpop.f32.mrf.mxu0
    %v7575 = vadd.f32 0.0, %v7574
    %v7576 = vpop.f32.mrf.mxu0
    %7577 = vmatprep.mubr.bf16.mxu0 0
    %7578 = vmatmul.mubr.bf16.gmra.mxu0 %v7260
    %v7579 = vpop.f32.mrf.mxu0
    %v7580 = vadd.f32 0.0, %v7579
    %v7581 = vpop.f32.mrf.mxu0
    %v7582 = vpop.f32.mrf.mxu0
    %v7583 = vadd.f32 0.0, %v7582
    %v7584 = vpop.f32.mrf.mxu0
    %7585 = vmatprep.mubr.bf16.mxu0 0
    %7586 = vmatmul.mubr.bf16.gmra.mxu0 %v7263
    %v7587 = vpop.f32.mrf.mxu0
    %v7588 = vadd.f32 0.0, %v7587
    %v7589 = vpop.f32.mrf.mxu0
    %v7590 = vpop.f32.mrf.mxu0
    %v7591 = vadd.f32 0.0, %v7590
    %v7592 = vpop.f32.mrf.mxu0
    %7593 = vmatprep.mubr.bf16.mxu0 0
    %7594 = vmatmul.mubr.bf16.gmra.mxu0 %v7266
    %v7595 = vpop.f32.mrf.mxu0
    %v7596 = vadd.f32 0.0, %v7595
    %v7597 = vpop.f32.mrf.mxu0
    %v7598 = vpop.f32.mrf.mxu0
    %v7599 = vadd.f32 0.0, %v7598
    %v7600 = vpop.f32.mrf.mxu0
    %7601 = vmatprep.mubr.bf16.mxu0 0
    %7602 = vmatmul.mubr.bf16.gmra.mxu0 %v7269
    %v7603 = vpop.f32.mrf.mxu0
    %v7604 = vadd.f32 0.0, %v7603
    %v7605 = vpop.f32.mrf.mxu0
    %v7606 = vpop.f32.mrf.mxu0
    %v7607 = vadd.f32 0.0, %v7606
    %v7608 = vpop.f32.mrf.mxu0
    %7609 = vmatprep.mubr.bf16.mxu0 0
    %7610 = vmatmul.mubr.bf16.gmra.mxu0 %v7272
    %v7611 = vpop.f32.mrf.mxu0
    %v7612 = vadd.f32 0.0, %v7611
    %v7613 = vpop.f32.mrf.mxu0
    %v7614 = vpop.f32.mrf.mxu0
    %v7615 = vadd.f32 0.0, %v7614
    %v7616 = vpop.f32.mrf.mxu0
    %7617 = vmatprep.mubr.bf16.mxu0 0
    %7618 = vmatmul.mubr.bf16.gmra.mxu0 %v7275
    %v7619 = vpop.f32.mrf.mxu0
    %v7620 = vadd.f32 0.0, %v7619
    %v7621 = vpop.f32.mrf.mxu0
    %v7622 = vpop.f32.mrf.mxu0
    %v7623 = vadd.f32 0.0, %v7622
    %v7624 = vpop.f32.mrf.mxu0
    %7625 = vmatprep.mubr.bf16.mxu0 0
    %7626 = vmatmul.mubr.bf16.gmra.mxu0 %v7278
    %v7627 = vpop.f32.mrf.mxu0
    %v7628 = vadd.f32 0.0, %v7627
    %v7629 = vpop.f32.mrf.mxu0
    %v7630 = vpop.f32.mrf.mxu0
    %v7631 = vadd.f32 0.0, %v7630
    %v7632 = vpop.f32.mrf.mxu0
    %7633 = vmatprep.mubr.bf16.mxu0 0
    %7634 = vmatmul.mubr.bf16.gmra.mxu0 %v7281
    %v7635 = vpop.f32.mrf.mxu0
    %v7636 = vadd.f32 0.0, %v7635
    %v7637 = vpop.f32.mrf.mxu0
    %v7638 = vpop.f32.mrf.mxu0
    %v7639 = vadd.f32 0.0, %v7638
    %v7640 = vpop.f32.mrf.mxu0
    %7641 = vmatprep.mubr.bf16.mxu0 0
    %7642 = vmatmul.mubr.bf16.gmra.mxu0 %v7284
    %v7643 = vpop.f32.mrf.mxu0
    %v7644 = vadd.f32 0.0, %v7643
    %v7645 = vpop.f32.mrf.mxu0
    %v7646 = vpop.f32.mrf.mxu0
    %v7647 = vpop.f32.mrf.mxu0
    %7648 = vdwg.mxu0
    %v7649 = vadd.f32 %v7080, %v7324
    %v7650 = vadd.f32 %v7081, %v7327
    %v7651 = vadd.f32 %v7082, %v7332
    %v7652 = vadd.f32 %v7083, %v7335
    %v7653 = vadd.f32 %v7084, %v7340
    %v7654 = vadd.f32 %v7085, %v7343
    %v7655 = vadd.f32 %v7086, %v7348
    %v7656 = vadd.f32 %v7087, %v7351
    %v7657 = vadd.f32 %v7088, %v7356
    %v7658 = vadd.f32 %v7089, %v7359
    %v7659 = vadd.f32 %v7090, %v7364
    %v7660 = vadd.f32 %v7091, %v7367
    %v7661 = vadd.f32 %v7092, %v7372
    %v7662 = vadd.f32 %v7093, %v7375
    %v7663 = vadd.f32 %v7094, %v7380
    %v7664 = vadd.f32 %v7095, %v7383
    %v7665 = vadd.f32 %v7096, %v7388
    %v7666 = vadd.f32 %v7097, %v7391
    %v7667 = vadd.f32 %v7098, %v7396
    %v7668 = vadd.f32 %v7099, %v7399
    %v7669 = vadd.f32 %v7100, %v7404
    %v7670 = vadd.f32 %v7101, %v7407
    %v7671 = vadd.f32 %v7102, %v7412
    %v7672 = vadd.f32 %v7103, %v7415
    %v7673 = vadd.f32 %v7104, %v7420
    %v7674 = vadd.f32 %v7105, %v7423
    %v7675 = vadd.f32 %v7106, %v7428
    %v7676 = vadd.f32 %v7107, %v7431
    %v7677 = vadd.f32 %v7108, %v7436
    %v7678 = vadd.f32 %v7109, %v7439
    %v7679 = vadd.f32 %v7110, %v7444
    %v7680 = vadd.f32 %v7111, %v7447
    %v7681 = vadd.f32 %v7112, %v7452
    %v7682 = vadd.f32 %v7113, %v7455
    %v7683 = vadd.f32 %v7114, %v7460
    %v7684 = vadd.f32 %v7115, %v7463
    %v7685 = vadd.f32 %v7116, %v7468
    %v7686 = vadd.f32 %v7117, %v7471
    %v7687 = vadd.f32 %v7118, %v7476
    %v7688 = vadd.f32 %v7119, %v7479
    %v7689 = vadd.f32 %v7120, %v7484
    %v7690 = vadd.f32 %v7121, %v7487
    %v7691 = vadd.f32 %v7122, %v7492
    %v7692 = vadd.f32 %v7123, %v7495
    %v7693 = vadd.f32 %v7124, %v7500
    %v7694 = vadd.f32 %v7125, %v7503
    %v7695 = vadd.f32 %v7126, %v7508
    %v7696 = vadd.f32 %v7127, %v7511
    %v7697 = vadd.f32 %v7128, %v7516
    %v7698 = vadd.f32 %v7129, %v7519
    %v7699 = vadd.f32 %v7130, %v7524
    %v7700 = vadd.f32 %v7131, %v7527
    %v7701 = vadd.f32 %v7132, %v7532
    %v7702 = vadd.f32 %v7133, %v7535
    %v7703 = vadd.f32 %v7134, %v7540
    %v7704 = vadd.f32 %v7135, %v7543
    %v7705 = vadd.f32 %v7136, %v7548
    %v7706 = vadd.f32 %v7137, %v7551
    %v7707 = vadd.f32 %v7138, %v7556
    %v7708 = vadd.f32 %v7139, %v7559
    %v7709 = vadd.f32 %v7140, %v7564
    %v7710 = vadd.f32 %v7141, %v7567
    %v7711 = vadd.f32 %v7142, %v7572
    %v7712 = vadd.f32 %v7143, %v7575
    %v7713 = vadd.f32 %v7144, %v7580
    %v7714 = vadd.f32 %v7145, %v7583
    %v7715 = vadd.f32 %v7146, %v7588
    %v7716 = vadd.f32 %v7147, %v7591
    %v7717 = vadd.f32 %v7148, %v7596
    %v7718 = vadd.f32 %v7149, %v7599
    %v7719 = vadd.f32 %v7150, %v7604
    %v7720 = vadd.f32 %v7151, %v7607
    %v7721 = vadd.f32 %v7152, %v7612
    %v7722 = vadd.f32 %v7153, %v7615
    %v7723 = vadd.f32 %v7154, %v7620
    %v7724 = vadd.f32 %v7155, %v7623
    %v7725 = vadd.f32 %v7156, %v7628
    %v7726 = vadd.f32 %v7157, %v7631
    %v7727 = vadd.f32 %v7158, %v7636
    %v7728 = vadd.f32 %v7159, %v7639
    %v7729 = vadd.f32 %v7160, %v7644
    %7730 = vst.msk [vmem:[#allocation2] sm:$0xff] %vm52, %v7649
    %7731 = vst.msk [vmem:[#allocation2 + $0x8] sm:$0xff] %vm52, %v7650
    %7732 = vst.msk [vmem:[#allocation2 + $0x10] sm:$0xff] %vm52, %v7651
    %7733 = vst.msk [vmem:[#allocation2 + $0x18] sm:$0xff] %vm52, %v7652
    %7734 = vst.msk [vmem:[#allocation2 + $0x20] sm:$0xff] %vm52, %v7653
    %7735 = vst.msk [vmem:[#allocation2 + $0x28] sm:$0xff] %vm52, %v7654
    %7736 = vst.msk [vmem:[#allocation2 + $0x30] sm:$0xff] %vm52, %v7655
    %7737 = vst.msk [vmem:[#allocation2 + $0x38] sm:$0xff] %vm52, %v7656
    %7738 = vst.msk [vmem:[#allocation2 + $0x40] sm:$0xff] %vm52, %v7657
    %7739 = vst.msk [vmem:[#allocation2 + $0x48] sm:$0xff] %vm52, %v7658
    %7740 = vst.msk [vmem:[#allocation2 + $0x50] sm:$0xff] %vm52, %v7659
    %7741 = vst.msk [vmem:[#allocation2 + $0x58] sm:$0xff] %vm52, %v7660
    %7742 = vst.msk [vmem:[#allocation2 + $0x60] sm:$0xff] %vm52, %v7661
    %7743 = vst.msk [vmem:[#allocation2 + $0x68] sm:$0xff] %vm52, %v7662
    %7744 = vst.msk [vmem:[#allocation2 + $0x70] sm:$0xff] %vm52, %v7663
    %7745 = vst.msk [vmem:[#allocation2 + $0x78] sm:$0xff] %vm52, %v7664
    %7746 = vst.msk [vmem:[#allocation2 + $0x80] sm:$0xff] %vm52, %v7665
    %7747 = vst.msk [vmem:[#allocation2 + $0x88] sm:$0xff] %vm52, %v7666
    %7748 = vst.msk [vmem:[#allocation2 + $0x90] sm:$0xff] %vm52, %v7667
    %7749 = vst.msk [vmem:[#allocation2 + $0x98] sm:$0xff] %vm52, %v7668
    %7750 = vst.msk [vmem:[#allocation2 + $0xa0] sm:$0xff] %vm52, %v7669
    %7751 = vst.msk [vmem:[#allocation2 + $0xa8] sm:$0xff] %vm52, %v7670
    %7752 = vst.msk [vmem:[#allocation2 + $0xb0] sm:$0xff] %vm52, %v7671
    %7753 = vst.msk [vmem:[#allocation2 + $0xb8] sm:$0xff] %vm52, %v7672
    %7754 = vst.msk [vmem:[#allocation2 + $0xc0] sm:$0xff] %vm52, %v7673
    %7755 = vst.msk [vmem:[#allocation2 + $0xc8] sm:$0xff] %vm52, %v7674
    %7756 = vst.msk [vmem:[#allocation2 + $0xd0] sm:$0xff] %vm52, %v7675
    %7757 = vst.msk [vmem:[#allocation2 + $0xd8] sm:$0xff] %vm52, %v7676
    %7758 = vst.msk [vmem:[#allocation2 + $0xe0] sm:$0xff] %vm52, %v7677
    %7759 = vst.msk [vmem:[#allocation2 + $0xe8] sm:$0xff] %vm52, %v7678
    %7760 = vst.msk [vmem:[#allocation2 + $0xf0] sm:$0xff] %vm52, %v7679
    %7761 = vst.msk [vmem:[#allocation2 + $0xf8] sm:$0xff] %vm52, %v7680
    %7762 = vst.msk [vmem:[#allocation2 + $0x100] sm:$0xff] %vm52, %v7681
    %7763 = vst.msk [vmem:[#allocation2 + $0x108] sm:$0xff] %vm52, %v7682
    %7764 = vst.msk [vmem:[#allocation2 + $0x110] sm:$0xff] %vm52, %v7683
    %7765 = vst.msk [vmem:[#allocation2 + $0x118] sm:$0xff] %vm52, %v7684
    %7766 = vst.msk [vmem:[#allocation2 + $0x120] sm:$0xff] %vm52, %v7685
    %7767 = vst.msk [vmem:[#allocation2 + $0x128] sm:$0xff] %vm52, %v7686
    %7768 = vst.msk [vmem:[#allocation2 + $0x130] sm:$0xff] %vm52, %v7687
    %7769 = vst.msk [vmem:[#allocation2 + $0x138] sm:$0xff] %vm52, %v7688
    %7770 = vst.msk [vmem:[#allocation2 + $0x140] sm:$0xff] %vm52, %v7689
    %7771 = vst.msk [vmem:[#allocation2 + $0x148] sm:$0xff] %vm52, %v7690
    %7772 = vst.msk [vmem:[#allocation2 + $0x150] sm:$0xff] %vm52, %v7691
    %7773 = vst.msk [vmem:[#allocation2 + $0x158] sm:$0xff] %vm52, %v7692
    %7774 = vst.msk [vmem:[#allocation2 + $0x160] sm:$0xff] %vm52, %v7693
    %7775 = vst.msk [vmem:[#allocation2 + $0x168] sm:$0xff] %vm52, %v7694
    %7776 = vst.msk [vmem:[#allocation2 + $0x170] sm:$0xff] %vm52, %v7695
    %7777 = vst.msk [vmem:[#allocation2 + $0x178] sm:$0xff] %vm52, %v7696
    %7778 = vst.msk [vmem:[#allocation2 + $0x180] sm:$0xff] %vm52, %v7697
    %7779 = vst.msk [vmem:[#allocation2 + $0x188] sm:$0xff] %vm52, %v7698
    %7780 = vst.msk [vmem:[#allocation2 + $0x190] sm:$0xff] %vm52, %v7699
    %7781 = vst.msk [vmem:[#allocation2 + $0x198] sm:$0xff] %vm52, %v7700
    %7782 = vst.msk [vmem:[#allocation2 + $0x1a0] sm:$0xff] %vm52, %v7701
    %7783 = vst.msk [vmem:[#allocation2 + $0x1a8] sm:$0xff] %vm52, %v7702
    %7784 = vst.msk [vmem:[#allocation2 + $0x1b0] sm:$0xff] %vm52, %v7703
    %7785 = vst.msk [vmem:[#allocation2 + $0x1b8] sm:$0xff] %vm52, %v7704
    %7786 = vst.msk [vmem:[#allocation2 + $0x1c0] sm:$0xff] %vm52, %v7705
    %7787 = vst.msk [vmem:[#allocation2 + $0x1c8] sm:$0xff] %vm52, %v7706
    %7788 = vst.msk [vmem:[#allocation2 + $0x1d0] sm:$0xff] %vm52, %v7707
    %7789 = vst.msk [vmem:[#allocation2 + $0x1d8] sm:$0xff] %vm52, %v7708
    %7790 = vst.msk [vmem:[#allocation2 + $0x1e0] sm:$0xff] %vm52, %v7709
    %7791 = vst.msk [vmem:[#allocation2 + $0x1e8] sm:$0xff] %vm52, %v7710
    %7792 = vst.msk [vmem:[#allocation2 + $0x1f0] sm:$0xff] %vm52, %v7711
    %7793 = vst.msk [vmem:[#allocation2 + $0x1f8] sm:$0xff] %vm52, %v7712
    %7794 = vst.msk [vmem:[#allocation2 + $0x200] sm:$0xff] %vm52, %v7713
    %7795 = vst.msk [vmem:[#allocation2 + $0x208] sm:$0xff] %vm52, %v7714
    %7796 = vst.msk [vmem:[#allocation2 + $0x210] sm:$0xff] %vm52, %v7715
    %7797 = vst.msk [vmem:[#allocation2 + $0x218] sm:$0xff] %vm52, %v7716
    %7798 = vst.msk [vmem:[#allocation2 + $0x220] sm:$0xff] %vm52, %v7717
    %7799 = vst.msk [vmem:[#allocation2 + $0x228] sm:$0xff] %vm52, %v7718
    %7800 = vst.msk [vmem:[#allocation2 + $0x230] sm:$0xff] %vm52, %v7719
    %7801 = vst.msk [vmem:[#allocation2 + $0x238] sm:$0xff] %vm52, %v7720
    %7802 = vst.msk [vmem:[#allocation2 + $0x240] sm:$0xff] %vm52, %v7721
    %7803 = vst.msk [vmem:[#allocation2 + $0x248] sm:$0xff] %vm52, %v7722
    %7804 = vst.msk [vmem:[#allocation2 + $0x250] sm:$0xff] %vm52, %v7723
    %7805 = vst.msk [vmem:[#allocation2 + $0x258] sm:$0xff] %vm52, %v7724
    %7806 = vst.msk [vmem:[#allocation2 + $0x260] sm:$0xff] %vm52, %v7725
    %7807 = vst.msk [vmem:[#allocation2 + $0x268] sm:$0xff] %vm52, %v7726
    %7808 = vst.msk [vmem:[#allocation2 + $0x270] sm:$0xff] %vm52, %v7727
    %7809 = vst.msk [vmem:[#allocation2 + $0x278] sm:$0xff] %vm52, %v7728
    %7810 = vst.msk [vmem:[#allocation2 + $0x280] sm:$0xff] %vm52, %v7729
    %v7811 = vld [vmem:[#allocation2] sm:$0xff]
    %v7812 = vld [vmem:[#allocation2 + $0x8] sm:$0xff]
    %v7813 = vld [vmem:[#allocation2 + $0x10] sm:$0xff]
    %v7814 = vld [vmem:[#allocation2 + $0x18] sm:$0xff]
    %v7815 = vld [vmem:[#allocation2 + $0x20] sm:$0xff]
    %v7816 = vld [vmem:[#allocation2 + $0x28] sm:$0xff]
    %v7817 = vld [vmem:[#allocation2 + $0x30] sm:$0xff]
    %v7818 = vld [vmem:[#allocation2 + $0x38] sm:$0xff]
    %v7819 = vld [vmem:[#allocation2 + $0x40] sm:$0xff]
    %v7820 = vld [vmem:[#allocation2 + $0x48] sm:$0xff]
    %v7821 = vld [vmem:[#allocation2 + $0x50] sm:$0xff]
    %v7822 = vld [vmem:[#allocation2 + $0x58] sm:$0xff]
    %v7823 = vld [vmem:[#allocation2 + $0x60] sm:$0xff]
    %v7824 = vld [vmem:[#allocation2 + $0x68] sm:$0xff]
    %v7825 = vld [vmem:[#allocation2 + $0x70] sm:$0xff]
    %v7826 = vld [vmem:[#allocation2 + $0x78] sm:$0xff]
    %v7827 = vld [vmem:[#allocation2 + $0x80] sm:$0xff]
    %v7828 = vld [vmem:[#allocation2 + $0x88] sm:$0xff]
    %v7829 = vld [vmem:[#allocation2 + $0x90] sm:$0xff]
    %v7830 = vld [vmem:[#allocation2 + $0x98] sm:$0xff]
    %v7831 = vld [vmem:[#allocation2 + $0xa0] sm:$0xff]
    %v7832 = vld [vmem:[#allocation2 + $0xa8] sm:$0xff]
    %v7833 = vld [vmem:[#allocation2 + $0xb0] sm:$0xff]
    %v7834 = vld [vmem:[#allocation2 + $0xb8] sm:$0xff]
    %v7835 = vld [vmem:[#allocation2 + $0xc0] sm:$0xff]
    %v7836 = vld [vmem:[#allocation2 + $0xc8] sm:$0xff]
    %v7837 = vld [vmem:[#allocation2 + $0xd0] sm:$0xff]
    %v7838 = vld [vmem:[#allocation2 + $0xd8] sm:$0xff]
    %v7839 = vld [vmem:[#allocation2 + $0xe0] sm:$0xff]
    %v7840 = vld [vmem:[#allocation2 + $0xe8] sm:$0xff]
    %v7841 = vld [vmem:[#allocation2 + $0xf0] sm:$0xff]
    %v7842 = vld [vmem:[#allocation2 + $0xf8] sm:$0xff]
    %v7843 = vld [vmem:[#allocation2 + $0x100] sm:$0xff]
    %v7844 = vld [vmem:[#allocation2 + $0x108] sm:$0xff]
    %v7845 = vld [vmem:[#allocation2 + $0x110] sm:$0xff]
    %v7846 = vld [vmem:[#allocation2 + $0x118] sm:$0xff]
    %v7847 = vld [vmem:[#allocation2 + $0x120] sm:$0xff]
    %v7848 = vld [vmem:[#allocation2 + $0x128] sm:$0xff]
    %v7849 = vld [vmem:[#allocation2 + $0x130] sm:$0xff]
    %v7850 = vld [vmem:[#allocation2 + $0x138] sm:$0xff]
    %v7851 = vld [vmem:[#allocation2 + $0x140] sm:$0xff]
    %v7852 = vld [vmem:[#allocation2 + $0x148] sm:$0xff]
    %v7853 = vld [vmem:[#allocation2 + $0x150] sm:$0xff]
    %v7854 = vld [vmem:[#allocation2 + $0x158] sm:$0xff]
    %v7855 = vld [vmem:[#allocation2 + $0x160] sm:$0xff]
    %v7856 = vld [vmem:[#allocation2 + $0x168] sm:$0xff]
    %v7857 = vld [vmem:[#allocation2 + $0x170] sm:$0xff]
    %v7858 = vld [vmem:[#allocation2 + $0x178] sm:$0xff]
    %v7859 = vld [vmem:[#allocation2 + $0x180] sm:$0xff]
    %v7860 = vld [vmem:[#allocation2 + $0x188] sm:$0xff]
    %v7861 = vld [vmem:[#allocation2 + $0x190] sm:$0xff]
    %v7862 = vld [vmem:[#allocation2 + $0x198] sm:$0xff]
    %v7863 = vld [vmem:[#allocation2 + $0x1a0] sm:$0xff]
    %v7864 = vld [vmem:[#allocation2 + $0x1a8] sm:$0xff]
    %v7865 = vld [vmem:[#allocation2 + $0x1b0] sm:$0xff]
    %v7866 = vld [vmem:[#allocation2 + $0x1b8] sm:$0xff]
    %v7867 = vld [vmem:[#allocation2 + $0x1c0] sm:$0xff]
    %v7868 = vld [vmem:[#allocation2 + $0x1c8] sm:$0xff]
    %v7869 = vld [vmem:[#allocation2 + $0x1d0] sm:$0xff]
    %v7870 = vld [vmem:[#allocation2 + $0x1d8] sm:$0xff]
    %v7871 = vld [vmem:[#allocation2 + $0x1e0] sm:$0xff]
    %v7872 = vld [vmem:[#allocation2 + $0x1e8] sm:$0xff]
    %v7873 = vld [vmem:[#allocation2 + $0x1f0] sm:$0xff]
    %v7874 = vld [vmem:[#allocation2 + $0x1f8] sm:$0xff]
    %v7875 = vld [vmem:[#allocation2 + $0x200] sm:$0xff]
    %v7876 = vld [vmem:[#allocation2 + $0x208] sm:$0xff]
    %v7877 = vld [vmem:[#allocation2 + $0x210] sm:$0xff]
    %v7878 = vld [vmem:[#allocation2 + $0x218] sm:$0xff]
    %v7879 = vld [vmem:[#allocation2 + $0x220] sm:$0xff]
    %v7880 = vld [vmem:[#allocation2 + $0x228] sm:$0xff]
    %v7881 = vld [vmem:[#allocation2 + $0x230] sm:$0xff]
    %v7882 = vld [vmem:[#allocation2 + $0x238] sm:$0xff]
    %v7883 = vld [vmem:[#allocation2 + $0x240] sm:$0xff]
    %v7884 = vld [vmem:[#allocation2 + $0x248] sm:$0xff]
    %v7885 = vld [vmem:[#allocation2 + $0x250] sm:$0xff]
    %v7886 = vld [vmem:[#allocation2 + $0x258] sm:$0xff]
    %v7887 = vld [vmem:[#allocation2 + $0x260] sm:$0xff]
    %v7888 = vld [vmem:[#allocation2 + $0x268] sm:$0xff]
    %v7889 = vld [vmem:[#allocation2 + $0x270] sm:$0xff]
    %v7890 = vld [vmem:[#allocation2 + $0x278] sm:$0xff]
    %v7891 = vld [vmem:[#allocation2 + $0x280] sm:$0xff]
    %v7892 = vld [vmem:[%s3] sm:$0x1]
    %v7894 = vlaneseq
    %v7895 = vshrl.u32 %v7894, 7
    %v7896 = vsub.s32 0, %v7895
    %v7897 = vrot.slane %v7892, %v7896
    %v7899 = vadd.f32 %v7811, %v7897
    %v7900 = vadd.f32 %v7812, %v7897
    %v7901 = vadd.f32 %v7813, %v7897
    %v7902 = vadd.f32 %v7814, %v7897
    %v7903 = vadd.f32 %v7815, %v7897
    %v7904 = vadd.f32 %v7816, %v7897
    %v7905 = vadd.f32 %v7817, %v7897
    %v7906 = vadd.f32 %v7818, %v7897
    %v7907 = vadd.f32 %v7819, %v7897
    %v7908 = vadd.f32 %v7820, %v7897
    %v7909 = vadd.f32 %v7821, %v7897
    %v7910 = vadd.f32 %v7822, %v7897
    %v7911 = vadd.f32 %v7823, %v7897
    %v7912 = vadd.f32 %v7824, %v7897
    %v7913 = vadd.f32 %v7825, %v7897
    %v7914 = vadd.f32 %v7826, %v7897
    %v7915 = vadd.f32 %v7827, %v7897
    %v7916 = vadd.f32 %v7828, %v7897
    %v7917 = vadd.f32 %v7829, %v7897
    %v7918 = vadd.f32 %v7830, %v7897
    %v7919 = vadd.f32 %v7831, %v7897
    %v7920 = vadd.f32 %v7832, %v7897
    %v7921 = vadd.f32 %v7833, %v7897
    %v7922 = vadd.f32 %v7834, %v7897
    %v7923 = vadd.f32 %v7835, %v7897
    %v7924 = vadd.f32 %v7836, %v7897
    %v7925 = vadd.f32 %v7837, %v7897
    %v7926 = vadd.f32 %v7838, %v7897
    %v7927 = vadd.f32 %v7839, %v7897
    %v7928 = vadd.f32 %v7840, %v7897
    %v7929 = vadd.f32 %v7841, %v7897
    %v7930 = vadd.f32 %v7842, %v7897
    %v7931 = vadd.f32 %v7843, %v7897
    %v7932 = vadd.f32 %v7844, %v7897
    %v7933 = vadd.f32 %v7845, %v7897
    %v7934 = vadd.f32 %v7846, %v7897
    %v7935 = vadd.f32 %v7847, %v7897
    %v7936 = vadd.f32 %v7848, %v7897
    %v7937 = vadd.f32 %v7849, %v7897
    %v7938 = vadd.f32 %v7850, %v7897
    %v7939 = vadd.f32 %v7851, %v7897
    %v7940 = vadd.f32 %v7852, %v7897
    %v7941 = vadd.f32 %v7853, %v7897
    %v7942 = vadd.f32 %v7854, %v7897
    %v7943 = vadd.f32 %v7855, %v7897
    %v7944 = vadd.f32 %v7856, %v7897
    %v7945 = vadd.f32 %v7857, %v7897
    %v7946 = vadd.f32 %v7858, %v7897
    %v7947 = vadd.f32 %v7859, %v7897
    %v7948 = vadd.f32 %v7860, %v7897
    %v7949 = vadd.f32 %v7861, %v7897
    %v7950 = vadd.f32 %v7862, %v7897
    %v7951 = vadd.f32 %v7863, %v7897
    %v7952 = vadd.f32 %v7864, %v7897
    %v7953 = vadd.f32 %v7865, %v7897
    %v7954 = vadd.f32 %v7866, %v7897
    %v7955 = vadd.f32 %v7867, %v7897
    %v7956 = vadd.f32 %v7868, %v7897
    %v7957 = vadd.f32 %v7869, %v7897
    %v7958 = vadd.f32 %v7870, %v7897
    %v7959 = vadd.f32 %v7871, %v7897
    %v7960 = vadd.f32 %v7872, %v7897
    %v7961 = vadd.f32 %v7873, %v7897
    %v7962 = vadd.f32 %v7874, %v7897
    %v7963 = vadd.f32 %v7875, %v7897
    %v7964 = vadd.f32 %v7876, %v7897
    %v7965 = vadd.f32 %v7877, %v7897
    %v7966 = vadd.f32 %v7878, %v7897
    %v7967 = vadd.f32 %v7879, %v7897
    %v7968 = vadd.f32 %v7880, %v7897
    %v7969 = vadd.f32 %v7881, %v7897
    %v7970 = vadd.f32 %v7882, %v7897
    %v7971 = vadd.f32 %v7883, %v7897
    %v7972 = vadd.f32 %v7884, %v7897
    %v7973 = vadd.f32 %v7885, %v7897
    %v7974 = vadd.f32 %v7886, %v7897
    %v7975 = vadd.f32 %v7887, %v7897
    %v7976 = vadd.f32 %v7888, %v7897
    %v7977 = vadd.f32 %v7889, %v7897
    %v7978 = vadd.f32 %v7890, %v7897
    %v7979 = vadd.f32 %v7891, %v7897
    %v7980 = vmax.f32 %v7899, 0.0
    %v7981 = vmax.f32 %v7900, 0.0
    %v7982 = vmax.f32 %v7901, 0.0
    %v7983 = vmax.f32 %v7902, 0.0
    %v7984 = vmax.f32 %v7903, 0.0
    %v7985 = vmax.f32 %v7904, 0.0
    %v7986 = vmax.f32 %v7905, 0.0
    %v7987 = vmax.f32 %v7906, 0.0
    %v7988 = vmax.f32 %v7907, 0.0
    %v7989 = vmax.f32 %v7908, 0.0
    %v7990 = vmax.f32 %v7909, 0.0
    %v7991 = vmax.f32 %v7910, 0.0
    %v7992 = vmax.f32 %v7911, 0.0
    %v7993 = vmax.f32 %v7912, 0.0
    %v7994 = vmax.f32 %v7913, 0.0
    %v7995 = vmax.f32 %v7914, 0.0
    %v7996 = vmax.f32 %v7915, 0.0
    %v7997 = vmax.f32 %v7916, 0.0
    %v7998 = vmax.f32 %v7917, 0.0
    %v7999 = vmax.f32 %v7918, 0.0
    %v8000 = vmax.f32 %v7919, 0.0
    %v8001 = vmax.f32 %v7920, 0.0
    %v8002 = vmax.f32 %v7921, 0.0
    %v8003 = vmax.f32 %v7922, 0.0
    %v8004 = vmax.f32 %v7923, 0.0
    %v8005 = vmax.f32 %v7924, 0.0
    %v8006 = vmax.f32 %v7925, 0.0
    %v8007 = vmax.f32 %v7926, 0.0
    %v8008 = vmax.f32 %v7927, 0.0
    %v8009 = vmax.f32 %v7928, 0.0
    %v8010 = vmax.f32 %v7929, 0.0
    %v8011 = vmax.f32 %v7930, 0.0
    %v8012 = vmax.f32 %v7931, 0.0
    %v8013 = vmax.f32 %v7932, 0.0
    %v8014 = vmax.f32 %v7933, 0.0
    %v8015 = vmax.f32 %v7934, 0.0
    %v8016 = vmax.f32 %v7935, 0.0
    %v8017 = vmax.f32 %v7936, 0.0
    %v8018 = vmax.f32 %v7937, 0.0
    %v8019 = vmax.f32 %v7938, 0.0
    %v8020 = vmax.f32 %v7939, 0.0
    %v8021 = vmax.f32 %v7940, 0.0
    %v8022 = vmax.f32 %v7941, 0.0
    %v8023 = vmax.f32 %v7942, 0.0
    %v8024 = vmax.f32 %v7943, 0.0
    %v8025 = vmax.f32 %v7944, 0.0
    %v8026 = vmax.f32 %v7945, 0.0
    %v8027 = vmax.f32 %v7946, 0.0
    %v8028 = vmax.f32 %v7947, 0.0
    %v8029 = vmax.f32 %v7948, 0.0
    %v8030 = vmax.f32 %v7949, 0.0
    %v8031 = vmax.f32 %v7950, 0.0
    %v8032 = vmax.f32 %v7951, 0.0
    %v8033 = vmax.f32 %v7952, 0.0
    %v8034 = vmax.f32 %v7953, 0.0
    %v8035 = vmax.f32 %v7954, 0.0
    %v8036 = vmax.f32 %v7955, 0.0
    %v8037 = vmax.f32 %v7956, 0.0
    %v8038 = vmax.f32 %v7957, 0.0
    %v8039 = vmax.f32 %v7958, 0.0
    %v8040 = vmax.f32 %v7959, 0.0
    %v8041 = vmax.f32 %v7960, 0.0
    %v8042 = vmax.f32 %v7961, 0.0
    %v8043 = vmax.f32 %v7962, 0.0
    %v8044 = vmax.f32 %v7963, 0.0
    %v8045 = vmax.f32 %v7964, 0.0
    %v8046 = vmax.f32 %v7965, 0.0
    %v8047 = vmax.f32 %v7966, 0.0
    %v8048 = vmax.f32 %v7967, 0.0
    %v8049 = vmax.f32 %v7968, 0.0
    %v8050 = vmax.f32 %v7969, 0.0
    %v8051 = vmax.f32 %v7970, 0.0
    %v8052 = vmax.f32 %v7971, 0.0
    %v8053 = vmax.f32 %v7972, 0.0
    %v8054 = vmax.f32 %v7973, 0.0
    %v8055 = vmax.f32 %v7974, 0.0
    %v8056 = vmax.f32 %v7975, 0.0
    %v8057 = vmax.f32 %v7976, 0.0
    %v8058 = vmax.f32 %v7977, 0.0
    %v8059 = vmax.f32 %v7978, 0.0
    %v8060 = vmax.f32 %v7979, 0.0
    %v8061 = vld [vmem:[%s1] sm:$0x3f]
    %v8062 = vpack.c.bf16 %v7981, %v7980
    %v8063 = vpack.c.bf16 %v7983, %v7982
    %v8064 = vpack.c.bf16 %v7985, %v7984
    %v8065 = vpack.c.bf16 %v7987, %v7986
    %v8066 = vpack.c.bf16 %v7989, %v7988
    %v8067 = vpack.c.bf16 %v7991, %v7990
    %v8068 = vpack.c.bf16 %v7993, %v7992
    %v8069 = vpack.c.bf16 %v7995, %v7994
    %v8070 = vpack.c.bf16 %v7997, %v7996
    %v8071 = vpack.c.bf16 %v7999, %v7998
    %v8072 = vpack.c.bf16 %v8001, %v8000
    %v8073 = vpack.c.bf16 %v8003, %v8002
    %v8074 = vpack.c.bf16 %v8005, %v8004
    %v8075 = vpack.c.bf16 %v8007, %v8006
    %v8076 = vpack.c.bf16 %v8009, %v8008
    %v8077 = vpack.c.bf16 %v8011, %v8010
    %v8078 = vpack.c.bf16 %v8013, %v8012
    %v8079 = vpack.c.bf16 %v8015, %v8014
    %v8080 = vpack.c.bf16 %v8017, %v8016
    %v8081 = vpack.c.bf16 %v8019, %v8018
    %v8082 = vpack.c.bf16 %v8021, %v8020
    %v8083 = vpack.c.bf16 %v8023, %v8022
    %v8084 = vpack.c.bf16 %v8025, %v8024
    %v8085 = vpack.c.bf16 %v8027, %v8026
    %v8086 = vpack.c.bf16 %v8029, %v8028
    %v8087 = vpack.c.bf16 %v8031, %v8030
    %v8088 = vpack.c.bf16 %v8033, %v8032
    %v8089 = vpack.c.bf16 %v8035, %v8034
    %v8090 = vpack.c.bf16 %v8037, %v8036
    %v8091 = vpack.c.bf16 %v8039, %v8038
    %v8092 = vpack.c.bf16 %v8041, %v8040
    %v8093 = vpack.c.bf16 %v8043, %v8042
    %v8094 = vpack.c.bf16 %v8045, %v8044
    %v8095 = vpack.c.bf16 %v8047, %v8046
    %v8096 = vpack.c.bf16 %v8049, %v8048
    %v8097 = vpack.c.bf16 %v8051, %v8050
    %v8098 = vpack.c.bf16 %v8053, %v8052
    %v8099 = vpack.c.bf16 %v8055, %v8054
    %v8100 = vpack.c.bf16 %v8057, %v8056
    %v8101 = vpack.c.bf16 %v8059, %v8058
    %v8102 = vpack.c.bf16 %v8060, %v8060
    %v8104 = vcombine.high %v8061, %v8061
    %v8106 = vunpack.c.l.s4 1966171168
    %v8107 = vunpack.c.0.s8 %v8106
    %v8108 = vlaneseq
    %v8109 = vshrl.u32 %v8108, 7
    %v8110 = vsub.s32 %v8107, %v8109
    %v8111 = vrot.slane %v8061, %v8110
    %v8113 = vunpack.c.l.s4 1966171168
    %v8114 = vunpack.c.0.s8 %v8113
    %v8115 = vlaneseq
    %v8116 = vshrl.u32 %v8115, 7
    %v8117 = vsub.s32 %v8114, %v8116
    %v8118 = vrot.slane %v8104, %v8117
    %v8119 = vcombine.high %v8111, %v8111
    %v8120 = vcombine.high %v8118, %v8118
    %v8122 = vunpack.c.l.s4 1966171168
    %v8123 = vunpack.c.0.s8 %v8122
    %v8124 = vlaneseq
    %v8125 = vshrl.u32 %v8124, 7
    %v8126 = vsub.s32 %v8123, %v8125
    %v8127 = vrot.slane %v8111, %v8126
    %v8129 = vunpack.c.l.s4 1966171168
    %v8130 = vunpack.c.0.s8 %v8129
    %v8131 = vlaneseq
    %v8132 = vshrl.u32 %v8131, 7
    %v8133 = vsub.s32 %v8130, %v8132
    %v8134 = vrot.slane %v8118, %v8133
    %v8136 = vunpack.c.l.s4 1966171168
    %v8137 = vunpack.c.0.s8 %v8136
    %v8138 = vlaneseq
    %v8139 = vshrl.u32 %v8138, 7
    %v8140 = vsub.s32 %v8137, %v8139
    %v8141 = vrot.slane %v8119, %v8140
    %v8143 = vunpack.c.l.s4 1966171168
    %v8144 = vunpack.c.0.s8 %v8143
    %v8145 = vlaneseq
    %v8146 = vshrl.u32 %v8145, 7
    %v8147 = vsub.s32 %v8144, %v8146
    %v8148 = vrot.slane %v8120, %v8147
    %v8149 = vcombine.high %v8127, %v8127
    %v8150 = vcombine.high %v8141, %v8141
    %v8157 = vsel %vm52, %v8148, 0
    %v8160 = vsel %vm461, %v8102, 0
    %8162 = vmatprep.subr.bf16.mxu0 0
    %8163 = vmatpush1.bf16.msra.mxu0 %v8069
    %8164 = vmatprep.subr.bf16.mxu0 0
    %8165 = vmatpush1.bf16.msra.mxu0 %v8068
    %8166 = vmatprep.subr.bf16.mxu0 0
    %8167 = vmatpush1.bf16.msra.mxu0 %v8067
    %8168 = vmatprep.subr.bf16.mxu0 0
    %8169 = vmatpush1.bf16.msra.mxu0 %v8066
    %8170 = vmatprep.subr.bf16.mxu0 0
    %8171 = vmatpush1.bf16.msra.mxu0 %v8065
    %8172 = vmatprep.subr.bf16.mxu0 0
    %8173 = vmatpush1.bf16.msra.mxu0 %v8064
    %8174 = vmatprep.subr.bf16.mxu0 0
    %8175 = vmatpush1.bf16.msra.mxu0 %v8063
    %8176 = vmatprep.subr.bf16.mxu0 0
    %8177 = vmatpush1.bf16.msra.mxu0 %v8062
    %8178 = vmatprep.subr.bf16.mxu0 0
    %8179 = vmatpush2.bf16.msra.mxu0 %v8077
    %8180 = vmatprep.subr.bf16.mxu0 0
    %8181 = vmatpush2.bf16.msra.mxu0 %v8076
    %8182 = vmatprep.subr.bf16.mxu0 0
    %8183 = vmatpush2.bf16.msra.mxu0 %v8075
    %8184 = vmatprep.subr.bf16.mxu0 0
    %8185 = vmatpush2.bf16.msra.mxu0 %v8074
    %8186 = vmatprep.subr.bf16.mxu0 0
    %8187 = vmatpush2.bf16.msra.mxu0 %v8073
    %8188 = vmatprep.subr.bf16.mxu0 0
    %8189 = vmatpush2.bf16.msra.mxu0 %v8072
    %8190 = vmatprep.subr.bf16.mxu0 0
    %8191 = vmatpush2.bf16.msra.mxu0 %v8071
    %8192 = vmatprep.subr.bf16.mxu0 0
    %8193 = vmatpush2.bf16.msra.mxu0 %v8070
    %8194 = vmatprep.mubr.bf16.mxu0 %v8141
    %8195 = vmatmul.mubr.bf16.gmra.mxu0 %v8127
    %v8196 = vpop.f32.mrf.mxu0
    %v8197 = vadd.f32 0.0, %v8196
    %v8198 = vpop.f32.mrf.mxu0
    %v8199 = vpop.f32.mrf.mxu0
    %v8200 = vpop.f32.mrf.mxu0
    %8201 = vdwg.mxu0
    %8202 = vmatprep.subr.bf16.mxu0 0
    %8203 = vmatpush1.bf16.msra.mxu0 %v8085
    %8204 = vmatprep.subr.bf16.mxu0 0
    %8205 = vmatpush1.bf16.msra.mxu0 %v8084
    %8206 = vmatprep.subr.bf16.mxu0 0
    %8207 = vmatpush1.bf16.msra.mxu0 %v8083
    %8208 = vmatprep.subr.bf16.mxu0 0
    %8209 = vmatpush1.bf16.msra.mxu0 %v8082
    %8210 = vmatprep.subr.bf16.mxu0 0
    %8211 = vmatpush1.bf16.msra.mxu0 %v8081
    %8212 = vmatprep.subr.bf16.mxu0 0
    %8213 = vmatpush1.bf16.msra.mxu0 %v8080
    %8214 = vmatprep.subr.bf16.mxu0 0
    %8215 = vmatpush1.bf16.msra.mxu0 %v8079
    %8216 = vmatprep.subr.bf16.mxu0 0
    %8217 = vmatpush1.bf16.msra.mxu0 %v8078
    %8218 = vmatprep.subr.bf16.mxu0 0
    %8219 = vmatpush2.bf16.msra.mxu0 %v8093
    %8220 = vmatprep.subr.bf16.mxu0 0
    %8221 = vmatpush2.bf16.msra.mxu0 %v8092
    %8222 = vmatprep.subr.bf16.mxu0 0
    %8223 = vmatpush2.bf16.msra.mxu0 %v8091
    %8224 = vmatprep.subr.bf16.mxu0 0
    %8225 = vmatpush2.bf16.msra.mxu0 %v8090
    %8226 = vmatprep.subr.bf16.mxu0 0
    %8227 = vmatpush2.bf16.msra.mxu0 %v8089
    %8228 = vmatprep.subr.bf16.mxu0 0
    %8229 = vmatpush2.bf16.msra.mxu0 %v8088
    %8230 = vmatprep.subr.bf16.mxu0 0
    %8231 = vmatpush2.bf16.msra.mxu0 %v8087
    %8232 = vmatprep.subr.bf16.mxu0 0
    %8233 = vmatpush2.bf16.msra.mxu0 %v8086
    %8234 = vmatprep.mubr.bf16.mxu0 %v8150
    %8235 = vmatmul.mubr.bf16.gmra.mxu0 %v8149
    %v8236 = vpop.f32.mrf.mxu0
    %v8237 = vadd.f32 %v8197, %v8236
    %v8238 = vpop.f32.mrf.mxu0
    %v8239 = vpop.f32.mrf.mxu0
    %v8240 = vpop.f32.mrf.mxu0
    %8241 = vdwg.mxu0
    %8242 = vmatprep.subr.bf16.mxu0 0
    %8243 = vmatpush1.bf16.msra.mxu0 %v8101
    %8244 = vmatprep.subr.bf16.mxu0 0
    %8245 = vmatpush1.bf16.msra.mxu0 %v8100
    %8246 = vmatprep.subr.bf16.mxu0 0
    %8247 = vmatpush1.bf16.msra.mxu0 %v8099
    %8248 = vmatprep.subr.bf16.mxu0 0
    %8249 = vmatpush1.bf16.msra.mxu0 %v8098
    %8250 = vmatprep.subr.bf16.mxu0 0
    %8251 = vmatpush1.bf16.msra.mxu0 %v8097
    %8252 = vmatprep.subr.bf16.mxu0 0
    %8253 = vmatpush1.bf16.msra.mxu0 %v8096
    %8254 = vmatprep.subr.bf16.mxu0 0
    %8255 = vmatpush1.bf16.msra.mxu0 %v8095
    %8256 = vmatprep.subr.bf16.mxu0 0
    %8257 = vmatpush1.bf16.msra.mxu0 %v8094
    %8258 = vmatprep.subr.bf16.mxu0 0
    %8259 = vmatpush2.bf16.msra.mxu0 0
    %8260 = vmatprep.subr.bf16.mxu0 0
    %8261 = vmatpush2.bf16.msra.mxu0 0
    %8262 = vmatprep.subr.bf16.mxu0 0
    %8263 = vmatpush2.bf16.msra.mxu0 0
    %8264 = vmatprep.subr.bf16.mxu0 0
    %8265 = vmatpush2.bf16.msra.mxu0 0
    %8266 = vmatprep.subr.bf16.mxu0 0
    %8267 = vmatpush2.bf16.msra.mxu0 0
    %8268 = vmatprep.subr.bf16.mxu0 0
    %8269 = vmatpush2.bf16.msra.mxu0 0
    %8270 = vmatprep.subr.bf16.mxu0 0
    %8271 = vmatpush2.bf16.msra.mxu0 0
    %8272 = vmatprep.subr.bf16.mxu0 0
    %8273 = vmatpush2.bf16.msra.mxu0 %v8160
    %8274 = vmatprep.mubr.bf16.mxu0 %v8157
    %8275 = vmatmul.mubr.bf16.gmra.mxu0 %v8134
    %v8276 = vpop.f32.mrf.mxu0
    %v8277 = vadd.f32 %v8237, %v8276
    %v8278 = vpop.f32.mrf.mxu0
    %v8279 = vpop.f32.mrf.mxu0
    %v8280 = vpop.f32.mrf.mxu0
    %8281 = vdwg.mxu0
    %v8282 = vpack.c.bf16 %v8277, %v8277
    %v8283 = vld [vmem:[%s4] sm:$0xf]
    %v8284 = vld [vmem:[%s5] sm:$0x1]
    %v8286 = vlaneseq
    %v8287 = vshrl.u32 %v8286, 7
    %v8288 = vsub.s32 0, %v8287
    %v8289 = vrot.slane %v8284, %v8288
    %v8292 = vsel %vm52, %v8282, 0
    %v8295 = vsel %vm461, %v8283, 0
    %8297 = vmatprep.subr.bf16.mxu0 0
    %8298 = vmatpush1.bf16.msra.mxu0 0
    %8299 = vmatprep.subr.bf16.mxu0 0
    %8300 = vmatpush1.bf16.msra.mxu0 0
    %8301 = vmatprep.subr.bf16.mxu0 0
    %8302 = vmatpush1.bf16.msra.mxu0 0
    %8303 = vmatprep.subr.bf16.mxu0 0
    %8304 = vmatpush1.bf16.msra.mxu0 0
    %8305 = vmatprep.subr.bf16.mxu0 0
    %8306 = vmatpush1.bf16.msra.mxu0 0
    %8307 = vmatprep.subr.bf16.mxu0 0
    %8308 = vmatpush1.bf16.msra.mxu0 0
    %8309 = vmatprep.subr.bf16.mxu0 0
    %8310 = vmatpush1.bf16.msra.mxu0 0
    %8311 = vmatprep.subr.bf16.mxu0 0
    %8312 = vmatpush1.bf16.msra.mxu0 %v8295
    %8313 = vmatprep.subr.bf16.mxu0 0
    %8314 = vmatpush2.bf16.msra.mxu0 0
    %8315 = vmatprep.subr.bf16.mxu0 0
    %8316 = vmatpush2.bf16.msra.mxu0 0
    %8317 = vmatprep.subr.bf16.mxu0 0
    %8318 = vmatpush2.bf16.msra.mxu0 0
    %8319 = vmatprep.subr.bf16.mxu0 0
    %8320 = vmatpush2.bf16.msra.mxu0 0
    %8321 = vmatprep.subr.bf16.mxu0 0
    %8322 = vmatpush2.bf16.msra.mxu0 0
    %8323 = vmatprep.subr.bf16.mxu0 0
    %8324 = vmatpush2.bf16.msra.mxu0 0
    %8325 = vmatprep.subr.bf16.mxu0 0
    %8326 = vmatpush2.bf16.msra.mxu0 0
    %8327 = vmatprep.subr.bf16.mxu0 0
    %8328 = vmatpush2.bf16.msra.mxu0 0
    %8329 = vmatprep.mubr.bf16.mxu0 0
    %8330 = vmatmul.mubr.bf16.gmra.mxu0 %v8292
    %v8331 = vpop.f32.mrf.mxu0
    %v8332 = vadd.f32 %v8289, %v8331
    %v8333 = vpop.f32.mrf.mxu0
    %v8334 = vpop.f32.mrf.mxu0
    %v8335 = vpop.f32.mrf.mxu0
    %8336 = vdwg.mxu0
    %v8337 = vld [vmem:[%s6] sm:$0x1]
    %v8338 = vld [vmem:[%s7] sm:$0xf]
    %v8339 = vld [vmem:[%s7 + $0x4] sm:$0xf]
    %v8340 = vld [vmem:[%s8] sm:$0x1]
    %v8343 = vunpack.c.l.b16 %v8338
    %v8344 = vunpack.c.l.b16 %v8339
    %v8345 = vpack.c.b16 %v8344, %v8343
    %vm8347 = vcmask 130048
    %v8349 = vsel %vm8347, %v8337, 0
    %8351 = vmatprep.subr.bf16.mxu0 0
    %8352 = vmatpush1.bf16.msra.mxu0 0
    %8353 = vmatprep.subr.bf16.mxu0 0
    %8354 = vmatpush1.bf16.msra.mxu0 0
    %8355 = vmatprep.subr.bf16.mxu0 0
    %8356 = vmatpush1.bf16.msra.mxu0 0
    %8357 = vmatprep.subr.bf16.mxu0 0
    %8358 = vmatpush1.bf16.msra.mxu0 0
    %8359 = vmatprep.subr.bf16.mxu0 0
    %8360 = vmatpush1.bf16.msra.mxu0 0
    %8361 = vmatprep.subr.bf16.mxu0 0
    %8362 = vmatpush1.bf16.msra.mxu0 0
    %8363 = vmatprep.subr.bf16.mxu0 0
    %8364 = vmatpush1.bf16.msra.mxu0 0
    %8365 = vmatprep.subr.bf16.mxu0 0
    %8366 = vmatpush1.bf16.msra.mxu0 %v8345
    %8367 = vmatprep.subr.bf16.mxu0 0
    %8368 = vmatpush2.bf16.msra.mxu0 0
    %8369 = vmatprep.subr.bf16.mxu0 0
    %8370 = vmatpush2.bf16.msra.mxu0 0
    %8371 = vmatprep.subr.bf16.mxu0 0
    %8372 = vmatpush2.bf16.msra.mxu0 0
    %8373 = vmatprep.subr.bf16.mxu0 0
    %8374 = vmatpush2.bf16.msra.mxu0 0
    %8375 = vmatprep.subr.bf16.mxu0 0
    %8376 = vmatpush2.bf16.msra.mxu0 0
    %8377 = vmatprep.subr.bf16.mxu0 0
    %8378 = vmatpush2.bf16.msra.mxu0 0
    %8379 = vmatprep.subr.bf16.mxu0 0
    %8380 = vmatpush2.bf16.msra.mxu0 0
    %8381 = vmatprep.subr.bf16.mxu0 0
    %8382 = vmatpush2.bf16.msra.mxu0 0
    %8383 = vmatprep.mubr.bf16.mxu0 0
    %8384 = vmatmul.mubr.bf16.gmra.mxu0 %v8349
    %v8385 = vpop.f32.mrf.mxu0
    %v8386 = vadd.f32 %v8340, %v8385
    %v8387 = vpop.f32.mrf.mxu0
    %v8388 = vpop.f32.mrf.mxu0
    %v8389 = vpop.f32.mrf.mxu0
    %8390 = vdwg.mxu0
    %v8391 = vpack.c.bf16 %v8332, %v8332
    %v8392 = vpack.c.bf16 %v8386, %v8386
    %v8393 = vld [vmem:[%s9] sm:$0xf]
    %v8394 = vld [vmem:[%s9 + $0x4] sm:$0xf]
    %v8395 = vld [vmem:[%s9 + $0x8] sm:$0xf]
    %v8396 = vld [vmem:[%s9 + $0xc] sm:$0xf]
    %v8397 = vld [vmem:[%s9 + $0x10] sm:$0xf]
    %v8398 = vld [vmem:[%s9 + $0x14] sm:$0xf]
    %v8399 = vld [vmem:[%s9 + $0x18] sm:$0xf]
    %v8400 = vld [vmem:[%s9 + $0x1c] sm:$0xf]
    %v8401 = vld [vmem:[%s9 + $0x20] sm:$0xf]
    %v8402 = vld [vmem:[%s9 + $0x24] sm:$0xf]
    %v8403 = vld [vmem:[%s9 + $0x28] sm:$0xf]
    %v8404 = vld [vmem:[%s9 + $0x2c] sm:$0xf]
    %v8405 = vld [vmem:[%s9 + $0x30] sm:$0xf]
    %v8406 = vld [vmem:[%s9 + $0x34] sm:$0xf]
    %v8407 = vld [vmem:[%s9 + $0x38] sm:$0xf]
    %v8408 = vld [vmem:[%s9 + $0x3c] sm:$0xf]
    %v8417 = vunpack.c.l.b16 %v8401
    %v8418 = vunpack.c.l.b16 %v8402
    %v8419 = vunpack.c.l.b16 %v8403
    %v8420 = vunpack.c.l.b16 %v8404
    %v8421 = vunpack.c.l.b16 %v8405
    %v8422 = vunpack.c.l.b16 %v8406
    %v8423 = vunpack.c.l.b16 %v8407
    %v8424 = vunpack.c.l.b16 %v8408
    %v8425 = vpack.c.b16 %v8418, %v8417
    %v8426 = vpack.c.b16 %v8420, %v8419
    %v8427 = vpack.c.b16 %v8422, %v8421
    %v8428 = vpack.c.b16 %v8424, %v8423
    %vm8433 = vcmask 523264
    %v8435 = vsel %vm8433, %v8392, 0
    %8437 = vmatprep.subr.bf16.mxu0 0
    %8438 = vmatpush1.bf16.msra.mxu0 0
    %8439 = vmatprep.subr.bf16.mxu0 0
    %8440 = vmatpush1.bf16.msra.mxu0 0
    %8441 = vmatprep.subr.bf16.mxu0 0
    %8442 = vmatpush1.bf16.msra.mxu0 0
    %8443 = vmatprep.subr.bf16.mxu0 0
    %8444 = vmatpush1.bf16.msra.mxu0 0
    %8445 = vmatprep.subr.bf16.mxu0 0
    %8446 = vmatpush1.bf16.msra.mxu0 %v8428
    %8447 = vmatprep.subr.bf16.mxu0 0
    %8448 = vmatpush1.bf16.msra.mxu0 %v8427
    %8449 = vmatprep.subr.bf16.mxu0 0
    %8450 = vmatpush1.bf16.msra.mxu0 %v8426
    %8451 = vmatprep.subr.bf16.mxu0 0
    %8452 = vmatpush1.bf16.msra.mxu0 %v8425
    %8453 = vmatprep.subr.bf16.mxu0 0
    %8454 = vmatpush2.bf16.msra.mxu0 0
    %8455 = vmatprep.subr.bf16.mxu0 0
    %8456 = vmatpush2.bf16.msra.mxu0 0
    %8457 = vmatprep.subr.bf16.mxu0 0
    %8458 = vmatpush2.bf16.msra.mxu0 0
    %8459 = vmatprep.subr.bf16.mxu0 0
    %8460 = vmatpush2.bf16.msra.mxu0 0
    %8461 = vmatprep.subr.bf16.mxu0 0
    %8462 = vmatpush2.bf16.msra.mxu0 0
    %8463 = vmatprep.subr.bf16.mxu0 0
    %8464 = vmatpush2.bf16.msra.mxu0 0
    %8465 = vmatprep.subr.bf16.mxu0 0
    %8466 = vmatpush2.bf16.msra.mxu0 0
    %8467 = vmatprep.subr.bf16.mxu0 0
    %8468 = vmatpush2.bf16.msra.mxu0 0
    %8469 = vmatprep.mubr.bf16.mxu0 0
    %8470 = vmatmul.mubr.bf16.gmra.mxu0 %v8435
    %v8471 = vpop.f32.mrf.mxu0
    %v8472 = vadd.f32 0.0, %v8471
    %v8473 = vpop.f32.mrf.mxu0
    %v8474 = vpop.f32.mrf.mxu0
    %v8475 = vpop.f32.mrf.mxu0
    %8476 = vdwg.mxu0
    %v8477 = vlaneseq
    %v8478 = vshrl.u32 %v8477, 7
    %v8479 = vsub.s32 0, %v8478
    %v8480 = vrot.slane %v8472, %v8479
    %v8489 = vunpack.c.l.b16 %v8393
    %v8490 = vunpack.c.l.b16 %v8394
    %v8491 = vunpack.c.l.b16 %v8395
    %v8492 = vunpack.c.l.b16 %v8396
    %v8493 = vunpack.c.l.b16 %v8397
    %v8494 = vunpack.c.l.b16 %v8398
    %v8495 = vunpack.c.l.b16 %v8399
    %v8496 = vunpack.c.l.b16 %v8400
    %v8497 = vpack.c.b16 %v8490, %v8489
    %v8498 = vpack.c.b16 %v8492, %v8491
    %v8499 = vpack.c.b16 %v8494, %v8493
    %v8500 = vpack.c.b16 %v8496, %v8495
    %v8506 = vsel %vm8433, %v8391, 0
    %8508 = vmatprep.subr.bf16.mxu0 0
    %8509 = vmatpush1.bf16.msra.mxu0 0
    %8510 = vmatprep.subr.bf16.mxu0 0
    %8511 = vmatpush1.bf16.msra.mxu0 0
    %8512 = vmatprep.subr.bf16.mxu0 0
    %8513 = vmatpush1.bf16.msra.mxu0 0
    %8514 = vmatprep.subr.bf16.mxu0 0
    %8515 = vmatpush1.bf16.msra.mxu0 0
    %8516 = vmatprep.subr.bf16.mxu0 0
    %8517 = vmatpush1.bf16.msra.mxu0 %v8500
    %8518 = vmatprep.subr.bf16.mxu0 0
    %8519 = vmatpush1.bf16.msra.mxu0 %v8499
    %8520 = vmatprep.subr.bf16.mxu0 0
    %8521 = vmatpush1.bf16.msra.mxu0 %v8498
    %8522 = vmatprep.subr.bf16.mxu0 0
    %8523 = vmatpush1.bf16.msra.mxu0 %v8497
    %8524 = vmatprep.subr.bf16.mxu0 0
    %8525 = vmatpush2.bf16.msra.mxu0 0
    %8526 = vmatprep.subr.bf16.mxu0 0
    %8527 = vmatpush2.bf16.msra.mxu0 0
    %8528 = vmatprep.subr.bf16.mxu0 0
    %8529 = vmatpush2.bf16.msra.mxu0 0
    %8530 = vmatprep.subr.bf16.mxu0 0
    %8531 = vmatpush2.bf16.msra.mxu0 0
    %8532 = vmatprep.subr.bf16.mxu0 0
    %8533 = vmatpush2.bf16.msra.mxu0 0
    %8534 = vmatprep.subr.bf16.mxu0 0
    %8535 = vmatpush2.bf16.msra.mxu0 0
    %8536 = vmatprep.subr.bf16.mxu0 0
    %8537 = vmatpush2.bf16.msra.mxu0 0
    %8538 = vmatprep.subr.bf16.mxu0 0
    %8539 = vmatpush2.bf16.msra.mxu0 0
    %8540 = vmatprep.mubr.bf16.mxu0 0
    %8541 = vmatmul.mubr.bf16.gmra.mxu0 %v8506
    %v8542 = vpop.f32.mrf.mxu0
    %v8543 = vadd.f32 %v8480, %v8542
    %v8544 = vpop.f32.mrf.mxu0
    %v8545 = vpop.f32.mrf.mxu0
    %v8546 = vpop.f32.mrf.mxu0
    %8547 = vdwg.mxu0
    %v8548 = vld [vmem:[%s11] sm:$0x1]
    %v8550 = vlaneseq
    %v8551 = vshrl.u32 %v8550, 7
    %v8552 = vsub.s32 0, %v8551
    %v8553 = vrot.slane %v8548, %v8552
    %v8555 = vadd.f32 %v8543, %v8553
    %v8556 = vld [vmem:[%s10] sm:$0xf]
    %v8557 = vld [vmem:[%s10 + $0x4] sm:$0xf]
    %v8558 = vld [vmem:[%s10 + $0x8] sm:$0xf]
    %v8559 = vld [vmem:[%s10 + $0xc] sm:$0xf]
    %v8560 = vld [vmem:[%s10 + $0x10] sm:$0xf]
    %v8561 = vld [vmem:[%s10 + $0x14] sm:$0xf]
    %v8562 = vld [vmem:[%s10 + $0x18] sm:$0xf]
    %v8563 = vld [vmem:[%s10 + $0x1c] sm:$0xf]
    %v8564 = vld [vmem:[%s10 + $0x20] sm:$0xf]
    %v8565 = vld [vmem:[%s10 + $0x24] sm:$0xf]
    %v8566 = vld [vmem:[%s10 + $0x28] sm:$0xf]
    %v8567 = vld [vmem:[%s10 + $0x2c] sm:$0xf]
    %v8568 = vld [vmem:[%s10 + $0x30] sm:$0xf]
    %v8569 = vld [vmem:[%s10 + $0x34] sm:$0xf]
    %v8570 = vld [vmem:[%s10 + $0x38] sm:$0xf]
    %v8571 = vld [vmem:[%s10 + $0x3c] sm:$0xf]
    %v8580 = vunpack.c.l.b16 %v8564
    %v8581 = vunpack.c.l.b16 %v8565
    %v8582 = vunpack.c.l.b16 %v8566
    %v8583 = vunpack.c.l.b16 %v8567
    %v8584 = vunpack.c.l.b16 %v8568
    %v8585 = vunpack.c.l.b16 %v8569
    %v8586 = vunpack.c.l.b16 %v8570
    %v8587 = vunpack.c.l.b16 %v8571
    %v8588 = vpack.c.b16 %v8581, %v8580
    %v8589 = vpack.c.b16 %v8583, %v8582
    %v8590 = vpack.c.b16 %v8585, %v8584
    %v8591 = vpack.c.b16 %v8587, %v8586
    %8596 = vmatprep.subr.bf16.mxu0 0
    %8597 = vmatpush1.bf16.msra.mxu0 0
    %8598 = vmatprep.subr.bf16.mxu0 0
    %8599 = vmatpush1.bf16.msra.mxu0 0
    %8600 = vmatprep.subr.bf16.mxu0 0
    %8601 = vmatpush1.bf16.msra.mxu0 0
    %8602 = vmatprep.subr.bf16.mxu0 0
    %8603 = vmatpush1.bf16.msra.mxu0 0
    %8604 = vmatprep.subr.bf16.mxu0 0
    %8605 = vmatpush1.bf16.msra.mxu0 %v8591
    %8606 = vmatprep.subr.bf16.mxu0 0
    %8607 = vmatpush1.bf16.msra.mxu0 %v8590
    %8608 = vmatprep.subr.bf16.mxu0 0
    %8609 = vmatpush1.bf16.msra.mxu0 %v8589
    %8610 = vmatprep.subr.bf16.mxu0 0
    %8611 = vmatpush1.bf16.msra.mxu0 %v8588
    %8612 = vmatprep.subr.bf16.mxu0 0
    %8613 = vmatpush2.bf16.msra.mxu0 0
    %8614 = vmatprep.subr.bf16.mxu0 0
    %8615 = vmatpush2.bf16.msra.mxu0 0
    %8616 = vmatprep.subr.bf16.mxu0 0
    %8617 = vmatpush2.bf16.msra.mxu0 0
    %8618 = vmatprep.subr.bf16.mxu0 0
    %8619 = vmatpush2.bf16.msra.mxu0 0
    %8620 = vmatprep.subr.bf16.mxu0 0
    %8621 = vmatpush2.bf16.msra.mxu0 0
    %8622 = vmatprep.subr.bf16.mxu0 0
    %8623 = vmatpush2.bf16.msra.mxu0 0
    %8624 = vmatprep.subr.bf16.mxu0 0
    %8625 = vmatpush2.bf16.msra.mxu0 0
    %8626 = vmatprep.subr.bf16.mxu0 0
    %8627 = vmatpush2.bf16.msra.mxu0 0
    %8628 = vmatprep.mubr.bf16.mxu0 0
    %8629 = vmatmul.mubr.bf16.gmra.mxu0 %v8435
    %v8630 = vpop.f32.mrf.mxu0
    %v8631 = vadd.f32 0.0, %v8630
    %v8632 = vpop.f32.mrf.mxu0
    %v8633 = vpop.f32.mrf.mxu0
    %v8634 = vpop.f32.mrf.mxu0
    %8635 = vdwg.mxu0
    %v8636 = vlaneseq
    %v8637 = vshrl.u32 %v8636, 7
    %v8638 = vsub.s32 0, %v8637
    %v8639 = vrot.slane %v8631, %v8638
    %v8648 = vunpack.c.l.b16 %v8556
    %v8649 = vunpack.c.l.b16 %v8557
    %v8650 = vunpack.c.l.b16 %v8558
    %v8651 = vunpack.c.l.b16 %v8559
    %v8652 = vunpack.c.l.b16 %v8560
    %v8653 = vunpack.c.l.b16 %v8561
    %v8654 = vunpack.c.l.b16 %v8562
    %v8655 = vunpack.c.l.b16 %v8563
    %v8656 = vpack.c.b16 %v8649, %v8648
    %v8657 = vpack.c.b16 %v8651, %v8650
    %v8658 = vpack.c.b16 %v8653, %v8652
    %v8659 = vpack.c.b16 %v8655, %v8654
    %8664 = vmatprep.subr.bf16.mxu0 0
    %8665 = vmatpush1.bf16.msra.mxu0 0
    %8666 = vmatprep.subr.bf16.mxu0 0
    %8667 = vmatpush1.bf16.msra.mxu0 0
    %8668 = vmatprep.subr.bf16.mxu0 0
    %8669 = vmatpush1.bf16.msra.mxu0 0
    %8670 = vmatprep.subr.bf16.mxu0 0
    %8671 = vmatpush1.bf16.msra.mxu0 0
    %8672 = vmatprep.subr.bf16.mxu0 0
    %8673 = vmatpush1.bf16.msra.mxu0 %v8659
    %8674 = vmatprep.subr.bf16.mxu0 0
    %8675 = vmatpush1.bf16.msra.mxu0 %v8658
    %8676 = vmatprep.subr.bf16.mxu0 0
    %8677 = vmatpush1.bf16.msra.mxu0 %v8657
    %8678 = vmatprep.subr.bf16.mxu0 0
    %8679 = vmatpush1.bf16.msra.mxu0 %v8656
    %8680 = vmatprep.subr.bf16.mxu0 0
    %8681 = vmatpush2.bf16.msra.mxu0 0
    %8682 = vmatprep.subr.bf16.mxu0 0
    %8683 = vmatpush2.bf16.msra.mxu0 0
    %8684 = vmatprep.subr.bf16.mxu0 0
    %8685 = vmatpush2.bf16.msra.mxu0 0
    %8686 = vmatprep.subr.bf16.mxu0 0
    %8687 = vmatpush2.bf16.msra.mxu0 0
    %8688 = vmatprep.subr.bf16.mxu0 0
    %8689 = vmatpush2.bf16.msra.mxu0 0
    %8690 = vmatprep.subr.bf16.mxu0 0
    %8691 = vmatpush2.bf16.msra.mxu0 0
    %8692 = vmatprep.subr.bf16.mxu0 0
    %8693 = vmatpush2.bf16.msra.mxu0 0
    %8694 = vmatprep.subr.bf16.mxu0 0
    %8695 = vmatpush2.bf16.msra.mxu0 0
    %8696 = vmatprep.mubr.bf16.mxu0 0
    %8697 = vmatmul.mubr.bf16.gmra.mxu0 %v8506
    %v8698 = vpop.f32.mrf.mxu0
    %v8699 = vadd.f32 %v8639, %v8698
    %v8700 = vpop.f32.mrf.mxu0
    %v8701 = vpop.f32.mrf.mxu0
    %v8702 = vpop.f32.mrf.mxu0
    %8703 = vdwg.mxu0
    %v8704 = vld [vmem:[%s12] sm:$0x1]
    %v8706 = vlaneseq
    %v8707 = vshrl.u32 %v8706, 7
    %v8708 = vsub.s32 0, %v8707
    %v8709 = vrot.slane %v8704, %v8708
    %v8711 = vadd.f32 %v8699, %v8709
    %v8712 = vxor.u32 %v8555, 2147483648
    %v8713 = vmul.f32 %v8712, 1.442695
    %v8714 = vpow.pop %v8713
    %v8715 = vadd.f32 %v8714, 1.0
    %v8716 = vrcp.pop %v8715
    %v8717 = vmul.f32 1.0, %v8716
    %v8718 = vmul.f32 %v8332, %v8717
    %v8719 = vxor.u32 %v8711, 2147483648
    %v8720 = vmul.f32 %v8719, 1.442695
    %v8721 = vpow.pop %v8720
    %v8722 = vadd.f32 %v8721, 1.0
    %v8723 = vrcp.pop %v8722
    %v8724 = vmul.f32 1.0, %v8723
    %v8725 = vlaneseq
    %v8726 = vshrl.u32 %v8725, 7
    %v8727 = vsub.s32 0, %v8726
    %v8728 = vrot.slane %v8386, %v8727
    %v8729 = vmul.f32 %v8728, %v8724
    %v8730 = vpack.c.bf16 %v8718, %v8718
    %v8731 = vld [vmem:[%s13] sm:$0xf]
    %v8732 = vld [vmem:[%s13 + $0x4] sm:$0xf]
    %v8733 = vld [vmem:[%s13 + $0x8] sm:$0xf]
    %v8734 = vld [vmem:[%s13 + $0xc] sm:$0xf]
    %v8735 = vld [vmem:[%s13 + $0x10] sm:$0xf]
    %v8736 = vld [vmem:[%s13 + $0x14] sm:$0xf]
    %v8737 = vld [vmem:[%s13 + $0x18] sm:$0xf]
    %v8738 = vld [vmem:[%s13 + $0x1c] sm:$0xf]
    %v8739 = vpack.c.bf16 %v8729, %v8729
    %v8740 = vld [vmem:[%s13 + $0x20] sm:$0xf]
    %v8741 = vld [vmem:[%s13 + $0x24] sm:$0xf]
    %v8742 = vld [vmem:[%s13 + $0x28] sm:$0xf]
    %v8743 = vld [vmem:[%s13 + $0x2c] sm:$0xf]
    %v8744 = vld [vmem:[%s13 + $0x30] sm:$0xf]
    %v8745 = vld [vmem:[%s13 + $0x34] sm:$0xf]
    %v8746 = vld [vmem:[%s13 + $0x38] sm:$0xf]
    %v8747 = vld [vmem:[%s13 + $0x3c] sm:$0xf]
    %v8756 = vunpack.c.l.b16 %v8740
    %v8757 = vunpack.c.l.b16 %v8741
    %v8758 = vunpack.c.l.b16 %v8742
    %v8759 = vunpack.c.l.b16 %v8743
    %v8760 = vunpack.c.l.b16 %v8744
    %v8761 = vunpack.c.l.b16 %v8745
    %v8762 = vunpack.c.l.b16 %v8746
    %v8763 = vunpack.c.l.b16 %v8747
    %v8764 = vpack.c.b16 %v8757, %v8756
    %v8765 = vpack.c.b16 %v8759, %v8758
    %v8766 = vpack.c.b16 %v8761, %v8760
    %v8767 = vpack.c.b16 %v8763, %v8762
    %v8773 = vsel %vm8433, %v8739, 0
    %8775 = vmatprep.subr.bf16.mxu0 0
    %8776 = vmatpush1.bf16.msra.mxu0 0
    %8777 = vmatprep.subr.bf16.mxu0 0
    %8778 = vmatpush1.bf16.msra.mxu0 0
    %8779 = vmatprep.subr.bf16.mxu0 0
    %8780 = vmatpush1.bf16.msra.mxu0 0
    %8781 = vmatprep.subr.bf16.mxu0 0
    %8782 = vmatpush1.bf16.msra.mxu0 0
    %8783 = vmatprep.subr.bf16.mxu0 0
    %8784 = vmatpush1.bf16.msra.mxu0 %v8767
    %8785 = vmatprep.subr.bf16.mxu0 0
    %8786 = vmatpush1.bf16.msra.mxu0 %v8766
    %8787 = vmatprep.subr.bf16.mxu0 0
    %8788 = vmatpush1.bf16.msra.mxu0 %v8765
    %8789 = vmatprep.subr.bf16.mxu0 0
    %8790 = vmatpush1.bf16.msra.mxu0 %v8764
    %8791 = vmatprep.subr.bf16.mxu0 0
    %8792 = vmatpush2.bf16.msra.mxu0 0
    %8793 = vmatprep.subr.bf16.mxu0 0
    %8794 = vmatpush2.bf16.msra.mxu0 0
    %8795 = vmatprep.subr.bf16.mxu0 0
    %8796 = vmatpush2.bf16.msra.mxu0 0
    %8797 = vmatprep.subr.bf16.mxu0 0
    %8798 = vmatpush2.bf16.msra.mxu0 0
    %8799 = vmatprep.subr.bf16.mxu0 0
    %8800 = vmatpush2.bf16.msra.mxu0 0
    %8801 = vmatprep.subr.bf16.mxu0 0
    %8802 = vmatpush2.bf16.msra.mxu0 0
    %8803 = vmatprep.subr.bf16.mxu0 0
    %8804 = vmatpush2.bf16.msra.mxu0 0
    %8805 = vmatprep.subr.bf16.mxu0 0
    %8806 = vmatpush2.bf16.msra.mxu0 0
    %8807 = vmatprep.mubr.bf16.mxu0 0
    %8808 = vmatmul.mubr.bf16.gmra.mxu0 %v8773
    %v8809 = vpop.f32.mrf.mxu0
    %v8810 = vadd.f32 0.0, %v8809
    %v8811 = vpop.f32.mrf.mxu0
    %v8812 = vpop.f32.mrf.mxu0
    %v8813 = vpop.f32.mrf.mxu0
    %8814 = vdwg.mxu0
    %v8823 = vunpack.c.l.b16 %v8731
    %v8824 = vunpack.c.l.b16 %v8732
    %v8825 = vunpack.c.l.b16 %v8733
    %v8826 = vunpack.c.l.b16 %v8734
    %v8827 = vunpack.c.l.b16 %v8735
    %v8828 = vunpack.c.l.b16 %v8736
    %v8829 = vunpack.c.l.b16 %v8737
    %v8830 = vunpack.c.l.b16 %v8738
    %v8831 = vpack.c.b16 %v8824, %v8823
    %v8832 = vpack.c.b16 %v8826, %v8825
    %v8833 = vpack.c.b16 %v8828, %v8827
    %v8834 = vpack.c.b16 %v8830, %v8829
    %v8840 = vsel %vm8433, %v8730, 0
    %8842 = vmatprep.subr.bf16.mxu0 0
    %8843 = vmatpush1.bf16.msra.mxu0 0
    %8844 = vmatprep.subr.bf16.mxu0 0
    %8845 = vmatpush1.bf16.msra.mxu0 0
    %8846 = vmatprep.subr.bf16.mxu0 0
    %8847 = vmatpush1.bf16.msra.mxu0 0
    %8848 = vmatprep.subr.bf16.mxu0 0
    %8849 = vmatpush1.bf16.msra.mxu0 0
    %8850 = vmatprep.subr.bf16.mxu0 0
    %8851 = vmatpush1.bf16.msra.mxu0 %v8834
    %8852 = vmatprep.subr.bf16.mxu0 0
    %8853 = vmatpush1.bf16.msra.mxu0 %v8833
    %8854 = vmatprep.subr.bf16.mxu0 0
    %8855 = vmatpush1.bf16.msra.mxu0 %v8832
    %8856 = vmatprep.subr.bf16.mxu0 0
    %8857 = vmatpush1.bf16.msra.mxu0 %v8831
    %8858 = vmatprep.subr.bf16.mxu0 0
    %8859 = vmatpush2.bf16.msra.mxu0 0
    %8860 = vmatprep.subr.bf16.mxu0 0
    %8861 = vmatpush2.bf16.msra.mxu0 0
    %8862 = vmatprep.subr.bf16.mxu0 0
    %8863 = vmatpush2.bf16.msra.mxu0 0
    %8864 = vmatprep.subr.bf16.mxu0 0
    %8865 = vmatpush2.bf16.msra.mxu0 0
    %8866 = vmatprep.subr.bf16.mxu0 0
    %8867 = vmatpush2.bf16.msra.mxu0 0
    %8868 = vmatprep.subr.bf16.mxu0 0
    %8869 = vmatpush2.bf16.msra.mxu0 0
    %8870 = vmatprep.subr.bf16.mxu0 0
    %8871 = vmatpush2.bf16.msra.mxu0 0
    %8872 = vmatprep.subr.bf16.mxu0 0
    %8873 = vmatpush2.bf16.msra.mxu0 0
    %8874 = vmatprep.mubr.bf16.mxu0 0
    %8875 = vmatmul.mubr.bf16.gmra.mxu0 %v8840
    %v8876 = vpop.f32.mrf.mxu0
    %v8877 = vadd.f32 %v8810, %v8876
    %v8878 = vpop.f32.mrf.mxu0
    %v8879 = vpop.f32.mrf.mxu0
    %v8880 = vpop.f32.mrf.mxu0
    %8881 = vdwg.mxu0
    %v8882 = vld [vmem:[%s14] sm:$0x1]
    %v8884 = vlaneseq
    %v8885 = vshrl.u32 %v8884, 7
    %v8886 = vsub.s32 0, %v8885
    %v8887 = vrot.slane %v8882, %v8886
    %v8889 = vadd.f32 %v8877, %v8887
    %vm8890 = vcmask 115712
    %8891 = vst.msk [vmem:[#allocation3] sm:$0x3] %vm8890, %v8889
    // Predicated region
    $region62: #{test_forward.1} parent=1 // pred_check
      _
    $region63: #{test_forward.1} parent=1 // pred_check_branch
      %8893 = sbr.rel (0) target = $region65
    $region64: #{test_forward.1} parent=1 // pred_region
      %s8895 = ssub.s32 32, 32
      %8896 = vsyncadd [#allocation4], %s8895
      %s8898 = sshll.u32 [#allocation3], 4
      %s8899 = int_to_ptr.vmem [resolvable:$true] %s8898
      %8901 = dma.vmem_to_hbm [thread:$0]  %s8899, 32, %s15, [#allocation4]
    $region65: #{test_forward.1} parent=1 // pred_fallthru
      _
    // Predicated region
    $region66: #{test_forward.1} parent=1 // pred_check
      _
    $region67: #{test_forward.1} parent=1 // pred_check_branch
      %8903 = sbr.rel (0) target = $region69
    $region68: #{test_forward.1} parent=1 // pred_region
      %8904 = dma.done [#allocation4], 32
    $region69: #{test_forward.1} parent=1 // pred_fallthru
      _
    %8905 = vsyncpa [#allocation4], 1

</llo_original>
